<compile_context>
chip_gen: v5e
topology: v5e:2x2
jax: 0.10.0
libtpu: 0.0.40
codegen_flags: <defaults>
</compile_context>

<pallas_src>
import numpy as np
import jax
import jax.numpy as jnp
from jax.experimental import pallas as pl
from jax.experimental.pallas import tpu as pltpu


# --------------------------------------------------------------------------- #
# Small helpers
# --------------------------------------------------------------------------- #
def _as_tuple(v, n, name):
    if isinstance(v, (int, np.integer)):
        return (int(v),) * n
    v = tuple(int(e) for e in v)
    if len(v) != n:
        raise ValueError(f"{name} must have length {n}, got {v}")
    return v


def _round_up(x, m):
    return ((x + m - 1) // m) * m


def _tpu_hints():
    """Best-effort (grid-shardable TensorCores, preferred MXU M tile, per-core VMEM bytes)."""
    try:
        kind = jax.devices()[0].device_kind.lower()
    except Exception:
        kind = ""
    if "7x" in kind or "v7" in kind:   # v7x: 2 TCs/chip, 64 MiB VMEM per TC, 256-wide MXU
        return 2, 256, 64 << 20
    if "v6" in kind:                   # v6e: 1 TC, 128 MiB VMEM, 256-wide MXU
        return 1, 256, 128 << 20
    if "v5" in kind:                   # v5e: 1 TC, 128 MiB VMEM, 128-wide MXU
        return 1, 128, 128 << 20
    return 1, 256, 64 << 20            # unknown: conservative VMEM assumption


# --------------------------------------------------------------------------- #
# Fold matrix (vectorized host-side construction)
# --------------------------------------------------------------------------- #
def _build_fold_matrix(conv_dims, kernel_dims, dilation, padding, stride,
                       out_dims, kernel_position, dtype):
    """0/1 matrix F such that fold(x)[b] == x_flat[b] @ F.

    Row index = flat index over (*conv_dims, *kernel_dims) for 'last'
    (over (*kernel_dims, *conv_dims) for 'first'); column index = flat index
    over *out_dims. Contributions landing in the cropped padding border are
    dropped, matching the reference module.
    """
    kN = len(kernel_dims)
    full = tuple(conv_dims) + tuple(kernel_dims)
    valid = np.ones(full, dtype=bool)
    col = np.zeros(full, dtype=np.int64)
    for d in range(kN):
        o = np.arange(conv_dims[d])[:, None]
        k = np.arange(kernel_dims[d])[None, :]
        t = o * stride[d] + k * dilation[d] - padding[d]           # (conv_d, kern_d)
        v = (t >= 0) & (t < out_dims[d])
        shape = [1] * (2 * kN)
        shape[d] = conv_dims[d]
        shape[kN + d] = kernel_dims[d]
        valid &= v.reshape(shape)
        col = col * out_dims[d] + np.clip(t, 0, out_dims[d] - 1).reshape(shape)
    if kernel_position == "first":
        perm = tuple(range(kN, 2 * kN)) + tuple(range(kN))
        valid = np.transpose(valid, perm)
        col = np.transpose(col, perm)
    rows = int(np.prod(conv_dims)) * int(np.prod(kernel_dims))
    cols = int(np.prod(out_dims))
    F = np.zeros((rows, cols), dtype=np.float32)
    v = valid.reshape(-1)
    F[np.arange(rows)[v], col.reshape(-1)[v]] = 1.0
    return jnp.asarray(F, dtype=dtype)


# --------------------------------------------------------------------------- #
# Tile planning (generation-aware)
# --------------------------------------------------------------------------- #
def _plan_tiles(B, R, Y, x_item, f_item):
    n_cores, mxu_m, vmem_cap = _tpu_hints()

    # Y tile: keep the resident F block bounded (~16 MiB per core).
    f_budget = 16 << 20
    yt = Y
    if R * Y * f_item > f_budget and Y > 128:
        yt = max(128, (f_budget // (R * f_item)) // 128 * 128)
        yt = min(yt, Y)
        # prefer a divisor of Y that is a multiple of 128 (unmasked full-width stores)
        for cand in range(yt - (yt % 128), 127, -128):
            if Y % cand == 0:
                yt = cand
                break
    f_bufs = 1 if yt == Y else 2       # constant F block index -> single buffer is enough

    # Batch tile: as big as VMEM allows, aiming for a full MXU M tile.
    budget = int(vmem_cap * 0.6) - f_bufs * R * yt * f_item
    per_row = 2 * (R + yt) * x_item    # double-buffered x block + out block, per batch row
    tb_cap = max(8, (budget // per_row) // 8 * 8) if budget > per_row * 8 else 8
    tb = min(_round_up(B, 8), tb_cap)
    if n_cores > 1 and B > 16:         # v7x: >= n_cores grid steps so both TCs get work
        tb = min(tb, max(8, _round_up(-(-B // n_cores), 8)))
    tb = max(8, tb)

    derived = f_bufs * R * yt * f_item + tb * per_row
    vmem_limit = int(min(vmem_cap, max(32 << 20, int(derived * 1.4))))
    return tb, yt, f_bufs, vmem_limit, mxu_m


# --------------------------------------------------------------------------- #
# Kernel
# --------------------------------------------------------------------------- #
def _fold_kernel(x_ref, f_ref, o_ref):
    # x_ref: (TB, R)   lane-dense contiguous rows of unfolded data
    # f_ref: (R, YT)   constant 0/1 fold matrix tile
    # o_ref: (TB, YT)  lane-dense folded output rows
    o_ref[...] = jnp.dot(
        x_ref[...], f_ref[...], preferred_element_type=jnp.float32
    ).astype(o_ref.dtype)


def pallas_fold(x, kernel_size, dilation=1, padding=0, stride=1,
                kernel_position="last", block_batch=None, block_out=None):
    """Fold (col2im) of an unfolded tensor.

    kernel_position='last':  x is (*batch, *conv_output_dims, *kernel_dims)
    kernel_position='first': x is (*batch, *kernel_dims, *conv_output_dims)
    Returns (*batch, *output_spatial_dims), matching the PyTorch module.
    """
    if kernel_position not in ("first", "last"):
        raise ValueError(f"kernel_position must be 'first' or 'last', got {kernel_position!r}")
    kernel_size = tuple(int(k) for k in kernel_size)
    kN = len(kernel_size)
    dilation = _as_tuple(dilation, kN, "dilation")
    padding = _as_tuple(padding, kN, "padding")
    stride = _as_tuple(stride, kN, "stride")

    if x.ndim < 2 * kN:
        raise ValueError("input rank must be at least 2 * len(kernel_size)")
    batch_shape = x.shape[: x.ndim - 2 * kN]
    if kernel_position == "last":
        conv_dims = tuple(x.shape[x.ndim - 2 * kN: x.ndim - kN])
        k_dims = tuple(x.shape[x.ndim - kN:])
    else:
        k_dims = tuple(x.shape[x.ndim - 2 * kN: x.ndim - kN])
        conv_dims = tuple(x.shape[x.ndim - kN:])
    if k_dims != kernel_size:
        raise ValueError(f"kernel dims {k_dims} do not match kernel_size {kernel_size}")

    out_dims = tuple(s * (o - 1) + d * (k - 1) + 1 - 2 * p
                     for o, k, d, p, s in zip(conv_dims, kernel_size, dilation, padding, stride))
    if any(o <= 0 for o in out_dims):
        raise ValueError(f"non-positive fold output size {out_dims} (padding too large)")

    B = int(np.prod(batch_shape)) if batch_shape else 1
    R = int(np.prod(conv_dims)) * int(np.prod(kernel_size))
    Y = int(np.prod(out_dims))

    # bf16 inputs get a bf16 F (exact 0/1, full-rate bf16 MXU path); f32 stays f32.
    f_dtype = jnp.bfloat16 if x.dtype == jnp.bfloat16 else jnp.float32
    f_item = jnp.dtype(f_dtype).itemsize
    if R * Y * f_item > (2 << 30):
        # TODO(synk): banded per-output-tile F construction for very large spatial extents.
        raise ValueError("dense fold matrix would exceed 2 GiB; spatial extent too large "
                         "for the dense-F formulation")

    # Free (contiguous) reshape only -- no extra HBM transpose pass.
    x2 = x.reshape(B, R)
    F = _build_fold_matrix(conv_dims, kernel_size, dilation, padding, stride,
                           out_dims, kernel_position, f_dtype)

    tb, yt, f_bufs, vmem_limit, _ = _plan_tiles(B, R, Y, x.dtype.itemsize, f_item)
    if block_batch is not None:
        tb = int(block_batch)
    if block_out is not None:
        yt = int(block_out)
        f_bufs = 1 if yt == Y else 2
    if R * yt * f_item > (48 << 20):
        # TODO(synk): tile the reduction (R) axis with a banded F so the fold-matrix
        # block fits VMEM when the spatial extent / kernel is very large.
        raise ValueError("fold-matrix tile too large for VMEM with the dense-F kernel")

    # Pad batch rows to a multiple of the batch tile (keeps >=1 full-width tiles,
    # avoids collapsing awkward B to a single unpipelined step).
    B_pad = _round_up(B, tb)
    if B_pad != B:
        x2 = jnp.pad(x2, ((0, B_pad - B), (0, 0)))

    grid = (B_pad // tb, pl.cdiv(Y, yt))
    cost = pl.CostEstimate(
        flops=2 * B_pad * R * Y,
        transcendentals=0,
        bytes_accessed=(B_pad * R * x.dtype.itemsize
                        + (B_pad // tb) * R * Y * f_item
                        + B_pad * Y * x.dtype.itemsize),
    )

    def _call(f_pipeline_mode):
        f_kwargs = {} if f_pipeline_mode is None else {"pipeline_mode": f_pipeline_mode}
        return pl.pallas_call(
            _fold_kernel,
            out_shape=jax.ShapeDtypeStruct((B_pad, Y), x.dtype),
            grid_spec=pltpu.PrefetchScalarGridSpec(
                num_scalar_prefetch=0,
                grid=grid,
                in_specs=[
                    # batched rows, contiguous, lane-dense; constant across the Y axis
                    pl.BlockSpec((tb, R), lambda b, j: (b, 0)),
                    # constant fold matrix tile; single-buffered when fully resident
                    pl.BlockSpec((R, yt), lambda b, j: (0, j), **f_kwargs),
                ],
                out_specs=pl.BlockSpec((tb, yt), lambda b, j: (b, j)),  # lane-dense stores
            ),
            compiler_params=pltpu.CompilerParams(
                dimension_semantics=("parallel", "parallel"),
                vmem_limit_bytes=vmem_limit,
            ),
            cost_estimate=cost,
        )(x2, F)

    f_mode = pl.Buffered(1) if f_bufs == 1 else None
    try:
        y2 = _call(f_mode)
    except Exception:
        if f_mode is None:
            raise
        # Fallback for jax versions without pipeline_mode / Buffered(1) support.
        y2 = _call(None)

    if B_pad != B:
        y2 = y2[:B]
    return y2.reshape(*batch_shape, *out_dims)


# --------------------------------------------------------------------------- #
# Pure-JAX reference (matches the PyTorch Fold.forward semantics)
# --------------------------------------------------------------------------- #
def fold_ref(x, kernel_size, dilation=1, padding=0, stride=1, kernel_position="last"):
    kN = len(kernel_size)
    dilation = _as_tuple(dilation, kN, "dilation")
    padding = _as_tuple(padding, kN, "padding")
    stride = _as_tuple(stride, kN, "stride")
    nb = x.ndim - 2 * kN
    batch = x.shape[:nb]
    if kernel_position == "first":
        perm = tuple(range(nb)) + tuple(range(nb + kN, nb + 2 * kN)) + tuple(range(nb, nb + kN))
        x = jnp.transpose(x, perm)
    conv_dims = x.shape[nb: nb + kN]
    pad_dims = tuple(s * (o - 1) + d * (k - 1) + 1
                     for o, k, d, s in zip(conv_dims, kernel_size, dilation, stride))
    acc = jnp.zeros((*batch, *pad_dims), jnp.float32)
    for k_idx in np.ndindex(*kernel_size):
        src = x[(slice(None),) * (nb + kN) + k_idx].astype(jnp.float32)
        dst = (slice(None),) * nb + tuple(
            slice(ki * d, ki * d + s * (o - 1) + 1, s)
            for ki, d, s, o in zip(k_idx, dilation, stride, conv_dims))
        acc = acc.at[dst].add(src)
    crop = (slice(None),) * nb + tuple(slice(p, sz - p) for p, sz in zip(padding, pad_dims))
    return acc[crop].astype(x.dtype)


# --------------------------------------------------------------------------- #
# Self-test
# --------------------------------------------------------------------------- #
if __name__ == "__main__":
    key = jax.random.PRNGKey(0)
    k1, k2, k3 = jax.random.split(key, 3)

    # Config 1: 3x3 kernel, stride 1, dilation 1, padding 1, kernel_position='last'.
    kernel_size = (3, 3)
    batch = (2, 64)
    x = jax.random.normal(k1, (*batch, 16, 16, *kernel_size), dtype=jnp.float32)
    y = jax.block_until_ready(pallas_fold(x, kernel_size, 1, (1, 1), 1))
    y_ref = fold_ref(x, kernel_size, 1, (1, 1), 1)
    assert y.shape == (*batch, 16, 16), y.shape
    np.testing.assert_allclose(np.asarray(y), np.asarray(y_ref), rtol=1e-5, atol=1e-5)

    # Config 2: rectangular kernel with stride / dilation / padding.
    ks2, dil2, pad2, st2 = (2, 3), (1, 2), (0, 1), (2, 1)
    x2 = jax.random.normal(k2, (16, 8, 8, *ks2), dtype=jnp.float32)
    y2 = jax.block_until_ready(pallas_fold(x2, ks2, dil2, pad2, st2))
    y2_ref = fold_ref(x2, ks2, dil2, pad2, st2)
    assert y2.shape == (16, 16, 10), y2.shape
    np.testing.assert_allclose(np.asarray(y2), np.asarray(y2_ref), rtol=1e-5, atol=1e-5)

    # Config 3: kernel_position='first', bf16 input (bf16 F path), awkward batch size.
    ks3, st3 = (2, 2), (2, 2)
    x3 = jax.random.normal(k3, (3, *ks3, 4, 4), dtype=jnp.bfloat16)
    y3 = jax.block_until_ready(pallas_fold(x3, ks3, 1, 0, st3, kernel_position="first"))
    y3_ref = fold_ref(x3, ks3, 1, 0, st3, kernel_position="first")
    assert y3.shape == (3, 8, 8), y3.shape
    np.testing.assert_allclose(np.asarray(y3.astype(jnp.float32)),
                               np.asarray(y3_ref.astype(jnp.float32)),
                               rtol=5e-2, atol=5e-2)

    print("KERNEL_OK")
</pallas_src>

<mosaic_0001>
module attributes {stable_mosaic.version = 11 : i64} {
  func.func @_fold_kernel(%arg0: i32, %arg1: i32, %arg2: memref<128x2304xf32, #tpu.memory_space<vmem>>, %arg3: memref<2304x256xf32, #tpu.memory_space<vmem>>, %arg4: memref<128x256xf32, #tpu.memory_space<vmem>>) attributes {dimension_semantics = [#tpu.dimension_semantics<parallel>, #tpu.dimension_semantics<parallel>], iteration_bounds = array<i64: 1, 1>, scalar_prefetch = 0 : i64, scratch_operands = 0 : i64, tpu.core_type = #tpu.core_type<tc>, window_params = [{transform_indices = @transform_0, window_bounds = array<i64: 128, 2304>}, {pipeline_mode = #tpu.pipeline_mode<synchronous>, transform_indices = @transform_1, window_bounds = array<i64: 2304, 256>}, {transform_indices = @transform_2, window_bounds = array<i64: 128, 256>}]} {
    %c0 = arith.constant 0 : index
    %c0_0 = arith.constant 0 : index
    %0 = vector.load %arg2[%c0, %c0_0] : memref<128x2304xf32, #tpu.memory_space<vmem>>, vector<128x2304xf32>
    %c0_1 = arith.constant 0 : index
    %c0_2 = arith.constant 0 : index
    %1 = vector.load %arg3[%c0_1, %c0_2] : memref<2304x256xf32, #tpu.memory_space<vmem>>, vector<2304x256xf32>
    %cst = arith.constant dense<0.000000e+00> : vector<128x256xf32>
    %2 = tpu.matmul %0, %1, %cst {dimension_numbers = #tpu.dot_dimension_numbers<[1], [0], [0], [1], [0, 0, 1, 1], [], []>} : vector<128x2304xf32>, vector<2304x256xf32>, vector<128x256xf32> -> vector<128x256xf32>
    %c0_3 = arith.constant 0 : index
    %c0_4 = arith.constant 0 : index
    %3 = vector.load %arg4[%c0_3, %c0_4] : memref<128x256xf32, #tpu.memory_space<vmem>>, vector<128x256xf32>
    tpu.vector_store %arg4[%c0_3, %c0_4], %2 {strides = array<i32>} : memref<128x256xf32, #tpu.memory_space<vmem>>, vector<128x256xf32>,
    return
  }
  func.func @transform_0(%arg0: i32, %arg1: i32) -> (i32, i32) {
    %c0_i32 = arith.constant 0 : i32
    %c0_i32_0 = arith.constant 0 : i32
    return %arg0, %c0_i32 : i32, i32
  }
  func.func @transform_1(%arg0: i32, %arg1: i32) -> (i32, i32) {
    %c0_i32 = arith.constant 0 : i32
    %c0_i32_0 = arith.constant 0 : i32
    return %c0_i32, %arg1 : i32, i32
  }
  func.func @transform_2(%arg0: i32, %arg1: i32) -> (i32, i32) {
    %c0_i32 = arith.constant 0 : i32
    return %arg0, %arg1 : i32, i32
  }
}

module attributes {stable_mosaic.version = 11 : i64} {
  func.func @_fold_kernel(%arg0: i32, %arg1: i32, %arg2: memref<128x2304xf32, #tpu.memory_space<vmem>>, %arg3: memref<2304x256xf32, #tpu.memory_space<vmem>>, %arg4: memref<128x256xf32, #tpu.memory_space<vmem>>) attributes {dimension_semantics = [#tpu.dimension_semantics<parallel>, #tpu.dimension_semantics<parallel>], iteration_bounds = array<i64: 1, 1>, scalar_prefetch = 0 : i64, scratch_operands = 0 : i64, tpu.core_type = #tpu.core_type<tc>, window_params = [{transform_indices = @transform_0, window_bounds = array<i64: 128, 2304>}, {transform_indices = @transform_1, window_bounds = array<i64: 2304, 256>}, {transform_indices = @transform_2, window_bounds = array<i64: 128, 256>}]} {
    %c0 = arith.constant 0 : index
    %c0_0 = arith.constant 0 : index
    %0 = vector.load %arg2[%c0, %c0_0] : memref<128x2304xf32, #tpu.memory_space<vmem>>, vector<128x2304xf32>
    %c0_1 = arith.constant 0 : index
    %c0_2 = arith.constant 0 : index
    %1 = vector.load %arg3[%c0_1, %c0_2] : memref<2304x256xf32, #tpu.memory_space<vmem>>, vector<2304x256xf32>
    %cst = arith.constant dense<0.000000e+00> : vector<128x256xf32>
    %2 = tpu.matmul %0, %1, %cst {dimension_numbers = #tpu.dot_dimension_numbers<[1], [0], [0], [1], [0, 0, 1, 1], [], []>} : vector<128x2304xf32>, vector<2304x256xf32>, vector<128x256xf32> -> vector<128x256xf32>
    %c0_3 = arith.constant 0 : index
    %c0_4 = arith.constant 0 : index
    %3 = vector.load %arg4[%c0_3, %c0_4] : memref<128x256xf32, #tpu.memory_space<vmem>>, vector<128x256xf32>
    tpu.vector_store %arg4[%c0_3, %c0_4], %2 {strides = array<i32>} : memref<128x256xf32, #tpu.memory_space<vmem>>, vector<128x256xf32>,
    return
  }
  func.func @transform_0(%arg0: i32, %arg1: i32) -> (i32, i32) {
    %c0_i32 = arith.constant 0 : i32
    %c0_i32_0 = arith.constant 0 : i32
    return %arg0, %c0_i32 : i32, i32
  }
  func.func @transform_1(%arg0: i32, %arg1: i32) -> (i32, i32) {
    %c0_i32 = arith.constant 0 : i32
    %c0_i32_0 = arith.constant 0 : i32
    return %c0_i32, %arg1 : i32, i32
  }
  func.func @transform_2(%arg0: i32, %arg1: i32) -> (i32, i32) {
    %c0_i32 = arith.constant 0 : i32
    return %arg0, %arg1 : i32, i32
  }
}

</mosaic_0001>

<llo_original>
// kernel: tpu_custom_call.1
$region0: #{tpu_custom_call.1}
  #allocation0 [shape = 'u32[]', space=smem, size = 0x4, offset = 0x4, fixed_abs, tag = 'smem constant byte address 0x4 - core index']
  #allocation1 [shape = 'u32[72,128]{1,0:T(1,128)}', space=vmem, size = 0x9000, scoped, tag = 'internal scratch']
  %s0 = inlined_call_operand.hbm [shape: f32[128,2304], index: 0, kind: input, shape index: {}]
  %s1 = inlined_call_operand.hbm [shape: f32[2304,256], index: 1, kind: input, shape index: {}]
  %s2 = inlined_call_operand.hbm [shape: f32[128,256], index: 2, kind: output, shape index: {}]
  %s3 = sld [smem:[#allocation0]]
  $region26: #{tpu_custom_call.1} parent=0
    _
  %s5 = ssub.s32 1, %s3
  %s6 = scalar_select 0, %s5, %s3
  $region1: #{tpu_custom_call.1} parent=0
    #allocation2 [shape = 'u8[1179648]{0}', space=vmem, size = 0x120000, scoped, tag = 'input window, operand 0, single buffered']
    #allocation3 [shape = 's32[1]{0}', space=sflag, size = 0x4, scoped, tag = 'scoped memory for tpu_custom_call.1']
    #allocation4 [shape = 's32[1]{0}', space=sflag, size = 0x4, scoped, tag = 'scoped memory for tpu_custom_call.1']
    #allocation5 [shape = 'u8[2359296]{0}', space=vmem, size = 0x240000, scoped, tag = 'input window, operand 1, single buffered']
    #allocation6 [shape = 's32[1]{0}', space=sflag, size = 0x4, scoped, tag = 'scoped memory for tpu_custom_call.1']
    #allocation7 [shape = 'u8[131072]{0}', space=vmem, size = 0x20000, scoped, tag = 'output window, operand 0, single buffered']
    %7 = vsyncpa [#allocation3], 0
    %8 = vsyncpa [#allocation6], 0
    %9 = vsyncpa [#allocation4], 0
    // Predicated region
    $region2: #{tpu_custom_call.1} parent=1 // pred_check
      _
    $region3: #{tpu_custom_call.1} parent=1 // pred_check_branch
      %11 = sbr.rel (0) target = $region5
    $region4: #{tpu_custom_call.1} parent=1 // pred_region
      %13 = vsyncadd [#allocation3], 0
      %s14 = sshll.u32 %s0, 4
      %s15 = int_to_ptr.hbm [resolvable:$true] %s14
      %s16 = sshll.u32 [#allocation2], 4
      %s17 = int_to_ptr.vmem [resolvable:$true] %s16
      %22 = dma.hbm_to_vmem [thread:$0]  %s15, 36864, %s17, [#allocation3], 2304, 2304, 144
    $region5: #{tpu_custom_call.1} parent=1 // pred_fallthru
      _
    // Predicated region
    $region6: #{tpu_custom_call.1} parent=1 // pred_check
      _
    $region7: #{tpu_custom_call.1} parent=1 // pred_check_branch
      %24 = sbr.rel (0) target = $region9
    $region8: #{tpu_custom_call.1} parent=1 // pred_region
      %26 = vsyncadd [#allocation6], 0
      %s27 = sshll.u32 %s1, 4
      %s28 = int_to_ptr.hbm [resolvable:$true] %s27
      %s29 = sshll.u32 [#allocation5], 4
      %s30 = int_to_ptr.vmem [resolvable:$true] %s29
      %35 = dma.hbm_to_vmem [thread:$0]  %s28, 73728, %s30, [#allocation6], 256, 256, 16
    $region9: #{tpu_custom_call.1} parent=1 // pred_fallthru
      _
    // Predicated region
    $region10: #{tpu_custom_call.1} parent=1 // pred_check
      _
    $region11: #{tpu_custom_call.1} parent=1 // pred_check_branch
      %37 = sbr.rel (0) target = $region13
    $region12: #{tpu_custom_call.1} parent=1 // pred_region
      %39 = dma.done [#allocation3], 36864
    $region13: #{tpu_custom_call.1} parent=1 // pred_fallthru
      _
    // Predicated region
    $region14: #{tpu_custom_call.1} parent=1 // pred_check
      _
    $region15: #{tpu_custom_call.1} parent=1 // pred_check_branch
      %41 = sbr.rel (0) target = $region17
    $region16: #{tpu_custom_call.1} parent=1 // pred_region
      %43 = dma.done [#allocation6], 73728
    $region17: #{tpu_custom_call.1} parent=1 // pred_fallthru
      _
    %v44 = vld [vmem:[#allocation2] sm:$0xff]
    %v45 = vld [vmem:[#allocation2 + $0x8] sm:$0xff]
    %v46 = vld [vmem:[#allocation2 + $0x10] sm:$0xff]
    %v47 = vld [vmem:[#allocation2 + $0x18] sm:$0xff]
    %v48 = vld [vmem:[#allocation2 + $0x20] sm:$0xff]
    %v49 = vld [vmem:[#allocation2 + $0x28] sm:$0xff]
    %v50 = vld [vmem:[#allocation2 + $0x30] sm:$0xff]
    %v51 = vld [vmem:[#allocation2 + $0x38] sm:$0xff]
    %v52 = vld [vmem:[#allocation2 + $0x40] sm:$0xff]
    %v53 = vld [vmem:[#allocation2 + $0x48] sm:$0xff]
    %v54 = vld [vmem:[#allocation2 + $0x50] sm:$0xff]
    %v55 = vld [vmem:[#allocation2 + $0x58] sm:$0xff]
    %v56 = vld [vmem:[#allocation2 + $0x60] sm:$0xff]
    %v57 = vld [vmem:[#allocation2 + $0x68] sm:$0xff]
    %v58 = vld [vmem:[#allocation2 + $0x70] sm:$0xff]
    %v59 = vld [vmem:[#allocation2 + $0x78] sm:$0xff]
    %v60 = vld [vmem:[#allocation2 + $0x80] sm:$0xff]
    %v61 = vld [vmem:[#allocation2 + $0x88] sm:$0xff]
    %v62 = vld [vmem:[#allocation2 + $0x90] sm:$0xff]
    %v63 = vld [vmem:[#allocation2 + $0x98] sm:$0xff]
    %v64 = vld [vmem:[#allocation2 + $0xa0] sm:$0xff]
    %v65 = vld [vmem:[#allocation2 + $0xa8] sm:$0xff]
    %v66 = vld [vmem:[#allocation2 + $0xb0] sm:$0xff]
    %v67 = vld [vmem:[#allocation2 + $0xb8] sm:$0xff]
    %v68 = vld [vmem:[#allocation2 + $0xc0] sm:$0xff]
    %v69 = vld [vmem:[#allocation2 + $0xc8] sm:$0xff]
    %v70 = vld [vmem:[#allocation2 + $0xd0] sm:$0xff]
    %v71 = vld [vmem:[#allocation2 + $0xd8] sm:$0xff]
    %v72 = vld [vmem:[#allocation2 + $0xe0] sm:$0xff]
    %v73 = vld [vmem:[#allocation2 + $0xe8] sm:$0xff]
    %v74 = vld [vmem:[#allocation2 + $0xf0] sm:$0xff]
    %v75 = vld [vmem:[#allocation2 + $0xf8] sm:$0xff]
    %v76 = vld [vmem:[#allocation2 + $0x100] sm:$0xff]
    %v77 = vld [vmem:[#allocation2 + $0x108] sm:$0xff]
    %v78 = vld [vmem:[#allocation2 + $0x110] sm:$0xff]
    %v79 = vld [vmem:[#allocation2 + $0x118] sm:$0xff]
    %v80 = vld [vmem:[#allocation2 + $0x120] sm:$0xff]
    %v81 = vld [vmem:[#allocation2 + $0x128] sm:$0xff]
    %v82 = vld [vmem:[#allocation2 + $0x130] sm:$0xff]
    %v83 = vld [vmem:[#allocation2 + $0x138] sm:$0xff]
    %v84 = vld [vmem:[#allocation2 + $0x140] sm:$0xff]
    %v85 = vld [vmem:[#allocation2 + $0x148] sm:$0xff]
    %v86 = vld [vmem:[#allocation2 + $0x150] sm:$0xff]
    %v87 = vld [vmem:[#allocation2 + $0x158] sm:$0xff]
    %v88 = vld [vmem:[#allocation2 + $0x160] sm:$0xff]
    %v89 = vld [vmem:[#allocation2 + $0x168] sm:$0xff]
    %v90 = vld [vmem:[#allocation2 + $0x170] sm:$0xff]
    %v91 = vld [vmem:[#allocation2 + $0x178] sm:$0xff]
    %v92 = vld [vmem:[#allocation2 + $0x180] sm:$0xff]
    %v93 = vld [vmem:[#allocation2 + $0x188] sm:$0xff]
    %v94 = vld [vmem:[#allocation2 + $0x190] sm:$0xff]
    %v95 = vld [vmem:[#allocation2 + $0x198] sm:$0xff]
    %v96 = vld [vmem:[#allocation2 + $0x1a0] sm:$0xff]
    %v97 = vld [vmem:[#allocation2 + $0x1a8] sm:$0xff]
    %v98 = vld [vmem:[#allocation2 + $0x1b0] sm:$0xff]
    %v99 = vld [vmem:[#allocation2 + $0x1b8] sm:$0xff]
    %v100 = vld [vmem:[#allocation2 + $0x1c0] sm:$0xff]
    %v101 = vld [vmem:[#allocation2 + $0x1c8] sm:$0xff]
    %v102 = vld [vmem:[#allocation2 + $0x1d0] sm:$0xff]
    %v103 = vld [vmem:[#allocation2 + $0x1d8] sm:$0xff]
    %v104 = vld [vmem:[#allocation2 + $0x1e0] sm:$0xff]
    %v105 = vld [vmem:[#allocation2 + $0x1e8] sm:$0xff]
    %v106 = vld [vmem:[#allocation2 + $0x1f0] sm:$0xff]
    %v107 = vld [vmem:[#allocation2 + $0x1f8] sm:$0xff]
    %v108 = vld [vmem:[#allocation2 + $0x200] sm:$0xff]
    %v109 = vld [vmem:[#allocation2 + $0x208] sm:$0xff]
    %v110 = vld [vmem:[#allocation2 + $0x210] sm:$0xff]
    %v111 = vld [vmem:[#allocation2 + $0x218] sm:$0xff]
    %v112 = vld [vmem:[#allocation2 + $0x220] sm:$0xff]
    %v113 = vld [vmem:[#allocation2 + $0x228] sm:$0xff]
    %v114 = vld [vmem:[#allocation2 + $0x230] sm:$0xff]
    %v115 = vld [vmem:[#allocation2 + $0x238] sm:$0xff]
    %v116 = vld [vmem:[#allocation2 + $0x240] sm:$0xff]
    %v117 = vld [vmem:[#allocation2 + $0x248] sm:$0xff]
    %v118 = vld [vmem:[#allocation2 + $0x250] sm:$0xff]
    %v119 = vld [vmem:[#allocation2 + $0x258] sm:$0xff]
    %v120 = vld [vmem:[#allocation2 + $0x260] sm:$0xff]
    %v121 = vld [vmem:[#allocation2 + $0x268] sm:$0xff]
    %v122 = vld [vmem:[#allocation2 + $0x270] sm:$0xff]
    %v123 = vld [vmem:[#allocation2 + $0x278] sm:$0xff]
    %v124 = vld [vmem:[#allocation2 + $0x280] sm:$0xff]
    %v125 = vld [vmem:[#allocation2 + $0x288] sm:$0xff]
    %v126 = vld [vmem:[#allocation2 + $0x290] sm:$0xff]
    %v127 = vld [vmem:[#allocation2 + $0x298] sm:$0xff]
    %v128 = vld [vmem:[#allocation2 + $0x2a0] sm:$0xff]
    %v129 = vld [vmem:[#allocation2 + $0x2a8] sm:$0xff]
    %v130 = vld [vmem:[#allocation2 + $0x2b0] sm:$0xff]
    %v131 = vld [vmem:[#allocation2 + $0x2b8] sm:$0xff]
    %v132 = vld [vmem:[#allocation2 + $0x2c0] sm:$0xff]
    %v133 = vld [vmem:[#allocation2 + $0x2c8] sm:$0xff]
    %v134 = vld [vmem:[#allocation2 + $0x2d0] sm:$0xff]
    %v135 = vld [vmem:[#allocation2 + $0x2d8] sm:$0xff]
    %v136 = vld [vmem:[#allocation2 + $0x2e0] sm:$0xff]
    %v137 = vld [vmem:[#allocation2 + $0x2e8] sm:$0xff]
    %v138 = vld [vmem:[#allocation2 + $0x2f0] sm:$0xff]
    %v139 = vld [vmem:[#allocation2 + $0x2f8] sm:$0xff]
    %v140 = vld [vmem:[#allocation2 + $0x300] sm:$0xff]
    %v141 = vld [vmem:[#allocation2 + $0x308] sm:$0xff]
    %v142 = vld [vmem:[#allocation2 + $0x310] sm:$0xff]
    %v143 = vld [vmem:[#allocation2 + $0x318] sm:$0xff]
    %v144 = vld [vmem:[#allocation2 + $0x320] sm:$0xff]
    %v145 = vld [vmem:[#allocation2 + $0x328] sm:$0xff]
    %v146 = vld [vmem:[#allocation2 + $0x330] sm:$0xff]
    %v147 = vld [vmem:[#allocation2 + $0x338] sm:$0xff]
    %v148 = vld [vmem:[#allocation2 + $0x340] sm:$0xff]
    %v149 = vld [vmem:[#allocation2 + $0x348] sm:$0xff]
    %v150 = vld [vmem:[#allocation2 + $0x350] sm:$0xff]
    %v151 = vld [vmem:[#allocation2 + $0x358] sm:$0xff]
    %v152 = vld [vmem:[#allocation2 + $0x360] sm:$0xff]
    %v153 = vld [vmem:[#allocation2 + $0x368] sm:$0xff]
    %v154 = vld [vmem:[#allocation2 + $0x370] sm:$0xff]
    %v155 = vld [vmem:[#allocation2 + $0x378] sm:$0xff]
    %v156 = vld [vmem:[#allocation2 + $0x380] sm:$0xff]
    %v157 = vld [vmem:[#allocation2 + $0x388] sm:$0xff]
    %v158 = vld [vmem:[#allocation2 + $0x390] sm:$0xff]
    %v159 = vld [vmem:[#allocation2 + $0x398] sm:$0xff]
    %v160 = vld [vmem:[#allocation2 + $0x3a0] sm:$0xff]
    %v161 = vld [vmem:[#allocation2 + $0x3a8] sm:$0xff]
    %v162 = vld [vmem:[#allocation2 + $0x3b0] sm:$0xff]
    %v163 = vld [vmem:[#allocation2 + $0x3b8] sm:$0xff]
    %v164 = vld [vmem:[#allocation2 + $0x3c0] sm:$0xff]
    %v165 = vld [vmem:[#allocation2 + $0x3c8] sm:$0xff]
    %v166 = vld [vmem:[#allocation2 + $0x3d0] sm:$0xff]
    %v167 = vld [vmem:[#allocation2 + $0x3d8] sm:$0xff]
    %v168 = vld [vmem:[#allocation2 + $0x3e0] sm:$0xff]
    %v169 = vld [vmem:[#allocation2 + $0x3e8] sm:$0xff]
    %v170 = vld [vmem:[#allocation2 + $0x3f0] sm:$0xff]
    %v171 = vld [vmem:[#allocation2 + $0x3f8] sm:$0xff]
    %v172 = vld [vmem:[#allocation2 + $0x400] sm:$0xff]
    %v173 = vld [vmem:[#allocation2 + $0x408] sm:$0xff]
    %v174 = vld [vmem:[#allocation2 + $0x410] sm:$0xff]
    %v175 = vld [vmem:[#allocation2 + $0x418] sm:$0xff]
    %v176 = vld [vmem:[#allocation2 + $0x420] sm:$0xff]
    %v177 = vld [vmem:[#allocation2 + $0x428] sm:$0xff]
    %v178 = vld [vmem:[#allocation2 + $0x430] sm:$0xff]
    %v179 = vld [vmem:[#allocation2 + $0x438] sm:$0xff]
    %v180 = vld [vmem:[#allocation2 + $0x440] sm:$0xff]
    %v181 = vld [vmem:[#allocation2 + $0x448] sm:$0xff]
    %v182 = vld [vmem:[#allocation2 + $0x450] sm:$0xff]
    %v183 = vld [vmem:[#allocation2 + $0x458] sm:$0xff]
    %v184 = vld [vmem:[#allocation2 + $0x460] sm:$0xff]
    %v185 = vld [vmem:[#allocation2 + $0x468] sm:$0xff]
    %v186 = vld [vmem:[#allocation2 + $0x470] sm:$0xff]
    %v187 = vld [vmem:[#allocation2 + $0x478] sm:$0xff]
    %v188 = vld [vmem:[#allocation2 + $0x480] sm:$0xff]
    %v189 = vld [vmem:[#allocation2 + $0x488] sm:$0xff]
    %v190 = vld [vmem:[#allocation2 + $0x490] sm:$0xff]
    %v191 = vld [vmem:[#allocation2 + $0x498] sm:$0xff]
    %v192 = vld [vmem:[#allocation2 + $0x4a0] sm:$0xff]
    %v193 = vld [vmem:[#allocation2 + $0x4a8] sm:$0xff]
    %v194 = vld [vmem:[#allocation2 + $0x4b0] sm:$0xff]
    %v195 = vld [vmem:[#allocation2 + $0x4b8] sm:$0xff]
    %v196 = vld [vmem:[#allocation2 + $0x4c0] sm:$0xff]
    %v197 = vld [vmem:[#allocation2 + $0x4c8] sm:$0xff]
    %v198 = vld [vmem:[#allocation2 + $0x4d0] sm:$0xff]
    %v199 = vld [vmem:[#allocation2 + $0x4d8] sm:$0xff]
    %v200 = vld [vmem:[#allocation2 + $0x4e0] sm:$0xff]
    %v201 = vld [vmem:[#allocation2 + $0x4e8] sm:$0xff]
    %v202 = vld [vmem:[#allocation2 + $0x4f0] sm:$0xff]
    %v203 = vld [vmem:[#allocation2 + $0x4f8] sm:$0xff]
    %v204 = vld [vmem:[#allocation2 + $0x500] sm:$0xff]
    %v205 = vld [vmem:[#allocation2 + $0x508] sm:$0xff]
    %v206 = vld [vmem:[#allocation2 + $0x510] sm:$0xff]
    %v207 = vld [vmem:[#allocation2 + $0x518] sm:$0xff]
    %v208 = vld [vmem:[#allocation2 + $0x520] sm:$0xff]
    %v209 = vld [vmem:[#allocation2 + $0x528] sm:$0xff]
    %v210 = vld [vmem:[#allocation2 + $0x530] sm:$0xff]
    %v211 = vld [vmem:[#allocation2 + $0x538] sm:$0xff]
    %v212 = vld [vmem:[#allocation2 + $0x540] sm:$0xff]
    %v213 = vld [vmem:[#allocation2 + $0x548] sm:$0xff]
    %v214 = vld [vmem:[#allocation2 + $0x550] sm:$0xff]
    %v215 = vld [vmem:[#allocation2 + $0x558] sm:$0xff]
    %v216 = vld [vmem:[#allocation2 + $0x560] sm:$0xff]
    %v217 = vld [vmem:[#allocation2 + $0x568] sm:$0xff]
    %v218 = vld [vmem:[#allocation2 + $0x570] sm:$0xff]
    %v219 = vld [vmem:[#allocation2 + $0x578] sm:$0xff]
    %v220 = vld [vmem:[#allocation2 + $0x580] sm:$0xff]
    %v221 = vld [vmem:[#allocation2 + $0x588] sm:$0xff]
    %v222 = vld [vmem:[#allocation2 + $0x590] sm:$0xff]
    %v223 = vld [vmem:[#allocation2 + $0x598] sm:$0xff]
    %v224 = vld [vmem:[#allocation2 + $0x5a0] sm:$0xff]
    %v225 = vld [vmem:[#allocation2 + $0x5a8] sm:$0xff]
    %v226 = vld [vmem:[#allocation2 + $0x5b0] sm:$0xff]
    %v227 = vld [vmem:[#allocation2 + $0x5b8] sm:$0xff]
    %v228 = vld [vmem:[#allocation2 + $0x5c0] sm:$0xff]
    %v229 = vld [vmem:[#allocation2 + $0x5c8] sm:$0xff]
    %v230 = vld [vmem:[#allocation2 + $0x5d0] sm:$0xff]
    %v231 = vld [vmem:[#allocation2 + $0x5d8] sm:$0xff]
    %v232 = vld [vmem:[#allocation2 + $0x5e0] sm:$0xff]
    %v233 = vld [vmem:[#allocation2 + $0x5e8] sm:$0xff]
    %v234 = vld [vmem:[#allocation2 + $0x5f0] sm:$0xff]
    %v235 = vld [vmem:[#allocation2 + $0x5f8] sm:$0xff]
    %v236 = vld [vmem:[#allocation2 + $0x600] sm:$0xff]
    %v237 = vld [vmem:[#allocation2 + $0x608] sm:$0xff]
    %v238 = vld [vmem:[#allocation2 + $0x610] sm:$0xff]
    %v239 = vld [vmem:[#allocation2 + $0x618] sm:$0xff]
    %v240 = vld [vmem:[#allocation2 + $0x620] sm:$0xff]
    %v241 = vld [vmem:[#allocation2 + $0x628] sm:$0xff]
    %v242 = vld [vmem:[#allocation2 + $0x630] sm:$0xff]
    %v243 = vld [vmem:[#allocation2 + $0x638] sm:$0xff]
    %v244 = vld [vmem:[#allocation2 + $0x640] sm:$0xff]
    %v245 = vld [vmem:[#allocation2 + $0x648] sm:$0xff]
    %v246 = vld [vmem:[#allocation2 + $0x650] sm:$0xff]
    %v247 = vld [vmem:[#allocation2 + $0x658] sm:$0xff]
    %v248 = vld [vmem:[#allocation2 + $0x660] sm:$0xff]
    %v249 = vld [vmem:[#allocation2 + $0x668] sm:$0xff]
    %v250 = vld [vmem:[#allocation2 + $0x670] sm:$0xff]
    %v251 = vld [vmem:[#allocation2 + $0x678] sm:$0xff]
    %v252 = vld [vmem:[#allocation2 + $0x680] sm:$0xff]
    %v253 = vld [vmem:[#allocation2 + $0x688] sm:$0xff]
    %v254 = vld [vmem:[#allocation2 + $0x690] sm:$0xff]
    %v255 = vld [vmem:[#allocation2 + $0x698] sm:$0xff]
    %v256 = vld [vmem:[#allocation2 + $0x6a0] sm:$0xff]
    %v257 = vld [vmem:[#allocation2 + $0x6a8] sm:$0xff]
    %v258 = vld [vmem:[#allocation2 + $0x6b0] sm:$0xff]
    %v259 = vld [vmem:[#allocation2 + $0x6b8] sm:$0xff]
    %v260 = vld [vmem:[#allocation2 + $0x6c0] sm:$0xff]
    %v261 = vld [vmem:[#allocation2 + $0x6c8] sm:$0xff]
    %v262 = vld [vmem:[#allocation2 + $0x6d0] sm:$0xff]
    %v263 = vld [vmem:[#allocation2 + $0x6d8] sm:$0xff]
    %v264 = vld [vmem:[#allocation2 + $0x6e0] sm:$0xff]
    %v265 = vld [vmem:[#allocation2 + $0x6e8] sm:$0xff]
    %v266 = vld [vmem:[#allocation2 + $0x6f0] sm:$0xff]
    %v267 = vld [vmem:[#allocation2 + $0x6f8] sm:$0xff]
    %v268 = vld [vmem:[#allocation2 + $0x700] sm:$0xff]
    %v269 = vld [vmem:[#allocation2 + $0x708] sm:$0xff]
    %v270 = vld [vmem:[#allocation2 + $0x710] sm:$0xff]
    %v271 = vld [vmem:[#allocation2 + $0x718] sm:$0xff]
    %v272 = vld [vmem:[#allocation2 + $0x720] sm:$0xff]
    %v273 = vld [vmem:[#allocation2 + $0x728] sm:$0xff]
    %v274 = vld [vmem:[#allocation2 + $0x730] sm:$0xff]
    %v275 = vld [vmem:[#allocation2 + $0x738] sm:$0xff]
    %v276 = vld [vmem:[#allocation2 + $0x740] sm:$0xff]
    %v277 = vld [vmem:[#allocation2 + $0x748] sm:$0xff]
    %v278 = vld [vmem:[#allocation2 + $0x750] sm:$0xff]
    %v279 = vld [vmem:[#allocation2 + $0x758] sm:$0xff]
    %v280 = vld [vmem:[#allocation2 + $0x760] sm:$0xff]
    %v281 = vld [vmem:[#allocation2 + $0x768] sm:$0xff]
    %v282 = vld [vmem:[#allocation2 + $0x770] sm:$0xff]
    %v283 = vld [vmem:[#allocation2 + $0x778] sm:$0xff]
    %v284 = vld [vmem:[#allocation2 + $0x780] sm:$0xff]
    %v285 = vld [vmem:[#allocation2 + $0x788] sm:$0xff]
    %v286 = vld [vmem:[#allocation2 + $0x790] sm:$0xff]
    %v287 = vld [vmem:[#allocation2 + $0x798] sm:$0xff]
    %v288 = vld [vmem:[#allocation2 + $0x7a0] sm:$0xff]
    %v289 = vld [vmem:[#allocation2 + $0x7a8] sm:$0xff]
    %v290 = vld [vmem:[#allocation2 + $0x7b0] sm:$0xff]
    %v291 = vld [vmem:[#allocation2 + $0x7b8] sm:$0xff]
    %v292 = vld [vmem:[#allocation2 + $0x7c0] sm:$0xff]
    %v293 = vld [vmem:[#allocation2 + $0x7c8] sm:$0xff]
    %v294 = vld [vmem:[#allocation2 + $0x7d0] sm:$0xff]
    %v295 = vld [vmem:[#allocation2 + $0x7d8] sm:$0xff]
    %v296 = vld [vmem:[#allocation2 + $0x7e0] sm:$0xff]
    %v297 = vld [vmem:[#allocation2 + $0x7e8] sm:$0xff]
    %v298 = vld [vmem:[#allocation2 + $0x7f0] sm:$0xff]
    %v299 = vld [vmem:[#allocation2 + $0x7f8] sm:$0xff]
    %v300 = vld [vmem:[#allocation2 + $0x800] sm:$0xff]
    %v301 = vld [vmem:[#allocation2 + $0x808] sm:$0xff]
    %v302 = vld [vmem:[#allocation2 + $0x810] sm:$0xff]
    %v303 = vld [vmem:[#allocation2 + $0x818] sm:$0xff]
    %v304 = vld [vmem:[#allocation2 + $0x820] sm:$0xff]
    %v305 = vld [vmem:[#allocation2 + $0x828] sm:$0xff]
    %v306 = vld [vmem:[#allocation2 + $0x830] sm:$0xff]
    %v307 = vld [vmem:[#allocation2 + $0x838] sm:$0xff]
    %v308 = vld [vmem:[#allocation2 + $0x840] sm:$0xff]
    %v309 = vld [vmem:[#allocation2 + $0x848] sm:$0xff]
    %v310 = vld [vmem:[#allocation2 + $0x850] sm:$0xff]
    %v311 = vld [vmem:[#allocation2 + $0x858] sm:$0xff]
    %v312 = vld [vmem:[#allocation2 + $0x860] sm:$0xff]
    %v313 = vld [vmem:[#allocation2 + $0x868] sm:$0xff]
    %v314 = vld [vmem:[#allocation2 + $0x870] sm:$0xff]
    %v315 = vld [vmem:[#allocation2 + $0x878] sm:$0xff]
    %v316 = vld [vmem:[#allocation2 + $0x880] sm:$0xff]
    %v317 = vld [vmem:[#allocation2 + $0x888] sm:$0xff]
    %v318 = vld [vmem:[#allocation2 + $0x890] sm:$0xff]
    %v319 = vld [vmem:[#allocation2 + $0x898] sm:$0xff]
    %v320 = vld [vmem:[#allocation2 + $0x8a0] sm:$0xff]
    %v321 = vld [vmem:[#allocation2 + $0x8a8] sm:$0xff]
    %v322 = vld [vmem:[#allocation2 + $0x8b0] sm:$0xff]
    %v323 = vld [vmem:[#allocation2 + $0x8b8] sm:$0xff]
    %v324 = vld [vmem:[#allocation2 + $0x8c0] sm:$0xff]
    %v325 = vld [vmem:[#allocation2 + $0x8c8] sm:$0xff]
    %v326 = vld [vmem:[#allocation2 + $0x8d0] sm:$0xff]
    %v327 = vld [vmem:[#allocation2 + $0x8d8] sm:$0xff]
    %v328 = vld [vmem:[#allocation2 + $0x8e0] sm:$0xff]
    %v329 = vld [vmem:[#allocation2 + $0x8e8] sm:$0xff]
    %v330 = vld [vmem:[#allocation2 + $0x8f0] sm:$0xff]
    %v331 = vld [vmem:[#allocation2 + $0x8f8] sm:$0xff]
    %v332 = vld [vmem:[#allocation5] sm:$0xff]
    %v333 = vld [vmem:[#allocation5 + $0x8] sm:$0xff]
    %v334 = vld [vmem:[#allocation5 + $0x10] sm:$0xff]
    %v335 = vld [vmem:[#allocation5 + $0x18] sm:$0xff]
    %v336 = vld [vmem:[#allocation5 + $0x20] sm:$0xff]
    %v337 = vld [vmem:[#allocation5 + $0x28] sm:$0xff]
    %v338 = vld [vmem:[#allocation5 + $0x30] sm:$0xff]
    %v339 = vld [vmem:[#allocation5 + $0x38] sm:$0xff]
    %v340 = vld [vmem:[#allocation5 + $0x40] sm:$0xff]
    %v341 = vld [vmem:[#allocation5 + $0x48] sm:$0xff]
    %v342 = vld [vmem:[#allocation5 + $0x50] sm:$0xff]
    %v343 = vld [vmem:[#allocation5 + $0x58] sm:$0xff]
    %v344 = vld [vmem:[#allocation5 + $0x60] sm:$0xff]
    %v345 = vld [vmem:[#allocation5 + $0x68] sm:$0xff]
    %v346 = vld [vmem:[#allocation5 + $0x70] sm:$0xff]
    %v347 = vld [vmem:[#allocation5 + $0x78] sm:$0xff]
    %v348 = vld [vmem:[#allocation5 + $0x80] sm:$0xff]
    %v349 = vld [vmem:[#allocation5 + $0x88] sm:$0xff]
    %v350 = vld [vmem:[#allocation5 + $0x90] sm:$0xff]
    %v351 = vld [vmem:[#allocation5 + $0x98] sm:$0xff]
    %v352 = vld [vmem:[#allocation5 + $0xa0] sm:$0xff]
    %v353 = vld [vmem:[#allocation5 + $0xa8] sm:$0xff]
    %v354 = vld [vmem:[#allocation5 + $0xb0] sm:$0xff]
    %v355 = vld [vmem:[#allocation5 + $0xb8] sm:$0xff]
    %v356 = vld [vmem:[#allocation5 + $0xc0] sm:$0xff]
    %v357 = vld [vmem:[#allocation5 + $0xc8] sm:$0xff]
    %v358 = vld [vmem:[#allocation5 + $0xd0] sm:$0xff]
    %v359 = vld [vmem:[#allocation5 + $0xd8] sm:$0xff]
    %v360 = vld [vmem:[#allocation5 + $0xe0] sm:$0xff]
    %v361 = vld [vmem:[#allocation5 + $0xe8] sm:$0xff]
    %v362 = vld [vmem:[#allocation5 + $0xf0] sm:$0xff]
    %v363 = vld [vmem:[#allocation5 + $0xf8] sm:$0xff]
    %v364 = vld [vmem:[#allocation5 + $0x100] sm:$0xff]
    %v365 = vld [vmem:[#allocation5 + $0x108] sm:$0xff]
    %v366 = vld [vmem:[#allocation5 + $0x110] sm:$0xff]
    %v367 = vld [vmem:[#allocation5 + $0x118] sm:$0xff]
    %v368 = vld [vmem:[#allocation5 + $0x120] sm:$0xff]
    %v369 = vld [vmem:[#allocation5 + $0x128] sm:$0xff]
    %v370 = vld [vmem:[#allocation5 + $0x130] sm:$0xff]
    %v371 = vld [vmem:[#allocation5 + $0x138] sm:$0xff]
    %v372 = vld [vmem:[#allocation5 + $0x140] sm:$0xff]
    %v373 = vld [vmem:[#allocation5 + $0x148] sm:$0xff]
    %v374 = vld [vmem:[#allocation5 + $0x150] sm:$0xff]
    %v375 = vld [vmem:[#allocation5 + $0x158] sm:$0xff]
    %v376 = vld [vmem:[#allocation5 + $0x160] sm:$0xff]
    %v377 = vld [vmem:[#allocation5 + $0x168] sm:$0xff]
    %v378 = vld [vmem:[#allocation5 + $0x170] sm:$0xff]
    %v379 = vld [vmem:[#allocation5 + $0x178] sm:$0xff]
    %v380 = vld [vmem:[#allocation5 + $0x180] sm:$0xff]
    %v381 = vld [vmem:[#allocation5 + $0x188] sm:$0xff]
    %v382 = vld [vmem:[#allocation5 + $0x190] sm:$0xff]
    %v383 = vld [vmem:[#allocation5 + $0x198] sm:$0xff]
    %v384 = vld [vmem:[#allocation5 + $0x1a0] sm:$0xff]
    %v385 = vld [vmem:[#allocation5 + $0x1a8] sm:$0xff]
    %v386 = vld [vmem:[#allocation5 + $0x1b0] sm:$0xff]
    %v387 = vld [vmem:[#allocation5 + $0x1b8] sm:$0xff]
    %v388 = vld [vmem:[#allocation5 + $0x1c0] sm:$0xff]
    %v389 = vld [vmem:[#allocation5 + $0x1c8] sm:$0xff]
    %v390 = vld [vmem:[#allocation5 + $0x1d0] sm:$0xff]
    %v391 = vld [vmem:[#allocation5 + $0x1d8] sm:$0xff]
    %v392 = vld [vmem:[#allocation5 + $0x1e0] sm:$0xff]
    %v393 = vld [vmem:[#allocation5 + $0x1e8] sm:$0xff]
    %v394 = vld [vmem:[#allocation5 + $0x1f0] sm:$0xff]
    %v395 = vld [vmem:[#allocation5 + $0x1f8] sm:$0xff]
    %v396 = vld [vmem:[#allocation5 + $0x200] sm:$0xff]
    %v397 = vld [vmem:[#allocation5 + $0x208] sm:$0xff]
    %v398 = vld [vmem:[#allocation5 + $0x210] sm:$0xff]
    %v399 = vld [vmem:[#allocation5 + $0x218] sm:$0xff]
    %v400 = vld [vmem:[#allocation5 + $0x220] sm:$0xff]
    %v401 = vld [vmem:[#allocation5 + $0x228] sm:$0xff]
    %v402 = vld [vmem:[#allocation5 + $0x230] sm:$0xff]
    %v403 = vld [vmem:[#allocation5 + $0x238] sm:$0xff]
    %v404 = vld [vmem:[#allocation5 + $0x240] sm:$0xff]
    %v405 = vld [vmem:[#allocation5 + $0x248] sm:$0xff]
    %v406 = vld [vmem:[#allocation5 + $0x250] sm:$0xff]
    %v407 = vld [vmem:[#allocation5 + $0x258] sm:$0xff]
    %v408 = vld [vmem:[#allocation5 + $0x260] sm:$0xff]
    %v409 = vld [vmem:[#allocation5 + $0x268] sm:$0xff]
    %v410 = vld [vmem:[#allocation5 + $0x270] sm:$0xff]
    %v411 = vld [vmem:[#allocation5 + $0x278] sm:$0xff]
    %v412 = vld [vmem:[#allocation5 + $0x280] sm:$0xff]
    %v413 = vld [vmem:[#allocation5 + $0x288] sm:$0xff]
    %v414 = vld [vmem:[#allocation5 + $0x290] sm:$0xff]
    %v415 = vld [vmem:[#allocation5 + $0x298] sm:$0xff]
    %v416 = vld [vmem:[#allocation5 + $0x2a0] sm:$0xff]
    %v417 = vld [vmem:[#allocation5 + $0x2a8] sm:$0xff]
    %v418 = vld [vmem:[#allocation5 + $0x2b0] sm:$0xff]
    %v419 = vld [vmem:[#allocation5 + $0x2b8] sm:$0xff]
    %v420 = vld [vmem:[#allocation5 + $0x2c0] sm:$0xff]
    %v421 = vld [vmem:[#allocation5 + $0x2c8] sm:$0xff]
    %v422 = vld [vmem:[#allocation5 + $0x2d0] sm:$0xff]
    %v423 = vld [vmem:[#allocation5 + $0x2d8] sm:$0xff]
    %v424 = vld [vmem:[#allocation5 + $0x2e0] sm:$0xff]
    %v425 = vld [vmem:[#allocation5 + $0x2e8] sm:$0xff]
    %v426 = vld [vmem:[#allocation5 + $0x2f0] sm:$0xff]
    %v427 = vld [vmem:[#allocation5 + $0x2f8] sm:$0xff]
    %v428 = vld [vmem:[#allocation5 + $0x300] sm:$0xff]
    %v429 = vld [vmem:[#allocation5 + $0x308] sm:$0xff]
    %v430 = vld [vmem:[#allocation5 + $0x310] sm:$0xff]
    %v431 = vld [vmem:[#allocation5 + $0x318] sm:$0xff]
    %v432 = vld [vmem:[#allocation5 + $0x320] sm:$0xff]
    %v433 = vld [vmem:[#allocation5 + $0x328] sm:$0xff]
    %v434 = vld [vmem:[#allocation5 + $0x330] sm:$0xff]
    %v435 = vld [vmem:[#allocation5 + $0x338] sm:$0xff]
    %v436 = vld [vmem:[#allocation5 + $0x340] sm:$0xff]
    %v437 = vld [vmem:[#allocation5 + $0x348] sm:$0xff]
    %v438 = vld [vmem:[#allocation5 + $0x350] sm:$0xff]
    %v439 = vld [vmem:[#allocation5 + $0x358] sm:$0xff]
    %v440 = vld [vmem:[#allocation5 + $0x360] sm:$0xff]
    %v441 = vld [vmem:[#allocation5 + $0x368] sm:$0xff]
    %v442 = vld [vmem:[#allocation5 + $0x370] sm:$0xff]
    %v443 = vld [vmem:[#allocation5 + $0x378] sm:$0xff]
    %v444 = vld [vmem:[#allocation5 + $0x380] sm:$0xff]
    %v445 = vld [vmem:[#allocation5 + $0x388] sm:$0xff]
    %v446 = vld [vmem:[#allocation5 + $0x390] sm:$0xff]
    %v447 = vld [vmem:[#allocation5 + $0x398] sm:$0xff]
    %v448 = vld [vmem:[#allocation5 + $0x3a0] sm:$0xff]
    %v449 = vld [vmem:[#allocation5 + $0x3a8] sm:$0xff]
    %v450 = vld [vmem:[#allocation5 + $0x3b0] sm:$0xff]
    %v451 = vld [vmem:[#allocation5 + $0x3b8] sm:$0xff]
    %v452 = vld [vmem:[#allocation5 + $0x3c0] sm:$0xff]
    %v453 = vld [vmem:[#allocation5 + $0x3c8] sm:$0xff]
    %v454 = vld [vmem:[#allocation5 + $0x3d0] sm:$0xff]
    %v455 = vld [vmem:[#allocation5 + $0x3d8] sm:$0xff]
    %v456 = vld [vmem:[#allocation5 + $0x3e0] sm:$0xff]
    %v457 = vld [vmem:[#allocation5 + $0x3e8] sm:$0xff]
    %v458 = vld [vmem:[#allocation5 + $0x3f0] sm:$0xff]
    %v459 = vld [vmem:[#allocation5 + $0x3f8] sm:$0xff]
    %v460 = vld [vmem:[#allocation5 + $0x400] sm:$0xff]
    %v461 = vld [vmem:[#allocation5 + $0x408] sm:$0xff]
    %v462 = vld [vmem:[#allocation5 + $0x410] sm:$0xff]
    %v463 = vld [vmem:[#allocation5 + $0x418] sm:$0xff]
    %v464 = vld [vmem:[#allocation5 + $0x420] sm:$0xff]
    %v465 = vld [vmem:[#allocation5 + $0x428] sm:$0xff]
    %v466 = vld [vmem:[#allocation5 + $0x430] sm:$0xff]
    %v467 = vld [vmem:[#allocation5 + $0x438] sm:$0xff]
    %v468 = vld [vmem:[#allocation5 + $0x440] sm:$0xff]
    %v469 = vld [vmem:[#allocation5 + $0x448] sm:$0xff]
    %v470 = vld [vmem:[#allocation5 + $0x450] sm:$0xff]
    %v471 = vld [vmem:[#allocation5 + $0x458] sm:$0xff]
    %v472 = vld [vmem:[#allocation5 + $0x460] sm:$0xff]
    %v473 = vld [vmem:[#allocation5 + $0x468] sm:$0xff]
    %v474 = vld [vmem:[#allocation5 + $0x470] sm:$0xff]
    %v475 = vld [vmem:[#allocation5 + $0x478] sm:$0xff]
    %v476 = vld [vmem:[#allocation5 + $0x480] sm:$0xff]
    %v477 = vld [vmem:[#allocation5 + $0x488] sm:$0xff]
    %v478 = vld [vmem:[#allocation5 + $0x490] sm:$0xff]
    %v479 = vld [vmem:[#allocation5 + $0x498] sm:$0xff]
    %v480 = vld [vmem:[#allocation5 + $0x4a0] sm:$0xff]
    %v481 = vld [vmem:[#allocation5 + $0x4a8] sm:$0xff]
    %v482 = vld [vmem:[#allocation5 + $0x4b0] sm:$0xff]
    %v483 = vld [vmem:[#allocation5 + $0x4b8] sm:$0xff]
    %v484 = vld [vmem:[#allocation5 + $0x4c0] sm:$0xff]
    %v485 = vld [vmem:[#allocation5 + $0x4c8] sm:$0xff]
    %v486 = vld [vmem:[#allocation5 + $0x4d0] sm:$0xff]
    %v487 = vld [vmem:[#allocation5 + $0x4d8] sm:$0xff]
    %v488 = vld [vmem:[#allocation5 + $0x4e0] sm:$0xff]
    %v489 = vld [vmem:[#allocation5 + $0x4e8] sm:$0xff]
    %v490 = vld [vmem:[#allocation5 + $0x4f0] sm:$0xff]
    %v491 = vld [vmem:[#allocation5 + $0x4f8] sm:$0xff]
    %v492 = vld [vmem:[#allocation5 + $0x500] sm:$0xff]
    %v493 = vld [vmem:[#allocation5 + $0x508] sm:$0xff]
    %v494 = vld [vmem:[#allocation5 + $0x510] sm:$0xff]
    %v495 = vld [vmem:[#allocation5 + $0x518] sm:$0xff]
    %v496 = vld [vmem:[#allocation5 + $0x520] sm:$0xff]
    %v497 = vld [vmem:[#allocation5 + $0x528] sm:$0xff]
    %v498 = vld [vmem:[#allocation5 + $0x530] sm:$0xff]
    %v499 = vld [vmem:[#allocation5 + $0x538] sm:$0xff]
    %v500 = vld [vmem:[#allocation5 + $0x540] sm:$0xff]
    %v501 = vld [vmem:[#allocation5 + $0x548] sm:$0xff]
    %v502 = vld [vmem:[#allocation5 + $0x550] sm:$0xff]
    %v503 = vld [vmem:[#allocation5 + $0x558] sm:$0xff]
    %v504 = vld [vmem:[#allocation5 + $0x560] sm:$0xff]
    %v505 = vld [vmem:[#allocation5 + $0x568] sm:$0xff]
    %v506 = vld [vmem:[#allocation5 + $0x570] sm:$0xff]
    %v507 = vld [vmem:[#allocation5 + $0x578] sm:$0xff]
    %v508 = vld [vmem:[#allocation5 + $0x580] sm:$0xff]
    %v509 = vld [vmem:[#allocation5 + $0x588] sm:$0xff]
    %v510 = vld [vmem:[#allocation5 + $0x590] sm:$0xff]
    %v511 = vld [vmem:[#allocation5 + $0x598] sm:$0xff]
    %v512 = vld [vmem:[#allocation5 + $0x5a0] sm:$0xff]
    %v513 = vld [vmem:[#allocation5 + $0x5a8] sm:$0xff]
    %v514 = vld [vmem:[#allocation5 + $0x5b0] sm:$0xff]
    %v515 = vld [vmem:[#allocation5 + $0x5b8] sm:$0xff]
    %v516 = vld [vmem:[#allocation5 + $0x5c0] sm:$0xff]
    %v517 = vld [vmem:[#allocation5 + $0x5c8] sm:$0xff]
    %v518 = vld [vmem:[#allocation5 + $0x5d0] sm:$0xff]
    %v519 = vld [vmem:[#allocation5 + $0x5d8] sm:$0xff]
    %v520 = vld [vmem:[#allocation5 + $0x5e0] sm:$0xff]
    %v521 = vld [vmem:[#allocation5 + $0x5e8] sm:$0xff]
    %v522 = vld [vmem:[#allocation5 + $0x5f0] sm:$0xff]
    %v523 = vld [vmem:[#allocation5 + $0x5f8] sm:$0xff]
    %v524 = vld [vmem:[#allocation5 + $0x600] sm:$0xff]
    %v525 = vld [vmem:[#allocation5 + $0x608] sm:$0xff]
    %v526 = vld [vmem:[#allocation5 + $0x610] sm:$0xff]
    %v527 = vld [vmem:[#allocation5 + $0x618] sm:$0xff]
    %v528 = vld [vmem:[#allocation5 + $0x620] sm:$0xff]
    %v529 = vld [vmem:[#allocation5 + $0x628] sm:$0xff]
    %v530 = vld [vmem:[#allocation5 + $0x630] sm:$0xff]
    %v531 = vld [vmem:[#allocation5 + $0x638] sm:$0xff]
    %v532 = vld [vmem:[#allocation5 + $0x640] sm:$0xff]
    %v533 = vld [vmem:[#allocation5 + $0x648] sm:$0xff]
    %v534 = vld [vmem:[#allocation5 + $0x650] sm:$0xff]
    %v535 = vld [vmem:[#allocation5 + $0x658] sm:$0xff]
    %v536 = vld [vmem:[#allocation5 + $0x660] sm:$0xff]
    %v537 = vld [vmem:[#allocation5 + $0x668] sm:$0xff]
    %v538 = vld [vmem:[#allocation5 + $0x670] sm:$0xff]
    %v539 = vld [vmem:[#allocation5 + $0x678] sm:$0xff]
    %v540 = vld [vmem:[#allocation5 + $0x680] sm:$0xff]
    %v541 = vld [vmem:[#allocation5 + $0x688] sm:$0xff]
    %v542 = vld [vmem:[#allocation5 + $0x690] sm:$0xff]
    %v543 = vld [vmem:[#allocation5 + $0x698] sm:$0xff]
    %v544 = vld [vmem:[#allocation5 + $0x6a0] sm:$0xff]
    %v545 = vld [vmem:[#allocation5 + $0x6a8] sm:$0xff]
    %v546 = vld [vmem:[#allocation5 + $0x6b0] sm:$0xff]
    %v547 = vld [vmem:[#allocation5 + $0x6b8] sm:$0xff]
    %v548 = vld [vmem:[#allocation5 + $0x6c0] sm:$0xff]
    %v549 = vld [vmem:[#allocation5 + $0x6c8] sm:$0xff]
    %v550 = vld [vmem:[#allocation5 + $0x6d0] sm:$0xff]
    %v551 = vld [vmem:[#allocation5 + $0x6d8] sm:$0xff]
    %v552 = vld [vmem:[#allocation5 + $0x6e0] sm:$0xff]
    %v553 = vld [vmem:[#allocation5 + $0x6e8] sm:$0xff]
    %v554 = vld [vmem:[#allocation5 + $0x6f0] sm:$0xff]
    %v555 = vld [vmem:[#allocation5 + $0x6f8] sm:$0xff]
    %v556 = vld [vmem:[#allocation5 + $0x700] sm:$0xff]
    %v557 = vld [vmem:[#allocation5 + $0x708] sm:$0xff]
    %v558 = vld [vmem:[#allocation5 + $0x710] sm:$0xff]
    %v559 = vld [vmem:[#allocation5 + $0x718] sm:$0xff]
    %v560 = vld [vmem:[#allocation5 + $0x720] sm:$0xff]
    %v561 = vld [vmem:[#allocation5 + $0x728] sm:$0xff]
    %v562 = vld [vmem:[#allocation5 + $0x730] sm:$0xff]
    %v563 = vld [vmem:[#allocation5 + $0x738] sm:$0xff]
    %v564 = vld [vmem:[#allocation5 + $0x740] sm:$0xff]
    %v565 = vld [vmem:[#allocation5 + $0x748] sm:$0xff]
    %v566 = vld [vmem:[#allocation5 + $0x750] sm:$0xff]
    %v567 = vld [vmem:[#allocation5 + $0x758] sm:$0xff]
    %v568 = vld [vmem:[#allocation5 + $0x760] sm:$0xff]
    %v569 = vld [vmem:[#allocation5 + $0x768] sm:$0xff]
    %v570 = vld [vmem:[#allocation5 + $0x770] sm:$0xff]
    %v571 = vld [vmem:[#allocation5 + $0x778] sm:$0xff]
    %v572 = vld [vmem:[#allocation5 + $0x780] sm:$0xff]
    %v573 = vld [vmem:[#allocation5 + $0x788] sm:$0xff]
    %v574 = vld [vmem:[#allocation5 + $0x790] sm:$0xff]
    %v575 = vld [vmem:[#allocation5 + $0x798] sm:$0xff]
    %v576 = vld [vmem:[#allocation5 + $0x7a0] sm:$0xff]
    %v577 = vld [vmem:[#allocation5 + $0x7a8] sm:$0xff]
    %v578 = vld [vmem:[#allocation5 + $0x7b0] sm:$0xff]
    %v579 = vld [vmem:[#allocation5 + $0x7b8] sm:$0xff]
    %v580 = vld [vmem:[#allocation5 + $0x7c0] sm:$0xff]
    %v581 = vld [vmem:[#allocation5 + $0x7c8] sm:$0xff]
    %v582 = vld [vmem:[#allocation5 + $0x7d0] sm:$0xff]
    %v583 = vld [vmem:[#allocation5 + $0x7d8] sm:$0xff]
    %v584 = vld [vmem:[#allocation5 + $0x7e0] sm:$0xff]
    %v585 = vld [vmem:[#allocation5 + $0x7e8] sm:$0xff]
    %v586 = vld [vmem:[#allocation5 + $0x7f0] sm:$0xff]
    %v587 = vld [vmem:[#allocation5 + $0x7f8] sm:$0xff]
    %v588 = vld [vmem:[#allocation5 + $0x800] sm:$0xff]
    %v589 = vld [vmem:[#allocation5 + $0x808] sm:$0xff]
    %v590 = vld [vmem:[#allocation5 + $0x810] sm:$0xff]
    %v591 = vld [vmem:[#allocation5 + $0x818] sm:$0xff]
    %v592 = vld [vmem:[#allocation5 + $0x820] sm:$0xff]
    %v593 = vld [vmem:[#allocation5 + $0x828] sm:$0xff]
    %v594 = vld [vmem:[#allocation5 + $0x830] sm:$0xff]
    %v595 = vld [vmem:[#allocation5 + $0x838] sm:$0xff]
    %v596 = vld [vmem:[#allocation5 + $0x840] sm:$0xff]
    %v597 = vld [vmem:[#allocation5 + $0x848] sm:$0xff]
    %v598 = vld [vmem:[#allocation5 + $0x850] sm:$0xff]
    %v599 = vld [vmem:[#allocation5 + $0x858] sm:$0xff]
    %v600 = vld [vmem:[#allocation5 + $0x860] sm:$0xff]
    %v601 = vld [vmem:[#allocation5 + $0x868] sm:$0xff]
    %v602 = vld [vmem:[#allocation5 + $0x870] sm:$0xff]
    %v603 = vld [vmem:[#allocation5 + $0x878] sm:$0xff]
    %v604 = vld [vmem:[#allocation5 + $0x880] sm:$0xff]
    %v605 = vld [vmem:[#allocation5 + $0x888] sm:$0xff]
    %v606 = vld [vmem:[#allocation5 + $0x890] sm:$0xff]
    %v607 = vld [vmem:[#allocation5 + $0x898] sm:$0xff]
    %v608 = vld [vmem:[#allocation5 + $0x8a0] sm:$0xff]
    %v609 = vld [vmem:[#allocation5 + $0x8a8] sm:$0xff]
    %v610 = vld [vmem:[#allocation5 + $0x8b0] sm:$0xff]
    %v611 = vld [vmem:[#allocation5 + $0x8b8] sm:$0xff]
    %v612 = vld [vmem:[#allocation5 + $0x8c0] sm:$0xff]
    %v613 = vld [vmem:[#allocation5 + $0x8c8] sm:$0xff]
    %v614 = vld [vmem:[#allocation5 + $0x8d0] sm:$0xff]
    %v615 = vld [vmem:[#allocation5 + $0x8d8] sm:$0xff]
    %v616 = vld [vmem:[#allocation5 + $0x8e0] sm:$0xff]
    %v617 = vld [vmem:[#allocation5 + $0x8e8] sm:$0xff]
    %v618 = vld [vmem:[#allocation5 + $0x8f0] sm:$0xff]
    %v619 = vld [vmem:[#allocation5 + $0x8f8] sm:$0xff]
    %v620 = vld [vmem:[#allocation5 + $0x900] sm:$0xff]
    %v621 = vld [vmem:[#allocation5 + $0x908] sm:$0xff]
    %v622 = vld [vmem:[#allocation5 + $0x910] sm:$0xff]
    %v623 = vld [vmem:[#allocation5 + $0x918] sm:$0xff]
    %v624 = vld [vmem:[#allocation5 + $0x920] sm:$0xff]
    %v625 = vld [vmem:[#allocation5 + $0x928] sm:$0xff]
    %v626 = vld [vmem:[#allocation5 + $0x930] sm:$0xff]
    %v627 = vld [vmem:[#allocation5 + $0x938] sm:$0xff]
    %v628 = vld [vmem:[#allocation5 + $0x940] sm:$0xff]
    %v629 = vld [vmem:[#allocation5 + $0x948] sm:$0xff]
    %v630 = vld [vmem:[#allocation5 + $0x950] sm:$0xff]
    %v631 = vld [vmem:[#allocation5 + $0x958] sm:$0xff]
    %v632 = vld [vmem:[#allocation5 + $0x960] sm:$0xff]
    %v633 = vld [vmem:[#allocation5 + $0x968] sm:$0xff]
    %v634 = vld [vmem:[#allocation5 + $0x970] sm:$0xff]
    %v635 = vld [vmem:[#allocation5 + $0x978] sm:$0xff]
    %v636 = vld [vmem:[#allocation5 + $0x980] sm:$0xff]
    %v637 = vld [vmem:[#allocation5 + $0x988] sm:$0xff]
    %v638 = vld [vmem:[#allocation5 + $0x990] sm:$0xff]
    %v639 = vld [vmem:[#allocation5 + $0x998] sm:$0xff]
    %v640 = vld [vmem:[#allocation5 + $0x9a0] sm:$0xff]
    %v641 = vld [vmem:[#allocation5 + $0x9a8] sm:$0xff]
    %v642 = vld [vmem:[#allocation5 + $0x9b0] sm:$0xff]
    %v643 = vld [vmem:[#allocation5 + $0x9b8] sm:$0xff]
    %v644 = vld [vmem:[#allocation5 + $0x9c0] sm:$0xff]
    %v645 = vld [vmem:[#allocation5 + $0x9c8] sm:$0xff]
    %v646 = vld [vmem:[#allocation5 + $0x9d0] sm:$0xff]
    %v647 = vld [vmem:[#allocation5 + $0x9d8] sm:$0xff]
    %v648 = vld [vmem:[#allocation5 + $0x9e0] sm:$0xff]
    %v649 = vld [vmem:[#allocation5 + $0x9e8] sm:$0xff]
    %v650 = vld [vmem:[#allocation5 + $0x9f0] sm:$0xff]
    %v651 = vld [vmem:[#allocation5 + $0x9f8] sm:$0xff]
    %v652 = vld [vmem:[#allocation5 + $0xa00] sm:$0xff]
    %v653 = vld [vmem:[#allocation5 + $0xa08] sm:$0xff]
    %v654 = vld [vmem:[#allocation5 + $0xa10] sm:$0xff]
    %v655 = vld [vmem:[#allocation5 + $0xa18] sm:$0xff]
    %v656 = vld [vmem:[#allocation5 + $0xa20] sm:$0xff]
    %v657 = vld [vmem:[#allocation5 + $0xa28] sm:$0xff]
    %v658 = vld [vmem:[#allocation5 + $0xa30] sm:$0xff]
    %v659 = vld [vmem:[#allocation5 + $0xa38] sm:$0xff]
    %v660 = vld [vmem:[#allocation5 + $0xa40] sm:$0xff]
    %v661 = vld [vmem:[#allocation5 + $0xa48] sm:$0xff]
    %v662 = vld [vmem:[#allocation5 + $0xa50] sm:$0xff]
    %v663 = vld [vmem:[#allocation5 + $0xa58] sm:$0xff]
    %v664 = vld [vmem:[#allocation5 + $0xa60] sm:$0xff]
    %v665 = vld [vmem:[#allocation5 + $0xa68] sm:$0xff]
    %v666 = vld [vmem:[#allocation5 + $0xa70] sm:$0xff]
    %v667 = vld [vmem:[#allocation5 + $0xa78] sm:$0xff]
    %v668 = vld [vmem:[#allocation5 + $0xa80] sm:$0xff]
    %v669 = vld [vmem:[#allocation5 + $0xa88] sm:$0xff]
    %v670 = vld [vmem:[#allocation5 + $0xa90] sm:$0xff]
    %v671 = vld [vmem:[#allocation5 + $0xa98] sm:$0xff]
    %v672 = vld [vmem:[#allocation5 + $0xaa0] sm:$0xff]
    %v673 = vld [vmem:[#allocation5 + $0xaa8] sm:$0xff]
    %v674 = vld [vmem:[#allocation5 + $0xab0] sm:$0xff]
    %v675 = vld [vmem:[#allocation5 + $0xab8] sm:$0xff]
    %v676 = vld [vmem:[#allocation5 + $0xac0] sm:$0xff]
    %v677 = vld [vmem:[#allocation5 + $0xac8] sm:$0xff]
    %v678 = vld [vmem:[#allocation5 + $0xad0] sm:$0xff]
    %v679 = vld [vmem:[#allocation5 + $0xad8] sm:$0xff]
    %v680 = vld [vmem:[#allocation5 + $0xae0] sm:$0xff]
    %v681 = vld [vmem:[#allocation5 + $0xae8] sm:$0xff]
    %v682 = vld [vmem:[#allocation5 + $0xaf0] sm:$0xff]
    %v683 = vld [vmem:[#allocation5 + $0xaf8] sm:$0xff]
    %v684 = vld [vmem:[#allocation5 + $0xb00] sm:$0xff]
    %v685 = vld [vmem:[#allocation5 + $0xb08] sm:$0xff]
    %v686 = vld [vmem:[#allocation5 + $0xb10] sm:$0xff]
    %v687 = vld [vmem:[#allocation5 + $0xb18] sm:$0xff]
    %v688 = vld [vmem:[#allocation5 + $0xb20] sm:$0xff]
    %v689 = vld [vmem:[#allocation5 + $0xb28] sm:$0xff]
    %v690 = vld [vmem:[#allocation5 + $0xb30] sm:$0xff]
    %v691 = vld [vmem:[#allocation5 + $0xb38] sm:$0xff]
    %v692 = vld [vmem:[#allocation5 + $0xb40] sm:$0xff]
    %v693 = vld [vmem:[#allocation5 + $0xb48] sm:$0xff]
    %v694 = vld [vmem:[#allocation5 + $0xb50] sm:$0xff]
    %v695 = vld [vmem:[#allocation5 + $0xb58] sm:$0xff]
    %v696 = vld [vmem:[#allocation5 + $0xb60] sm:$0xff]
    %v697 = vld [vmem:[#allocation5 + $0xb68] sm:$0xff]
    %v698 = vld [vmem:[#allocation5 + $0xb70] sm:$0xff]
    %v699 = vld [vmem:[#allocation5 + $0xb78] sm:$0xff]
    %v700 = vld [vmem:[#allocation5 + $0xb80] sm:$0xff]
    %v701 = vld [vmem:[#allocation5 + $0xb88] sm:$0xff]
    %v702 = vld [vmem:[#allocation5 + $0xb90] sm:$0xff]
    %v703 = vld [vmem:[#allocation5 + $0xb98] sm:$0xff]
    %v704 = vld [vmem:[#allocation5 + $0xba0] sm:$0xff]
    %v705 = vld [vmem:[#allocation5 + $0xba8] sm:$0xff]
    %v706 = vld [vmem:[#allocation5 + $0xbb0] sm:$0xff]
    %v707 = vld [vmem:[#allocation5 + $0xbb8] sm:$0xff]
    %v708 = vld [vmem:[#allocation5 + $0xbc0] sm:$0xff]
    %v709 = vld [vmem:[#allocation5 + $0xbc8] sm:$0xff]
    %v710 = vld [vmem:[#allocation5 + $0xbd0] sm:$0xff]
    %v711 = vld [vmem:[#allocation5 + $0xbd8] sm:$0xff]
    %v712 = vld [vmem:[#allocation5 + $0xbe0] sm:$0xff]
    %v713 = vld [vmem:[#allocation5 + $0xbe8] sm:$0xff]
    %v714 = vld [vmem:[#allocation5 + $0xbf0] sm:$0xff]
    %v715 = vld [vmem:[#allocation5 + $0xbf8] sm:$0xff]
    %v716 = vld [vmem:[#allocation5 + $0xc00] sm:$0xff]
    %v717 = vld [vmem:[#allocation5 + $0xc08] sm:$0xff]
    %v718 = vld [vmem:[#allocation5 + $0xc10] sm:$0xff]
    %v719 = vld [vmem:[#allocation5 + $0xc18] sm:$0xff]
    %v720 = vld [vmem:[#allocation5 + $0xc20] sm:$0xff]
    %v721 = vld [vmem:[#allocation5 + $0xc28] sm:$0xff]
    %v722 = vld [vmem:[#allocation5 + $0xc30] sm:$0xff]
    %v723 = vld [vmem:[#allocation5 + $0xc38] sm:$0xff]
    %v724 = vld [vmem:[#allocation5 + $0xc40] sm:$0xff]
    %v725 = vld [vmem:[#allocation5 + $0xc48] sm:$0xff]
    %v726 = vld [vmem:[#allocation5 + $0xc50] sm:$0xff]
    %v727 = vld [vmem:[#allocation5 + $0xc58] sm:$0xff]
    %v728 = vld [vmem:[#allocation5 + $0xc60] sm:$0xff]
    %v729 = vld [vmem:[#allocation5 + $0xc68] sm:$0xff]
    %v730 = vld [vmem:[#allocation5 + $0xc70] sm:$0xff]
    %v731 = vld [vmem:[#allocation5 + $0xc78] sm:$0xff]
    %v732 = vld [vmem:[#allocation5 + $0xc80] sm:$0xff]
    %v733 = vld [vmem:[#allocation5 + $0xc88] sm:$0xff]
    %v734 = vld [vmem:[#allocation5 + $0xc90] sm:$0xff]
    %v735 = vld [vmem:[#allocation5 + $0xc98] sm:$0xff]
    %v736 = vld [vmem:[#allocation5 + $0xca0] sm:$0xff]
    %v737 = vld [vmem:[#allocation5 + $0xca8] sm:$0xff]
    %v738 = vld [vmem:[#allocation5 + $0xcb0] sm:$0xff]
    %v739 = vld [vmem:[#allocation5 + $0xcb8] sm:$0xff]
    %v740 = vld [vmem:[#allocation5 + $0xcc0] sm:$0xff]
    %v741 = vld [vmem:[#allocation5 + $0xcc8] sm:$0xff]
    %v742 = vld [vmem:[#allocation5 + $0xcd0] sm:$0xff]
    %v743 = vld [vmem:[#allocation5 + $0xcd8] sm:$0xff]
    %v744 = vld [vmem:[#allocation5 + $0xce0] sm:$0xff]
    %v745 = vld [vmem:[#allocation5 + $0xce8] sm:$0xff]
    %v746 = vld [vmem:[#allocation5 + $0xcf0] sm:$0xff]
    %v747 = vld [vmem:[#allocation5 + $0xcf8] sm:$0xff]
    %v748 = vld [vmem:[#allocation5 + $0xd00] sm:$0xff]
    %v749 = vld [vmem:[#allocation5 + $0xd08] sm:$0xff]
    %v750 = vld [vmem:[#allocation5 + $0xd10] sm:$0xff]
    %v751 = vld [vmem:[#allocation5 + $0xd18] sm:$0xff]
    %v752 = vld [vmem:[#allocation5 + $0xd20] sm:$0xff]
    %v753 = vld [vmem:[#allocation5 + $0xd28] sm:$0xff]
    %v754 = vld [vmem:[#allocation5 + $0xd30] sm:$0xff]
    %v755 = vld [vmem:[#allocation5 + $0xd38] sm:$0xff]
    %v756 = vld [vmem:[#allocation5 + $0xd40] sm:$0xff]
    %v757 = vld [vmem:[#allocation5 + $0xd48] sm:$0xff]
    %v758 = vld [vmem:[#allocation5 + $0xd50] sm:$0xff]
    %v759 = vld [vmem:[#allocation5 + $0xd58] sm:$0xff]
    %v760 = vld [vmem:[#allocation5 + $0xd60] sm:$0xff]
    %v761 = vld [vmem:[#allocation5 + $0xd68] sm:$0xff]
    %v762 = vld [vmem:[#allocation5 + $0xd70] sm:$0xff]
    %v763 = vld [vmem:[#allocation5 + $0xd78] sm:$0xff]
    %v764 = vld [vmem:[#allocation5 + $0xd80] sm:$0xff]
    %v765 = vld [vmem:[#allocation5 + $0xd88] sm:$0xff]
    %v766 = vld [vmem:[#allocation5 + $0xd90] sm:$0xff]
    %v767 = vld [vmem:[#allocation5 + $0xd98] sm:$0xff]
    %v768 = vld [vmem:[#allocation5 + $0xda0] sm:$0xff]
    %v769 = vld [vmem:[#allocation5 + $0xda8] sm:$0xff]
    %v770 = vld [vmem:[#allocation5 + $0xdb0] sm:$0xff]
    %v771 = vld [vmem:[#allocation5 + $0xdb8] sm:$0xff]
    %v772 = vld [vmem:[#allocation5 + $0xdc0] sm:$0xff]
    %v773 = vld [vmem:[#allocation5 + $0xdc8] sm:$0xff]
    %v774 = vld [vmem:[#allocation5 + $0xdd0] sm:$0xff]
    %v775 = vld [vmem:[#allocation5 + $0xdd8] sm:$0xff]
    %v776 = vld [vmem:[#allocation5 + $0xde0] sm:$0xff]
    %v777 = vld [vmem:[#allocation5 + $0xde8] sm:$0xff]
    %v778 = vld [vmem:[#allocation5 + $0xdf0] sm:$0xff]
    %v779 = vld [vmem:[#allocation5 + $0xdf8] sm:$0xff]
    %v780 = vld [vmem:[#allocation5 + $0xe00] sm:$0xff]
    %v781 = vld [vmem:[#allocation5 + $0xe08] sm:$0xff]
    %v782 = vld [vmem:[#allocation5 + $0xe10] sm:$0xff]
    %v783 = vld [vmem:[#allocation5 + $0xe18] sm:$0xff]
    %v784 = vld [vmem:[#allocation5 + $0xe20] sm:$0xff]
    %v785 = vld [vmem:[#allocation5 + $0xe28] sm:$0xff]
    %v786 = vld [vmem:[#allocation5 + $0xe30] sm:$0xff]
    %v787 = vld [vmem:[#allocation5 + $0xe38] sm:$0xff]
    %v788 = vld [vmem:[#allocation5 + $0xe40] sm:$0xff]
    %v789 = vld [vmem:[#allocation5 + $0xe48] sm:$0xff]
    %v790 = vld [vmem:[#allocation5 + $0xe50] sm:$0xff]
    %v791 = vld [vmem:[#allocation5 + $0xe58] sm:$0xff]
    %v792 = vld [vmem:[#allocation5 + $0xe60] sm:$0xff]
    %v793 = vld [vmem:[#allocation5 + $0xe68] sm:$0xff]
    %v794 = vld [vmem:[#allocation5 + $0xe70] sm:$0xff]
    %v795 = vld [vmem:[#allocation5 + $0xe78] sm:$0xff]
    %v796 = vld [vmem:[#allocation5 + $0xe80] sm:$0xff]
    %v797 = vld [vmem:[#allocation5 + $0xe88] sm:$0xff]
    %v798 = vld [vmem:[#allocation5 + $0xe90] sm:$0xff]
    %v799 = vld [vmem:[#allocation5 + $0xe98] sm:$0xff]
    %v800 = vld [vmem:[#allocation5 + $0xea0] sm:$0xff]
    %v801 = vld [vmem:[#allocation5 + $0xea8] sm:$0xff]
    %v802 = vld [vmem:[#allocation5 + $0xeb0] sm:$0xff]
    %v803 = vld [vmem:[#allocation5 + $0xeb8] sm:$0xff]
    %v804 = vld [vmem:[#allocation5 + $0xec0] sm:$0xff]
    %v805 = vld [vmem:[#allocation5 + $0xec8] sm:$0xff]
    %v806 = vld [vmem:[#allocation5 + $0xed0] sm:$0xff]
    %v807 = vld [vmem:[#allocation5 + $0xed8] sm:$0xff]
    %v808 = vld [vmem:[#allocation5 + $0xee0] sm:$0xff]
    %v809 = vld [vmem:[#allocation5 + $0xee8] sm:$0xff]
    %v810 = vld [vmem:[#allocation5 + $0xef0] sm:$0xff]
    %v811 = vld [vmem:[#allocation5 + $0xef8] sm:$0xff]
    %v812 = vld [vmem:[#allocation5 + $0xf00] sm:$0xff]
    %v813 = vld [vmem:[#allocation5 + $0xf08] sm:$0xff]
    %v814 = vld [vmem:[#allocation5 + $0xf10] sm:$0xff]
    %v815 = vld [vmem:[#allocation5 + $0xf18] sm:$0xff]
    %v816 = vld [vmem:[#allocation5 + $0xf20] sm:$0xff]
    %v817 = vld [vmem:[#allocation5 + $0xf28] sm:$0xff]
    %v818 = vld [vmem:[#allocation5 + $0xf30] sm:$0xff]
    %v819 = vld [vmem:[#allocation5 + $0xf38] sm:$0xff]
    %v820 = vld [vmem:[#allocation5 + $0xf40] sm:$0xff]
    %v821 = vld [vmem:[#allocation5 + $0xf48] sm:$0xff]
    %v822 = vld [vmem:[#allocation5 + $0xf50] sm:$0xff]
    %v823 = vld [vmem:[#allocation5 + $0xf58] sm:$0xff]
    %v824 = vld [vmem:[#allocation5 + $0xf60] sm:$0xff]
    %v825 = vld [vmem:[#allocation5 + $0xf68] sm:$0xff]
    %v826 = vld [vmem:[#allocation5 + $0xf70] sm:$0xff]
    %v827 = vld [vmem:[#allocation5 + $0xf78] sm:$0xff]
    %v828 = vld [vmem:[#allocation5 + $0xf80] sm:$0xff]
    %v829 = vld [vmem:[#allocation5 + $0xf88] sm:$0xff]
    %v830 = vld [vmem:[#allocation5 + $0xf90] sm:$0xff]
    %v831 = vld [vmem:[#allocation5 + $0xf98] sm:$0xff]
    %v832 = vld [vmem:[#allocation5 + $0xfa0] sm:$0xff]
    %v833 = vld [vmem:[#allocation5 + $0xfa8] sm:$0xff]
    %v834 = vld [vmem:[#allocation5 + $0xfb0] sm:$0xff]
    %v835 = vld [vmem:[#allocation5 + $0xfb8] sm:$0xff]
    %v836 = vld [vmem:[#allocation5 + $0xfc0] sm:$0xff]
    %v837 = vld [vmem:[#allocation5 + $0xfc8] sm:$0xff]
    %v838 = vld [vmem:[#allocation5 + $0xfd0] sm:$0xff]
    %v839 = vld [vmem:[#allocation5 + $0xfd8] sm:$0xff]
    %v840 = vld [vmem:[#allocation5 + $0xfe0] sm:$0xff]
    %v841 = vld [vmem:[#allocation5 + $0xfe8] sm:$0xff]
    %v842 = vld [vmem:[#allocation5 + $0xff0] sm:$0xff]
    %v843 = vld [vmem:[#allocation5 + $0xff8] sm:$0xff]
    %v844 = vld [vmem:[#allocation5 + $0x1000] sm:$0xff]
    %v845 = vld [vmem:[#allocation5 + $0x1008] sm:$0xff]
    %v846 = vld [vmem:[#allocation5 + $0x1010] sm:$0xff]
    %v847 = vld [vmem:[#allocation5 + $0x1018] sm:$0xff]
    %v848 = vld [vmem:[#allocation5 + $0x1020] sm:$0xff]
    %v849 = vld [vmem:[#allocation5 + $0x1028] sm:$0xff]
    %v850 = vld [vmem:[#allocation5 + $0x1030] sm:$0xff]
    %v851 = vld [vmem:[#allocation5 + $0x1038] sm:$0xff]
    %v852 = vld [vmem:[#allocation5 + $0x1040] sm:$0xff]
    %v853 = vld [vmem:[#allocation5 + $0x1048] sm:$0xff]
    %v854 = vld [vmem:[#allocation5 + $0x1050] sm:$0xff]
    %v855 = vld [vmem:[#allocation5 + $0x1058] sm:$0xff]
    %v856 = vld [vmem:[#allocation5 + $0x1060] sm:$0xff]
    %v857 = vld [vmem:[#allocation5 + $0x1068] sm:$0xff]
    %v858 = vld [vmem:[#allocation5 + $0x1070] sm:$0xff]
    %v859 = vld [vmem:[#allocation5 + $0x1078] sm:$0xff]
    %v860 = vld [vmem:[#allocation5 + $0x1080] sm:$0xff]
    %v861 = vld [vmem:[#allocation5 + $0x1088] sm:$0xff]
    %v862 = vld [vmem:[#allocation5 + $0x1090] sm:$0xff]
    %v863 = vld [vmem:[#allocation5 + $0x1098] sm:$0xff]
    %v864 = vld [vmem:[#allocation5 + $0x10a0] sm:$0xff]
    %v865 = vld [vmem:[#allocation5 + $0x10a8] sm:$0xff]
    %v866 = vld [vmem:[#allocation5 + $0x10b0] sm:$0xff]
    %v867 = vld [vmem:[#allocation5 + $0x10b8] sm:$0xff]
    %v868 = vld [vmem:[#allocation5 + $0x10c0] sm:$0xff]
    %v869 = vld [vmem:[#allocation5 + $0x10c8] sm:$0xff]
    %v870 = vld [vmem:[#allocation5 + $0x10d0] sm:$0xff]
    %v871 = vld [vmem:[#allocation5 + $0x10d8] sm:$0xff]
    %v872 = vld [vmem:[#allocation5 + $0x10e0] sm:$0xff]
    %v873 = vld [vmem:[#allocation5 + $0x10e8] sm:$0xff]
    %v874 = vld [vmem:[#allocation5 + $0x10f0] sm:$0xff]
    %v875 = vld [vmem:[#allocation5 + $0x10f8] sm:$0xff]
    %v876 = vld [vmem:[#allocation5 + $0x1100] sm:$0xff]
    %v877 = vld [vmem:[#allocation5 + $0x1108] sm:$0xff]
    %v878 = vld [vmem:[#allocation5 + $0x1110] sm:$0xff]
    %v879 = vld [vmem:[#allocation5 + $0x1118] sm:$0xff]
    %v880 = vld [vmem:[#allocation5 + $0x1120] sm:$0xff]
    %v881 = vld [vmem:[#allocation5 + $0x1128] sm:$0xff]
    %v882 = vld [vmem:[#allocation5 + $0x1130] sm:$0xff]
    %v883 = vld [vmem:[#allocation5 + $0x1138] sm:$0xff]
    %v884 = vld [vmem:[#allocation5 + $0x1140] sm:$0xff]
    %v885 = vld [vmem:[#allocation5 + $0x1148] sm:$0xff]
    %v886 = vld [vmem:[#allocation5 + $0x1150] sm:$0xff]
    %v887 = vld [vmem:[#allocation5 + $0x1158] sm:$0xff]
    %v888 = vld [vmem:[#allocation5 + $0x1160] sm:$0xff]
    %v889 = vld [vmem:[#allocation5 + $0x1168] sm:$0xff]
    %v890 = vld [vmem:[#allocation5 + $0x1170] sm:$0xff]
    %v891 = vld [vmem:[#allocation5 + $0x1178] sm:$0xff]
    %v892 = vld [vmem:[#allocation5 + $0x1180] sm:$0xff]
    %v893 = vld [vmem:[#allocation5 + $0x1188] sm:$0xff]
    %v894 = vld [vmem:[#allocation5 + $0x1190] sm:$0xff]
    %v895 = vld [vmem:[#allocation5 + $0x1198] sm:$0xff]
    %v896 = vld [vmem:[#allocation5 + $0x11a0] sm:$0xff]
    %v897 = vld [vmem:[#allocation5 + $0x11a8] sm:$0xff]
    %v898 = vld [vmem:[#allocation5 + $0x11b0] sm:$0xff]
    %v899 = vld [vmem:[#allocation5 + $0x11b8] sm:$0xff]
    %v900 = vld [vmem:[#allocation5 + $0x11c0] sm:$0xff]
    %v901 = vld [vmem:[#allocation5 + $0x11c8] sm:$0xff]
    %v902 = vld [vmem:[#allocation5 + $0x11d0] sm:$0xff]
    %v903 = vld [vmem:[#allocation5 + $0x11d8] sm:$0xff]
    %v904 = vld [vmem:[#allocation5 + $0x11e0] sm:$0xff]
    %v905 = vld [vmem:[#allocation5 + $0x11e8] sm:$0xff]
    %v906 = vld [vmem:[#allocation5 + $0x11f0] sm:$0xff]
    %v907 = vld [vmem:[#allocation5 + $0x11f8] sm:$0xff]
    %908 = vmatpush.msra.mxu0 %v362
    %909 = vmatpush.msra.mxu0 %v360
    %910 = vmatpush.msra.mxu0 %v358
    %911 = vmatpush.msra.mxu0 %v356
    %912 = vmatpush.msra.mxu0 %v354
    %913 = vmatpush.msra.mxu0 %v352
    %914 = vmatpush.msra.mxu0 %v350
    %915 = vmatpush.msra.mxu0 %v348
    %916 = vmatpush.msra.mxu0 %v346
    %917 = vmatpush.msra.mxu0 %v344
    %918 = vmatpush.msra.mxu0 %v342
    %919 = vmatpush.msra.mxu0 %v340
    %920 = vmatpush.msra.mxu0 %v338
    %921 = vmatpush.msra.mxu0 %v336
    %922 = vmatpush.msra.mxu0 %v334
    %923 = vmatpush.msra.mxu0 %v332
    %924 = vmatmul.f32.gmra.mxu0 %v44
    %v925 = vpop.f32.mrf.mxu0
    %v926 = vadd.f32 0.0, %v925
    %927 = vmatmul.f32.gmra.mxu0 %v62
    %v928 = vpop.f32.mrf.mxu0
    %v929 = vadd.f32 0.0, %v928
    %930 = vmatmul.f32.gmra.mxu0 %v80
    %v931 = vpop.f32.mrf.mxu0
    %v932 = vadd.f32 0.0, %v931
    %933 = vmatmul.f32.gmra.mxu0 %v98
    %v934 = vpop.f32.mrf.mxu0
    %v935 = vadd.f32 0.0, %v934
    %936 = vmatmul.f32.gmra.mxu0 %v116
    %v937 = vpop.f32.mrf.mxu0
    %v938 = vadd.f32 0.0, %v937
    %939 = vmatmul.f32.gmra.mxu0 %v134
    %v940 = vpop.f32.mrf.mxu0
    %v941 = vadd.f32 0.0, %v940
    %942 = vmatmul.f32.gmra.mxu0 %v152
    %v943 = vpop.f32.mrf.mxu0
    %v944 = vadd.f32 0.0, %v943
    %945 = vmatmul.f32.gmra.mxu0 %v170
    %v946 = vpop.f32.mrf.mxu0
    %v947 = vadd.f32 0.0, %v946
    %948 = vmatmul.f32.gmra.mxu0 %v188
    %v949 = vpop.f32.mrf.mxu0
    %v950 = vadd.f32 0.0, %v949
    %951 = vmatmul.f32.gmra.mxu0 %v206
    %v952 = vpop.f32.mrf.mxu0
    %v953 = vadd.f32 0.0, %v952
    %954 = vmatmul.f32.gmra.mxu0 %v224
    %v955 = vpop.f32.mrf.mxu0
    %v956 = vadd.f32 0.0, %v955
    %957 = vmatmul.f32.gmra.mxu0 %v242
    %v958 = vpop.f32.mrf.mxu0
    %v959 = vadd.f32 0.0, %v958
    %960 = vmatmul.f32.gmra.mxu0 %v260
    %v961 = vpop.f32.mrf.mxu0
    %v962 = vadd.f32 0.0, %v961
    %963 = vmatmul.f32.gmra.mxu0 %v278
    %v964 = vpop.f32.mrf.mxu0
    %v965 = vadd.f32 0.0, %v964
    %966 = vmatmul.f32.gmra.mxu0 %v296
    %v967 = vpop.f32.mrf.mxu0
    %v968 = vadd.f32 0.0, %v967
    %969 = vmatmul.f32.gmra.mxu0 %v314
    %v970 = vpop.f32.mrf.mxu0
    %v971 = vadd.f32 0.0, %v970
    %972 = vdwg.mxu0
    %973 = vmatpush.msra.mxu0 %v394
    %974 = vmatpush.msra.mxu0 %v392
    %975 = vmatpush.msra.mxu0 %v390
    %976 = vmatpush.msra.mxu0 %v388
    %977 = vmatpush.msra.mxu0 %v386
    %978 = vmatpush.msra.mxu0 %v384
    %979 = vmatpush.msra.mxu0 %v382
    %980 = vmatpush.msra.mxu0 %v380
    %981 = vmatpush.msra.mxu0 %v378
    %982 = vmatpush.msra.mxu0 %v376
    %983 = vmatpush.msra.mxu0 %v374
    %984 = vmatpush.msra.mxu0 %v372
    %985 = vmatpush.msra.mxu0 %v370
    %986 = vmatpush.msra.mxu0 %v368
    %987 = vmatpush.msra.mxu0 %v366
    %988 = vmatpush.msra.mxu0 %v364
    %989 = vmatmul.f32.gmra.mxu0 %v45
    %v990 = vpop.f32.mrf.mxu0
    %v991 = vadd.f32 %v926, %v990
    %992 = vmatmul.f32.gmra.mxu0 %v63
    %v993 = vpop.f32.mrf.mxu0
    %v994 = vadd.f32 %v929, %v993
    %995 = vmatmul.f32.gmra.mxu0 %v81
    %v996 = vpop.f32.mrf.mxu0
    %v997 = vadd.f32 %v932, %v996
    %998 = vmatmul.f32.gmra.mxu0 %v99
    %v999 = vpop.f32.mrf.mxu0
    %v1000 = vadd.f32 %v935, %v999
    %1001 = vmatmul.f32.gmra.mxu0 %v117
    %v1002 = vpop.f32.mrf.mxu0
    %v1003 = vadd.f32 %v938, %v1002
    %1004 = vmatmul.f32.gmra.mxu0 %v135
    %v1005 = vpop.f32.mrf.mxu0
    %v1006 = vadd.f32 %v941, %v1005
    %1007 = vmatmul.f32.gmra.mxu0 %v153
    %v1008 = vpop.f32.mrf.mxu0
    %v1009 = vadd.f32 %v944, %v1008
    %1010 = vmatmul.f32.gmra.mxu0 %v171
    %v1011 = vpop.f32.mrf.mxu0
    %v1012 = vadd.f32 %v947, %v1011
    %1013 = vmatmul.f32.gmra.mxu0 %v189
    %v1014 = vpop.f32.mrf.mxu0
    %v1015 = vadd.f32 %v950, %v1014
    %1016 = vmatmul.f32.gmra.mxu0 %v207
    %v1017 = vpop.f32.mrf.mxu0
    %v1018 = vadd.f32 %v953, %v1017
    %1019 = vmatmul.f32.gmra.mxu0 %v225
    %v1020 = vpop.f32.mrf.mxu0
    %v1021 = vadd.f32 %v956, %v1020
    %1022 = vmatmul.f32.gmra.mxu0 %v243
    %v1023 = vpop.f32.mrf.mxu0
    %v1024 = vadd.f32 %v959, %v1023
    %1025 = vmatmul.f32.gmra.mxu0 %v261
    %v1026 = vpop.f32.mrf.mxu0
    %v1027 = vadd.f32 %v962, %v1026
    %1028 = vmatmul.f32.gmra.mxu0 %v279
    %v1029 = vpop.f32.mrf.mxu0
    %v1030 = vadd.f32 %v965, %v1029
    %1031 = vmatmul.f32.gmra.mxu0 %v297
    %v1032 = vpop.f32.mrf.mxu0
    %v1033 = vadd.f32 %v968, %v1032
    %1034 = vmatmul.f32.gmra.mxu0 %v315
    %v1035 = vpop.f32.mrf.mxu0
    %v1036 = vadd.f32 %v971, %v1035
    %1037 = vdwg.mxu0
    %1038 = vmatpush.msra.mxu0 %v426
    %1039 = vmatpush.msra.mxu0 %v424
    %1040 = vmatpush.msra.mxu0 %v422
    %1041 = vmatpush.msra.mxu0 %v420
    %1042 = vmatpush.msra.mxu0 %v418
    %1043 = vmatpush.msra.mxu0 %v416
    %1044 = vmatpush.msra.mxu0 %v414
    %1045 = vmatpush.msra.mxu0 %v412
    %1046 = vmatpush.msra.mxu0 %v410
    %1047 = vmatpush.msra.mxu0 %v408
    %1048 = vmatpush.msra.mxu0 %v406
    %1049 = vmatpush.msra.mxu0 %v404
    %1050 = vmatpush.msra.mxu0 %v402
    %1051 = vmatpush.msra.mxu0 %v400
    %1052 = vmatpush.msra.mxu0 %v398
    %1053 = vmatpush.msra.mxu0 %v396
    %1054 = vmatmul.f32.gmra.mxu0 %v46
    %v1055 = vpop.f32.mrf.mxu0
    %v1056 = vadd.f32 %v991, %v1055
    %1057 = vmatmul.f32.gmra.mxu0 %v64
    %v1058 = vpop.f32.mrf.mxu0
    %v1059 = vadd.f32 %v994, %v1058
    %1060 = vmatmul.f32.gmra.mxu0 %v82
    %v1061 = vpop.f32.mrf.mxu0
    %v1062 = vadd.f32 %v997, %v1061
    %1063 = vmatmul.f32.gmra.mxu0 %v100
    %v1064 = vpop.f32.mrf.mxu0
    %v1065 = vadd.f32 %v1000, %v1064
    %1066 = vmatmul.f32.gmra.mxu0 %v118
    %v1067 = vpop.f32.mrf.mxu0
    %v1068 = vadd.f32 %v1003, %v1067
    %1069 = vmatmul.f32.gmra.mxu0 %v136
    %v1070 = vpop.f32.mrf.mxu0
    %v1071 = vadd.f32 %v1006, %v1070
    %1072 = vmatmul.f32.gmra.mxu0 %v154
    %v1073 = vpop.f32.mrf.mxu0
    %v1074 = vadd.f32 %v1009, %v1073
    %1075 = vmatmul.f32.gmra.mxu0 %v172
    %v1076 = vpop.f32.mrf.mxu0
    %v1077 = vadd.f32 %v1012, %v1076
    %1078 = vmatmul.f32.gmra.mxu0 %v190
    %v1079 = vpop.f32.mrf.mxu0
    %v1080 = vadd.f32 %v1015, %v1079
    %1081 = vmatmul.f32.gmra.mxu0 %v208
    %v1082 = vpop.f32.mrf.mxu0
    %v1083 = vadd.f32 %v1018, %v1082
    %1084 = vmatmul.f32.gmra.mxu0 %v226
    %v1085 = vpop.f32.mrf.mxu0
    %v1086 = vadd.f32 %v1021, %v1085
    %1087 = vmatmul.f32.gmra.mxu0 %v244
    %v1088 = vpop.f32.mrf.mxu0
    %v1089 = vadd.f32 %v1024, %v1088
    %1090 = vmatmul.f32.gmra.mxu0 %v262
    %v1091 = vpop.f32.mrf.mxu0
    %v1092 = vadd.f32 %v1027, %v1091
    %1093 = vmatmul.f32.gmra.mxu0 %v280
    %v1094 = vpop.f32.mrf.mxu0
    %v1095 = vadd.f32 %v1030, %v1094
    %1096 = vmatmul.f32.gmra.mxu0 %v298
    %v1097 = vpop.f32.mrf.mxu0
    %v1098 = vadd.f32 %v1033, %v1097
    %1099 = vmatmul.f32.gmra.mxu0 %v316
    %v1100 = vpop.f32.mrf.mxu0
    %v1101 = vadd.f32 %v1036, %v1100
    %1102 = vdwg.mxu0
    %1103 = vmatpush.msra.mxu0 %v458
    %1104 = vmatpush.msra.mxu0 %v456
    %1105 = vmatpush.msra.mxu0 %v454
    %1106 = vmatpush.msra.mxu0 %v452
    %1107 = vmatpush.msra.mxu0 %v450
    %1108 = vmatpush.msra.mxu0 %v448
    %1109 = vmatpush.msra.mxu0 %v446
    %1110 = vmatpush.msra.mxu0 %v444
    %1111 = vmatpush.msra.mxu0 %v442
    %1112 = vmatpush.msra.mxu0 %v440
    %1113 = vmatpush.msra.mxu0 %v438
    %1114 = vmatpush.msra.mxu0 %v436
    %1115 = vmatpush.msra.mxu0 %v434
    %1116 = vmatpush.msra.mxu0 %v432
    %1117 = vmatpush.msra.mxu0 %v430
    %1118 = vmatpush.msra.mxu0 %v428
    %1119 = vmatmul.f32.gmra.mxu0 %v47
    %v1120 = vpop.f32.mrf.mxu0
    %v1121 = vadd.f32 %v1056, %v1120
    %1122 = vmatmul.f32.gmra.mxu0 %v65
    %v1123 = vpop.f32.mrf.mxu0
    %v1124 = vadd.f32 %v1059, %v1123
    %1125 = vmatmul.f32.gmra.mxu0 %v83
    %v1126 = vpop.f32.mrf.mxu0
    %v1127 = vadd.f32 %v1062, %v1126
    %1128 = vmatmul.f32.gmra.mxu0 %v101
    %v1129 = vpop.f32.mrf.mxu0
    %v1130 = vadd.f32 %v1065, %v1129
    %1131 = vmatmul.f32.gmra.mxu0 %v119
    %v1132 = vpop.f32.mrf.mxu0
    %v1133 = vadd.f32 %v1068, %v1132
    %1134 = vmatmul.f32.gmra.mxu0 %v137
    %v1135 = vpop.f32.mrf.mxu0
    %v1136 = vadd.f32 %v1071, %v1135
    %1137 = vmatmul.f32.gmra.mxu0 %v155
    %v1138 = vpop.f32.mrf.mxu0
    %v1139 = vadd.f32 %v1074, %v1138
    %1140 = vmatmul.f32.gmra.mxu0 %v173
    %v1141 = vpop.f32.mrf.mxu0
    %v1142 = vadd.f32 %v1077, %v1141
    %1143 = vmatmul.f32.gmra.mxu0 %v191
    %v1144 = vpop.f32.mrf.mxu0
    %v1145 = vadd.f32 %v1080, %v1144
    %1146 = vmatmul.f32.gmra.mxu0 %v209
    %v1147 = vpop.f32.mrf.mxu0
    %v1148 = vadd.f32 %v1083, %v1147
    %1149 = vmatmul.f32.gmra.mxu0 %v227
    %v1150 = vpop.f32.mrf.mxu0
    %v1151 = vadd.f32 %v1086, %v1150
    %1152 = vmatmul.f32.gmra.mxu0 %v245
    %v1153 = vpop.f32.mrf.mxu0
    %v1154 = vadd.f32 %v1089, %v1153
    %1155 = vmatmul.f32.gmra.mxu0 %v263
    %v1156 = vpop.f32.mrf.mxu0
    %v1157 = vadd.f32 %v1092, %v1156
    %1158 = vmatmul.f32.gmra.mxu0 %v281
    %v1159 = vpop.f32.mrf.mxu0
    %v1160 = vadd.f32 %v1095, %v1159
    %1161 = vmatmul.f32.gmra.mxu0 %v299
    %v1162 = vpop.f32.mrf.mxu0
    %v1163 = vadd.f32 %v1098, %v1162
    %1164 = vmatmul.f32.gmra.mxu0 %v317
    %v1165 = vpop.f32.mrf.mxu0
    %v1166 = vadd.f32 %v1101, %v1165
    %1167 = vdwg.mxu0
    %1168 = vmatpush.msra.mxu0 %v490
    %1169 = vmatpush.msra.mxu0 %v488
    %1170 = vmatpush.msra.mxu0 %v486
    %1171 = vmatpush.msra.mxu0 %v484
    %1172 = vmatpush.msra.mxu0 %v482
    %1173 = vmatpush.msra.mxu0 %v480
    %1174 = vmatpush.msra.mxu0 %v478
    %1175 = vmatpush.msra.mxu0 %v476
    %1176 = vmatpush.msra.mxu0 %v474
    %1177 = vmatpush.msra.mxu0 %v472
    %1178 = vmatpush.msra.mxu0 %v470
    %1179 = vmatpush.msra.mxu0 %v468
    %1180 = vmatpush.msra.mxu0 %v466
    %1181 = vmatpush.msra.mxu0 %v464
    %1182 = vmatpush.msra.mxu0 %v462
    %1183 = vmatpush.msra.mxu0 %v460
    %1184 = vmatmul.f32.gmra.mxu0 %v48
    %v1185 = vpop.f32.mrf.mxu0
    %v1186 = vadd.f32 %v1121, %v1185
    %1187 = vmatmul.f32.gmra.mxu0 %v66
    %v1188 = vpop.f32.mrf.mxu0
    %v1189 = vadd.f32 %v1124, %v1188
    %1190 = vmatmul.f32.gmra.mxu0 %v84
    %v1191 = vpop.f32.mrf.mxu0
    %v1192 = vadd.f32 %v1127, %v1191
    %1193 = vmatmul.f32.gmra.mxu0 %v102
    %v1194 = vpop.f32.mrf.mxu0
    %v1195 = vadd.f32 %v1130, %v1194
    %1196 = vmatmul.f32.gmra.mxu0 %v120
    %v1197 = vpop.f32.mrf.mxu0
    %v1198 = vadd.f32 %v1133, %v1197
    %1199 = vmatmul.f32.gmra.mxu0 %v138
    %v1200 = vpop.f32.mrf.mxu0
    %v1201 = vadd.f32 %v1136, %v1200
    %1202 = vmatmul.f32.gmra.mxu0 %v156
    %v1203 = vpop.f32.mrf.mxu0
    %v1204 = vadd.f32 %v1139, %v1203
    %1205 = vmatmul.f32.gmra.mxu0 %v174
    %v1206 = vpop.f32.mrf.mxu0
    %v1207 = vadd.f32 %v1142, %v1206
    %1208 = vmatmul.f32.gmra.mxu0 %v192
    %v1209 = vpop.f32.mrf.mxu0
    %v1210 = vadd.f32 %v1145, %v1209
    %1211 = vmatmul.f32.gmra.mxu0 %v210
    %v1212 = vpop.f32.mrf.mxu0
    %v1213 = vadd.f32 %v1148, %v1212
    %1214 = vmatmul.f32.gmra.mxu0 %v228
    %v1215 = vpop.f32.mrf.mxu0
    %v1216 = vadd.f32 %v1151, %v1215
    %1217 = vmatmul.f32.gmra.mxu0 %v246
    %v1218 = vpop.f32.mrf.mxu0
    %v1219 = vadd.f32 %v1154, %v1218
    %1220 = vmatmul.f32.gmra.mxu0 %v264
    %v1221 = vpop.f32.mrf.mxu0
    %v1222 = vadd.f32 %v1157, %v1221
    %1223 = vmatmul.f32.gmra.mxu0 %v282
    %v1224 = vpop.f32.mrf.mxu0
    %v1225 = vadd.f32 %v1160, %v1224
    %1226 = vmatmul.f32.gmra.mxu0 %v300
    %v1227 = vpop.f32.mrf.mxu0
    %v1228 = vadd.f32 %v1163, %v1227
    %1229 = vmatmul.f32.gmra.mxu0 %v318
    %v1230 = vpop.f32.mrf.mxu0
    %v1231 = vadd.f32 %v1166, %v1230
    %1232 = vdwg.mxu0
    %1233 = vmatpush.msra.mxu0 %v522
    %1234 = vmatpush.msra.mxu0 %v520
    %1235 = vmatpush.msra.mxu0 %v518
    %1236 = vmatpush.msra.mxu0 %v516
    %1237 = vmatpush.msra.mxu0 %v514
    %1238 = vmatpush.msra.mxu0 %v512
    %1239 = vmatpush.msra.mxu0 %v510
    %1240 = vmatpush.msra.mxu0 %v508
    %1241 = vmatpush.msra.mxu0 %v506
    %1242 = vmatpush.msra.mxu0 %v504
    %1243 = vmatpush.msra.mxu0 %v502
    %1244 = vmatpush.msra.mxu0 %v500
    %1245 = vmatpush.msra.mxu0 %v498
    %1246 = vmatpush.msra.mxu0 %v496
    %1247 = vmatpush.msra.mxu0 %v494
    %1248 = vmatpush.msra.mxu0 %v492
    %1249 = vmatmul.f32.gmra.mxu0 %v49
    %v1250 = vpop.f32.mrf.mxu0
    %v1251 = vadd.f32 %v1186, %v1250
    %1252 = vmatmul.f32.gmra.mxu0 %v67
    %v1253 = vpop.f32.mrf.mxu0
    %v1254 = vadd.f32 %v1189, %v1253
    %1255 = vmatmul.f32.gmra.mxu0 %v85
    %v1256 = vpop.f32.mrf.mxu0
    %v1257 = vadd.f32 %v1192, %v1256
    %1258 = vmatmul.f32.gmra.mxu0 %v103
    %v1259 = vpop.f32.mrf.mxu0
    %v1260 = vadd.f32 %v1195, %v1259
    %1261 = vmatmul.f32.gmra.mxu0 %v121
    %v1262 = vpop.f32.mrf.mxu0
    %v1263 = vadd.f32 %v1198, %v1262
    %1264 = vmatmul.f32.gmra.mxu0 %v139
    %v1265 = vpop.f32.mrf.mxu0
    %v1266 = vadd.f32 %v1201, %v1265
    %1267 = vmatmul.f32.gmra.mxu0 %v157
    %v1268 = vpop.f32.mrf.mxu0
    %v1269 = vadd.f32 %v1204, %v1268
    %1270 = vmatmul.f32.gmra.mxu0 %v175
    %v1271 = vpop.f32.mrf.mxu0
    %v1272 = vadd.f32 %v1207, %v1271
    %1273 = vmatmul.f32.gmra.mxu0 %v193
    %v1274 = vpop.f32.mrf.mxu0
    %v1275 = vadd.f32 %v1210, %v1274
    %1276 = vmatmul.f32.gmra.mxu0 %v211
    %v1277 = vpop.f32.mrf.mxu0
    %v1278 = vadd.f32 %v1213, %v1277
    %1279 = vmatmul.f32.gmra.mxu0 %v229
    %v1280 = vpop.f32.mrf.mxu0
    %v1281 = vadd.f32 %v1216, %v1280
    %1282 = vmatmul.f32.gmra.mxu0 %v247
    %v1283 = vpop.f32.mrf.mxu0
    %v1284 = vadd.f32 %v1219, %v1283
    %1285 = vmatmul.f32.gmra.mxu0 %v265
    %v1286 = vpop.f32.mrf.mxu0
    %v1287 = vadd.f32 %v1222, %v1286
    %1288 = vmatmul.f32.gmra.mxu0 %v283
    %v1289 = vpop.f32.mrf.mxu0
    %v1290 = vadd.f32 %v1225, %v1289
    %1291 = vmatmul.f32.gmra.mxu0 %v301
    %v1292 = vpop.f32.mrf.mxu0
    %v1293 = vadd.f32 %v1228, %v1292
    %1294 = vmatmul.f32.gmra.mxu0 %v319
    %v1295 = vpop.f32.mrf.mxu0
    %v1296 = vadd.f32 %v1231, %v1295
    %1297 = vdwg.mxu0
    %1298 = vmatpush.msra.mxu0 %v554
    %1299 = vmatpush.msra.mxu0 %v552
    %1300 = vmatpush.msra.mxu0 %v550
    %1301 = vmatpush.msra.mxu0 %v548
    %1302 = vmatpush.msra.mxu0 %v546
    %1303 = vmatpush.msra.mxu0 %v544
    %1304 = vmatpush.msra.mxu0 %v542
    %1305 = vmatpush.msra.mxu0 %v540
    %1306 = vmatpush.msra.mxu0 %v538
    %1307 = vmatpush.msra.mxu0 %v536
    %1308 = vmatpush.msra.mxu0 %v534
    %1309 = vmatpush.msra.mxu0 %v532
    %1310 = vmatpush.msra.mxu0 %v530
    %1311 = vmatpush.msra.mxu0 %v528
    %1312 = vmatpush.msra.mxu0 %v526
    %1313 = vmatpush.msra.mxu0 %v524
    %1314 = vmatmul.f32.gmra.mxu0 %v50
    %v1315 = vpop.f32.mrf.mxu0
    %v1316 = vadd.f32 %v1251, %v1315
    %1317 = vmatmul.f32.gmra.mxu0 %v68
    %v1318 = vpop.f32.mrf.mxu0
    %v1319 = vadd.f32 %v1254, %v1318
    %1320 = vmatmul.f32.gmra.mxu0 %v86
    %v1321 = vpop.f32.mrf.mxu0
    %v1322 = vadd.f32 %v1257, %v1321
    %1323 = vmatmul.f32.gmra.mxu0 %v104
    %v1324 = vpop.f32.mrf.mxu0
    %v1325 = vadd.f32 %v1260, %v1324
    %1326 = vmatmul.f32.gmra.mxu0 %v122
    %v1327 = vpop.f32.mrf.mxu0
    %v1328 = vadd.f32 %v1263, %v1327
    %1329 = vmatmul.f32.gmra.mxu0 %v140
    %v1330 = vpop.f32.mrf.mxu0
    %v1331 = vadd.f32 %v1266, %v1330
    %1332 = vmatmul.f32.gmra.mxu0 %v158
    %v1333 = vpop.f32.mrf.mxu0
    %v1334 = vadd.f32 %v1269, %v1333
    %1335 = vmatmul.f32.gmra.mxu0 %v176
    %v1336 = vpop.f32.mrf.mxu0
    %v1337 = vadd.f32 %v1272, %v1336
    %1338 = vmatmul.f32.gmra.mxu0 %v194
    %v1339 = vpop.f32.mrf.mxu0
    %v1340 = vadd.f32 %v1275, %v1339
    %1341 = vmatmul.f32.gmra.mxu0 %v212
    %v1342 = vpop.f32.mrf.mxu0
    %v1343 = vadd.f32 %v1278, %v1342
    %1344 = vmatmul.f32.gmra.mxu0 %v230
    %v1345 = vpop.f32.mrf.mxu0
    %v1346 = vadd.f32 %v1281, %v1345
    %1347 = vmatmul.f32.gmra.mxu0 %v248
    %v1348 = vpop.f32.mrf.mxu0
    %v1349 = vadd.f32 %v1284, %v1348
    %1350 = vmatmul.f32.gmra.mxu0 %v266
    %v1351 = vpop.f32.mrf.mxu0
    %v1352 = vadd.f32 %v1287, %v1351
    %1353 = vmatmul.f32.gmra.mxu0 %v284
    %v1354 = vpop.f32.mrf.mxu0
    %v1355 = vadd.f32 %v1290, %v1354
    %1356 = vmatmul.f32.gmra.mxu0 %v302
    %v1357 = vpop.f32.mrf.mxu0
    %v1358 = vadd.f32 %v1293, %v1357
    %1359 = vmatmul.f32.gmra.mxu0 %v320
    %v1360 = vpop.f32.mrf.mxu0
    %v1361 = vadd.f32 %v1296, %v1360
    %1362 = vdwg.mxu0
    %1363 = vmatpush.msra.mxu0 %v586
    %1364 = vmatpush.msra.mxu0 %v584
    %1365 = vmatpush.msra.mxu0 %v582
    %1366 = vmatpush.msra.mxu0 %v580
    %1367 = vmatpush.msra.mxu0 %v578
    %1368 = vmatpush.msra.mxu0 %v576
    %1369 = vmatpush.msra.mxu0 %v574
    %1370 = vmatpush.msra.mxu0 %v572
    %1371 = vmatpush.msra.mxu0 %v570
    %1372 = vmatpush.msra.mxu0 %v568
    %1373 = vmatpush.msra.mxu0 %v566
    %1374 = vmatpush.msra.mxu0 %v564
    %1375 = vmatpush.msra.mxu0 %v562
    %1376 = vmatpush.msra.mxu0 %v560
    %1377 = vmatpush.msra.mxu0 %v558
    %1378 = vmatpush.msra.mxu0 %v556
    %1379 = vmatmul.f32.gmra.mxu0 %v51
    %v1380 = vpop.f32.mrf.mxu0
    %v1381 = vadd.f32 %v1316, %v1380
    %1382 = vmatmul.f32.gmra.mxu0 %v69
    %v1383 = vpop.f32.mrf.mxu0
    %v1384 = vadd.f32 %v1319, %v1383
    %1385 = vmatmul.f32.gmra.mxu0 %v87
    %v1386 = vpop.f32.mrf.mxu0
    %v1387 = vadd.f32 %v1322, %v1386
    %1388 = vmatmul.f32.gmra.mxu0 %v105
    %v1389 = vpop.f32.mrf.mxu0
    %v1390 = vadd.f32 %v1325, %v1389
    %1391 = vmatmul.f32.gmra.mxu0 %v123
    %v1392 = vpop.f32.mrf.mxu0
    %v1393 = vadd.f32 %v1328, %v1392
    %1394 = vmatmul.f32.gmra.mxu0 %v141
    %v1395 = vpop.f32.mrf.mxu0
    %v1396 = vadd.f32 %v1331, %v1395
    %1397 = vmatmul.f32.gmra.mxu0 %v159
    %v1398 = vpop.f32.mrf.mxu0
    %v1399 = vadd.f32 %v1334, %v1398
    %1400 = vmatmul.f32.gmra.mxu0 %v177
    %v1401 = vpop.f32.mrf.mxu0
    %v1402 = vadd.f32 %v1337, %v1401
    %1403 = vmatmul.f32.gmra.mxu0 %v195
    %v1404 = vpop.f32.mrf.mxu0
    %v1405 = vadd.f32 %v1340, %v1404
    %1406 = vmatmul.f32.gmra.mxu0 %v213
    %v1407 = vpop.f32.mrf.mxu0
    %v1408 = vadd.f32 %v1343, %v1407
    %1409 = vmatmul.f32.gmra.mxu0 %v231
    %v1410 = vpop.f32.mrf.mxu0
    %v1411 = vadd.f32 %v1346, %v1410
    %1412 = vmatmul.f32.gmra.mxu0 %v249
    %v1413 = vpop.f32.mrf.mxu0
    %v1414 = vadd.f32 %v1349, %v1413
    %1415 = vmatmul.f32.gmra.mxu0 %v267
    %v1416 = vpop.f32.mrf.mxu0
    %v1417 = vadd.f32 %v1352, %v1416
    %1418 = vmatmul.f32.gmra.mxu0 %v285
    %v1419 = vpop.f32.mrf.mxu0
    %v1420 = vadd.f32 %v1355, %v1419
    %1421 = vmatmul.f32.gmra.mxu0 %v303
    %v1422 = vpop.f32.mrf.mxu0
    %v1423 = vadd.f32 %v1358, %v1422
    %1424 = vmatmul.f32.gmra.mxu0 %v321
    %v1425 = vpop.f32.mrf.mxu0
    %v1426 = vadd.f32 %v1361, %v1425
    %1427 = vdwg.mxu0
    %1428 = vmatpush.msra.mxu0 %v618
    %1429 = vmatpush.msra.mxu0 %v616
    %1430 = vmatpush.msra.mxu0 %v614
    %1431 = vmatpush.msra.mxu0 %v612
    %1432 = vmatpush.msra.mxu0 %v610
    %1433 = vmatpush.msra.mxu0 %v608
    %1434 = vmatpush.msra.mxu0 %v606
    %1435 = vmatpush.msra.mxu0 %v604
    %1436 = vmatpush.msra.mxu0 %v602
    %1437 = vmatpush.msra.mxu0 %v600
    %1438 = vmatpush.msra.mxu0 %v598
    %1439 = vmatpush.msra.mxu0 %v596
    %1440 = vmatpush.msra.mxu0 %v594
    %1441 = vmatpush.msra.mxu0 %v592
    %1442 = vmatpush.msra.mxu0 %v590
    %1443 = vmatpush.msra.mxu0 %v588
    %1444 = vmatmul.f32.gmra.mxu0 %v52
    %v1445 = vpop.f32.mrf.mxu0
    %v1446 = vadd.f32 %v1381, %v1445
    %1447 = vmatmul.f32.gmra.mxu0 %v70
    %v1448 = vpop.f32.mrf.mxu0
    %v1449 = vadd.f32 %v1384, %v1448
    %1450 = vmatmul.f32.gmra.mxu0 %v88
    %v1451 = vpop.f32.mrf.mxu0
    %v1452 = vadd.f32 %v1387, %v1451
    %1453 = vmatmul.f32.gmra.mxu0 %v106
    %v1454 = vpop.f32.mrf.mxu0
    %v1455 = vadd.f32 %v1390, %v1454
    %1456 = vmatmul.f32.gmra.mxu0 %v124
    %v1457 = vpop.f32.mrf.mxu0
    %v1458 = vadd.f32 %v1393, %v1457
    %1459 = vmatmul.f32.gmra.mxu0 %v142
    %v1460 = vpop.f32.mrf.mxu0
    %v1461 = vadd.f32 %v1396, %v1460
    %1462 = vmatmul.f32.gmra.mxu0 %v160
    %v1463 = vpop.f32.mrf.mxu0
    %v1464 = vadd.f32 %v1399, %v1463
    %1465 = vmatmul.f32.gmra.mxu0 %v178
    %v1466 = vpop.f32.mrf.mxu0
    %v1467 = vadd.f32 %v1402, %v1466
    %1468 = vmatmul.f32.gmra.mxu0 %v196
    %v1469 = vpop.f32.mrf.mxu0
    %v1470 = vadd.f32 %v1405, %v1469
    %1471 = vmatmul.f32.gmra.mxu0 %v214
    %v1472 = vpop.f32.mrf.mxu0
    %v1473 = vadd.f32 %v1408, %v1472
    %1474 = vmatmul.f32.gmra.mxu0 %v232
    %v1475 = vpop.f32.mrf.mxu0
    %v1476 = vadd.f32 %v1411, %v1475
    %1477 = vmatmul.f32.gmra.mxu0 %v250
    %v1478 = vpop.f32.mrf.mxu0
    %v1479 = vadd.f32 %v1414, %v1478
    %1480 = vmatmul.f32.gmra.mxu0 %v268
    %v1481 = vpop.f32.mrf.mxu0
    %v1482 = vadd.f32 %v1417, %v1481
    %1483 = vmatmul.f32.gmra.mxu0 %v286
    %v1484 = vpop.f32.mrf.mxu0
    %v1485 = vadd.f32 %v1420, %v1484
    %1486 = vmatmul.f32.gmra.mxu0 %v304
    %v1487 = vpop.f32.mrf.mxu0
    %v1488 = vadd.f32 %v1423, %v1487
    %1489 = vmatmul.f32.gmra.mxu0 %v322
    %v1490 = vpop.f32.mrf.mxu0
    %v1491 = vadd.f32 %v1426, %v1490
    %1492 = vdwg.mxu0
    %1493 = vmatpush.msra.mxu0 %v650
    %1494 = vmatpush.msra.mxu0 %v648
    %1495 = vmatpush.msra.mxu0 %v646
    %1496 = vmatpush.msra.mxu0 %v644
    %1497 = vmatpush.msra.mxu0 %v642
    %1498 = vmatpush.msra.mxu0 %v640
    %1499 = vmatpush.msra.mxu0 %v638
    %1500 = vmatpush.msra.mxu0 %v636
    %1501 = vmatpush.msra.mxu0 %v634
    %1502 = vmatpush.msra.mxu0 %v632
    %1503 = vmatpush.msra.mxu0 %v630
    %1504 = vmatpush.msra.mxu0 %v628
    %1505 = vmatpush.msra.mxu0 %v626
    %1506 = vmatpush.msra.mxu0 %v624
    %1507 = vmatpush.msra.mxu0 %v622
    %1508 = vmatpush.msra.mxu0 %v620
    %1509 = vmatmul.f32.gmra.mxu0 %v53
    %v1510 = vpop.f32.mrf.mxu0
    %v1511 = vadd.f32 %v1446, %v1510
    %1512 = vmatmul.f32.gmra.mxu0 %v71
    %v1513 = vpop.f32.mrf.mxu0
    %v1514 = vadd.f32 %v1449, %v1513
    %1515 = vmatmul.f32.gmra.mxu0 %v89
    %v1516 = vpop.f32.mrf.mxu0
    %v1517 = vadd.f32 %v1452, %v1516
    %1518 = vmatmul.f32.gmra.mxu0 %v107
    %v1519 = vpop.f32.mrf.mxu0
    %v1520 = vadd.f32 %v1455, %v1519
    %1521 = vmatmul.f32.gmra.mxu0 %v125
    %v1522 = vpop.f32.mrf.mxu0
    %v1523 = vadd.f32 %v1458, %v1522
    %1524 = vmatmul.f32.gmra.mxu0 %v143
    %v1525 = vpop.f32.mrf.mxu0
    %v1526 = vadd.f32 %v1461, %v1525
    %1527 = vmatmul.f32.gmra.mxu0 %v161
    %v1528 = vpop.f32.mrf.mxu0
    %v1529 = vadd.f32 %v1464, %v1528
    %1530 = vmatmul.f32.gmra.mxu0 %v179
    %v1531 = vpop.f32.mrf.mxu0
    %v1532 = vadd.f32 %v1467, %v1531
    %1533 = vmatmul.f32.gmra.mxu0 %v197
    %v1534 = vpop.f32.mrf.mxu0
    %v1535 = vadd.f32 %v1470, %v1534
    %1536 = vmatmul.f32.gmra.mxu0 %v215
    %v1537 = vpop.f32.mrf.mxu0
    %v1538 = vadd.f32 %v1473, %v1537
    %1539 = vmatmul.f32.gmra.mxu0 %v233
    %v1540 = vpop.f32.mrf.mxu0
    %v1541 = vadd.f32 %v1476, %v1540
    %1542 = vmatmul.f32.gmra.mxu0 %v251
    %v1543 = vpop.f32.mrf.mxu0
    %v1544 = vadd.f32 %v1479, %v1543
    %1545 = vmatmul.f32.gmra.mxu0 %v269
    %v1546 = vpop.f32.mrf.mxu0
    %v1547 = vadd.f32 %v1482, %v1546
    %1548 = vmatmul.f32.gmra.mxu0 %v287
    %v1549 = vpop.f32.mrf.mxu0
    %v1550 = vadd.f32 %v1485, %v1549
    %1551 = vmatmul.f32.gmra.mxu0 %v305
    %v1552 = vpop.f32.mrf.mxu0
    %v1553 = vadd.f32 %v1488, %v1552
    %1554 = vmatmul.f32.gmra.mxu0 %v323
    %v1555 = vpop.f32.mrf.mxu0
    %v1556 = vadd.f32 %v1491, %v1555
    %1557 = vdwg.mxu0
    %1558 = vmatpush.msra.mxu0 %v682
    %1559 = vmatpush.msra.mxu0 %v680
    %1560 = vmatpush.msra.mxu0 %v678
    %1561 = vmatpush.msra.mxu0 %v676
    %1562 = vmatpush.msra.mxu0 %v674
    %1563 = vmatpush.msra.mxu0 %v672
    %1564 = vmatpush.msra.mxu0 %v670
    %1565 = vmatpush.msra.mxu0 %v668
    %1566 = vmatpush.msra.mxu0 %v666
    %1567 = vmatpush.msra.mxu0 %v664
    %1568 = vmatpush.msra.mxu0 %v662
    %1569 = vmatpush.msra.mxu0 %v660
    %1570 = vmatpush.msra.mxu0 %v658
    %1571 = vmatpush.msra.mxu0 %v656
    %1572 = vmatpush.msra.mxu0 %v654
    %1573 = vmatpush.msra.mxu0 %v652
    %1574 = vmatmul.f32.gmra.mxu0 %v54
    %v1575 = vpop.f32.mrf.mxu0
    %v1576 = vadd.f32 %v1511, %v1575
    %1577 = vmatmul.f32.gmra.mxu0 %v72
    %v1578 = vpop.f32.mrf.mxu0
    %v1579 = vadd.f32 %v1514, %v1578
    %1580 = vmatmul.f32.gmra.mxu0 %v90
    %v1581 = vpop.f32.mrf.mxu0
    %v1582 = vadd.f32 %v1517, %v1581
    %1583 = vmatmul.f32.gmra.mxu0 %v108
    %v1584 = vpop.f32.mrf.mxu0
    %v1585 = vadd.f32 %v1520, %v1584
    %1586 = vmatmul.f32.gmra.mxu0 %v126
    %v1587 = vpop.f32.mrf.mxu0
    %v1588 = vadd.f32 %v1523, %v1587
    %1589 = vmatmul.f32.gmra.mxu0 %v144
    %v1590 = vpop.f32.mrf.mxu0
    %v1591 = vadd.f32 %v1526, %v1590
    %1592 = vmatmul.f32.gmra.mxu0 %v162
    %v1593 = vpop.f32.mrf.mxu0
    %v1594 = vadd.f32 %v1529, %v1593
    %1595 = vmatmul.f32.gmra.mxu0 %v180
    %v1596 = vpop.f32.mrf.mxu0
    %v1597 = vadd.f32 %v1532, %v1596
    %1598 = vmatmul.f32.gmra.mxu0 %v198
    %v1599 = vpop.f32.mrf.mxu0
    %v1600 = vadd.f32 %v1535, %v1599
    %1601 = vmatmul.f32.gmra.mxu0 %v216
    %v1602 = vpop.f32.mrf.mxu0
    %v1603 = vadd.f32 %v1538, %v1602
    %1604 = vmatmul.f32.gmra.mxu0 %v234
    %v1605 = vpop.f32.mrf.mxu0
    %v1606 = vadd.f32 %v1541, %v1605
    %1607 = vmatmul.f32.gmra.mxu0 %v252
    %v1608 = vpop.f32.mrf.mxu0
    %v1609 = vadd.f32 %v1544, %v1608
    %1610 = vmatmul.f32.gmra.mxu0 %v270
    %v1611 = vpop.f32.mrf.mxu0
    %v1612 = vadd.f32 %v1547, %v1611
    %1613 = vmatmul.f32.gmra.mxu0 %v288
    %v1614 = vpop.f32.mrf.mxu0
    %v1615 = vadd.f32 %v1550, %v1614
    %1616 = vmatmul.f32.gmra.mxu0 %v306
    %v1617 = vpop.f32.mrf.mxu0
    %v1618 = vadd.f32 %v1553, %v1617
    %1619 = vmatmul.f32.gmra.mxu0 %v324
    %v1620 = vpop.f32.mrf.mxu0
    %v1621 = vadd.f32 %v1556, %v1620
    %1622 = vdwg.mxu0
    %1623 = vmatpush.msra.mxu0 %v714
    %1624 = vmatpush.msra.mxu0 %v712
    %1625 = vmatpush.msra.mxu0 %v710
    %1626 = vmatpush.msra.mxu0 %v708
    %1627 = vmatpush.msra.mxu0 %v706
    %1628 = vmatpush.msra.mxu0 %v704
    %1629 = vmatpush.msra.mxu0 %v702
    %1630 = vmatpush.msra.mxu0 %v700
    %1631 = vmatpush.msra.mxu0 %v698
    %1632 = vmatpush.msra.mxu0 %v696
    %1633 = vmatpush.msra.mxu0 %v694
    %1634 = vmatpush.msra.mxu0 %v692
    %1635 = vmatpush.msra.mxu0 %v690
    %1636 = vmatpush.msra.mxu0 %v688
    %1637 = vmatpush.msra.mxu0 %v686
    %1638 = vmatpush.msra.mxu0 %v684
    %1639 = vmatmul.f32.gmra.mxu0 %v55
    %v1640 = vpop.f32.mrf.mxu0
    %v1641 = vadd.f32 %v1576, %v1640
    %1642 = vmatmul.f32.gmra.mxu0 %v73
    %v1643 = vpop.f32.mrf.mxu0
    %v1644 = vadd.f32 %v1579, %v1643
    %1645 = vmatmul.f32.gmra.mxu0 %v91
    %v1646 = vpop.f32.mrf.mxu0
    %v1647 = vadd.f32 %v1582, %v1646
    %1648 = vmatmul.f32.gmra.mxu0 %v109
    %v1649 = vpop.f32.mrf.mxu0
    %v1650 = vadd.f32 %v1585, %v1649
    %1651 = vmatmul.f32.gmra.mxu0 %v127
    %v1652 = vpop.f32.mrf.mxu0
    %v1653 = vadd.f32 %v1588, %v1652
    %1654 = vmatmul.f32.gmra.mxu0 %v145
    %v1655 = vpop.f32.mrf.mxu0
    %v1656 = vadd.f32 %v1591, %v1655
    %1657 = vmatmul.f32.gmra.mxu0 %v163
    %v1658 = vpop.f32.mrf.mxu0
    %v1659 = vadd.f32 %v1594, %v1658
    %1660 = vmatmul.f32.gmra.mxu0 %v181
    %v1661 = vpop.f32.mrf.mxu0
    %v1662 = vadd.f32 %v1597, %v1661
    %1663 = vmatmul.f32.gmra.mxu0 %v199
    %v1664 = vpop.f32.mrf.mxu0
    %v1665 = vadd.f32 %v1600, %v1664
    %1666 = vmatmul.f32.gmra.mxu0 %v217
    %v1667 = vpop.f32.mrf.mxu0
    %v1668 = vadd.f32 %v1603, %v1667
    %1669 = vmatmul.f32.gmra.mxu0 %v235
    %v1670 = vpop.f32.mrf.mxu0
    %v1671 = vadd.f32 %v1606, %v1670
    %1672 = vmatmul.f32.gmra.mxu0 %v253
    %v1673 = vpop.f32.mrf.mxu0
    %v1674 = vadd.f32 %v1609, %v1673
    %1675 = vmatmul.f32.gmra.mxu0 %v271
    %v1676 = vpop.f32.mrf.mxu0
    %v1677 = vadd.f32 %v1612, %v1676
    %1678 = vmatmul.f32.gmra.mxu0 %v289
    %v1679 = vpop.f32.mrf.mxu0
    %v1680 = vadd.f32 %v1615, %v1679
    %1681 = vmatmul.f32.gmra.mxu0 %v307
    %v1682 = vpop.f32.mrf.mxu0
    %v1683 = vadd.f32 %v1618, %v1682
    %1684 = vmatmul.f32.gmra.mxu0 %v325
    %v1685 = vpop.f32.mrf.mxu0
    %v1686 = vadd.f32 %v1621, %v1685
    %1687 = vdwg.mxu0
    %1688 = vmatpush.msra.mxu0 %v746
    %1689 = vmatpush.msra.mxu0 %v744
    %1690 = vmatpush.msra.mxu0 %v742
    %1691 = vmatpush.msra.mxu0 %v740
    %1692 = vmatpush.msra.mxu0 %v738
    %1693 = vmatpush.msra.mxu0 %v736
    %1694 = vmatpush.msra.mxu0 %v734
    %1695 = vmatpush.msra.mxu0 %v732
    %1696 = vmatpush.msra.mxu0 %v730
    %1697 = vmatpush.msra.mxu0 %v728
    %1698 = vmatpush.msra.mxu0 %v726
    %1699 = vmatpush.msra.mxu0 %v724
    %1700 = vmatpush.msra.mxu0 %v722
    %1701 = vmatpush.msra.mxu0 %v720
    %1702 = vmatpush.msra.mxu0 %v718
    %1703 = vmatpush.msra.mxu0 %v716
    %1704 = vmatmul.f32.gmra.mxu0 %v56
    %v1705 = vpop.f32.mrf.mxu0
    %v1706 = vadd.f32 %v1641, %v1705
    %1707 = vmatmul.f32.gmra.mxu0 %v74
    %v1708 = vpop.f32.mrf.mxu0
    %v1709 = vadd.f32 %v1644, %v1708
    %1710 = vmatmul.f32.gmra.mxu0 %v92
    %v1711 = vpop.f32.mrf.mxu0
    %v1712 = vadd.f32 %v1647, %v1711
    %1713 = vmatmul.f32.gmra.mxu0 %v110
    %v1714 = vpop.f32.mrf.mxu0
    %v1715 = vadd.f32 %v1650, %v1714
    %1716 = vmatmul.f32.gmra.mxu0 %v128
    %v1717 = vpop.f32.mrf.mxu0
    %v1718 = vadd.f32 %v1653, %v1717
    %1719 = vmatmul.f32.gmra.mxu0 %v146
    %v1720 = vpop.f32.mrf.mxu0
    %v1721 = vadd.f32 %v1656, %v1720
    %1722 = vmatmul.f32.gmra.mxu0 %v164
    %v1723 = vpop.f32.mrf.mxu0
    %v1724 = vadd.f32 %v1659, %v1723
    %1725 = vmatmul.f32.gmra.mxu0 %v182
    %v1726 = vpop.f32.mrf.mxu0
    %v1727 = vadd.f32 %v1662, %v1726
    %1728 = vmatmul.f32.gmra.mxu0 %v200
    %v1729 = vpop.f32.mrf.mxu0
    %v1730 = vadd.f32 %v1665, %v1729
    %1731 = vmatmul.f32.gmra.mxu0 %v218
    %v1732 = vpop.f32.mrf.mxu0
    %v1733 = vadd.f32 %v1668, %v1732
    %1734 = vmatmul.f32.gmra.mxu0 %v236
    %v1735 = vpop.f32.mrf.mxu0
    %v1736 = vadd.f32 %v1671, %v1735
    %1737 = vmatmul.f32.gmra.mxu0 %v254
    %v1738 = vpop.f32.mrf.mxu0
    %v1739 = vadd.f32 %v1674, %v1738
    %1740 = vmatmul.f32.gmra.mxu0 %v272
    %v1741 = vpop.f32.mrf.mxu0
    %v1742 = vadd.f32 %v1677, %v1741
    %1743 = vmatmul.f32.gmra.mxu0 %v290
    %v1744 = vpop.f32.mrf.mxu0
    %v1745 = vadd.f32 %v1680, %v1744
    %1746 = vmatmul.f32.gmra.mxu0 %v308
    %v1747 = vpop.f32.mrf.mxu0
    %v1748 = vadd.f32 %v1683, %v1747
    %1749 = vmatmul.f32.gmra.mxu0 %v326
    %v1750 = vpop.f32.mrf.mxu0
    %v1751 = vadd.f32 %v1686, %v1750
    %1752 = vdwg.mxu0
    %1753 = vmatpush.msra.mxu0 %v778
    %1754 = vmatpush.msra.mxu0 %v776
    %1755 = vmatpush.msra.mxu0 %v774
    %1756 = vmatpush.msra.mxu0 %v772
    %1757 = vmatpush.msra.mxu0 %v770
    %1758 = vmatpush.msra.mxu0 %v768
    %1759 = vmatpush.msra.mxu0 %v766
    %1760 = vmatpush.msra.mxu0 %v764
    %1761 = vmatpush.msra.mxu0 %v762
    %1762 = vmatpush.msra.mxu0 %v760
    %1763 = vmatpush.msra.mxu0 %v758
    %1764 = vmatpush.msra.mxu0 %v756
    %1765 = vmatpush.msra.mxu0 %v754
    %1766 = vmatpush.msra.mxu0 %v752
    %1767 = vmatpush.msra.mxu0 %v750
    %1768 = vmatpush.msra.mxu0 %v748
    %1769 = vmatmul.f32.gmra.mxu0 %v57
    %v1770 = vpop.f32.mrf.mxu0
    %v1771 = vadd.f32 %v1706, %v1770
    %1772 = vmatmul.f32.gmra.mxu0 %v75
    %v1773 = vpop.f32.mrf.mxu0
    %v1774 = vadd.f32 %v1709, %v1773
    %1775 = vmatmul.f32.gmra.mxu0 %v93
    %v1776 = vpop.f32.mrf.mxu0
    %v1777 = vadd.f32 %v1712, %v1776
    %1778 = vmatmul.f32.gmra.mxu0 %v111
    %v1779 = vpop.f32.mrf.mxu0
    %v1780 = vadd.f32 %v1715, %v1779
    %1781 = vmatmul.f32.gmra.mxu0 %v129
    %v1782 = vpop.f32.mrf.mxu0
    %v1783 = vadd.f32 %v1718, %v1782
    %1784 = vmatmul.f32.gmra.mxu0 %v147
    %v1785 = vpop.f32.mrf.mxu0
    %v1786 = vadd.f32 %v1721, %v1785
    %1787 = vmatmul.f32.gmra.mxu0 %v165
    %v1788 = vpop.f32.mrf.mxu0
    %v1789 = vadd.f32 %v1724, %v1788
    %1790 = vmatmul.f32.gmra.mxu0 %v183
    %v1791 = vpop.f32.mrf.mxu0
    %v1792 = vadd.f32 %v1727, %v1791
    %1793 = vmatmul.f32.gmra.mxu0 %v201
    %v1794 = vpop.f32.mrf.mxu0
    %v1795 = vadd.f32 %v1730, %v1794
    %1796 = vmatmul.f32.gmra.mxu0 %v219
    %v1797 = vpop.f32.mrf.mxu0
    %v1798 = vadd.f32 %v1733, %v1797
    %1799 = vmatmul.f32.gmra.mxu0 %v237
    %v1800 = vpop.f32.mrf.mxu0
    %v1801 = vadd.f32 %v1736, %v1800
    %1802 = vmatmul.f32.gmra.mxu0 %v255
    %v1803 = vpop.f32.mrf.mxu0
    %v1804 = vadd.f32 %v1739, %v1803
    %1805 = vmatmul.f32.gmra.mxu0 %v273
    %v1806 = vpop.f32.mrf.mxu0
    %v1807 = vadd.f32 %v1742, %v1806
    %1808 = vmatmul.f32.gmra.mxu0 %v291
    %v1809 = vpop.f32.mrf.mxu0
    %v1810 = vadd.f32 %v1745, %v1809
    %1811 = vmatmul.f32.gmra.mxu0 %v309
    %v1812 = vpop.f32.mrf.mxu0
    %v1813 = vadd.f32 %v1748, %v1812
    %1814 = vmatmul.f32.gmra.mxu0 %v327
    %v1815 = vpop.f32.mrf.mxu0
    %v1816 = vadd.f32 %v1751, %v1815
    %1817 = vdwg.mxu0
    %1818 = vmatpush.msra.mxu0 %v810
    %1819 = vmatpush.msra.mxu0 %v808
    %1820 = vmatpush.msra.mxu0 %v806
    %1821 = vmatpush.msra.mxu0 %v804
    %1822 = vmatpush.msra.mxu0 %v802
    %1823 = vmatpush.msra.mxu0 %v800
    %1824 = vmatpush.msra.mxu0 %v798
    %1825 = vmatpush.msra.mxu0 %v796
    %1826 = vmatpush.msra.mxu0 %v794
    %1827 = vmatpush.msra.mxu0 %v792
    %1828 = vmatpush.msra.mxu0 %v790
    %1829 = vmatpush.msra.mxu0 %v788
    %1830 = vmatpush.msra.mxu0 %v786
    %1831 = vmatpush.msra.mxu0 %v784
    %1832 = vmatpush.msra.mxu0 %v782
    %1833 = vmatpush.msra.mxu0 %v780
    %1834 = vmatmul.f32.gmra.mxu0 %v58
    %v1835 = vpop.f32.mrf.mxu0
    %v1836 = vadd.f32 %v1771, %v1835
    %1837 = vmatmul.f32.gmra.mxu0 %v76
    %v1838 = vpop.f32.mrf.mxu0
    %v1839 = vadd.f32 %v1774, %v1838
    %1840 = vmatmul.f32.gmra.mxu0 %v94
    %v1841 = vpop.f32.mrf.mxu0
    %v1842 = vadd.f32 %v1777, %v1841
    %1843 = vmatmul.f32.gmra.mxu0 %v112
    %v1844 = vpop.f32.mrf.mxu0
    %v1845 = vadd.f32 %v1780, %v1844
    %1846 = vmatmul.f32.gmra.mxu0 %v130
    %v1847 = vpop.f32.mrf.mxu0
    %v1848 = vadd.f32 %v1783, %v1847
    %1849 = vmatmul.f32.gmra.mxu0 %v148
    %v1850 = vpop.f32.mrf.mxu0
    %v1851 = vadd.f32 %v1786, %v1850
    %1852 = vmatmul.f32.gmra.mxu0 %v166
    %v1853 = vpop.f32.mrf.mxu0
    %v1854 = vadd.f32 %v1789, %v1853
    %1855 = vmatmul.f32.gmra.mxu0 %v184
    %v1856 = vpop.f32.mrf.mxu0
    %v1857 = vadd.f32 %v1792, %v1856
    %1858 = vmatmul.f32.gmra.mxu0 %v202
    %v1859 = vpop.f32.mrf.mxu0
    %v1860 = vadd.f32 %v1795, %v1859
    %1861 = vmatmul.f32.gmra.mxu0 %v220
    %v1862 = vpop.f32.mrf.mxu0
    %v1863 = vadd.f32 %v1798, %v1862
    %1864 = vmatmul.f32.gmra.mxu0 %v238
    %v1865 = vpop.f32.mrf.mxu0
    %v1866 = vadd.f32 %v1801, %v1865
    %1867 = vmatmul.f32.gmra.mxu0 %v256
    %v1868 = vpop.f32.mrf.mxu0
    %v1869 = vadd.f32 %v1804, %v1868
    %1870 = vmatmul.f32.gmra.mxu0 %v274
    %v1871 = vpop.f32.mrf.mxu0
    %v1872 = vadd.f32 %v1807, %v1871
    %1873 = vmatmul.f32.gmra.mxu0 %v292
    %v1874 = vpop.f32.mrf.mxu0
    %v1875 = vadd.f32 %v1810, %v1874
    %1876 = vmatmul.f32.gmra.mxu0 %v310
    %v1877 = vpop.f32.mrf.mxu0
    %v1878 = vadd.f32 %v1813, %v1877
    %1879 = vmatmul.f32.gmra.mxu0 %v328
    %v1880 = vpop.f32.mrf.mxu0
    %v1881 = vadd.f32 %v1816, %v1880
    %1882 = vdwg.mxu0
    %1883 = vmatpush.msra.mxu0 %v842
    %1884 = vmatpush.msra.mxu0 %v840
    %1885 = vmatpush.msra.mxu0 %v838
    %1886 = vmatpush.msra.mxu0 %v836
    %1887 = vmatpush.msra.mxu0 %v834
    %1888 = vmatpush.msra.mxu0 %v832
    %1889 = vmatpush.msra.mxu0 %v830
    %1890 = vmatpush.msra.mxu0 %v828
    %1891 = vmatpush.msra.mxu0 %v826
    %1892 = vmatpush.msra.mxu0 %v824
    %1893 = vmatpush.msra.mxu0 %v822
    %1894 = vmatpush.msra.mxu0 %v820
    %1895 = vmatpush.msra.mxu0 %v818
    %1896 = vmatpush.msra.mxu0 %v816
    %1897 = vmatpush.msra.mxu0 %v814
    %1898 = vmatpush.msra.mxu0 %v812
    %1899 = vmatmul.f32.gmra.mxu0 %v59
    %v1900 = vpop.f32.mrf.mxu0
    %v1901 = vadd.f32 %v1836, %v1900
    %1902 = vmatmul.f32.gmra.mxu0 %v77
    %v1903 = vpop.f32.mrf.mxu0
    %v1904 = vadd.f32 %v1839, %v1903
    %1905 = vmatmul.f32.gmra.mxu0 %v95
    %v1906 = vpop.f32.mrf.mxu0
    %v1907 = vadd.f32 %v1842, %v1906
    %1908 = vmatmul.f32.gmra.mxu0 %v113
    %v1909 = vpop.f32.mrf.mxu0
    %v1910 = vadd.f32 %v1845, %v1909
    %1911 = vmatmul.f32.gmra.mxu0 %v131
    %v1912 = vpop.f32.mrf.mxu0
    %v1913 = vadd.f32 %v1848, %v1912
    %1914 = vmatmul.f32.gmra.mxu0 %v149
    %v1915 = vpop.f32.mrf.mxu0
    %v1916 = vadd.f32 %v1851, %v1915
    %1917 = vmatmul.f32.gmra.mxu0 %v167
    %v1918 = vpop.f32.mrf.mxu0
    %v1919 = vadd.f32 %v1854, %v1918
    %1920 = vmatmul.f32.gmra.mxu0 %v185
    %v1921 = vpop.f32.mrf.mxu0
    %v1922 = vadd.f32 %v1857, %v1921
    %1923 = vmatmul.f32.gmra.mxu0 %v203
    %v1924 = vpop.f32.mrf.mxu0
    %v1925 = vadd.f32 %v1860, %v1924
    %1926 = vmatmul.f32.gmra.mxu0 %v221
    %v1927 = vpop.f32.mrf.mxu0
    %v1928 = vadd.f32 %v1863, %v1927
    %1929 = vmatmul.f32.gmra.mxu0 %v239
    %v1930 = vpop.f32.mrf.mxu0
    %v1931 = vadd.f32 %v1866, %v1930
    %1932 = vmatmul.f32.gmra.mxu0 %v257
    %v1933 = vpop.f32.mrf.mxu0
    %v1934 = vadd.f32 %v1869, %v1933
    %1935 = vmatmul.f32.gmra.mxu0 %v275
    %v1936 = vpop.f32.mrf.mxu0
    %v1937 = vadd.f32 %v1872, %v1936
    %1938 = vmatmul.f32.gmra.mxu0 %v293
    %v1939 = vpop.f32.mrf.mxu0
    %v1940 = vadd.f32 %v1875, %v1939
    %1941 = vmatmul.f32.gmra.mxu0 %v311
    %v1942 = vpop.f32.mrf.mxu0
    %v1943 = vadd.f32 %v1878, %v1942
    %1944 = vmatmul.f32.gmra.mxu0 %v329
    %v1945 = vpop.f32.mrf.mxu0
    %v1946 = vadd.f32 %v1881, %v1945
    %1947 = vdwg.mxu0
    %1948 = vmatpush.msra.mxu0 %v874
    %1949 = vmatpush.msra.mxu0 %v872
    %1950 = vmatpush.msra.mxu0 %v870
    %1951 = vmatpush.msra.mxu0 %v868
    %1952 = vmatpush.msra.mxu0 %v866
    %1953 = vmatpush.msra.mxu0 %v864
    %1954 = vmatpush.msra.mxu0 %v862
    %1955 = vmatpush.msra.mxu0 %v860
    %1956 = vmatpush.msra.mxu0 %v858
    %1957 = vmatpush.msra.mxu0 %v856
    %1958 = vmatpush.msra.mxu0 %v854
    %1959 = vmatpush.msra.mxu0 %v852
    %1960 = vmatpush.msra.mxu0 %v850
    %1961 = vmatpush.msra.mxu0 %v848
    %1962 = vmatpush.msra.mxu0 %v846
    %1963 = vmatpush.msra.mxu0 %v844
    %1964 = vmatmul.f32.gmra.mxu0 %v60
    %v1965 = vpop.f32.mrf.mxu0
    %v1966 = vadd.f32 %v1901, %v1965
    %1967 = vmatmul.f32.gmra.mxu0 %v78
    %v1968 = vpop.f32.mrf.mxu0
    %v1969 = vadd.f32 %v1904, %v1968
    %1970 = vmatmul.f32.gmra.mxu0 %v96
    %v1971 = vpop.f32.mrf.mxu0
    %v1972 = vadd.f32 %v1907, %v1971
    %1973 = vmatmul.f32.gmra.mxu0 %v114
    %v1974 = vpop.f32.mrf.mxu0
    %v1975 = vadd.f32 %v1910, %v1974
    %1976 = vmatmul.f32.gmra.mxu0 %v132
    %v1977 = vpop.f32.mrf.mxu0
    %v1978 = vadd.f32 %v1913, %v1977
    %1979 = vmatmul.f32.gmra.mxu0 %v150
    %v1980 = vpop.f32.mrf.mxu0
    %v1981 = vadd.f32 %v1916, %v1980
    %1982 = vmatmul.f32.gmra.mxu0 %v168
    %v1983 = vpop.f32.mrf.mxu0
    %v1984 = vadd.f32 %v1919, %v1983
    %1985 = vmatmul.f32.gmra.mxu0 %v186
    %v1986 = vpop.f32.mrf.mxu0
    %v1987 = vadd.f32 %v1922, %v1986
    %1988 = vmatmul.f32.gmra.mxu0 %v204
    %v1989 = vpop.f32.mrf.mxu0
    %v1990 = vadd.f32 %v1925, %v1989
    %1991 = vmatmul.f32.gmra.mxu0 %v222
    %v1992 = vpop.f32.mrf.mxu0
    %v1993 = vadd.f32 %v1928, %v1992
    %1994 = vmatmul.f32.gmra.mxu0 %v240
    %v1995 = vpop.f32.mrf.mxu0
    %v1996 = vadd.f32 %v1931, %v1995
    %1997 = vmatmul.f32.gmra.mxu0 %v258
    %v1998 = vpop.f32.mrf.mxu0
    %v1999 = vadd.f32 %v1934, %v1998
    %2000 = vmatmul.f32.gmra.mxu0 %v276
    %v2001 = vpop.f32.mrf.mxu0
    %v2002 = vadd.f32 %v1937, %v2001
    %2003 = vmatmul.f32.gmra.mxu0 %v294
    %v2004 = vpop.f32.mrf.mxu0
    %v2005 = vadd.f32 %v1940, %v2004
    %2006 = vmatmul.f32.gmra.mxu0 %v312
    %v2007 = vpop.f32.mrf.mxu0
    %v2008 = vadd.f32 %v1943, %v2007
    %2009 = vmatmul.f32.gmra.mxu0 %v330
    %v2010 = vpop.f32.mrf.mxu0
    %v2011 = vadd.f32 %v1946, %v2010
    %2012 = vdwg.mxu0
    %2013 = vmatpush.msra.mxu0 %v906
    %2014 = vmatpush.msra.mxu0 %v904
    %2015 = vmatpush.msra.mxu0 %v902
    %2016 = vmatpush.msra.mxu0 %v900
    %2017 = vmatpush.msra.mxu0 %v898
    %2018 = vmatpush.msra.mxu0 %v896
    %2019 = vmatpush.msra.mxu0 %v894
    %2020 = vmatpush.msra.mxu0 %v892
    %2021 = vmatpush.msra.mxu0 %v890
    %2022 = vmatpush.msra.mxu0 %v888
    %2023 = vmatpush.msra.mxu0 %v886
    %2024 = vmatpush.msra.mxu0 %v884
    %2025 = vmatpush.msra.mxu0 %v882
    %2026 = vmatpush.msra.mxu0 %v880
    %2027 = vmatpush.msra.mxu0 %v878
    %2028 = vmatpush.msra.mxu0 %v876
    %2029 = vmatmul.f32.gmra.mxu0 %v61
    %v2030 = vpop.f32.mrf.mxu0
    %v2031 = vadd.f32 %v1966, %v2030
    %2032 = vmatmul.f32.gmra.mxu0 %v79
    %v2033 = vpop.f32.mrf.mxu0
    %v2034 = vadd.f32 %v1969, %v2033
    %2035 = vmatmul.f32.gmra.mxu0 %v97
    %v2036 = vpop.f32.mrf.mxu0
    %v2037 = vadd.f32 %v1972, %v2036
    %2038 = vmatmul.f32.gmra.mxu0 %v115
    %v2039 = vpop.f32.mrf.mxu0
    %v2040 = vadd.f32 %v1975, %v2039
    %2041 = vmatmul.f32.gmra.mxu0 %v133
    %v2042 = vpop.f32.mrf.mxu0
    %v2043 = vadd.f32 %v1978, %v2042
    %2044 = vmatmul.f32.gmra.mxu0 %v151
    %v2045 = vpop.f32.mrf.mxu0
    %v2046 = vadd.f32 %v1981, %v2045
    %2047 = vmatmul.f32.gmra.mxu0 %v169
    %v2048 = vpop.f32.mrf.mxu0
    %v2049 = vadd.f32 %v1984, %v2048
    %2050 = vmatmul.f32.gmra.mxu0 %v187
    %v2051 = vpop.f32.mrf.mxu0
    %v2052 = vadd.f32 %v1987, %v2051
    %2053 = vmatmul.f32.gmra.mxu0 %v205
    %v2054 = vpop.f32.mrf.mxu0
    %v2055 = vadd.f32 %v1990, %v2054
    %2056 = vmatmul.f32.gmra.mxu0 %v223
    %v2057 = vpop.f32.mrf.mxu0
    %v2058 = vadd.f32 %v1993, %v2057
    %2059 = vmatmul.f32.gmra.mxu0 %v241
    %v2060 = vpop.f32.mrf.mxu0
    %v2061 = vadd.f32 %v1996, %v2060
    %2062 = vmatmul.f32.gmra.mxu0 %v259
    %v2063 = vpop.f32.mrf.mxu0
    %v2064 = vadd.f32 %v1999, %v2063
    %2065 = vmatmul.f32.gmra.mxu0 %v277
    %v2066 = vpop.f32.mrf.mxu0
    %v2067 = vadd.f32 %v2002, %v2066
    %2068 = vmatmul.f32.gmra.mxu0 %v295
    %v2069 = vpop.f32.mrf.mxu0
    %v2070 = vadd.f32 %v2005, %v2069
    %2071 = vmatmul.f32.gmra.mxu0 %v313
    %v2072 = vpop.f32.mrf.mxu0
    %v2073 = vadd.f32 %v2008, %v2072
    %2074 = vmatmul.f32.gmra.mxu0 %v331
    %v2075 = vpop.f32.mrf.mxu0
    %v2076 = vadd.f32 %v2011, %v2075
    %2077 = vdwg.mxu0
    %2078 = vmatpush.msra.mxu0 %v363
    %2079 = vmatpush.msra.mxu0 %v361
    %2080 = vmatpush.msra.mxu0 %v359
    %2081 = vmatpush.msra.mxu0 %v357
    %2082 = vmatpush.msra.mxu0 %v355
    %2083 = vmatpush.msra.mxu0 %v353
    %2084 = vmatpush.msra.mxu0 %v351
    %2085 = vmatpush.msra.mxu0 %v349
    %2086 = vmatpush.msra.mxu0 %v347
    %2087 = vmatpush.msra.mxu0 %v345
    %2088 = vmatpush.msra.mxu0 %v343
    %2089 = vmatpush.msra.mxu0 %v341
    %2090 = vmatpush.msra.mxu0 %v339
    %2091 = vmatpush.msra.mxu0 %v337
    %2092 = vmatpush.msra.mxu0 %v335
    %2093 = vmatpush.msra.mxu0 %v333
    %2094 = vmatmul.f32.gmra.mxu0 %v44
    %v2095 = vpop.f32.mrf.mxu0
    %v2096 = vadd.f32 0.0, %v2095
    %2097 = vmatmul.f32.gmra.mxu0 %v62
    %v2098 = vpop.f32.mrf.mxu0
    %v2099 = vadd.f32 0.0, %v2098
    %2100 = vmatmul.f32.gmra.mxu0 %v80
    %v2101 = vpop.f32.mrf.mxu0
    %v2102 = vadd.f32 0.0, %v2101
    %2103 = vmatmul.f32.gmra.mxu0 %v98
    %v2104 = vpop.f32.mrf.mxu0
    %v2105 = vadd.f32 0.0, %v2104
    %2106 = vmatmul.f32.gmra.mxu0 %v116
    %v2107 = vpop.f32.mrf.mxu0
    %v2108 = vadd.f32 0.0, %v2107
    %2109 = vmatmul.f32.gmra.mxu0 %v134
    %v2110 = vpop.f32.mrf.mxu0
    %v2111 = vadd.f32 0.0, %v2110
    %2112 = vmatmul.f32.gmra.mxu0 %v152
    %v2113 = vpop.f32.mrf.mxu0
    %v2114 = vadd.f32 0.0, %v2113
    %2115 = vmatmul.f32.gmra.mxu0 %v170
    %v2116 = vpop.f32.mrf.mxu0
    %v2117 = vadd.f32 0.0, %v2116
    %2118 = vmatmul.f32.gmra.mxu0 %v188
    %v2119 = vpop.f32.mrf.mxu0
    %v2120 = vadd.f32 0.0, %v2119
    %2121 = vmatmul.f32.gmra.mxu0 %v206
    %v2122 = vpop.f32.mrf.mxu0
    %v2123 = vadd.f32 0.0, %v2122
    %2124 = vmatmul.f32.gmra.mxu0 %v224
    %v2125 = vpop.f32.mrf.mxu0
    %v2126 = vadd.f32 0.0, %v2125
    %2127 = vmatmul.f32.gmra.mxu0 %v242
    %v2128 = vpop.f32.mrf.mxu0
    %v2129 = vadd.f32 0.0, %v2128
    %2130 = vmatmul.f32.gmra.mxu0 %v260
    %v2131 = vpop.f32.mrf.mxu0
    %v2132 = vadd.f32 0.0, %v2131
    %2133 = vmatmul.f32.gmra.mxu0 %v278
    %v2134 = vpop.f32.mrf.mxu0
    %v2135 = vadd.f32 0.0, %v2134
    %2136 = vmatmul.f32.gmra.mxu0 %v296
    %v2137 = vpop.f32.mrf.mxu0
    %v2138 = vadd.f32 0.0, %v2137
    %2139 = vmatmul.f32.gmra.mxu0 %v314
    %v2140 = vpop.f32.mrf.mxu0
    %v2141 = vadd.f32 0.0, %v2140
    %2142 = vdwg.mxu0
    %2143 = vmatpush.msra.mxu0 %v395
    %2144 = vmatpush.msra.mxu0 %v393
    %2145 = vmatpush.msra.mxu0 %v391
    %2146 = vmatpush.msra.mxu0 %v389
    %2147 = vmatpush.msra.mxu0 %v387
    %2148 = vmatpush.msra.mxu0 %v385
    %2149 = vmatpush.msra.mxu0 %v383
    %2150 = vmatpush.msra.mxu0 %v381
    %2151 = vmatpush.msra.mxu0 %v379
    %2152 = vmatpush.msra.mxu0 %v377
    %2153 = vmatpush.msra.mxu0 %v375
    %2154 = vmatpush.msra.mxu0 %v373
    %2155 = vmatpush.msra.mxu0 %v371
    %2156 = vmatpush.msra.mxu0 %v369
    %2157 = vmatpush.msra.mxu0 %v367
    %2158 = vmatpush.msra.mxu0 %v365
    %2159 = vmatmul.f32.gmra.mxu0 %v45
    %v2160 = vpop.f32.mrf.mxu0
    %v2161 = vadd.f32 %v2096, %v2160
    %2162 = vmatmul.f32.gmra.mxu0 %v63
    %v2163 = vpop.f32.mrf.mxu0
    %v2164 = vadd.f32 %v2099, %v2163
    %2165 = vmatmul.f32.gmra.mxu0 %v81
    %v2166 = vpop.f32.mrf.mxu0
    %v2167 = vadd.f32 %v2102, %v2166
    %2168 = vmatmul.f32.gmra.mxu0 %v99
    %v2169 = vpop.f32.mrf.mxu0
    %v2170 = vadd.f32 %v2105, %v2169
    %2171 = vmatmul.f32.gmra.mxu0 %v117
    %v2172 = vpop.f32.mrf.mxu0
    %v2173 = vadd.f32 %v2108, %v2172
    %2174 = vmatmul.f32.gmra.mxu0 %v135
    %v2175 = vpop.f32.mrf.mxu0
    %v2176 = vadd.f32 %v2111, %v2175
    %2177 = vmatmul.f32.gmra.mxu0 %v153
    %v2178 = vpop.f32.mrf.mxu0
    %v2179 = vadd.f32 %v2114, %v2178
    %2180 = vmatmul.f32.gmra.mxu0 %v171
    %v2181 = vpop.f32.mrf.mxu0
    %v2182 = vadd.f32 %v2117, %v2181
    %2183 = vmatmul.f32.gmra.mxu0 %v189
    %v2184 = vpop.f32.mrf.mxu0
    %v2185 = vadd.f32 %v2120, %v2184
    %2186 = vmatmul.f32.gmra.mxu0 %v207
    %v2187 = vpop.f32.mrf.mxu0
    %v2188 = vadd.f32 %v2123, %v2187
    %2189 = vmatmul.f32.gmra.mxu0 %v225
    %v2190 = vpop.f32.mrf.mxu0
    %v2191 = vadd.f32 %v2126, %v2190
    %2192 = vmatmul.f32.gmra.mxu0 %v243
    %v2193 = vpop.f32.mrf.mxu0
    %v2194 = vadd.f32 %v2129, %v2193
    %2195 = vmatmul.f32.gmra.mxu0 %v261
    %v2196 = vpop.f32.mrf.mxu0
    %v2197 = vadd.f32 %v2132, %v2196
    %2198 = vmatmul.f32.gmra.mxu0 %v279
    %v2199 = vpop.f32.mrf.mxu0
    %v2200 = vadd.f32 %v2135, %v2199
    %2201 = vmatmul.f32.gmra.mxu0 %v297
    %v2202 = vpop.f32.mrf.mxu0
    %v2203 = vadd.f32 %v2138, %v2202
    %2204 = vmatmul.f32.gmra.mxu0 %v315
    %v2205 = vpop.f32.mrf.mxu0
    %v2206 = vadd.f32 %v2141, %v2205
    %2207 = vdwg.mxu0
    %2208 = vmatpush.msra.mxu0 %v427
    %2209 = vmatpush.msra.mxu0 %v425
    %2210 = vmatpush.msra.mxu0 %v423
    %2211 = vmatpush.msra.mxu0 %v421
    %2212 = vmatpush.msra.mxu0 %v419
    %2213 = vmatpush.msra.mxu0 %v417
    %2214 = vmatpush.msra.mxu0 %v415
    %2215 = vmatpush.msra.mxu0 %v413
    %2216 = vmatpush.msra.mxu0 %v411
    %2217 = vmatpush.msra.mxu0 %v409
    %2218 = vmatpush.msra.mxu0 %v407
    %2219 = vmatpush.msra.mxu0 %v405
    %2220 = vmatpush.msra.mxu0 %v403
    %2221 = vmatpush.msra.mxu0 %v401
    %2222 = vmatpush.msra.mxu0 %v399
    %2223 = vmatpush.msra.mxu0 %v397
    %2224 = vmatmul.f32.gmra.mxu0 %v46
    %v2225 = vpop.f32.mrf.mxu0
    %v2226 = vadd.f32 %v2161, %v2225
    %2227 = vmatmul.f32.gmra.mxu0 %v64
    %v2228 = vpop.f32.mrf.mxu0
    %v2229 = vadd.f32 %v2164, %v2228
    %2230 = vmatmul.f32.gmra.mxu0 %v82
    %v2231 = vpop.f32.mrf.mxu0
    %v2232 = vadd.f32 %v2167, %v2231
    %2233 = vmatmul.f32.gmra.mxu0 %v100
    %v2234 = vpop.f32.mrf.mxu0
    %v2235 = vadd.f32 %v2170, %v2234
    %2236 = vmatmul.f32.gmra.mxu0 %v118
    %v2237 = vpop.f32.mrf.mxu0
    %v2238 = vadd.f32 %v2173, %v2237
    %2239 = vmatmul.f32.gmra.mxu0 %v136
    %v2240 = vpop.f32.mrf.mxu0
    %v2241 = vadd.f32 %v2176, %v2240
    %2242 = vmatmul.f32.gmra.mxu0 %v154
    %v2243 = vpop.f32.mrf.mxu0
    %v2244 = vadd.f32 %v2179, %v2243
    %2245 = vmatmul.f32.gmra.mxu0 %v172
    %v2246 = vpop.f32.mrf.mxu0
    %v2247 = vadd.f32 %v2182, %v2246
    %2248 = vmatmul.f32.gmra.mxu0 %v190
    %v2249 = vpop.f32.mrf.mxu0
    %v2250 = vadd.f32 %v2185, %v2249
    %2251 = vmatmul.f32.gmra.mxu0 %v208
    %v2252 = vpop.f32.mrf.mxu0
    %v2253 = vadd.f32 %v2188, %v2252
    %2254 = vmatmul.f32.gmra.mxu0 %v226
    %v2255 = vpop.f32.mrf.mxu0
    %v2256 = vadd.f32 %v2191, %v2255
    %2257 = vmatmul.f32.gmra.mxu0 %v244
    %v2258 = vpop.f32.mrf.mxu0
    %v2259 = vadd.f32 %v2194, %v2258
    %2260 = vmatmul.f32.gmra.mxu0 %v262
    %v2261 = vpop.f32.mrf.mxu0
    %v2262 = vadd.f32 %v2197, %v2261
    %2263 = vmatmul.f32.gmra.mxu0 %v280
    %v2264 = vpop.f32.mrf.mxu0
    %v2265 = vadd.f32 %v2200, %v2264
    %2266 = vmatmul.f32.gmra.mxu0 %v298
    %v2267 = vpop.f32.mrf.mxu0
    %v2268 = vadd.f32 %v2203, %v2267
    %2269 = vmatmul.f32.gmra.mxu0 %v316
    %v2270 = vpop.f32.mrf.mxu0
    %v2271 = vadd.f32 %v2206, %v2270
    %2272 = vdwg.mxu0
    %2273 = vmatpush.msra.mxu0 %v459
    %2274 = vmatpush.msra.mxu0 %v457
    %2275 = vmatpush.msra.mxu0 %v455
    %2276 = vmatpush.msra.mxu0 %v453
    %2277 = vmatpush.msra.mxu0 %v451
    %2278 = vmatpush.msra.mxu0 %v449
    %2279 = vmatpush.msra.mxu0 %v447
    %2280 = vmatpush.msra.mxu0 %v445
    %2281 = vmatpush.msra.mxu0 %v443
    %2282 = vmatpush.msra.mxu0 %v441
    %2283 = vmatpush.msra.mxu0 %v439
    %2284 = vmatpush.msra.mxu0 %v437
    %2285 = vmatpush.msra.mxu0 %v435
    %2286 = vmatpush.msra.mxu0 %v433
    %2287 = vmatpush.msra.mxu0 %v431
    %2288 = vmatpush.msra.mxu0 %v429
    %2289 = vmatmul.f32.gmra.mxu0 %v47
    %v2290 = vpop.f32.mrf.mxu0
    %v2291 = vadd.f32 %v2226, %v2290
    %2292 = vmatmul.f32.gmra.mxu0 %v65
    %v2293 = vpop.f32.mrf.mxu0
    %v2294 = vadd.f32 %v2229, %v2293
    %2295 = vmatmul.f32.gmra.mxu0 %v83
    %v2296 = vpop.f32.mrf.mxu0
    %v2297 = vadd.f32 %v2232, %v2296
    %2298 = vmatmul.f32.gmra.mxu0 %v101
    %v2299 = vpop.f32.mrf.mxu0
    %v2300 = vadd.f32 %v2235, %v2299
    %2301 = vmatmul.f32.gmra.mxu0 %v119
    %v2302 = vpop.f32.mrf.mxu0
    %v2303 = vadd.f32 %v2238, %v2302
    %2304 = vmatmul.f32.gmra.mxu0 %v137
    %v2305 = vpop.f32.mrf.mxu0
    %v2306 = vadd.f32 %v2241, %v2305
    %2307 = vmatmul.f32.gmra.mxu0 %v155
    %v2308 = vpop.f32.mrf.mxu0
    %v2309 = vadd.f32 %v2244, %v2308
    %2310 = vmatmul.f32.gmra.mxu0 %v173
    %v2311 = vpop.f32.mrf.mxu0
    %v2312 = vadd.f32 %v2247, %v2311
    %2313 = vmatmul.f32.gmra.mxu0 %v191
    %v2314 = vpop.f32.mrf.mxu0
    %v2315 = vadd.f32 %v2250, %v2314
    %2316 = vmatmul.f32.gmra.mxu0 %v209
    %v2317 = vpop.f32.mrf.mxu0
    %v2318 = vadd.f32 %v2253, %v2317
    %2319 = vmatmul.f32.gmra.mxu0 %v227
    %v2320 = vpop.f32.mrf.mxu0
    %v2321 = vadd.f32 %v2256, %v2320
    %2322 = vmatmul.f32.gmra.mxu0 %v245
    %v2323 = vpop.f32.mrf.mxu0
    %v2324 = vadd.f32 %v2259, %v2323
    %2325 = vmatmul.f32.gmra.mxu0 %v263
    %v2326 = vpop.f32.mrf.mxu0
    %v2327 = vadd.f32 %v2262, %v2326
    %2328 = vmatmul.f32.gmra.mxu0 %v281
    %v2329 = vpop.f32.mrf.mxu0
    %v2330 = vadd.f32 %v2265, %v2329
    %2331 = vmatmul.f32.gmra.mxu0 %v299
    %v2332 = vpop.f32.mrf.mxu0
    %v2333 = vadd.f32 %v2268, %v2332
    %2334 = vmatmul.f32.gmra.mxu0 %v317
    %v2335 = vpop.f32.mrf.mxu0
    %v2336 = vadd.f32 %v2271, %v2335
    %2337 = vdwg.mxu0
    %2338 = vmatpush.msra.mxu0 %v491
    %2339 = vmatpush.msra.mxu0 %v489
    %2340 = vmatpush.msra.mxu0 %v487
    %2341 = vmatpush.msra.mxu0 %v485
    %2342 = vmatpush.msra.mxu0 %v483
    %2343 = vmatpush.msra.mxu0 %v481
    %2344 = vmatpush.msra.mxu0 %v479
    %2345 = vmatpush.msra.mxu0 %v477
    %2346 = vmatpush.msra.mxu0 %v475
    %2347 = vmatpush.msra.mxu0 %v473
    %2348 = vmatpush.msra.mxu0 %v471
    %2349 = vmatpush.msra.mxu0 %v469
    %2350 = vmatpush.msra.mxu0 %v467
    %2351 = vmatpush.msra.mxu0 %v465
    %2352 = vmatpush.msra.mxu0 %v463
    %2353 = vmatpush.msra.mxu0 %v461
    %2354 = vmatmul.f32.gmra.mxu0 %v48
    %v2355 = vpop.f32.mrf.mxu0
    %v2356 = vadd.f32 %v2291, %v2355
    %2357 = vmatmul.f32.gmra.mxu0 %v66
    %v2358 = vpop.f32.mrf.mxu0
    %v2359 = vadd.f32 %v2294, %v2358
    %2360 = vmatmul.f32.gmra.mxu0 %v84
    %v2361 = vpop.f32.mrf.mxu0
    %v2362 = vadd.f32 %v2297, %v2361
    %2363 = vmatmul.f32.gmra.mxu0 %v102
    %v2364 = vpop.f32.mrf.mxu0
    %v2365 = vadd.f32 %v2300, %v2364
    %2366 = vmatmul.f32.gmra.mxu0 %v120
    %v2367 = vpop.f32.mrf.mxu0
    %v2368 = vadd.f32 %v2303, %v2367
    %2369 = vmatmul.f32.gmra.mxu0 %v138
    %v2370 = vpop.f32.mrf.mxu0
    %v2371 = vadd.f32 %v2306, %v2370
    %2372 = vmatmul.f32.gmra.mxu0 %v156
    %v2373 = vpop.f32.mrf.mxu0
    %v2374 = vadd.f32 %v2309, %v2373
    %2375 = vmatmul.f32.gmra.mxu0 %v174
    %v2376 = vpop.f32.mrf.mxu0
    %v2377 = vadd.f32 %v2312, %v2376
    %2378 = vmatmul.f32.gmra.mxu0 %v192
    %v2379 = vpop.f32.mrf.mxu0
    %v2380 = vadd.f32 %v2315, %v2379
    %2381 = vmatmul.f32.gmra.mxu0 %v210
    %v2382 = vpop.f32.mrf.mxu0
    %v2383 = vadd.f32 %v2318, %v2382
    %2384 = vmatmul.f32.gmra.mxu0 %v228
    %v2385 = vpop.f32.mrf.mxu0
    %v2386 = vadd.f32 %v2321, %v2385
    %2387 = vmatmul.f32.gmra.mxu0 %v246
    %v2388 = vpop.f32.mrf.mxu0
    %v2389 = vadd.f32 %v2324, %v2388
    %2390 = vmatmul.f32.gmra.mxu0 %v264
    %v2391 = vpop.f32.mrf.mxu0
    %v2392 = vadd.f32 %v2327, %v2391
    %2393 = vmatmul.f32.gmra.mxu0 %v282
    %v2394 = vpop.f32.mrf.mxu0
    %v2395 = vadd.f32 %v2330, %v2394
    %2396 = vmatmul.f32.gmra.mxu0 %v300
    %v2397 = vpop.f32.mrf.mxu0
    %v2398 = vadd.f32 %v2333, %v2397
    %2399 = vmatmul.f32.gmra.mxu0 %v318
    %v2400 = vpop.f32.mrf.mxu0
    %v2401 = vadd.f32 %v2336, %v2400
    %2402 = vdwg.mxu0
    %2403 = vmatpush.msra.mxu0 %v523
    %2404 = vmatpush.msra.mxu0 %v521
    %2405 = vmatpush.msra.mxu0 %v519
    %2406 = vmatpush.msra.mxu0 %v517
    %2407 = vmatpush.msra.mxu0 %v515
    %2408 = vmatpush.msra.mxu0 %v513
    %2409 = vmatpush.msra.mxu0 %v511
    %2410 = vmatpush.msra.mxu0 %v509
    %2411 = vmatpush.msra.mxu0 %v507
    %2412 = vmatpush.msra.mxu0 %v505
    %2413 = vmatpush.msra.mxu0 %v503
    %2414 = vmatpush.msra.mxu0 %v501
    %2415 = vmatpush.msra.mxu0 %v499
    %2416 = vmatpush.msra.mxu0 %v497
    %2417 = vmatpush.msra.mxu0 %v495
    %2418 = vmatpush.msra.mxu0 %v493
    %2419 = vmatmul.f32.gmra.mxu0 %v49
    %v2420 = vpop.f32.mrf.mxu0
    %v2421 = vadd.f32 %v2356, %v2420
    %2422 = vmatmul.f32.gmra.mxu0 %v67
    %v2423 = vpop.f32.mrf.mxu0
    %v2424 = vadd.f32 %v2359, %v2423
    %2425 = vmatmul.f32.gmra.mxu0 %v85
    %v2426 = vpop.f32.mrf.mxu0
    %v2427 = vadd.f32 %v2362, %v2426
    %2428 = vmatmul.f32.gmra.mxu0 %v103
    %v2429 = vpop.f32.mrf.mxu0
    %v2430 = vadd.f32 %v2365, %v2429
    %2431 = vmatmul.f32.gmra.mxu0 %v121
    %v2432 = vpop.f32.mrf.mxu0
    %v2433 = vadd.f32 %v2368, %v2432
    %2434 = vmatmul.f32.gmra.mxu0 %v139
    %v2435 = vpop.f32.mrf.mxu0
    %v2436 = vadd.f32 %v2371, %v2435
    %2437 = vmatmul.f32.gmra.mxu0 %v157
    %v2438 = vpop.f32.mrf.mxu0
    %v2439 = vadd.f32 %v2374, %v2438
    %2440 = vmatmul.f32.gmra.mxu0 %v175
    %v2441 = vpop.f32.mrf.mxu0
    %v2442 = vadd.f32 %v2377, %v2441
    %2443 = vmatmul.f32.gmra.mxu0 %v193
    %v2444 = vpop.f32.mrf.mxu0
    %v2445 = vadd.f32 %v2380, %v2444
    %2446 = vmatmul.f32.gmra.mxu0 %v211
    %v2447 = vpop.f32.mrf.mxu0
    %v2448 = vadd.f32 %v2383, %v2447
    %2449 = vmatmul.f32.gmra.mxu0 %v229
    %v2450 = vpop.f32.mrf.mxu0
    %v2451 = vadd.f32 %v2386, %v2450
    %2452 = vmatmul.f32.gmra.mxu0 %v247
    %v2453 = vpop.f32.mrf.mxu0
    %v2454 = vadd.f32 %v2389, %v2453
    %2455 = vmatmul.f32.gmra.mxu0 %v265
    %v2456 = vpop.f32.mrf.mxu0
    %v2457 = vadd.f32 %v2392, %v2456
    %2458 = vmatmul.f32.gmra.mxu0 %v283
    %v2459 = vpop.f32.mrf.mxu0
    %v2460 = vadd.f32 %v2395, %v2459
    %2461 = vmatmul.f32.gmra.mxu0 %v301
    %v2462 = vpop.f32.mrf.mxu0
    %v2463 = vadd.f32 %v2398, %v2462
    %2464 = vmatmul.f32.gmra.mxu0 %v319
    %v2465 = vpop.f32.mrf.mxu0
    %v2466 = vadd.f32 %v2401, %v2465
    %2467 = vdwg.mxu0
    %2468 = vmatpush.msra.mxu0 %v555
    %2469 = vmatpush.msra.mxu0 %v553
    %2470 = vmatpush.msra.mxu0 %v551
    %2471 = vmatpush.msra.mxu0 %v549
    %2472 = vmatpush.msra.mxu0 %v547
    %2473 = vmatpush.msra.mxu0 %v545
    %2474 = vmatpush.msra.mxu0 %v543
    %2475 = vmatpush.msra.mxu0 %v541
    %2476 = vmatpush.msra.mxu0 %v539
    %2477 = vmatpush.msra.mxu0 %v537
    %2478 = vmatpush.msra.mxu0 %v535
    %2479 = vmatpush.msra.mxu0 %v533
    %2480 = vmatpush.msra.mxu0 %v531
    %2481 = vmatpush.msra.mxu0 %v529
    %2482 = vmatpush.msra.mxu0 %v527
    %2483 = vmatpush.msra.mxu0 %v525
    %2484 = vmatmul.f32.gmra.mxu0 %v50
    %v2485 = vpop.f32.mrf.mxu0
    %v2486 = vadd.f32 %v2421, %v2485
    %2487 = vmatmul.f32.gmra.mxu0 %v68
    %v2488 = vpop.f32.mrf.mxu0
    %v2489 = vadd.f32 %v2424, %v2488
    %2490 = vmatmul.f32.gmra.mxu0 %v86
    %v2491 = vpop.f32.mrf.mxu0
    %v2492 = vadd.f32 %v2427, %v2491
    %2493 = vmatmul.f32.gmra.mxu0 %v104
    %v2494 = vpop.f32.mrf.mxu0
    %v2495 = vadd.f32 %v2430, %v2494
    %2496 = vmatmul.f32.gmra.mxu0 %v122
    %v2497 = vpop.f32.mrf.mxu0
    %v2498 = vadd.f32 %v2433, %v2497
    %2499 = vmatmul.f32.gmra.mxu0 %v140
    %v2500 = vpop.f32.mrf.mxu0
    %v2501 = vadd.f32 %v2436, %v2500
    %2502 = vmatmul.f32.gmra.mxu0 %v158
    %v2503 = vpop.f32.mrf.mxu0
    %v2504 = vadd.f32 %v2439, %v2503
    %2505 = vmatmul.f32.gmra.mxu0 %v176
    %v2506 = vpop.f32.mrf.mxu0
    %v2507 = vadd.f32 %v2442, %v2506
    %2508 = vmatmul.f32.gmra.mxu0 %v194
    %v2509 = vpop.f32.mrf.mxu0
    %v2510 = vadd.f32 %v2445, %v2509
    %2511 = vmatmul.f32.gmra.mxu0 %v212
    %v2512 = vpop.f32.mrf.mxu0
    %v2513 = vadd.f32 %v2448, %v2512
    %2514 = vmatmul.f32.gmra.mxu0 %v230
    %v2515 = vpop.f32.mrf.mxu0
    %v2516 = vadd.f32 %v2451, %v2515
    %2517 = vmatmul.f32.gmra.mxu0 %v248
    %v2518 = vpop.f32.mrf.mxu0
    %v2519 = vadd.f32 %v2454, %v2518
    %2520 = vmatmul.f32.gmra.mxu0 %v266
    %v2521 = vpop.f32.mrf.mxu0
    %v2522 = vadd.f32 %v2457, %v2521
    %2523 = vmatmul.f32.gmra.mxu0 %v284
    %v2524 = vpop.f32.mrf.mxu0
    %v2525 = vadd.f32 %v2460, %v2524
    %2526 = vmatmul.f32.gmra.mxu0 %v302
    %v2527 = vpop.f32.mrf.mxu0
    %v2528 = vadd.f32 %v2463, %v2527
    %2529 = vmatmul.f32.gmra.mxu0 %v320
    %v2530 = vpop.f32.mrf.mxu0
    %v2531 = vadd.f32 %v2466, %v2530
    %2532 = vdwg.mxu0
    %2533 = vmatpush.msra.mxu0 %v587
    %2534 = vmatpush.msra.mxu0 %v585
    %2535 = vmatpush.msra.mxu0 %v583
    %2536 = vmatpush.msra.mxu0 %v581
    %2537 = vmatpush.msra.mxu0 %v579
    %2538 = vmatpush.msra.mxu0 %v577
    %2539 = vmatpush.msra.mxu0 %v575
    %2540 = vmatpush.msra.mxu0 %v573
    %2541 = vmatpush.msra.mxu0 %v571
    %2542 = vmatpush.msra.mxu0 %v569
    %2543 = vmatpush.msra.mxu0 %v567
    %2544 = vmatpush.msra.mxu0 %v565
    %2545 = vmatpush.msra.mxu0 %v563
    %2546 = vmatpush.msra.mxu0 %v561
    %2547 = vmatpush.msra.mxu0 %v559
    %2548 = vmatpush.msra.mxu0 %v557
    %2549 = vmatmul.f32.gmra.mxu0 %v51
    %v2550 = vpop.f32.mrf.mxu0
    %v2551 = vadd.f32 %v2486, %v2550
    %2552 = vmatmul.f32.gmra.mxu0 %v69
    %v2553 = vpop.f32.mrf.mxu0
    %v2554 = vadd.f32 %v2489, %v2553
    %2555 = vmatmul.f32.gmra.mxu0 %v87
    %v2556 = vpop.f32.mrf.mxu0
    %v2557 = vadd.f32 %v2492, %v2556
    %2558 = vmatmul.f32.gmra.mxu0 %v105
    %v2559 = vpop.f32.mrf.mxu0
    %v2560 = vadd.f32 %v2495, %v2559
    %2561 = vmatmul.f32.gmra.mxu0 %v123
    %v2562 = vpop.f32.mrf.mxu0
    %v2563 = vadd.f32 %v2498, %v2562
    %2564 = vmatmul.f32.gmra.mxu0 %v141
    %v2565 = vpop.f32.mrf.mxu0
    %v2566 = vadd.f32 %v2501, %v2565
    %2567 = vmatmul.f32.gmra.mxu0 %v159
    %v2568 = vpop.f32.mrf.mxu0
    %v2569 = vadd.f32 %v2504, %v2568
    %2570 = vmatmul.f32.gmra.mxu0 %v177
    %v2571 = vpop.f32.mrf.mxu0
    %v2572 = vadd.f32 %v2507, %v2571
    %2573 = vmatmul.f32.gmra.mxu0 %v195
    %v2574 = vpop.f32.mrf.mxu0
    %v2575 = vadd.f32 %v2510, %v2574
    %2576 = vmatmul.f32.gmra.mxu0 %v213
    %v2577 = vpop.f32.mrf.mxu0
    %v2578 = vadd.f32 %v2513, %v2577
    %2579 = vmatmul.f32.gmra.mxu0 %v231
    %v2580 = vpop.f32.mrf.mxu0
    %v2581 = vadd.f32 %v2516, %v2580
    %2582 = vmatmul.f32.gmra.mxu0 %v249
    %v2583 = vpop.f32.mrf.mxu0
    %v2584 = vadd.f32 %v2519, %v2583
    %2585 = vmatmul.f32.gmra.mxu0 %v267
    %v2586 = vpop.f32.mrf.mxu0
    %v2587 = vadd.f32 %v2522, %v2586
    %2588 = vmatmul.f32.gmra.mxu0 %v285
    %v2589 = vpop.f32.mrf.mxu0
    %v2590 = vadd.f32 %v2525, %v2589
    %2591 = vmatmul.f32.gmra.mxu0 %v303
    %v2592 = vpop.f32.mrf.mxu0
    %v2593 = vadd.f32 %v2528, %v2592
    %2594 = vmatmul.f32.gmra.mxu0 %v321
    %v2595 = vpop.f32.mrf.mxu0
    %v2596 = vadd.f32 %v2531, %v2595
    %2597 = vdwg.mxu0
    %2598 = vmatpush.msra.mxu0 %v619
    %2599 = vmatpush.msra.mxu0 %v617
    %2600 = vmatpush.msra.mxu0 %v615
    %2601 = vmatpush.msra.mxu0 %v613
    %2602 = vmatpush.msra.mxu0 %v611
    %2603 = vmatpush.msra.mxu0 %v609
    %2604 = vmatpush.msra.mxu0 %v607
    %2605 = vmatpush.msra.mxu0 %v605
    %2606 = vmatpush.msra.mxu0 %v603
    %2607 = vmatpush.msra.mxu0 %v601
    %2608 = vmatpush.msra.mxu0 %v599
    %2609 = vmatpush.msra.mxu0 %v597
    %2610 = vmatpush.msra.mxu0 %v595
    %2611 = vmatpush.msra.mxu0 %v593
    %2612 = vmatpush.msra.mxu0 %v591
    %2613 = vmatpush.msra.mxu0 %v589
    %2614 = vmatmul.f32.gmra.mxu0 %v52
    %v2615 = vpop.f32.mrf.mxu0
    %v2616 = vadd.f32 %v2551, %v2615
    %2617 = vmatmul.f32.gmra.mxu0 %v70
    %v2618 = vpop.f32.mrf.mxu0
    %v2619 = vadd.f32 %v2554, %v2618
    %2620 = vmatmul.f32.gmra.mxu0 %v88
    %v2621 = vpop.f32.mrf.mxu0
    %v2622 = vadd.f32 %v2557, %v2621
    %2623 = vmatmul.f32.gmra.mxu0 %v106
    %v2624 = vpop.f32.mrf.mxu0
    %v2625 = vadd.f32 %v2560, %v2624
    %2626 = vmatmul.f32.gmra.mxu0 %v124
    %v2627 = vpop.f32.mrf.mxu0
    %v2628 = vadd.f32 %v2563, %v2627
    %2629 = vmatmul.f32.gmra.mxu0 %v142
    %v2630 = vpop.f32.mrf.mxu0
    %v2631 = vadd.f32 %v2566, %v2630
    %2632 = vmatmul.f32.gmra.mxu0 %v160
    %v2633 = vpop.f32.mrf.mxu0
    %v2634 = vadd.f32 %v2569, %v2633
    %2635 = vmatmul.f32.gmra.mxu0 %v178
    %v2636 = vpop.f32.mrf.mxu0
    %v2637 = vadd.f32 %v2572, %v2636
    %2638 = vmatmul.f32.gmra.mxu0 %v196
    %v2639 = vpop.f32.mrf.mxu0
    %v2640 = vadd.f32 %v2575, %v2639
    %2641 = vmatmul.f32.gmra.mxu0 %v214
    %v2642 = vpop.f32.mrf.mxu0
    %v2643 = vadd.f32 %v2578, %v2642
    %2644 = vmatmul.f32.gmra.mxu0 %v232
    %v2645 = vpop.f32.mrf.mxu0
    %v2646 = vadd.f32 %v2581, %v2645
    %2647 = vmatmul.f32.gmra.mxu0 %v250
    %v2648 = vpop.f32.mrf.mxu0
    %v2649 = vadd.f32 %v2584, %v2648
    %2650 = vmatmul.f32.gmra.mxu0 %v268
    %v2651 = vpop.f32.mrf.mxu0
    %v2652 = vadd.f32 %v2587, %v2651
    %2653 = vmatmul.f32.gmra.mxu0 %v286
    %v2654 = vpop.f32.mrf.mxu0
    %v2655 = vadd.f32 %v2590, %v2654
    %2656 = vmatmul.f32.gmra.mxu0 %v304
    %v2657 = vpop.f32.mrf.mxu0
    %v2658 = vadd.f32 %v2593, %v2657
    %2659 = vmatmul.f32.gmra.mxu0 %v322
    %v2660 = vpop.f32.mrf.mxu0
    %v2661 = vadd.f32 %v2596, %v2660
    %2662 = vdwg.mxu0
    %2663 = vmatpush.msra.mxu0 %v651
    %2664 = vmatpush.msra.mxu0 %v649
    %2665 = vmatpush.msra.mxu0 %v647
    %2666 = vmatpush.msra.mxu0 %v645
    %2667 = vmatpush.msra.mxu0 %v643
    %2668 = vmatpush.msra.mxu0 %v641
    %2669 = vmatpush.msra.mxu0 %v639
    %2670 = vmatpush.msra.mxu0 %v637
    %2671 = vmatpush.msra.mxu0 %v635
    %2672 = vmatpush.msra.mxu0 %v633
    %2673 = vmatpush.msra.mxu0 %v631
    %2674 = vmatpush.msra.mxu0 %v629
    %2675 = vmatpush.msra.mxu0 %v627
    %2676 = vmatpush.msra.mxu0 %v625
    %2677 = vmatpush.msra.mxu0 %v623
    %2678 = vmatpush.msra.mxu0 %v621
    %2679 = vmatmul.f32.gmra.mxu0 %v53
    %v2680 = vpop.f32.mrf.mxu0
    %v2681 = vadd.f32 %v2616, %v2680
    %2682 = vmatmul.f32.gmra.mxu0 %v71
    %v2683 = vpop.f32.mrf.mxu0
    %v2684 = vadd.f32 %v2619, %v2683
    %2685 = vmatmul.f32.gmra.mxu0 %v89
    %v2686 = vpop.f32.mrf.mxu0
    %v2687 = vadd.f32 %v2622, %v2686
    %2688 = vmatmul.f32.gmra.mxu0 %v107
    %v2689 = vpop.f32.mrf.mxu0
    %v2690 = vadd.f32 %v2625, %v2689
    %2691 = vmatmul.f32.gmra.mxu0 %v125
    %v2692 = vpop.f32.mrf.mxu0
    %v2693 = vadd.f32 %v2628, %v2692
    %2694 = vmatmul.f32.gmra.mxu0 %v143
    %v2695 = vpop.f32.mrf.mxu0
    %v2696 = vadd.f32 %v2631, %v2695
    %2697 = vmatmul.f32.gmra.mxu0 %v161
    %v2698 = vpop.f32.mrf.mxu0
    %v2699 = vadd.f32 %v2634, %v2698
    %2700 = vmatmul.f32.gmra.mxu0 %v179
    %v2701 = vpop.f32.mrf.mxu0
    %v2702 = vadd.f32 %v2637, %v2701
    %2703 = vmatmul.f32.gmra.mxu0 %v197
    %v2704 = vpop.f32.mrf.mxu0
    %v2705 = vadd.f32 %v2640, %v2704
    %2706 = vmatmul.f32.gmra.mxu0 %v215
    %v2707 = vpop.f32.mrf.mxu0
    %v2708 = vadd.f32 %v2643, %v2707
    %2709 = vmatmul.f32.gmra.mxu0 %v233
    %v2710 = vpop.f32.mrf.mxu0
    %v2711 = vadd.f32 %v2646, %v2710
    %2712 = vmatmul.f32.gmra.mxu0 %v251
    %v2713 = vpop.f32.mrf.mxu0
    %v2714 = vadd.f32 %v2649, %v2713
    %2715 = vmatmul.f32.gmra.mxu0 %v269
    %v2716 = vpop.f32.mrf.mxu0
    %v2717 = vadd.f32 %v2652, %v2716
    %2718 = vmatmul.f32.gmra.mxu0 %v287
    %v2719 = vpop.f32.mrf.mxu0
    %v2720 = vadd.f32 %v2655, %v2719
    %2721 = vmatmul.f32.gmra.mxu0 %v305
    %v2722 = vpop.f32.mrf.mxu0
    %v2723 = vadd.f32 %v2658, %v2722
    %2724 = vmatmul.f32.gmra.mxu0 %v323
    %v2725 = vpop.f32.mrf.mxu0
    %v2726 = vadd.f32 %v2661, %v2725
    %2727 = vdwg.mxu0
    %2728 = vmatpush.msra.mxu0 %v683
    %2729 = vmatpush.msra.mxu0 %v681
    %2730 = vmatpush.msra.mxu0 %v679
    %2731 = vmatpush.msra.mxu0 %v677
    %2732 = vmatpush.msra.mxu0 %v675
    %2733 = vmatpush.msra.mxu0 %v673
    %2734 = vmatpush.msra.mxu0 %v671
    %2735 = vmatpush.msra.mxu0 %v669
    %2736 = vmatpush.msra.mxu0 %v667
    %2737 = vmatpush.msra.mxu0 %v665
    %2738 = vmatpush.msra.mxu0 %v663
    %2739 = vmatpush.msra.mxu0 %v661
    %2740 = vmatpush.msra.mxu0 %v659
    %2741 = vmatpush.msra.mxu0 %v657
    %2742 = vmatpush.msra.mxu0 %v655
    %2743 = vmatpush.msra.mxu0 %v653
    %2744 = vmatmul.f32.gmra.mxu0 %v54
    %v2745 = vpop.f32.mrf.mxu0
    %v2746 = vadd.f32 %v2681, %v2745
    %2747 = vmatmul.f32.gmra.mxu0 %v72
    %v2748 = vpop.f32.mrf.mxu0
    %v2749 = vadd.f32 %v2684, %v2748
    %2750 = vmatmul.f32.gmra.mxu0 %v90
    %v2751 = vpop.f32.mrf.mxu0
    %v2752 = vadd.f32 %v2687, %v2751
    %2753 = vmatmul.f32.gmra.mxu0 %v108
    %v2754 = vpop.f32.mrf.mxu0
    %v2755 = vadd.f32 %v2690, %v2754
    %2756 = vmatmul.f32.gmra.mxu0 %v126
    %v2757 = vpop.f32.mrf.mxu0
    %v2758 = vadd.f32 %v2693, %v2757
    %2759 = vmatmul.f32.gmra.mxu0 %v144
    %v2760 = vpop.f32.mrf.mxu0
    %v2761 = vadd.f32 %v2696, %v2760
    %2762 = vmatmul.f32.gmra.mxu0 %v162
    %v2763 = vpop.f32.mrf.mxu0
    %v2764 = vadd.f32 %v2699, %v2763
    %2765 = vmatmul.f32.gmra.mxu0 %v180
    %v2766 = vpop.f32.mrf.mxu0
    %v2767 = vadd.f32 %v2702, %v2766
    %2768 = vmatmul.f32.gmra.mxu0 %v198
    %v2769 = vpop.f32.mrf.mxu0
    %v2770 = vadd.f32 %v2705, %v2769
    %2771 = vmatmul.f32.gmra.mxu0 %v216
    %v2772 = vpop.f32.mrf.mxu0
    %v2773 = vadd.f32 %v2708, %v2772
    %2774 = vmatmul.f32.gmra.mxu0 %v234
    %v2775 = vpop.f32.mrf.mxu0
    %v2776 = vadd.f32 %v2711, %v2775
    %2777 = vmatmul.f32.gmra.mxu0 %v252
    %v2778 = vpop.f32.mrf.mxu0
    %v2779 = vadd.f32 %v2714, %v2778
    %2780 = vmatmul.f32.gmra.mxu0 %v270
    %v2781 = vpop.f32.mrf.mxu0
    %v2782 = vadd.f32 %v2717, %v2781
    %2783 = vmatmul.f32.gmra.mxu0 %v288
    %v2784 = vpop.f32.mrf.mxu0
    %v2785 = vadd.f32 %v2720, %v2784
    %2786 = vmatmul.f32.gmra.mxu0 %v306
    %v2787 = vpop.f32.mrf.mxu0
    %v2788 = vadd.f32 %v2723, %v2787
    %2789 = vmatmul.f32.gmra.mxu0 %v324
    %v2790 = vpop.f32.mrf.mxu0
    %v2791 = vadd.f32 %v2726, %v2790
    %2792 = vdwg.mxu0
    %2793 = vmatpush.msra.mxu0 %v715
    %2794 = vmatpush.msra.mxu0 %v713
    %2795 = vmatpush.msra.mxu0 %v711
    %2796 = vmatpush.msra.mxu0 %v709
    %2797 = vmatpush.msra.mxu0 %v707
    %2798 = vmatpush.msra.mxu0 %v705
    %2799 = vmatpush.msra.mxu0 %v703
    %2800 = vmatpush.msra.mxu0 %v701
    %2801 = vmatpush.msra.mxu0 %v699
    %2802 = vmatpush.msra.mxu0 %v697
    %2803 = vmatpush.msra.mxu0 %v695
    %2804 = vmatpush.msra.mxu0 %v693
    %2805 = vmatpush.msra.mxu0 %v691
    %2806 = vmatpush.msra.mxu0 %v689
    %2807 = vmatpush.msra.mxu0 %v687
    %2808 = vmatpush.msra.mxu0 %v685
    %2809 = vmatmul.f32.gmra.mxu0 %v55
    %v2810 = vpop.f32.mrf.mxu0
    %v2811 = vadd.f32 %v2746, %v2810
    %2812 = vmatmul.f32.gmra.mxu0 %v73
    %v2813 = vpop.f32.mrf.mxu0
    %v2814 = vadd.f32 %v2749, %v2813
    %2815 = vmatmul.f32.gmra.mxu0 %v91
    %v2816 = vpop.f32.mrf.mxu0
    %v2817 = vadd.f32 %v2752, %v2816
    %2818 = vmatmul.f32.gmra.mxu0 %v109
    %v2819 = vpop.f32.mrf.mxu0
    %v2820 = vadd.f32 %v2755, %v2819
    %2821 = vmatmul.f32.gmra.mxu0 %v127
    %v2822 = vpop.f32.mrf.mxu0
    %v2823 = vadd.f32 %v2758, %v2822
    %2824 = vmatmul.f32.gmra.mxu0 %v145
    %v2825 = vpop.f32.mrf.mxu0
    %v2826 = vadd.f32 %v2761, %v2825
    %2827 = vmatmul.f32.gmra.mxu0 %v163
    %v2828 = vpop.f32.mrf.mxu0
    %v2829 = vadd.f32 %v2764, %v2828
    %2830 = vmatmul.f32.gmra.mxu0 %v181
    %v2831 = vpop.f32.mrf.mxu0
    %v2832 = vadd.f32 %v2767, %v2831
    %2833 = vmatmul.f32.gmra.mxu0 %v199
    %v2834 = vpop.f32.mrf.mxu0
    %v2835 = vadd.f32 %v2770, %v2834
    %2836 = vmatmul.f32.gmra.mxu0 %v217
    %v2837 = vpop.f32.mrf.mxu0
    %v2838 = vadd.f32 %v2773, %v2837
    %2839 = vmatmul.f32.gmra.mxu0 %v235
    %v2840 = vpop.f32.mrf.mxu0
    %v2841 = vadd.f32 %v2776, %v2840
    %2842 = vmatmul.f32.gmra.mxu0 %v253
    %v2843 = vpop.f32.mrf.mxu0
    %v2844 = vadd.f32 %v2779, %v2843
    %2845 = vmatmul.f32.gmra.mxu0 %v271
    %v2846 = vpop.f32.mrf.mxu0
    %v2847 = vadd.f32 %v2782, %v2846
    %2848 = vmatmul.f32.gmra.mxu0 %v289
    %v2849 = vpop.f32.mrf.mxu0
    %v2850 = vadd.f32 %v2785, %v2849
    %2851 = vmatmul.f32.gmra.mxu0 %v307
    %v2852 = vpop.f32.mrf.mxu0
    %v2853 = vadd.f32 %v2788, %v2852
    %2854 = vmatmul.f32.gmra.mxu0 %v325
    %v2855 = vpop.f32.mrf.mxu0
    %v2856 = vadd.f32 %v2791, %v2855
    %2857 = vdwg.mxu0
    %2858 = vmatpush.msra.mxu0 %v747
    %2859 = vmatpush.msra.mxu0 %v745
    %2860 = vmatpush.msra.mxu0 %v743
    %2861 = vmatpush.msra.mxu0 %v741
    %2862 = vmatpush.msra.mxu0 %v739
    %2863 = vmatpush.msra.mxu0 %v737
    %2864 = vmatpush.msra.mxu0 %v735
    %2865 = vmatpush.msra.mxu0 %v733
    %2866 = vmatpush.msra.mxu0 %v731
    %2867 = vmatpush.msra.mxu0 %v729
    %2868 = vmatpush.msra.mxu0 %v727
    %2869 = vmatpush.msra.mxu0 %v725
    %2870 = vmatpush.msra.mxu0 %v723
    %2871 = vmatpush.msra.mxu0 %v721
    %2872 = vmatpush.msra.mxu0 %v719
    %2873 = vmatpush.msra.mxu0 %v717
    %2874 = vmatmul.f32.gmra.mxu0 %v56
    %v2875 = vpop.f32.mrf.mxu0
    %v2876 = vadd.f32 %v2811, %v2875
    %2877 = vmatmul.f32.gmra.mxu0 %v74
    %v2878 = vpop.f32.mrf.mxu0
    %v2879 = vadd.f32 %v2814, %v2878
    %2880 = vmatmul.f32.gmra.mxu0 %v92
    %v2881 = vpop.f32.mrf.mxu0
    %v2882 = vadd.f32 %v2817, %v2881
    %2883 = vmatmul.f32.gmra.mxu0 %v110
    %v2884 = vpop.f32.mrf.mxu0
    %v2885 = vadd.f32 %v2820, %v2884
    %2886 = vmatmul.f32.gmra.mxu0 %v128
    %v2887 = vpop.f32.mrf.mxu0
    %v2888 = vadd.f32 %v2823, %v2887
    %2889 = vmatmul.f32.gmra.mxu0 %v146
    %v2890 = vpop.f32.mrf.mxu0
    %v2891 = vadd.f32 %v2826, %v2890
    %2892 = vmatmul.f32.gmra.mxu0 %v164
    %v2893 = vpop.f32.mrf.mxu0
    %v2894 = vadd.f32 %v2829, %v2893
    %2895 = vmatmul.f32.gmra.mxu0 %v182
    %v2896 = vpop.f32.mrf.mxu0
    %v2897 = vadd.f32 %v2832, %v2896
    %2898 = vmatmul.f32.gmra.mxu0 %v200
    %v2899 = vpop.f32.mrf.mxu0
    %v2900 = vadd.f32 %v2835, %v2899
    %2901 = vmatmul.f32.gmra.mxu0 %v218
    %v2902 = vpop.f32.mrf.mxu0
    %v2903 = vadd.f32 %v2838, %v2902
    %2904 = vmatmul.f32.gmra.mxu0 %v236
    %v2905 = vpop.f32.mrf.mxu0
    %v2906 = vadd.f32 %v2841, %v2905
    %2907 = vmatmul.f32.gmra.mxu0 %v254
    %v2908 = vpop.f32.mrf.mxu0
    %v2909 = vadd.f32 %v2844, %v2908
    %2910 = vmatmul.f32.gmra.mxu0 %v272
    %v2911 = vpop.f32.mrf.mxu0
    %v2912 = vadd.f32 %v2847, %v2911
    %2913 = vmatmul.f32.gmra.mxu0 %v290
    %v2914 = vpop.f32.mrf.mxu0
    %v2915 = vadd.f32 %v2850, %v2914
    %2916 = vmatmul.f32.gmra.mxu0 %v308
    %v2917 = vpop.f32.mrf.mxu0
    %v2918 = vadd.f32 %v2853, %v2917
    %2919 = vmatmul.f32.gmra.mxu0 %v326
    %v2920 = vpop.f32.mrf.mxu0
    %v2921 = vadd.f32 %v2856, %v2920
    %2922 = vdwg.mxu0
    %2923 = vmatpush.msra.mxu0 %v779
    %2924 = vmatpush.msra.mxu0 %v777
    %2925 = vmatpush.msra.mxu0 %v775
    %2926 = vmatpush.msra.mxu0 %v773
    %2927 = vmatpush.msra.mxu0 %v771
    %2928 = vmatpush.msra.mxu0 %v769
    %2929 = vmatpush.msra.mxu0 %v767
    %2930 = vmatpush.msra.mxu0 %v765
    %2931 = vmatpush.msra.mxu0 %v763
    %2932 = vmatpush.msra.mxu0 %v761
    %2933 = vmatpush.msra.mxu0 %v759
    %2934 = vmatpush.msra.mxu0 %v757
    %2935 = vmatpush.msra.mxu0 %v755
    %2936 = vmatpush.msra.mxu0 %v753
    %2937 = vmatpush.msra.mxu0 %v751
    %2938 = vmatpush.msra.mxu0 %v749
    %2939 = vmatmul.f32.gmra.mxu0 %v57
    %v2940 = vpop.f32.mrf.mxu0
    %v2941 = vadd.f32 %v2876, %v2940
    %2942 = vmatmul.f32.gmra.mxu0 %v75
    %v2943 = vpop.f32.mrf.mxu0
    %v2944 = vadd.f32 %v2879, %v2943
    %2945 = vmatmul.f32.gmra.mxu0 %v93
    %v2946 = vpop.f32.mrf.mxu0
    %v2947 = vadd.f32 %v2882, %v2946
    %2948 = vmatmul.f32.gmra.mxu0 %v111
    %v2949 = vpop.f32.mrf.mxu0
    %v2950 = vadd.f32 %v2885, %v2949
    %2951 = vmatmul.f32.gmra.mxu0 %v129
    %v2952 = vpop.f32.mrf.mxu0
    %v2953 = vadd.f32 %v2888, %v2952
    %2954 = vmatmul.f32.gmra.mxu0 %v147
    %v2955 = vpop.f32.mrf.mxu0
    %v2956 = vadd.f32 %v2891, %v2955
    %2957 = vmatmul.f32.gmra.mxu0 %v165
    %v2958 = vpop.f32.mrf.mxu0
    %v2959 = vadd.f32 %v2894, %v2958
    %2960 = vmatmul.f32.gmra.mxu0 %v183
    %v2961 = vpop.f32.mrf.mxu0
    %v2962 = vadd.f32 %v2897, %v2961
    %2963 = vmatmul.f32.gmra.mxu0 %v201
    %v2964 = vpop.f32.mrf.mxu0
    %v2965 = vadd.f32 %v2900, %v2964
    %2966 = vmatmul.f32.gmra.mxu0 %v219
    %v2967 = vpop.f32.mrf.mxu0
    %v2968 = vadd.f32 %v2903, %v2967
    %2969 = vmatmul.f32.gmra.mxu0 %v237
    %v2970 = vpop.f32.mrf.mxu0
    %v2971 = vadd.f32 %v2906, %v2970
    %2972 = vmatmul.f32.gmra.mxu0 %v255
    %v2973 = vpop.f32.mrf.mxu0
    %v2974 = vadd.f32 %v2909, %v2973
    %2975 = vmatmul.f32.gmra.mxu0 %v273
    %v2976 = vpop.f32.mrf.mxu0
    %v2977 = vadd.f32 %v2912, %v2976
    %2978 = vmatmul.f32.gmra.mxu0 %v291
    %v2979 = vpop.f32.mrf.mxu0
    %v2980 = vadd.f32 %v2915, %v2979
    %2981 = vmatmul.f32.gmra.mxu0 %v309
    %v2982 = vpop.f32.mrf.mxu0
    %v2983 = vadd.f32 %v2918, %v2982
    %2984 = vmatmul.f32.gmra.mxu0 %v327
    %v2985 = vpop.f32.mrf.mxu0
    %v2986 = vadd.f32 %v2921, %v2985
    %2987 = vdwg.mxu0
    %2988 = vmatpush.msra.mxu0 %v811
    %2989 = vmatpush.msra.mxu0 %v809
    %2990 = vmatpush.msra.mxu0 %v807
    %2991 = vmatpush.msra.mxu0 %v805
    %2992 = vmatpush.msra.mxu0 %v803
    %2993 = vmatpush.msra.mxu0 %v801
    %2994 = vmatpush.msra.mxu0 %v799
    %2995 = vmatpush.msra.mxu0 %v797
    %2996 = vmatpush.msra.mxu0 %v795
    %2997 = vmatpush.msra.mxu0 %v793
    %2998 = vmatpush.msra.mxu0 %v791
    %2999 = vmatpush.msra.mxu0 %v789
    %3000 = vmatpush.msra.mxu0 %v787
    %3001 = vmatpush.msra.mxu0 %v785
    %3002 = vmatpush.msra.mxu0 %v783
    %3003 = vmatpush.msra.mxu0 %v781
    %3004 = vmatmul.f32.gmra.mxu0 %v58
    %v3005 = vpop.f32.mrf.mxu0
    %v3006 = vadd.f32 %v2941, %v3005
    %3007 = vmatmul.f32.gmra.mxu0 %v76
    %v3008 = vpop.f32.mrf.mxu0
    %v3009 = vadd.f32 %v2944, %v3008
    %3010 = vmatmul.f32.gmra.mxu0 %v94
    %v3011 = vpop.f32.mrf.mxu0
    %v3012 = vadd.f32 %v2947, %v3011
    %3013 = vmatmul.f32.gmra.mxu0 %v112
    %v3014 = vpop.f32.mrf.mxu0
    %v3015 = vadd.f32 %v2950, %v3014
    %3016 = vmatmul.f32.gmra.mxu0 %v130
    %v3017 = vpop.f32.mrf.mxu0
    %v3018 = vadd.f32 %v2953, %v3017
    %3019 = vmatmul.f32.gmra.mxu0 %v148
    %v3020 = vpop.f32.mrf.mxu0
    %v3021 = vadd.f32 %v2956, %v3020
    %3022 = vmatmul.f32.gmra.mxu0 %v166
    %v3023 = vpop.f32.mrf.mxu0
    %v3024 = vadd.f32 %v2959, %v3023
    %3025 = vmatmul.f32.gmra.mxu0 %v184
    %v3026 = vpop.f32.mrf.mxu0
    %v3027 = vadd.f32 %v2962, %v3026
    %3028 = vmatmul.f32.gmra.mxu0 %v202
    %v3029 = vpop.f32.mrf.mxu0
    %v3030 = vadd.f32 %v2965, %v3029
    %3031 = vmatmul.f32.gmra.mxu0 %v220
    %v3032 = vpop.f32.mrf.mxu0
    %v3033 = vadd.f32 %v2968, %v3032
    %3034 = vmatmul.f32.gmra.mxu0 %v238
    %v3035 = vpop.f32.mrf.mxu0
    %v3036 = vadd.f32 %v2971, %v3035
    %3037 = vmatmul.f32.gmra.mxu0 %v256
    %v3038 = vpop.f32.mrf.mxu0
    %v3039 = vadd.f32 %v2974, %v3038
    %3040 = vmatmul.f32.gmra.mxu0 %v274
    %v3041 = vpop.f32.mrf.mxu0
    %v3042 = vadd.f32 %v2977, %v3041
    %3043 = vmatmul.f32.gmra.mxu0 %v292
    %v3044 = vpop.f32.mrf.mxu0
    %v3045 = vadd.f32 %v2980, %v3044
    %3046 = vmatmul.f32.gmra.mxu0 %v310
    %v3047 = vpop.f32.mrf.mxu0
    %v3048 = vadd.f32 %v2983, %v3047
    %3049 = vmatmul.f32.gmra.mxu0 %v328
    %v3050 = vpop.f32.mrf.mxu0
    %v3051 = vadd.f32 %v2986, %v3050
    %3052 = vdwg.mxu0
    %3053 = vmatpush.msra.mxu0 %v843
    %3054 = vmatpush.msra.mxu0 %v841
    %3055 = vmatpush.msra.mxu0 %v839
    %3056 = vmatpush.msra.mxu0 %v837
    %3057 = vmatpush.msra.mxu0 %v835
    %3058 = vmatpush.msra.mxu0 %v833
    %3059 = vmatpush.msra.mxu0 %v831
    %3060 = vmatpush.msra.mxu0 %v829
    %3061 = vmatpush.msra.mxu0 %v827
    %3062 = vmatpush.msra.mxu0 %v825
    %3063 = vmatpush.msra.mxu0 %v823
    %3064 = vmatpush.msra.mxu0 %v821
    %3065 = vmatpush.msra.mxu0 %v819
    %3066 = vmatpush.msra.mxu0 %v817
    %3067 = vmatpush.msra.mxu0 %v815
    %3068 = vmatpush.msra.mxu0 %v813
    %3069 = vmatmul.f32.gmra.mxu0 %v59
    %v3070 = vpop.f32.mrf.mxu0
    %v3071 = vadd.f32 %v3006, %v3070
    %3072 = vmatmul.f32.gmra.mxu0 %v77
    %v3073 = vpop.f32.mrf.mxu0
    %v3074 = vadd.f32 %v3009, %v3073
    %3075 = vmatmul.f32.gmra.mxu0 %v95
    %v3076 = vpop.f32.mrf.mxu0
    %v3077 = vadd.f32 %v3012, %v3076
    %3078 = vmatmul.f32.gmra.mxu0 %v113
    %v3079 = vpop.f32.mrf.mxu0
    %v3080 = vadd.f32 %v3015, %v3079
    %3081 = vmatmul.f32.gmra.mxu0 %v131
    %v3082 = vpop.f32.mrf.mxu0
    %v3083 = vadd.f32 %v3018, %v3082
    %3084 = vmatmul.f32.gmra.mxu0 %v149
    %v3085 = vpop.f32.mrf.mxu0
    %v3086 = vadd.f32 %v3021, %v3085
    %3087 = vmatmul.f32.gmra.mxu0 %v167
    %v3088 = vpop.f32.mrf.mxu0
    %v3089 = vadd.f32 %v3024, %v3088
    %3090 = vmatmul.f32.gmra.mxu0 %v185
    %v3091 = vpop.f32.mrf.mxu0
    %v3092 = vadd.f32 %v3027, %v3091
    %3093 = vmatmul.f32.gmra.mxu0 %v203
    %v3094 = vpop.f32.mrf.mxu0
    %v3095 = vadd.f32 %v3030, %v3094
    %3096 = vmatmul.f32.gmra.mxu0 %v221
    %v3097 = vpop.f32.mrf.mxu0
    %v3098 = vadd.f32 %v3033, %v3097
    %3099 = vmatmul.f32.gmra.mxu0 %v239
    %v3100 = vpop.f32.mrf.mxu0
    %v3101 = vadd.f32 %v3036, %v3100
    %3102 = vmatmul.f32.gmra.mxu0 %v257
    %v3103 = vpop.f32.mrf.mxu0
    %v3104 = vadd.f32 %v3039, %v3103
    %3105 = vmatmul.f32.gmra.mxu0 %v275
    %v3106 = vpop.f32.mrf.mxu0
    %v3107 = vadd.f32 %v3042, %v3106
    %3108 = vmatmul.f32.gmra.mxu0 %v293
    %v3109 = vpop.f32.mrf.mxu0
    %v3110 = vadd.f32 %v3045, %v3109
    %3111 = vmatmul.f32.gmra.mxu0 %v311
    %v3112 = vpop.f32.mrf.mxu0
    %v3113 = vadd.f32 %v3048, %v3112
    %3114 = vmatmul.f32.gmra.mxu0 %v329
    %v3115 = vpop.f32.mrf.mxu0
    %v3116 = vadd.f32 %v3051, %v3115
    %3117 = vdwg.mxu0
    %3118 = vmatpush.msra.mxu0 %v875
    %3119 = vmatpush.msra.mxu0 %v873
    %3120 = vmatpush.msra.mxu0 %v871
    %3121 = vmatpush.msra.mxu0 %v869
    %3122 = vmatpush.msra.mxu0 %v867
    %3123 = vmatpush.msra.mxu0 %v865
    %3124 = vmatpush.msra.mxu0 %v863
    %3125 = vmatpush.msra.mxu0 %v861
    %3126 = vmatpush.msra.mxu0 %v859
    %3127 = vmatpush.msra.mxu0 %v857
    %3128 = vmatpush.msra.mxu0 %v855
    %3129 = vmatpush.msra.mxu0 %v853
    %3130 = vmatpush.msra.mxu0 %v851
    %3131 = vmatpush.msra.mxu0 %v849
    %3132 = vmatpush.msra.mxu0 %v847
    %3133 = vmatpush.msra.mxu0 %v845
    %3134 = vmatmul.f32.gmra.mxu0 %v60
    %v3135 = vpop.f32.mrf.mxu0
    %v3136 = vadd.f32 %v3071, %v3135
    %3137 = vmatmul.f32.gmra.mxu0 %v78
    %v3138 = vpop.f32.mrf.mxu0
    %v3139 = vadd.f32 %v3074, %v3138
    %3140 = vmatmul.f32.gmra.mxu0 %v96
    %v3141 = vpop.f32.mrf.mxu0
    %v3142 = vadd.f32 %v3077, %v3141
    %3143 = vmatmul.f32.gmra.mxu0 %v114
    %v3144 = vpop.f32.mrf.mxu0
    %v3145 = vadd.f32 %v3080, %v3144
    %3146 = vmatmul.f32.gmra.mxu0 %v132
    %v3147 = vpop.f32.mrf.mxu0
    %v3148 = vadd.f32 %v3083, %v3147
    %3149 = vmatmul.f32.gmra.mxu0 %v150
    %v3150 = vpop.f32.mrf.mxu0
    %v3151 = vadd.f32 %v3086, %v3150
    %3152 = vmatmul.f32.gmra.mxu0 %v168
    %v3153 = vpop.f32.mrf.mxu0
    %v3154 = vadd.f32 %v3089, %v3153
    %3155 = vmatmul.f32.gmra.mxu0 %v186
    %v3156 = vpop.f32.mrf.mxu0
    %v3157 = vadd.f32 %v3092, %v3156
    %3158 = vmatmul.f32.gmra.mxu0 %v204
    %v3159 = vpop.f32.mrf.mxu0
    %v3160 = vadd.f32 %v3095, %v3159
    %3161 = vmatmul.f32.gmra.mxu0 %v222
    %v3162 = vpop.f32.mrf.mxu0
    %v3163 = vadd.f32 %v3098, %v3162
    %3164 = vmatmul.f32.gmra.mxu0 %v240
    %v3165 = vpop.f32.mrf.mxu0
    %v3166 = vadd.f32 %v3101, %v3165
    %3167 = vmatmul.f32.gmra.mxu0 %v258
    %v3168 = vpop.f32.mrf.mxu0
    %v3169 = vadd.f32 %v3104, %v3168
    %3170 = vmatmul.f32.gmra.mxu0 %v276
    %v3171 = vpop.f32.mrf.mxu0
    %v3172 = vadd.f32 %v3107, %v3171
    %3173 = vmatmul.f32.gmra.mxu0 %v294
    %v3174 = vpop.f32.mrf.mxu0
    %v3175 = vadd.f32 %v3110, %v3174
    %3176 = vmatmul.f32.gmra.mxu0 %v312
    %v3177 = vpop.f32.mrf.mxu0
    %v3178 = vadd.f32 %v3113, %v3177
    %3179 = vmatmul.f32.gmra.mxu0 %v330
    %v3180 = vpop.f32.mrf.mxu0
    %v3181 = vadd.f32 %v3116, %v3180
    %3182 = vdwg.mxu0
    %3183 = vmatpush.msra.mxu0 %v907
    %3184 = vmatpush.msra.mxu0 %v905
    %3185 = vmatpush.msra.mxu0 %v903
    %3186 = vmatpush.msra.mxu0 %v901
    %3187 = vmatpush.msra.mxu0 %v899
    %3188 = vmatpush.msra.mxu0 %v897
    %3189 = vmatpush.msra.mxu0 %v895
    %3190 = vmatpush.msra.mxu0 %v893
    %3191 = vmatpush.msra.mxu0 %v891
    %3192 = vmatpush.msra.mxu0 %v889
    %3193 = vmatpush.msra.mxu0 %v887
    %3194 = vmatpush.msra.mxu0 %v885
    %3195 = vmatpush.msra.mxu0 %v883
    %3196 = vmatpush.msra.mxu0 %v881
    %3197 = vmatpush.msra.mxu0 %v879
    %3198 = vmatpush.msra.mxu0 %v877
    %3199 = vmatmul.f32.gmra.mxu0 %v61
    %v3200 = vpop.f32.mrf.mxu0
    %v3201 = vadd.f32 %v3136, %v3200
    %3202 = vmatmul.f32.gmra.mxu0 %v79
    %v3203 = vpop.f32.mrf.mxu0
    %v3204 = vadd.f32 %v3139, %v3203
    %3205 = vmatmul.f32.gmra.mxu0 %v97
    %v3206 = vpop.f32.mrf.mxu0
    %v3207 = vadd.f32 %v3142, %v3206
    %3208 = vmatmul.f32.gmra.mxu0 %v115
    %v3209 = vpop.f32.mrf.mxu0
    %v3210 = vadd.f32 %v3145, %v3209
    %3211 = vmatmul.f32.gmra.mxu0 %v133
    %v3212 = vpop.f32.mrf.mxu0
    %v3213 = vadd.f32 %v3148, %v3212
    %3214 = vmatmul.f32.gmra.mxu0 %v151
    %v3215 = vpop.f32.mrf.mxu0
    %v3216 = vadd.f32 %v3151, %v3215
    %3217 = vmatmul.f32.gmra.mxu0 %v169
    %v3218 = vpop.f32.mrf.mxu0
    %v3219 = vadd.f32 %v3154, %v3218
    %3220 = vmatmul.f32.gmra.mxu0 %v187
    %v3221 = vpop.f32.mrf.mxu0
    %v3222 = vadd.f32 %v3157, %v3221
    %3223 = vmatmul.f32.gmra.mxu0 %v205
    %v3224 = vpop.f32.mrf.mxu0
    %v3225 = vadd.f32 %v3160, %v3224
    %3226 = vmatmul.f32.gmra.mxu0 %v223
    %v3227 = vpop.f32.mrf.mxu0
    %v3228 = vadd.f32 %v3163, %v3227
    %3229 = vmatmul.f32.gmra.mxu0 %v241
    %v3230 = vpop.f32.mrf.mxu0
    %v3231 = vadd.f32 %v3166, %v3230
    %3232 = vmatmul.f32.gmra.mxu0 %v259
    %v3233 = vpop.f32.mrf.mxu0
    %v3234 = vadd.f32 %v3169, %v3233
    %3235 = vmatmul.f32.gmra.mxu0 %v277
    %v3236 = vpop.f32.mrf.mxu0
    %v3237 = vadd.f32 %v3172, %v3236
    %3238 = vmatmul.f32.gmra.mxu0 %v295
    %v3239 = vpop.f32.mrf.mxu0
    %v3240 = vadd.f32 %v3175, %v3239
    %3241 = vmatmul.f32.gmra.mxu0 %v313
    %v3242 = vpop.f32.mrf.mxu0
    %v3243 = vadd.f32 %v3178, %v3242
    %3244 = vmatmul.f32.gmra.mxu0 %v331
    %v3245 = vpop.f32.mrf.mxu0
    %v3246 = vadd.f32 %v3181, %v3245
    %3247 = vdwg.mxu0
    %3248 = vst [vmem:[#allocation7] sm:$0xff] %v2031
    %3249 = vst [vmem:[#allocation7 + $0x8] sm:$0xff] %v3201
    %3250 = vst [vmem:[#allocation7 + $0x10] sm:$0xff] %v2034
    %3251 = vst [vmem:[#allocation7 + $0x18] sm:$0xff] %v3204
    %3252 = vst [vmem:[#allocation7 + $0x20] sm:$0xff] %v2037
    %3253 = vst [vmem:[#allocation7 + $0x28] sm:$0xff] %v3207
    %3254 = vst [vmem:[#allocation7 + $0x30] sm:$0xff] %v2040
    %3255 = vst [vmem:[#allocation7 + $0x38] sm:$0xff] %v3210
    %3256 = vst [vmem:[#allocation7 + $0x40] sm:$0xff] %v2043
    %3257 = vst [vmem:[#allocation7 + $0x48] sm:$0xff] %v3213
    %3258 = vst [vmem:[#allocation7 + $0x50] sm:$0xff] %v2046
    %3259 = vst [vmem:[#allocation7 + $0x58] sm:$0xff] %v3216
    %3260 = vst [vmem:[#allocation7 + $0x60] sm:$0xff] %v2049
    %3261 = vst [vmem:[#allocation7 + $0x68] sm:$0xff] %v3219
    %3262 = vst [vmem:[#allocation7 + $0x70] sm:$0xff] %v2052
    %3263 = vst [vmem:[#allocation7 + $0x78] sm:$0xff] %v3222
    %3264 = vst [vmem:[#allocation7 + $0x80] sm:$0xff] %v2055
    %3265 = vst [vmem:[#allocation7 + $0x88] sm:$0xff] %v3225
    %3266 = vst [vmem:[#allocation7 + $0x90] sm:$0xff] %v2058
    %3267 = vst [vmem:[#allocation7 + $0x98] sm:$0xff] %v3228
    %3268 = vst [vmem:[#allocation7 + $0xa0] sm:$0xff] %v2061
    %3269 = vst [vmem:[#allocation7 + $0xa8] sm:$0xff] %v3231
    %3270 = vst [vmem:[#allocation7 + $0xb0] sm:$0xff] %v2064
    %3271 = vst [vmem:[#allocation7 + $0xb8] sm:$0xff] %v3234
    %3272 = vst [vmem:[#allocation7 + $0xc0] sm:$0xff] %v2067
    %3273 = vst [vmem:[#allocation7 + $0xc8] sm:$0xff] %v3237
    %3274 = vst [vmem:[#allocation7 + $0xd0] sm:$0xff] %v2070
    %3275 = vst [vmem:[#allocation7 + $0xd8] sm:$0xff] %v3240
    %3276 = vst [vmem:[#allocation7 + $0xe0] sm:$0xff] %v2073
    %3277 = vst [vmem:[#allocation7 + $0xe8] sm:$0xff] %v3243
    %3278 = vst [vmem:[#allocation7 + $0xf0] sm:$0xff] %v2076
    %3279 = vst [vmem:[#allocation7 + $0xf8] sm:$0xff] %v3246
    // Predicated region
    $region18: #{tpu_custom_call.1} parent=1 // pred_check
      _
    $region19: #{tpu_custom_call.1} parent=1 // pred_check_branch
      %3281 = sbr.rel (0) target = $region21
    $region20: #{tpu_custom_call.1} parent=1 // pred_region
      %3283 = vsyncadd [#allocation4], 0
      %s3284 = sshll.u32 [#allocation7], 4
      %s3285 = int_to_ptr.vmem [resolvable:$true] %s3284
      %s3286 = sshll.u32 %s2, 4
      %s3287 = int_to_ptr.hbm [resolvable:$true] %s3286
      %3292 = dma.vmem_to_hbm [thread:$0]  %s3285, 4096, %s3287, [#allocation4], 256, 256, 16
    $region21: #{tpu_custom_call.1} parent=1 // pred_fallthru
      _
    // Predicated region
    $region22: #{tpu_custom_call.1} parent=1 // pred_check
      _
    $region23: #{tpu_custom_call.1} parent=1 // pred_check_branch
      %3294 = sbr.rel (0) target = $region25
    $region24: #{tpu_custom_call.1} parent=1 // pred_region
      %3296 = dma.done [#allocation4], 4096
    $region25: #{tpu_custom_call.1} parent=1 // pred_fallthru
      _
    %3297 = vsyncpa [#allocation3], 1
    %3298 = vsyncpa [#allocation6], 1
    %3299 = vsyncpa [#allocation4], 1

// kernel: tpu_custom_call.1
$region0: #{tpu_custom_call.1}
  #allocation0 [shape = 'u32[]', space=smem, size = 0x4, offset = 0x4, fixed_abs, tag = 'smem constant byte address 0x4 - core index']
  #allocation1 [shape = 'u32[72,128]{1,0:T(1,128)}', space=vmem, size = 0x9000, scoped, tag = 'internal scratch']
  %s0 = inlined_call_operand.hbm [shape: f32[128,2304], index: 0, kind: input, shape index: {}]
  %s1 = inlined_call_operand.hbm [shape: f32[2304,256], index: 1, kind: input, shape index: {}]
  %s2 = inlined_call_operand.hbm [shape: f32[128,256], index: 2, kind: output, shape index: {}]
  %s3 = sld [smem:[#allocation0]]
  $region26: #{tpu_custom_call.1} parent=0
    _
  %s5 = ssub.s32 1, %s3
  %s6 = scalar_select 0, %s5, %s3
  $region1: #{tpu_custom_call.1} parent=0
    #allocation2 [shape = 'u8[1179648]{0}', space=vmem, size = 0x120000, scoped, tag = 'input window, operand 0, single buffered']
    #allocation3 [shape = 's32[1]{0}', space=sflag, size = 0x4, scoped, tag = 'scoped memory for tpu_custom_call.1']
    #allocation4 [shape = 's32[1]{0}', space=sflag, size = 0x4, scoped, tag = 'scoped memory for tpu_custom_call.1']
    #allocation5 [shape = 'u8[2359296]{0}', space=vmem, size = 0x240000, scoped, tag = 'input window, operand 1, single buffered']
    #allocation6 [shape = 's32[1]{0}', space=sflag, size = 0x4, scoped, tag = 'scoped memory for tpu_custom_call.1']
    #allocation7 [shape = 'u8[131072]{0}', space=vmem, size = 0x20000, scoped, tag = 'output window, operand 0, single buffered']
    %7 = vsyncpa [#allocation3], 0
    %8 = vsyncpa [#allocation6], 0
    %9 = vsyncpa [#allocation4], 0
    // Predicated region
    $region2: #{tpu_custom_call.1} parent=1 // pred_check
      _
    $region3: #{tpu_custom_call.1} parent=1 // pred_check_branch
      %11 = sbr.rel (0) target = $region5
    $region4: #{tpu_custom_call.1} parent=1 // pred_region
      %13 = vsyncadd [#allocation3], 0
      %s14 = sshll.u32 %s0, 4
      %s15 = int_to_ptr.hbm [resolvable:$true] %s14
      %s16 = sshll.u32 [#allocation2], 4
      %s17 = int_to_ptr.vmem [resolvable:$true] %s16
      %22 = dma.hbm_to_vmem [thread:$0]  %s15, 36864, %s17, [#allocation3], 2304, 2304, 144
    $region5: #{tpu_custom_call.1} parent=1 // pred_fallthru
      _
    // Predicated region
    $region6: #{tpu_custom_call.1} parent=1 // pred_check
      _
    $region7: #{tpu_custom_call.1} parent=1 // pred_check_branch
      %24 = sbr.rel (0) target = $region9
    $region8: #{tpu_custom_call.1} parent=1 // pred_region
      %26 = vsyncadd [#allocation6], 0
      %s27 = sshll.u32 %s1, 4
      %s28 = int_to_ptr.hbm [resolvable:$true] %s27
      %s29 = sshll.u32 [#allocation5], 4
      %s30 = int_to_ptr.vmem [resolvable:$true] %s29
      %35 = dma.hbm_to_vmem [thread:$0]  %s28, 73728, %s30, [#allocation6], 256, 256, 16
    $region9: #{tpu_custom_call.1} parent=1 // pred_fallthru
      _
    // Predicated region
    $region10: #{tpu_custom_call.1} parent=1 // pred_check
      _
    $region11: #{tpu_custom_call.1} parent=1 // pred_check_branch
      %37 = sbr.rel (0) target = $region13
    $region12: #{tpu_custom_call.1} parent=1 // pred_region
      %39 = dma.done [#allocation3], 36864
    $region13: #{tpu_custom_call.1} parent=1 // pred_fallthru
      _
    // Predicated region
    $region14: #{tpu_custom_call.1} parent=1 // pred_check
      _
    $region15: #{tpu_custom_call.1} parent=1 // pred_check_branch
      %41 = sbr.rel (0) target = $region17
    $region16: #{tpu_custom_call.1} parent=1 // pred_region
      %43 = dma.done [#allocation6], 73728
    $region17: #{tpu_custom_call.1} parent=1 // pred_fallthru
      _
    %v44 = vld [vmem:[#allocation2] sm:$0xff]
    %v45 = vld [vmem:[#allocation2 + $0x8] sm:$0xff]
    %v46 = vld [vmem:[#allocation2 + $0x10] sm:$0xff]
    %v47 = vld [vmem:[#allocation2 + $0x18] sm:$0xff]
    %v48 = vld [vmem:[#allocation2 + $0x20] sm:$0xff]
    %v49 = vld [vmem:[#allocation2 + $0x28] sm:$0xff]
    %v50 = vld [vmem:[#allocation2 + $0x30] sm:$0xff]
    %v51 = vld [vmem:[#allocation2 + $0x38] sm:$0xff]
    %v52 = vld [vmem:[#allocation2 + $0x40] sm:$0xff]
    %v53 = vld [vmem:[#allocation2 + $0x48] sm:$0xff]
    %v54 = vld [vmem:[#allocation2 + $0x50] sm:$0xff]
    %v55 = vld [vmem:[#allocation2 + $0x58] sm:$0xff]
    %v56 = vld [vmem:[#allocation2 + $0x60] sm:$0xff]
    %v57 = vld [vmem:[#allocation2 + $0x68] sm:$0xff]
    %v58 = vld [vmem:[#allocation2 + $0x70] sm:$0xff]
    %v59 = vld [vmem:[#allocation2 + $0x78] sm:$0xff]
    %v60 = vld [vmem:[#allocation2 + $0x80] sm:$0xff]
    %v61 = vld [vmem:[#allocation2 + $0x88] sm:$0xff]
    %v62 = vld [vmem:[#allocation2 + $0x90] sm:$0xff]
    %v63 = vld [vmem:[#allocation2 + $0x98] sm:$0xff]
    %v64 = vld [vmem:[#allocation2 + $0xa0] sm:$0xff]
    %v65 = vld [vmem:[#allocation2 + $0xa8] sm:$0xff]
    %v66 = vld [vmem:[#allocation2 + $0xb0] sm:$0xff]
    %v67 = vld [vmem:[#allocation2 + $0xb8] sm:$0xff]
    %v68 = vld [vmem:[#allocation2 + $0xc0] sm:$0xff]
    %v69 = vld [vmem:[#allocation2 + $0xc8] sm:$0xff]
    %v70 = vld [vmem:[#allocation2 + $0xd0] sm:$0xff]
    %v71 = vld [vmem:[#allocation2 + $0xd8] sm:$0xff]
    %v72 = vld [vmem:[#allocation2 + $0xe0] sm:$0xff]
    %v73 = vld [vmem:[#allocation2 + $0xe8] sm:$0xff]
    %v74 = vld [vmem:[#allocation2 + $0xf0] sm:$0xff]
    %v75 = vld [vmem:[#allocation2 + $0xf8] sm:$0xff]
    %v76 = vld [vmem:[#allocation2 + $0x100] sm:$0xff]
    %v77 = vld [vmem:[#allocation2 + $0x108] sm:$0xff]
    %v78 = vld [vmem:[#allocation2 + $0x110] sm:$0xff]
    %v79 = vld [vmem:[#allocation2 + $0x118] sm:$0xff]
    %v80 = vld [vmem:[#allocation2 + $0x120] sm:$0xff]
    %v81 = vld [vmem:[#allocation2 + $0x128] sm:$0xff]
    %v82 = vld [vmem:[#allocation2 + $0x130] sm:$0xff]
    %v83 = vld [vmem:[#allocation2 + $0x138] sm:$0xff]
    %v84 = vld [vmem:[#allocation2 + $0x140] sm:$0xff]
    %v85 = vld [vmem:[#allocation2 + $0x148] sm:$0xff]
    %v86 = vld [vmem:[#allocation2 + $0x150] sm:$0xff]
    %v87 = vld [vmem:[#allocation2 + $0x158] sm:$0xff]
    %v88 = vld [vmem:[#allocation2 + $0x160] sm:$0xff]
    %v89 = vld [vmem:[#allocation2 + $0x168] sm:$0xff]
    %v90 = vld [vmem:[#allocation2 + $0x170] sm:$0xff]
    %v91 = vld [vmem:[#allocation2 + $0x178] sm:$0xff]
    %v92 = vld [vmem:[#allocation2 + $0x180] sm:$0xff]
    %v93 = vld [vmem:[#allocation2 + $0x188] sm:$0xff]
    %v94 = vld [vmem:[#allocation2 + $0x190] sm:$0xff]
    %v95 = vld [vmem:[#allocation2 + $0x198] sm:$0xff]
    %v96 = vld [vmem:[#allocation2 + $0x1a0] sm:$0xff]
    %v97 = vld [vmem:[#allocation2 + $0x1a8] sm:$0xff]
    %v98 = vld [vmem:[#allocation2 + $0x1b0] sm:$0xff]
    %v99 = vld [vmem:[#allocation2 + $0x1b8] sm:$0xff]
    %v100 = vld [vmem:[#allocation2 + $0x1c0] sm:$0xff]
    %v101 = vld [vmem:[#allocation2 + $0x1c8] sm:$0xff]
    %v102 = vld [vmem:[#allocation2 + $0x1d0] sm:$0xff]
    %v103 = vld [vmem:[#allocation2 + $0x1d8] sm:$0xff]
    %v104 = vld [vmem:[#allocation2 + $0x1e0] sm:$0xff]
    %v105 = vld [vmem:[#allocation2 + $0x1e8] sm:$0xff]
    %v106 = vld [vmem:[#allocation2 + $0x1f0] sm:$0xff]
    %v107 = vld [vmem:[#allocation2 + $0x1f8] sm:$0xff]
    %v108 = vld [vmem:[#allocation2 + $0x200] sm:$0xff]
    %v109 = vld [vmem:[#allocation2 + $0x208] sm:$0xff]
    %v110 = vld [vmem:[#allocation2 + $0x210] sm:$0xff]
    %v111 = vld [vmem:[#allocation2 + $0x218] sm:$0xff]
    %v112 = vld [vmem:[#allocation2 + $0x220] sm:$0xff]
    %v113 = vld [vmem:[#allocation2 + $0x228] sm:$0xff]
    %v114 = vld [vmem:[#allocation2 + $0x230] sm:$0xff]
    %v115 = vld [vmem:[#allocation2 + $0x238] sm:$0xff]
    %v116 = vld [vmem:[#allocation2 + $0x240] sm:$0xff]
    %v117 = vld [vmem:[#allocation2 + $0x248] sm:$0xff]
    %v118 = vld [vmem:[#allocation2 + $0x250] sm:$0xff]
    %v119 = vld [vmem:[#allocation2 + $0x258] sm:$0xff]
    %v120 = vld [vmem:[#allocation2 + $0x260] sm:$0xff]
    %v121 = vld [vmem:[#allocation2 + $0x268] sm:$0xff]
    %v122 = vld [vmem:[#allocation2 + $0x270] sm:$0xff]
    %v123 = vld [vmem:[#allocation2 + $0x278] sm:$0xff]
    %v124 = vld [vmem:[#allocation2 + $0x280] sm:$0xff]
    %v125 = vld [vmem:[#allocation2 + $0x288] sm:$0xff]
    %v126 = vld [vmem:[#allocation2 + $0x290] sm:$0xff]
    %v127 = vld [vmem:[#allocation2 + $0x298] sm:$0xff]
    %v128 = vld [vmem:[#allocation2 + $0x2a0] sm:$0xff]
    %v129 = vld [vmem:[#allocation2 + $0x2a8] sm:$0xff]
    %v130 = vld [vmem:[#allocation2 + $0x2b0] sm:$0xff]
    %v131 = vld [vmem:[#allocation2 + $0x2b8] sm:$0xff]
    %v132 = vld [vmem:[#allocation2 + $0x2c0] sm:$0xff]
    %v133 = vld [vmem:[#allocation2 + $0x2c8] sm:$0xff]
    %v134 = vld [vmem:[#allocation2 + $0x2d0] sm:$0xff]
    %v135 = vld [vmem:[#allocation2 + $0x2d8] sm:$0xff]
    %v136 = vld [vmem:[#allocation2 + $0x2e0] sm:$0xff]
    %v137 = vld [vmem:[#allocation2 + $0x2e8] sm:$0xff]
    %v138 = vld [vmem:[#allocation2 + $0x2f0] sm:$0xff]
    %v139 = vld [vmem:[#allocation2 + $0x2f8] sm:$0xff]
    %v140 = vld [vmem:[#allocation2 + $0x300] sm:$0xff]
    %v141 = vld [vmem:[#allocation2 + $0x308] sm:$0xff]
    %v142 = vld [vmem:[#allocation2 + $0x310] sm:$0xff]
    %v143 = vld [vmem:[#allocation2 + $0x318] sm:$0xff]
    %v144 = vld [vmem:[#allocation2 + $0x320] sm:$0xff]
    %v145 = vld [vmem:[#allocation2 + $0x328] sm:$0xff]
    %v146 = vld [vmem:[#allocation2 + $0x330] sm:$0xff]
    %v147 = vld [vmem:[#allocation2 + $0x338] sm:$0xff]
    %v148 = vld [vmem:[#allocation2 + $0x340] sm:$0xff]
    %v149 = vld [vmem:[#allocation2 + $0x348] sm:$0xff]
    %v150 = vld [vmem:[#allocation2 + $0x350] sm:$0xff]
    %v151 = vld [vmem:[#allocation2 + $0x358] sm:$0xff]
    %v152 = vld [vmem:[#allocation2 + $0x360] sm:$0xff]
    %v153 = vld [vmem:[#allocation2 + $0x368] sm:$0xff]
    %v154 = vld [vmem:[#allocation2 + $0x370] sm:$0xff]
    %v155 = vld [vmem:[#allocation2 + $0x378] sm:$0xff]
    %v156 = vld [vmem:[#allocation2 + $0x380] sm:$0xff]
    %v157 = vld [vmem:[#allocation2 + $0x388] sm:$0xff]
    %v158 = vld [vmem:[#allocation2 + $0x390] sm:$0xff]
    %v159 = vld [vmem:[#allocation2 + $0x398] sm:$0xff]
    %v160 = vld [vmem:[#allocation2 + $0x3a0] sm:$0xff]
    %v161 = vld [vmem:[#allocation2 + $0x3a8] sm:$0xff]
    %v162 = vld [vmem:[#allocation2 + $0x3b0] sm:$0xff]
    %v163 = vld [vmem:[#allocation2 + $0x3b8] sm:$0xff]
    %v164 = vld [vmem:[#allocation2 + $0x3c0] sm:$0xff]
    %v165 = vld [vmem:[#allocation2 + $0x3c8] sm:$0xff]
    %v166 = vld [vmem:[#allocation2 + $0x3d0] sm:$0xff]
    %v167 = vld [vmem:[#allocation2 + $0x3d8] sm:$0xff]
    %v168 = vld [vmem:[#allocation2 + $0x3e0] sm:$0xff]
    %v169 = vld [vmem:[#allocation2 + $0x3e8] sm:$0xff]
    %v170 = vld [vmem:[#allocation2 + $0x3f0] sm:$0xff]
    %v171 = vld [vmem:[#allocation2 + $0x3f8] sm:$0xff]
    %v172 = vld [vmem:[#allocation2 + $0x400] sm:$0xff]
    %v173 = vld [vmem:[#allocation2 + $0x408] sm:$0xff]
    %v174 = vld [vmem:[#allocation2 + $0x410] sm:$0xff]
    %v175 = vld [vmem:[#allocation2 + $0x418] sm:$0xff]
    %v176 = vld [vmem:[#allocation2 + $0x420] sm:$0xff]
    %v177 = vld [vmem:[#allocation2 + $0x428] sm:$0xff]
    %v178 = vld [vmem:[#allocation2 + $0x430] sm:$0xff]
    %v179 = vld [vmem:[#allocation2 + $0x438] sm:$0xff]
    %v180 = vld [vmem:[#allocation2 + $0x440] sm:$0xff]
    %v181 = vld [vmem:[#allocation2 + $0x448] sm:$0xff]
    %v182 = vld [vmem:[#allocation2 + $0x450] sm:$0xff]
    %v183 = vld [vmem:[#allocation2 + $0x458] sm:$0xff]
    %v184 = vld [vmem:[#allocation2 + $0x460] sm:$0xff]
    %v185 = vld [vmem:[#allocation2 + $0x468] sm:$0xff]
    %v186 = vld [vmem:[#allocation2 + $0x470] sm:$0xff]
    %v187 = vld [vmem:[#allocation2 + $0x478] sm:$0xff]
    %v188 = vld [vmem:[#allocation2 + $0x480] sm:$0xff]
    %v189 = vld [vmem:[#allocation2 + $0x488] sm:$0xff]
    %v190 = vld [vmem:[#allocation2 + $0x490] sm:$0xff]
    %v191 = vld [vmem:[#allocation2 + $0x498] sm:$0xff]
    %v192 = vld [vmem:[#allocation2 + $0x4a0] sm:$0xff]
    %v193 = vld [vmem:[#allocation2 + $0x4a8] sm:$0xff]
    %v194 = vld [vmem:[#allocation2 + $0x4b0] sm:$0xff]
    %v195 = vld [vmem:[#allocation2 + $0x4b8] sm:$0xff]
    %v196 = vld [vmem:[#allocation2 + $0x4c0] sm:$0xff]
    %v197 = vld [vmem:[#allocation2 + $0x4c8] sm:$0xff]
    %v198 = vld [vmem:[#allocation2 + $0x4d0] sm:$0xff]
    %v199 = vld [vmem:[#allocation2 + $0x4d8] sm:$0xff]
    %v200 = vld [vmem:[#allocation2 + $0x4e0] sm:$0xff]
    %v201 = vld [vmem:[#allocation2 + $0x4e8] sm:$0xff]
    %v202 = vld [vmem:[#allocation2 + $0x4f0] sm:$0xff]
    %v203 = vld [vmem:[#allocation2 + $0x4f8] sm:$0xff]
    %v204 = vld [vmem:[#allocation2 + $0x500] sm:$0xff]
    %v205 = vld [vmem:[#allocation2 + $0x508] sm:$0xff]
    %v206 = vld [vmem:[#allocation2 + $0x510] sm:$0xff]
    %v207 = vld [vmem:[#allocation2 + $0x518] sm:$0xff]
    %v208 = vld [vmem:[#allocation2 + $0x520] sm:$0xff]
    %v209 = vld [vmem:[#allocation2 + $0x528] sm:$0xff]
    %v210 = vld [vmem:[#allocation2 + $0x530] sm:$0xff]
    %v211 = vld [vmem:[#allocation2 + $0x538] sm:$0xff]
    %v212 = vld [vmem:[#allocation2 + $0x540] sm:$0xff]
    %v213 = vld [vmem:[#allocation2 + $0x548] sm:$0xff]
    %v214 = vld [vmem:[#allocation2 + $0x550] sm:$0xff]
    %v215 = vld [vmem:[#allocation2 + $0x558] sm:$0xff]
    %v216 = vld [vmem:[#allocation2 + $0x560] sm:$0xff]
    %v217 = vld [vmem:[#allocation2 + $0x568] sm:$0xff]
    %v218 = vld [vmem:[#allocation2 + $0x570] sm:$0xff]
    %v219 = vld [vmem:[#allocation2 + $0x578] sm:$0xff]
    %v220 = vld [vmem:[#allocation2 + $0x580] sm:$0xff]
    %v221 = vld [vmem:[#allocation2 + $0x588] sm:$0xff]
    %v222 = vld [vmem:[#allocation2 + $0x590] sm:$0xff]
    %v223 = vld [vmem:[#allocation2 + $0x598] sm:$0xff]
    %v224 = vld [vmem:[#allocation2 + $0x5a0] sm:$0xff]
    %v225 = vld [vmem:[#allocation2 + $0x5a8] sm:$0xff]
    %v226 = vld [vmem:[#allocation2 + $0x5b0] sm:$0xff]
    %v227 = vld [vmem:[#allocation2 + $0x5b8] sm:$0xff]
    %v228 = vld [vmem:[#allocation2 + $0x5c0] sm:$0xff]
    %v229 = vld [vmem:[#allocation2 + $0x5c8] sm:$0xff]
    %v230 = vld [vmem:[#allocation2 + $0x5d0] sm:$0xff]
    %v231 = vld [vmem:[#allocation2 + $0x5d8] sm:$0xff]
    %v232 = vld [vmem:[#allocation2 + $0x5e0] sm:$0xff]
    %v233 = vld [vmem:[#allocation2 + $0x5e8] sm:$0xff]
    %v234 = vld [vmem:[#allocation2 + $0x5f0] sm:$0xff]
    %v235 = vld [vmem:[#allocation2 + $0x5f8] sm:$0xff]
    %v236 = vld [vmem:[#allocation2 + $0x600] sm:$0xff]
    %v237 = vld [vmem:[#allocation2 + $0x608] sm:$0xff]
    %v238 = vld [vmem:[#allocation2 + $0x610] sm:$0xff]
    %v239 = vld [vmem:[#allocation2 + $0x618] sm:$0xff]
    %v240 = vld [vmem:[#allocation2 + $0x620] sm:$0xff]
    %v241 = vld [vmem:[#allocation2 + $0x628] sm:$0xff]
    %v242 = vld [vmem:[#allocation2 + $0x630] sm:$0xff]
    %v243 = vld [vmem:[#allocation2 + $0x638] sm:$0xff]
    %v244 = vld [vmem:[#allocation2 + $0x640] sm:$0xff]
    %v245 = vld [vmem:[#allocation2 + $0x648] sm:$0xff]
    %v246 = vld [vmem:[#allocation2 + $0x650] sm:$0xff]
    %v247 = vld [vmem:[#allocation2 + $0x658] sm:$0xff]
    %v248 = vld [vmem:[#allocation2 + $0x660] sm:$0xff]
    %v249 = vld [vmem:[#allocation2 + $0x668] sm:$0xff]
    %v250 = vld [vmem:[#allocation2 + $0x670] sm:$0xff]
    %v251 = vld [vmem:[#allocation2 + $0x678] sm:$0xff]
    %v252 = vld [vmem:[#allocation2 + $0x680] sm:$0xff]
    %v253 = vld [vmem:[#allocation2 + $0x688] sm:$0xff]
    %v254 = vld [vmem:[#allocation2 + $0x690] sm:$0xff]
    %v255 = vld [vmem:[#allocation2 + $0x698] sm:$0xff]
    %v256 = vld [vmem:[#allocation2 + $0x6a0] sm:$0xff]
    %v257 = vld [vmem:[#allocation2 + $0x6a8] sm:$0xff]
    %v258 = vld [vmem:[#allocation2 + $0x6b0] sm:$0xff]
    %v259 = vld [vmem:[#allocation2 + $0x6b8] sm:$0xff]
    %v260 = vld [vmem:[#allocation2 + $0x6c0] sm:$0xff]
    %v261 = vld [vmem:[#allocation2 + $0x6c8] sm:$0xff]
    %v262 = vld [vmem:[#allocation2 + $0x6d0] sm:$0xff]
    %v263 = vld [vmem:[#allocation2 + $0x6d8] sm:$0xff]
    %v264 = vld [vmem:[#allocation2 + $0x6e0] sm:$0xff]
    %v265 = vld [vmem:[#allocation2 + $0x6e8] sm:$0xff]
    %v266 = vld [vmem:[#allocation2 + $0x6f0] sm:$0xff]
    %v267 = vld [vmem:[#allocation2 + $0x6f8] sm:$0xff]
    %v268 = vld [vmem:[#allocation2 + $0x700] sm:$0xff]
    %v269 = vld [vmem:[#allocation2 + $0x708] sm:$0xff]
    %v270 = vld [vmem:[#allocation2 + $0x710] sm:$0xff]
    %v271 = vld [vmem:[#allocation2 + $0x718] sm:$0xff]
    %v272 = vld [vmem:[#allocation2 + $0x720] sm:$0xff]
    %v273 = vld [vmem:[#allocation2 + $0x728] sm:$0xff]
    %v274 = vld [vmem:[#allocation2 + $0x730] sm:$0xff]
    %v275 = vld [vmem:[#allocation2 + $0x738] sm:$0xff]
    %v276 = vld [vmem:[#allocation2 + $0x740] sm:$0xff]
    %v277 = vld [vmem:[#allocation2 + $0x748] sm:$0xff]
    %v278 = vld [vmem:[#allocation2 + $0x750] sm:$0xff]
    %v279 = vld [vmem:[#allocation2 + $0x758] sm:$0xff]
    %v280 = vld [vmem:[#allocation2 + $0x760] sm:$0xff]
    %v281 = vld [vmem:[#allocation2 + $0x768] sm:$0xff]
    %v282 = vld [vmem:[#allocation2 + $0x770] sm:$0xff]
    %v283 = vld [vmem:[#allocation2 + $0x778] sm:$0xff]
    %v284 = vld [vmem:[#allocation2 + $0x780] sm:$0xff]
    %v285 = vld [vmem:[#allocation2 + $0x788] sm:$0xff]
    %v286 = vld [vmem:[#allocation2 + $0x790] sm:$0xff]
    %v287 = vld [vmem:[#allocation2 + $0x798] sm:$0xff]
    %v288 = vld [vmem:[#allocation2 + $0x7a0] sm:$0xff]
    %v289 = vld [vmem:[#allocation2 + $0x7a8] sm:$0xff]
    %v290 = vld [vmem:[#allocation2 + $0x7b0] sm:$0xff]
    %v291 = vld [vmem:[#allocation2 + $0x7b8] sm:$0xff]
    %v292 = vld [vmem:[#allocation2 + $0x7c0] sm:$0xff]
    %v293 = vld [vmem:[#allocation2 + $0x7c8] sm:$0xff]
    %v294 = vld [vmem:[#allocation2 + $0x7d0] sm:$0xff]
    %v295 = vld [vmem:[#allocation2 + $0x7d8] sm:$0xff]
    %v296 = vld [vmem:[#allocation2 + $0x7e0] sm:$0xff]
    %v297 = vld [vmem:[#allocation2 + $0x7e8] sm:$0xff]
    %v298 = vld [vmem:[#allocation2 + $0x7f0] sm:$0xff]
    %v299 = vld [vmem:[#allocation2 + $0x7f8] sm:$0xff]
    %v300 = vld [vmem:[#allocation2 + $0x800] sm:$0xff]
    %v301 = vld [vmem:[#allocation2 + $0x808] sm:$0xff]
    %v302 = vld [vmem:[#allocation2 + $0x810] sm:$0xff]
    %v303 = vld [vmem:[#allocation2 + $0x818] sm:$0xff]
    %v304 = vld [vmem:[#allocation2 + $0x820] sm:$0xff]
    %v305 = vld [vmem:[#allocation2 + $0x828] sm:$0xff]
    %v306 = vld [vmem:[#allocation2 + $0x830] sm:$0xff]
    %v307 = vld [vmem:[#allocation2 + $0x838] sm:$0xff]
    %v308 = vld [vmem:[#allocation2 + $0x840] sm:$0xff]
    %v309 = vld [vmem:[#allocation2 + $0x848] sm:$0xff]
    %v310 = vld [vmem:[#allocation2 + $0x850] sm:$0xff]
    %v311 = vld [vmem:[#allocation2 + $0x858] sm:$0xff]
    %v312 = vld [vmem:[#allocation2 + $0x860] sm:$0xff]
    %v313 = vld [vmem:[#allocation2 + $0x868] sm:$0xff]
    %v314 = vld [vmem:[#allocation2 + $0x870] sm:$0xff]
    %v315 = vld [vmem:[#allocation2 + $0x878] sm:$0xff]
    %v316 = vld [vmem:[#allocation2 + $0x880] sm:$0xff]
    %v317 = vld [vmem:[#allocation2 + $0x888] sm:$0xff]
    %v318 = vld [vmem:[#allocation2 + $0x890] sm:$0xff]
    %v319 = vld [vmem:[#allocation2 + $0x898] sm:$0xff]
    %v320 = vld [vmem:[#allocation2 + $0x8a0] sm:$0xff]
    %v321 = vld [vmem:[#allocation2 + $0x8a8] sm:$0xff]
    %v322 = vld [vmem:[#allocation2 + $0x8b0] sm:$0xff]
    %v323 = vld [vmem:[#allocation2 + $0x8b8] sm:$0xff]
    %v324 = vld [vmem:[#allocation2 + $0x8c0] sm:$0xff]
    %v325 = vld [vmem:[#allocation2 + $0x8c8] sm:$0xff]
    %v326 = vld [vmem:[#allocation2 + $0x8d0] sm:$0xff]
    %v327 = vld [vmem:[#allocation2 + $0x8d8] sm:$0xff]
    %v328 = vld [vmem:[#allocation2 + $0x8e0] sm:$0xff]
    %v329 = vld [vmem:[#allocation2 + $0x8e8] sm:$0xff]
    %v330 = vld [vmem:[#allocation2 + $0x8f0] sm:$0xff]
    %v331 = vld [vmem:[#allocation2 + $0x8f8] sm:$0xff]
    %v332 = vld [vmem:[#allocation5] sm:$0xff]
    %v333 = vld [vmem:[#allocation5 + $0x8] sm:$0xff]
    %v334 = vld [vmem:[#allocation5 + $0x10] sm:$0xff]
    %v335 = vld [vmem:[#allocation5 + $0x18] sm:$0xff]
    %v336 = vld [vmem:[#allocation5 + $0x20] sm:$0xff]
    %v337 = vld [vmem:[#allocation5 + $0x28] sm:$0xff]
    %v338 = vld [vmem:[#allocation5 + $0x30] sm:$0xff]
    %v339 = vld [vmem:[#allocation5 + $0x38] sm:$0xff]
    %v340 = vld [vmem:[#allocation5 + $0x40] sm:$0xff]
    %v341 = vld [vmem:[#allocation5 + $0x48] sm:$0xff]
    %v342 = vld [vmem:[#allocation5 + $0x50] sm:$0xff]
    %v343 = vld [vmem:[#allocation5 + $0x58] sm:$0xff]
    %v344 = vld [vmem:[#allocation5 + $0x60] sm:$0xff]
    %v345 = vld [vmem:[#allocation5 + $0x68] sm:$0xff]
    %v346 = vld [vmem:[#allocation5 + $0x70] sm:$0xff]
    %v347 = vld [vmem:[#allocation5 + $0x78] sm:$0xff]
    %v348 = vld [vmem:[#allocation5 + $0x80] sm:$0xff]
    %v349 = vld [vmem:[#allocation5 + $0x88] sm:$0xff]
    %v350 = vld [vmem:[#allocation5 + $0x90] sm:$0xff]
    %v351 = vld [vmem:[#allocation5 + $0x98] sm:$0xff]
    %v352 = vld [vmem:[#allocation5 + $0xa0] sm:$0xff]
    %v353 = vld [vmem:[#allocation5 + $0xa8] sm:$0xff]
    %v354 = vld [vmem:[#allocation5 + $0xb0] sm:$0xff]
    %v355 = vld [vmem:[#allocation5 + $0xb8] sm:$0xff]
    %v356 = vld [vmem:[#allocation5 + $0xc0] sm:$0xff]
    %v357 = vld [vmem:[#allocation5 + $0xc8] sm:$0xff]
    %v358 = vld [vmem:[#allocation5 + $0xd0] sm:$0xff]
    %v359 = vld [vmem:[#allocation5 + $0xd8] sm:$0xff]
    %v360 = vld [vmem:[#allocation5 + $0xe0] sm:$0xff]
    %v361 = vld [vmem:[#allocation5 + $0xe8] sm:$0xff]
    %v362 = vld [vmem:[#allocation5 + $0xf0] sm:$0xff]
    %v363 = vld [vmem:[#allocation5 + $0xf8] sm:$0xff]
    %v364 = vld [vmem:[#allocation5 + $0x100] sm:$0xff]
    %v365 = vld [vmem:[#allocation5 + $0x108] sm:$0xff]
    %v366 = vld [vmem:[#allocation5 + $0x110] sm:$0xff]
    %v367 = vld [vmem:[#allocation5 + $0x118] sm:$0xff]
    %v368 = vld [vmem:[#allocation5 + $0x120] sm:$0xff]
    %v369 = vld [vmem:[#allocation5 + $0x128] sm:$0xff]
    %v370 = vld [vmem:[#allocation5 + $0x130] sm:$0xff]
    %v371 = vld [vmem:[#allocation5 + $0x138] sm:$0xff]
    %v372 = vld [vmem:[#allocation5 + $0x140] sm:$0xff]
    %v373 = vld [vmem:[#allocation5 + $0x148] sm:$0xff]
    %v374 = vld [vmem:[#allocation5 + $0x150] sm:$0xff]
    %v375 = vld [vmem:[#allocation5 + $0x158] sm:$0xff]
    %v376 = vld [vmem:[#allocation5 + $0x160] sm:$0xff]
    %v377 = vld [vmem:[#allocation5 + $0x168] sm:$0xff]
    %v378 = vld [vmem:[#allocation5 + $0x170] sm:$0xff]
    %v379 = vld [vmem:[#allocation5 + $0x178] sm:$0xff]
    %v380 = vld [vmem:[#allocation5 + $0x180] sm:$0xff]
    %v381 = vld [vmem:[#allocation5 + $0x188] sm:$0xff]
    %v382 = vld [vmem:[#allocation5 + $0x190] sm:$0xff]
    %v383 = vld [vmem:[#allocation5 + $0x198] sm:$0xff]
    %v384 = vld [vmem:[#allocation5 + $0x1a0] sm:$0xff]
    %v385 = vld [vmem:[#allocation5 + $0x1a8] sm:$0xff]
    %v386 = vld [vmem:[#allocation5 + $0x1b0] sm:$0xff]
    %v387 = vld [vmem:[#allocation5 + $0x1b8] sm:$0xff]
    %v388 = vld [vmem:[#allocation5 + $0x1c0] sm:$0xff]
    %v389 = vld [vmem:[#allocation5 + $0x1c8] sm:$0xff]
    %v390 = vld [vmem:[#allocation5 + $0x1d0] sm:$0xff]
    %v391 = vld [vmem:[#allocation5 + $0x1d8] sm:$0xff]
    %v392 = vld [vmem:[#allocation5 + $0x1e0] sm:$0xff]
    %v393 = vld [vmem:[#allocation5 + $0x1e8] sm:$0xff]
    %v394 = vld [vmem:[#allocation5 + $0x1f0] sm:$0xff]
    %v395 = vld [vmem:[#allocation5 + $0x1f8] sm:$0xff]
    %v396 = vld [vmem:[#allocation5 + $0x200] sm:$0xff]
    %v397 = vld [vmem:[#allocation5 + $0x208] sm:$0xff]
    %v398 = vld [vmem:[#allocation5 + $0x210] sm:$0xff]
    %v399 = vld [vmem:[#allocation5 + $0x218] sm:$0xff]
    %v400 = vld [vmem:[#allocation5 + $0x220] sm:$0xff]
    %v401 = vld [vmem:[#allocation5 + $0x228] sm:$0xff]
    %v402 = vld [vmem:[#allocation5 + $0x230] sm:$0xff]
    %v403 = vld [vmem:[#allocation5 + $0x238] sm:$0xff]
    %v404 = vld [vmem:[#allocation5 + $0x240] sm:$0xff]
    %v405 = vld [vmem:[#allocation5 + $0x248] sm:$0xff]
    %v406 = vld [vmem:[#allocation5 + $0x250] sm:$0xff]
    %v407 = vld [vmem:[#allocation5 + $0x258] sm:$0xff]
    %v408 = vld [vmem:[#allocation5 + $0x260] sm:$0xff]
    %v409 = vld [vmem:[#allocation5 + $0x268] sm:$0xff]
    %v410 = vld [vmem:[#allocation5 + $0x270] sm:$0xff]
    %v411 = vld [vmem:[#allocation5 + $0x278] sm:$0xff]
    %v412 = vld [vmem:[#allocation5 + $0x280] sm:$0xff]
    %v413 = vld [vmem:[#allocation5 + $0x288] sm:$0xff]
    %v414 = vld [vmem:[#allocation5 + $0x290] sm:$0xff]
    %v415 = vld [vmem:[#allocation5 + $0x298] sm:$0xff]
    %v416 = vld [vmem:[#allocation5 + $0x2a0] sm:$0xff]
    %v417 = vld [vmem:[#allocation5 + $0x2a8] sm:$0xff]
    %v418 = vld [vmem:[#allocation5 + $0x2b0] sm:$0xff]
    %v419 = vld [vmem:[#allocation5 + $0x2b8] sm:$0xff]
    %v420 = vld [vmem:[#allocation5 + $0x2c0] sm:$0xff]
    %v421 = vld [vmem:[#allocation5 + $0x2c8] sm:$0xff]
    %v422 = vld [vmem:[#allocation5 + $0x2d0] sm:$0xff]
    %v423 = vld [vmem:[#allocation5 + $0x2d8] sm:$0xff]
    %v424 = vld [vmem:[#allocation5 + $0x2e0] sm:$0xff]
    %v425 = vld [vmem:[#allocation5 + $0x2e8] sm:$0xff]
    %v426 = vld [vmem:[#allocation5 + $0x2f0] sm:$0xff]
    %v427 = vld [vmem:[#allocation5 + $0x2f8] sm:$0xff]
    %v428 = vld [vmem:[#allocation5 + $0x300] sm:$0xff]
    %v429 = vld [vmem:[#allocation5 + $0x308] sm:$0xff]
    %v430 = vld [vmem:[#allocation5 + $0x310] sm:$0xff]
    %v431 = vld [vmem:[#allocation5 + $0x318] sm:$0xff]
    %v432 = vld [vmem:[#allocation5 + $0x320] sm:$0xff]
    %v433 = vld [vmem:[#allocation5 + $0x328] sm:$0xff]
    %v434 = vld [vmem:[#allocation5 + $0x330] sm:$0xff]
    %v435 = vld [vmem:[#allocation5 + $0x338] sm:$0xff]
    %v436 = vld [vmem:[#allocation5 + $0x340] sm:$0xff]
    %v437 = vld [vmem:[#allocation5 + $0x348] sm:$0xff]
    %v438 = vld [vmem:[#allocation5 + $0x350] sm:$0xff]
    %v439 = vld [vmem:[#allocation5 + $0x358] sm:$0xff]
    %v440 = vld [vmem:[#allocation5 + $0x360] sm:$0xff]
    %v441 = vld [vmem:[#allocation5 + $0x368] sm:$0xff]
    %v442 = vld [vmem:[#allocation5 + $0x370] sm:$0xff]
    %v443 = vld [vmem:[#allocation5 + $0x378] sm:$0xff]
    %v444 = vld [vmem:[#allocation5 + $0x380] sm:$0xff]
    %v445 = vld [vmem:[#allocation5 + $0x388] sm:$0xff]
    %v446 = vld [vmem:[#allocation5 + $0x390] sm:$0xff]
    %v447 = vld [vmem:[#allocation5 + $0x398] sm:$0xff]
    %v448 = vld [vmem:[#allocation5 + $0x3a0] sm:$0xff]
    %v449 = vld [vmem:[#allocation5 + $0x3a8] sm:$0xff]
    %v450 = vld [vmem:[#allocation5 + $0x3b0] sm:$0xff]
    %v451 = vld [vmem:[#allocation5 + $0x3b8] sm:$0xff]
    %v452 = vld [vmem:[#allocation5 + $0x3c0] sm:$0xff]
    %v453 = vld [vmem:[#allocation5 + $0x3c8] sm:$0xff]
    %v454 = vld [vmem:[#allocation5 + $0x3d0] sm:$0xff]
    %v455 = vld [vmem:[#allocation5 + $0x3d8] sm:$0xff]
    %v456 = vld [vmem:[#allocation5 + $0x3e0] sm:$0xff]
    %v457 = vld [vmem:[#allocation5 + $0x3e8] sm:$0xff]
    %v458 = vld [vmem:[#allocation5 + $0x3f0] sm:$0xff]
    %v459 = vld [vmem:[#allocation5 + $0x3f8] sm:$0xff]
    %v460 = vld [vmem:[#allocation5 + $0x400] sm:$0xff]
    %v461 = vld [vmem:[#allocation5 + $0x408] sm:$0xff]
    %v462 = vld [vmem:[#allocation5 + $0x410] sm:$0xff]
    %v463 = vld [vmem:[#allocation5 + $0x418] sm:$0xff]
    %v464 = vld [vmem:[#allocation5 + $0x420] sm:$0xff]
    %v465 = vld [vmem:[#allocation5 + $0x428] sm:$0xff]
    %v466 = vld [vmem:[#allocation5 + $0x430] sm:$0xff]
    %v467 = vld [vmem:[#allocation5 + $0x438] sm:$0xff]
    %v468 = vld [vmem:[#allocation5 + $0x440] sm:$0xff]
    %v469 = vld [vmem:[#allocation5 + $0x448] sm:$0xff]
    %v470 = vld [vmem:[#allocation5 + $0x450] sm:$0xff]
    %v471 = vld [vmem:[#allocation5 + $0x458] sm:$0xff]
    %v472 = vld [vmem:[#allocation5 + $0x460] sm:$0xff]
    %v473 = vld [vmem:[#allocation5 + $0x468] sm:$0xff]
    %v474 = vld [vmem:[#allocation5 + $0x470] sm:$0xff]
    %v475 = vld [vmem:[#allocation5 + $0x478] sm:$0xff]
    %v476 = vld [vmem:[#allocation5 + $0x480] sm:$0xff]
    %v477 = vld [vmem:[#allocation5 + $0x488] sm:$0xff]
    %v478 = vld [vmem:[#allocation5 + $0x490] sm:$0xff]
    %v479 = vld [vmem:[#allocation5 + $0x498] sm:$0xff]
    %v480 = vld [vmem:[#allocation5 + $0x4a0] sm:$0xff]
    %v481 = vld [vmem:[#allocation5 + $0x4a8] sm:$0xff]
    %v482 = vld [vmem:[#allocation5 + $0x4b0] sm:$0xff]
    %v483 = vld [vmem:[#allocation5 + $0x4b8] sm:$0xff]
    %v484 = vld [vmem:[#allocation5 + $0x4c0] sm:$0xff]
    %v485 = vld [vmem:[#allocation5 + $0x4c8] sm:$0xff]
    %v486 = vld [vmem:[#allocation5 + $0x4d0] sm:$0xff]
    %v487 = vld [vmem:[#allocation5 + $0x4d8] sm:$0xff]
    %v488 = vld [vmem:[#allocation5 + $0x4e0] sm:$0xff]
    %v489 = vld [vmem:[#allocation5 + $0x4e8] sm:$0xff]
    %v490 = vld [vmem:[#allocation5 + $0x4f0] sm:$0xff]
    %v491 = vld [vmem:[#allocation5 + $0x4f8] sm:$0xff]
    %v492 = vld [vmem:[#allocation5 + $0x500] sm:$0xff]
    %v493 = vld [vmem:[#allocation5 + $0x508] sm:$0xff]
    %v494 = vld [vmem:[#allocation5 + $0x510] sm:$0xff]
    %v495 = vld [vmem:[#allocation5 + $0x518] sm:$0xff]
    %v496 = vld [vmem:[#allocation5 + $0x520] sm:$0xff]
    %v497 = vld [vmem:[#allocation5 + $0x528] sm:$0xff]
    %v498 = vld [vmem:[#allocation5 + $0x530] sm:$0xff]
    %v499 = vld [vmem:[#allocation5 + $0x538] sm:$0xff]
    %v500 = vld [vmem:[#allocation5 + $0x540] sm:$0xff]
    %v501 = vld [vmem:[#allocation5 + $0x548] sm:$0xff]
    %v502 = vld [vmem:[#allocation5 + $0x550] sm:$0xff]
    %v503 = vld [vmem:[#allocation5 + $0x558] sm:$0xff]
    %v504 = vld [vmem:[#allocation5 + $0x560] sm:$0xff]
    %v505 = vld [vmem:[#allocation5 + $0x568] sm:$0xff]
    %v506 = vld [vmem:[#allocation5 + $0x570] sm:$0xff]
    %v507 = vld [vmem:[#allocation5 + $0x578] sm:$0xff]
    %v508 = vld [vmem:[#allocation5 + $0x580] sm:$0xff]
    %v509 = vld [vmem:[#allocation5 + $0x588] sm:$0xff]
    %v510 = vld [vmem:[#allocation5 + $0x590] sm:$0xff]
    %v511 = vld [vmem:[#allocation5 + $0x598] sm:$0xff]
    %v512 = vld [vmem:[#allocation5 + $0x5a0] sm:$0xff]
    %v513 = vld [vmem:[#allocation5 + $0x5a8] sm:$0xff]
    %v514 = vld [vmem:[#allocation5 + $0x5b0] sm:$0xff]
    %v515 = vld [vmem:[#allocation5 + $0x5b8] sm:$0xff]
    %v516 = vld [vmem:[#allocation5 + $0x5c0] sm:$0xff]
    %v517 = vld [vmem:[#allocation5 + $0x5c8] sm:$0xff]
    %v518 = vld [vmem:[#allocation5 + $0x5d0] sm:$0xff]
    %v519 = vld [vmem:[#allocation5 + $0x5d8] sm:$0xff]
    %v520 = vld [vmem:[#allocation5 + $0x5e0] sm:$0xff]
    %v521 = vld [vmem:[#allocation5 + $0x5e8] sm:$0xff]
    %v522 = vld [vmem:[#allocation5 + $0x5f0] sm:$0xff]
    %v523 = vld [vmem:[#allocation5 + $0x5f8] sm:$0xff]
    %v524 = vld [vmem:[#allocation5 + $0x600] sm:$0xff]
    %v525 = vld [vmem:[#allocation5 + $0x608] sm:$0xff]
    %v526 = vld [vmem:[#allocation5 + $0x610] sm:$0xff]
    %v527 = vld [vmem:[#allocation5 + $0x618] sm:$0xff]
    %v528 = vld [vmem:[#allocation5 + $0x620] sm:$0xff]
    %v529 = vld [vmem:[#allocation5 + $0x628] sm:$0xff]
    %v530 = vld [vmem:[#allocation5 + $0x630] sm:$0xff]
    %v531 = vld [vmem:[#allocation5 + $0x638] sm:$0xff]
    %v532 = vld [vmem:[#allocation5 + $0x640] sm:$0xff]
    %v533 = vld [vmem:[#allocation5 + $0x648] sm:$0xff]
    %v534 = vld [vmem:[#allocation5 + $0x650] sm:$0xff]
    %v535 = vld [vmem:[#allocation5 + $0x658] sm:$0xff]
    %v536 = vld [vmem:[#allocation5 + $0x660] sm:$0xff]
    %v537 = vld [vmem:[#allocation5 + $0x668] sm:$0xff]
    %v538 = vld [vmem:[#allocation5 + $0x670] sm:$0xff]
    %v539 = vld [vmem:[#allocation5 + $0x678] sm:$0xff]
    %v540 = vld [vmem:[#allocation5 + $0x680] sm:$0xff]
    %v541 = vld [vmem:[#allocation5 + $0x688] sm:$0xff]
    %v542 = vld [vmem:[#allocation5 + $0x690] sm:$0xff]
    %v543 = vld [vmem:[#allocation5 + $0x698] sm:$0xff]
    %v544 = vld [vmem:[#allocation5 + $0x6a0] sm:$0xff]
    %v545 = vld [vmem:[#allocation5 + $0x6a8] sm:$0xff]
    %v546 = vld [vmem:[#allocation5 + $0x6b0] sm:$0xff]
    %v547 = vld [vmem:[#allocation5 + $0x6b8] sm:$0xff]
    %v548 = vld [vmem:[#allocation5 + $0x6c0] sm:$0xff]
    %v549 = vld [vmem:[#allocation5 + $0x6c8] sm:$0xff]
    %v550 = vld [vmem:[#allocation5 + $0x6d0] sm:$0xff]
    %v551 = vld [vmem:[#allocation5 + $0x6d8] sm:$0xff]
    %v552 = vld [vmem:[#allocation5 + $0x6e0] sm:$0xff]
    %v553 = vld [vmem:[#allocation5 + $0x6e8] sm:$0xff]
    %v554 = vld [vmem:[#allocation5 + $0x6f0] sm:$0xff]
    %v555 = vld [vmem:[#allocation5 + $0x6f8] sm:$0xff]
    %v556 = vld [vmem:[#allocation5 + $0x700] sm:$0xff]
    %v557 = vld [vmem:[#allocation5 + $0x708] sm:$0xff]
    %v558 = vld [vmem:[#allocation5 + $0x710] sm:$0xff]
    %v559 = vld [vmem:[#allocation5 + $0x718] sm:$0xff]
    %v560 = vld [vmem:[#allocation5 + $0x720] sm:$0xff]
    %v561 = vld [vmem:[#allocation5 + $0x728] sm:$0xff]
    %v562 = vld [vmem:[#allocation5 + $0x730] sm:$0xff]
    %v563 = vld [vmem:[#allocation5 + $0x738] sm:$0xff]
    %v564 = vld [vmem:[#allocation5 + $0x740] sm:$0xff]
    %v565 = vld [vmem:[#allocation5 + $0x748] sm:$0xff]
    %v566 = vld [vmem:[#allocation5 + $0x750] sm:$0xff]
    %v567 = vld [vmem:[#allocation5 + $0x758] sm:$0xff]
    %v568 = vld [vmem:[#allocation5 + $0x760] sm:$0xff]
    %v569 = vld [vmem:[#allocation5 + $0x768] sm:$0xff]
    %v570 = vld [vmem:[#allocation5 + $0x770] sm:$0xff]
    %v571 = vld [vmem:[#allocation5 + $0x778] sm:$0xff]
    %v572 = vld [vmem:[#allocation5 + $0x780] sm:$0xff]
    %v573 = vld [vmem:[#allocation5 + $0x788] sm:$0xff]
    %v574 = vld [vmem:[#allocation5 + $0x790] sm:$0xff]
    %v575 = vld [vmem:[#allocation5 + $0x798] sm:$0xff]
    %v576 = vld [vmem:[#allocation5 + $0x7a0] sm:$0xff]
    %v577 = vld [vmem:[#allocation5 + $0x7a8] sm:$0xff]
    %v578 = vld [vmem:[#allocation5 + $0x7b0] sm:$0xff]
    %v579 = vld [vmem:[#allocation5 + $0x7b8] sm:$0xff]
    %v580 = vld [vmem:[#allocation5 + $0x7c0] sm:$0xff]
    %v581 = vld [vmem:[#allocation5 + $0x7c8] sm:$0xff]
    %v582 = vld [vmem:[#allocation5 + $0x7d0] sm:$0xff]
    %v583 = vld [vmem:[#allocation5 + $0x7d8] sm:$0xff]
    %v584 = vld [vmem:[#allocation5 + $0x7e0] sm:$0xff]
    %v585 = vld [vmem:[#allocation5 + $0x7e8] sm:$0xff]
    %v586 = vld [vmem:[#allocation5 + $0x7f0] sm:$0xff]
    %v587 = vld [vmem:[#allocation5 + $0x7f8] sm:$0xff]
    %v588 = vld [vmem:[#allocation5 + $0x800] sm:$0xff]
    %v589 = vld [vmem:[#allocation5 + $0x808] sm:$0xff]
    %v590 = vld [vmem:[#allocation5 + $0x810] sm:$0xff]
    %v591 = vld [vmem:[#allocation5 + $0x818] sm:$0xff]
    %v592 = vld [vmem:[#allocation5 + $0x820] sm:$0xff]
    %v593 = vld [vmem:[#allocation5 + $0x828] sm:$0xff]
    %v594 = vld [vmem:[#allocation5 + $0x830] sm:$0xff]
    %v595 = vld [vmem:[#allocation5 + $0x838] sm:$0xff]
    %v596 = vld [vmem:[#allocation5 + $0x840] sm:$0xff]
    %v597 = vld [vmem:[#allocation5 + $0x848] sm:$0xff]
    %v598 = vld [vmem:[#allocation5 + $0x850] sm:$0xff]
    %v599 = vld [vmem:[#allocation5 + $0x858] sm:$0xff]
    %v600 = vld [vmem:[#allocation5 + $0x860] sm:$0xff]
    %v601 = vld [vmem:[#allocation5 + $0x868] sm:$0xff]
    %v602 = vld [vmem:[#allocation5 + $0x870] sm:$0xff]
    %v603 = vld [vmem:[#allocation5 + $0x878] sm:$0xff]
    %v604 = vld [vmem:[#allocation5 + $0x880] sm:$0xff]
    %v605 = vld [vmem:[#allocation5 + $0x888] sm:$0xff]
    %v606 = vld [vmem:[#allocation5 + $0x890] sm:$0xff]
    %v607 = vld [vmem:[#allocation5 + $0x898] sm:$0xff]
    %v608 = vld [vmem:[#allocation5 + $0x8a0] sm:$0xff]
    %v609 = vld [vmem:[#allocation5 + $0x8a8] sm:$0xff]
    %v610 = vld [vmem:[#allocation5 + $0x8b0] sm:$0xff]
    %v611 = vld [vmem:[#allocation5 + $0x8b8] sm:$0xff]
    %v612 = vld [vmem:[#allocation5 + $0x8c0] sm:$0xff]
    %v613 = vld [vmem:[#allocation5 + $0x8c8] sm:$0xff]
    %v614 = vld [vmem:[#allocation5 + $0x8d0] sm:$0xff]
    %v615 = vld [vmem:[#allocation5 + $0x8d8] sm:$0xff]
    %v616 = vld [vmem:[#allocation5 + $0x8e0] sm:$0xff]
    %v617 = vld [vmem:[#allocation5 + $0x8e8] sm:$0xff]
    %v618 = vld [vmem:[#allocation5 + $0x8f0] sm:$0xff]
    %v619 = vld [vmem:[#allocation5 + $0x8f8] sm:$0xff]
    %v620 = vld [vmem:[#allocation5 + $0x900] sm:$0xff]
    %v621 = vld [vmem:[#allocation5 + $0x908] sm:$0xff]
    %v622 = vld [vmem:[#allocation5 + $0x910] sm:$0xff]
    %v623 = vld [vmem:[#allocation5 + $0x918] sm:$0xff]
    %v624 = vld [vmem:[#allocation5 + $0x920] sm:$0xff]
    %v625 = vld [vmem:[#allocation5 + $0x928] sm:$0xff]
    %v626 = vld [vmem:[#allocation5 + $0x930] sm:$0xff]
    %v627 = vld [vmem:[#allocation5 + $0x938] sm:$0xff]
    %v628 = vld [vmem:[#allocation5 + $0x940] sm:$0xff]
    %v629 = vld [vmem:[#allocation5 + $0x948] sm:$0xff]
    %v630 = vld [vmem:[#allocation5 + $0x950] sm:$0xff]
    %v631 = vld [vmem:[#allocation5 + $0x958] sm:$0xff]
    %v632 = vld [vmem:[#allocation5 + $0x960] sm:$0xff]
    %v633 = vld [vmem:[#allocation5 + $0x968] sm:$0xff]
    %v634 = vld [vmem:[#allocation5 + $0x970] sm:$0xff]
    %v635 = vld [vmem:[#allocation5 + $0x978] sm:$0xff]
    %v636 = vld [vmem:[#allocation5 + $0x980] sm:$0xff]
    %v637 = vld [vmem:[#allocation5 + $0x988] sm:$0xff]
    %v638 = vld [vmem:[#allocation5 + $0x990] sm:$0xff]
    %v639 = vld [vmem:[#allocation5 + $0x998] sm:$0xff]
    %v640 = vld [vmem:[#allocation5 + $0x9a0] sm:$0xff]
    %v641 = vld [vmem:[#allocation5 + $0x9a8] sm:$0xff]
    %v642 = vld [vmem:[#allocation5 + $0x9b0] sm:$0xff]
    %v643 = vld [vmem:[#allocation5 + $0x9b8] sm:$0xff]
    %v644 = vld [vmem:[#allocation5 + $0x9c0] sm:$0xff]
    %v645 = vld [vmem:[#allocation5 + $0x9c8] sm:$0xff]
    %v646 = vld [vmem:[#allocation5 + $0x9d0] sm:$0xff]
    %v647 = vld [vmem:[#allocation5 + $0x9d8] sm:$0xff]
    %v648 = vld [vmem:[#allocation5 + $0x9e0] sm:$0xff]
    %v649 = vld [vmem:[#allocation5 + $0x9e8] sm:$0xff]
    %v650 = vld [vmem:[#allocation5 + $0x9f0] sm:$0xff]
    %v651 = vld [vmem:[#allocation5 + $0x9f8] sm:$0xff]
    %v652 = vld [vmem:[#allocation5 + $0xa00] sm:$0xff]
    %v653 = vld [vmem:[#allocation5 + $0xa08] sm:$0xff]
    %v654 = vld [vmem:[#allocation5 + $0xa10] sm:$0xff]
    %v655 = vld [vmem:[#allocation5 + $0xa18] sm:$0xff]
    %v656 = vld [vmem:[#allocation5 + $0xa20] sm:$0xff]
    %v657 = vld [vmem:[#allocation5 + $0xa28] sm:$0xff]
    %v658 = vld [vmem:[#allocation5 + $0xa30] sm:$0xff]
    %v659 = vld [vmem:[#allocation5 + $0xa38] sm:$0xff]
    %v660 = vld [vmem:[#allocation5 + $0xa40] sm:$0xff]
    %v661 = vld [vmem:[#allocation5 + $0xa48] sm:$0xff]
    %v662 = vld [vmem:[#allocation5 + $0xa50] sm:$0xff]
    %v663 = vld [vmem:[#allocation5 + $0xa58] sm:$0xff]
    %v664 = vld [vmem:[#allocation5 + $0xa60] sm:$0xff]
    %v665 = vld [vmem:[#allocation5 + $0xa68] sm:$0xff]
    %v666 = vld [vmem:[#allocation5 + $0xa70] sm:$0xff]
    %v667 = vld [vmem:[#allocation5 + $0xa78] sm:$0xff]
    %v668 = vld [vmem:[#allocation5 + $0xa80] sm:$0xff]
    %v669 = vld [vmem:[#allocation5 + $0xa88] sm:$0xff]
    %v670 = vld [vmem:[#allocation5 + $0xa90] sm:$0xff]
    %v671 = vld [vmem:[#allocation5 + $0xa98] sm:$0xff]
    %v672 = vld [vmem:[#allocation5 + $0xaa0] sm:$0xff]
    %v673 = vld [vmem:[#allocation5 + $0xaa8] sm:$0xff]
    %v674 = vld [vmem:[#allocation5 + $0xab0] sm:$0xff]
    %v675 = vld [vmem:[#allocation5 + $0xab8] sm:$0xff]
    %v676 = vld [vmem:[#allocation5 + $0xac0] sm:$0xff]
    %v677 = vld [vmem:[#allocation5 + $0xac8] sm:$0xff]
    %v678 = vld [vmem:[#allocation5 + $0xad0] sm:$0xff]
    %v679 = vld [vmem:[#allocation5 + $0xad8] sm:$0xff]
    %v680 = vld [vmem:[#allocation5 + $0xae0] sm:$0xff]
    %v681 = vld [vmem:[#allocation5 + $0xae8] sm:$0xff]
    %v682 = vld [vmem:[#allocation5 + $0xaf0] sm:$0xff]
    %v683 = vld [vmem:[#allocation5 + $0xaf8] sm:$0xff]
    %v684 = vld [vmem:[#allocation5 + $0xb00] sm:$0xff]
    %v685 = vld [vmem:[#allocation5 + $0xb08] sm:$0xff]
    %v686 = vld [vmem:[#allocation5 + $0xb10] sm:$0xff]
    %v687 = vld [vmem:[#allocation5 + $0xb18] sm:$0xff]
    %v688 = vld [vmem:[#allocation5 + $0xb20] sm:$0xff]
    %v689 = vld [vmem:[#allocation5 + $0xb28] sm:$0xff]
    %v690 = vld [vmem:[#allocation5 + $0xb30] sm:$0xff]
    %v691 = vld [vmem:[#allocation5 + $0xb38] sm:$0xff]
    %v692 = vld [vmem:[#allocation5 + $0xb40] sm:$0xff]
    %v693 = vld [vmem:[#allocation5 + $0xb48] sm:$0xff]
    %v694 = vld [vmem:[#allocation5 + $0xb50] sm:$0xff]
    %v695 = vld [vmem:[#allocation5 + $0xb58] sm:$0xff]
    %v696 = vld [vmem:[#allocation5 + $0xb60] sm:$0xff]
    %v697 = vld [vmem:[#allocation5 + $0xb68] sm:$0xff]
    %v698 = vld [vmem:[#allocation5 + $0xb70] sm:$0xff]
    %v699 = vld [vmem:[#allocation5 + $0xb78] sm:$0xff]
    %v700 = vld [vmem:[#allocation5 + $0xb80] sm:$0xff]
    %v701 = vld [vmem:[#allocation5 + $0xb88] sm:$0xff]
    %v702 = vld [vmem:[#allocation5 + $0xb90] sm:$0xff]
    %v703 = vld [vmem:[#allocation5 + $0xb98] sm:$0xff]
    %v704 = vld [vmem:[#allocation5 + $0xba0] sm:$0xff]
    %v705 = vld [vmem:[#allocation5 + $0xba8] sm:$0xff]
    %v706 = vld [vmem:[#allocation5 + $0xbb0] sm:$0xff]
    %v707 = vld [vmem:[#allocation5 + $0xbb8] sm:$0xff]
    %v708 = vld [vmem:[#allocation5 + $0xbc0] sm:$0xff]
    %v709 = vld [vmem:[#allocation5 + $0xbc8] sm:$0xff]
    %v710 = vld [vmem:[#allocation5 + $0xbd0] sm:$0xff]
    %v711 = vld [vmem:[#allocation5 + $0xbd8] sm:$0xff]
    %v712 = vld [vmem:[#allocation5 + $0xbe0] sm:$0xff]
    %v713 = vld [vmem:[#allocation5 + $0xbe8] sm:$0xff]
    %v714 = vld [vmem:[#allocation5 + $0xbf0] sm:$0xff]
    %v715 = vld [vmem:[#allocation5 + $0xbf8] sm:$0xff]
    %v716 = vld [vmem:[#allocation5 + $0xc00] sm:$0xff]
    %v717 = vld [vmem:[#allocation5 + $0xc08] sm:$0xff]
    %v718 = vld [vmem:[#allocation5 + $0xc10] sm:$0xff]
    %v719 = vld [vmem:[#allocation5 + $0xc18] sm:$0xff]
    %v720 = vld [vmem:[#allocation5 + $0xc20] sm:$0xff]
    %v721 = vld [vmem:[#allocation5 + $0xc28] sm:$0xff]
    %v722 = vld [vmem:[#allocation5 + $0xc30] sm:$0xff]
    %v723 = vld [vmem:[#allocation5 + $0xc38] sm:$0xff]
    %v724 = vld [vmem:[#allocation5 + $0xc40] sm:$0xff]
    %v725 = vld [vmem:[#allocation5 + $0xc48] sm:$0xff]
    %v726 = vld [vmem:[#allocation5 + $0xc50] sm:$0xff]
    %v727 = vld [vmem:[#allocation5 + $0xc58] sm:$0xff]
    %v728 = vld [vmem:[#allocation5 + $0xc60] sm:$0xff]
    %v729 = vld [vmem:[#allocation5 + $0xc68] sm:$0xff]
    %v730 = vld [vmem:[#allocation5 + $0xc70] sm:$0xff]
    %v731 = vld [vmem:[#allocation5 + $0xc78] sm:$0xff]
    %v732 = vld [vmem:[#allocation5 + $0xc80] sm:$0xff]
    %v733 = vld [vmem:[#allocation5 + $0xc88] sm:$0xff]
    %v734 = vld [vmem:[#allocation5 + $0xc90] sm:$0xff]
    %v735 = vld [vmem:[#allocation5 + $0xc98] sm:$0xff]
    %v736 = vld [vmem:[#allocation5 + $0xca0] sm:$0xff]
    %v737 = vld [vmem:[#allocation5 + $0xca8] sm:$0xff]
    %v738 = vld [vmem:[#allocation5 + $0xcb0] sm:$0xff]
    %v739 = vld [vmem:[#allocation5 + $0xcb8] sm:$0xff]
    %v740 = vld [vmem:[#allocation5 + $0xcc0] sm:$0xff]
    %v741 = vld [vmem:[#allocation5 + $0xcc8] sm:$0xff]
    %v742 = vld [vmem:[#allocation5 + $0xcd0] sm:$0xff]
    %v743 = vld [vmem:[#allocation5 + $0xcd8] sm:$0xff]
    %v744 = vld [vmem:[#allocation5 + $0xce0] sm:$0xff]
    %v745 = vld [vmem:[#allocation5 + $0xce8] sm:$0xff]
    %v746 = vld [vmem:[#allocation5 + $0xcf0] sm:$0xff]
    %v747 = vld [vmem:[#allocation5 + $0xcf8] sm:$0xff]
    %v748 = vld [vmem:[#allocation5 + $0xd00] sm:$0xff]
    %v749 = vld [vmem:[#allocation5 + $0xd08] sm:$0xff]
    %v750 = vld [vmem:[#allocation5 + $0xd10] sm:$0xff]
    %v751 = vld [vmem:[#allocation5 + $0xd18] sm:$0xff]
    %v752 = vld [vmem:[#allocation5 + $0xd20] sm:$0xff]
    %v753 = vld [vmem:[#allocation5 + $0xd28] sm:$0xff]
    %v754 = vld [vmem:[#allocation5 + $0xd30] sm:$0xff]
    %v755 = vld [vmem:[#allocation5 + $0xd38] sm:$0xff]
    %v756 = vld [vmem:[#allocation5 + $0xd40] sm:$0xff]
    %v757 = vld [vmem:[#allocation5 + $0xd48] sm:$0xff]
    %v758 = vld [vmem:[#allocation5 + $0xd50] sm:$0xff]
    %v759 = vld [vmem:[#allocation5 + $0xd58] sm:$0xff]
    %v760 = vld [vmem:[#allocation5 + $0xd60] sm:$0xff]
    %v761 = vld [vmem:[#allocation5 + $0xd68] sm:$0xff]
    %v762 = vld [vmem:[#allocation5 + $0xd70] sm:$0xff]
    %v763 = vld [vmem:[#allocation5 + $0xd78] sm:$0xff]
    %v764 = vld [vmem:[#allocation5 + $0xd80] sm:$0xff]
    %v765 = vld [vmem:[#allocation5 + $0xd88] sm:$0xff]
    %v766 = vld [vmem:[#allocation5 + $0xd90] sm:$0xff]
    %v767 = vld [vmem:[#allocation5 + $0xd98] sm:$0xff]
    %v768 = vld [vmem:[#allocation5 + $0xda0] sm:$0xff]
    %v769 = vld [vmem:[#allocation5 + $0xda8] sm:$0xff]
    %v770 = vld [vmem:[#allocation5 + $0xdb0] sm:$0xff]
    %v771 = vld [vmem:[#allocation5 + $0xdb8] sm:$0xff]
    %v772 = vld [vmem:[#allocation5 + $0xdc0] sm:$0xff]
    %v773 = vld [vmem:[#allocation5 + $0xdc8] sm:$0xff]
    %v774 = vld [vmem:[#allocation5 + $0xdd0] sm:$0xff]
    %v775 = vld [vmem:[#allocation5 + $0xdd8] sm:$0xff]
    %v776 = vld [vmem:[#allocation5 + $0xde0] sm:$0xff]
    %v777 = vld [vmem:[#allocation5 + $0xde8] sm:$0xff]
    %v778 = vld [vmem:[#allocation5 + $0xdf0] sm:$0xff]
    %v779 = vld [vmem:[#allocation5 + $0xdf8] sm:$0xff]
    %v780 = vld [vmem:[#allocation5 + $0xe00] sm:$0xff]
    %v781 = vld [vmem:[#allocation5 + $0xe08] sm:$0xff]
    %v782 = vld [vmem:[#allocation5 + $0xe10] sm:$0xff]
    %v783 = vld [vmem:[#allocation5 + $0xe18] sm:$0xff]
    %v784 = vld [vmem:[#allocation5 + $0xe20] sm:$0xff]
    %v785 = vld [vmem:[#allocation5 + $0xe28] sm:$0xff]
    %v786 = vld [vmem:[#allocation5 + $0xe30] sm:$0xff]
    %v787 = vld [vmem:[#allocation5 + $0xe38] sm:$0xff]
    %v788 = vld [vmem:[#allocation5 + $0xe40] sm:$0xff]
    %v789 = vld [vmem:[#allocation5 + $0xe48] sm:$0xff]
    %v790 = vld [vmem:[#allocation5 + $0xe50] sm:$0xff]
    %v791 = vld [vmem:[#allocation5 + $0xe58] sm:$0xff]
    %v792 = vld [vmem:[#allocation5 + $0xe60] sm:$0xff]
    %v793 = vld [vmem:[#allocation5 + $0xe68] sm:$0xff]
    %v794 = vld [vmem:[#allocation5 + $0xe70] sm:$0xff]
    %v795 = vld [vmem:[#allocation5 + $0xe78] sm:$0xff]
    %v796 = vld [vmem:[#allocation5 + $0xe80] sm:$0xff]
    %v797 = vld [vmem:[#allocation5 + $0xe88] sm:$0xff]
    %v798 = vld [vmem:[#allocation5 + $0xe90] sm:$0xff]
    %v799 = vld [vmem:[#allocation5 + $0xe98] sm:$0xff]
    %v800 = vld [vmem:[#allocation5 + $0xea0] sm:$0xff]
    %v801 = vld [vmem:[#allocation5 + $0xea8] sm:$0xff]
    %v802 = vld [vmem:[#allocation5 + $0xeb0] sm:$0xff]
    %v803 = vld [vmem:[#allocation5 + $0xeb8] sm:$0xff]
    %v804 = vld [vmem:[#allocation5 + $0xec0] sm:$0xff]
    %v805 = vld [vmem:[#allocation5 + $0xec8] sm:$0xff]
    %v806 = vld [vmem:[#allocation5 + $0xed0] sm:$0xff]
    %v807 = vld [vmem:[#allocation5 + $0xed8] sm:$0xff]
    %v808 = vld [vmem:[#allocation5 + $0xee0] sm:$0xff]
    %v809 = vld [vmem:[#allocation5 + $0xee8] sm:$0xff]
    %v810 = vld [vmem:[#allocation5 + $0xef0] sm:$0xff]
    %v811 = vld [vmem:[#allocation5 + $0xef8] sm:$0xff]
    %v812 = vld [vmem:[#allocation5 + $0xf00] sm:$0xff]
    %v813 = vld [vmem:[#allocation5 + $0xf08] sm:$0xff]
    %v814 = vld [vmem:[#allocation5 + $0xf10] sm:$0xff]
    %v815 = vld [vmem:[#allocation5 + $0xf18] sm:$0xff]
    %v816 = vld [vmem:[#allocation5 + $0xf20] sm:$0xff]
    %v817 = vld [vmem:[#allocation5 + $0xf28] sm:$0xff]
    %v818 = vld [vmem:[#allocation5 + $0xf30] sm:$0xff]
    %v819 = vld [vmem:[#allocation5 + $0xf38] sm:$0xff]
    %v820 = vld [vmem:[#allocation5 + $0xf40] sm:$0xff]
    %v821 = vld [vmem:[#allocation5 + $0xf48] sm:$0xff]
    %v822 = vld [vmem:[#allocation5 + $0xf50] sm:$0xff]
    %v823 = vld [vmem:[#allocation5 + $0xf58] sm:$0xff]
    %v824 = vld [vmem:[#allocation5 + $0xf60] sm:$0xff]
    %v825 = vld [vmem:[#allocation5 + $0xf68] sm:$0xff]
    %v826 = vld [vmem:[#allocation5 + $0xf70] sm:$0xff]
    %v827 = vld [vmem:[#allocation5 + $0xf78] sm:$0xff]
    %v828 = vld [vmem:[#allocation5 + $0xf80] sm:$0xff]
    %v829 = vld [vmem:[#allocation5 + $0xf88] sm:$0xff]
    %v830 = vld [vmem:[#allocation5 + $0xf90] sm:$0xff]
    %v831 = vld [vmem:[#allocation5 + $0xf98] sm:$0xff]
    %v832 = vld [vmem:[#allocation5 + $0xfa0] sm:$0xff]
    %v833 = vld [vmem:[#allocation5 + $0xfa8] sm:$0xff]
    %v834 = vld [vmem:[#allocation5 + $0xfb0] sm:$0xff]
    %v835 = vld [vmem:[#allocation5 + $0xfb8] sm:$0xff]
    %v836 = vld [vmem:[#allocation5 + $0xfc0] sm:$0xff]
    %v837 = vld [vmem:[#allocation5 + $0xfc8] sm:$0xff]
    %v838 = vld [vmem:[#allocation5 + $0xfd0] sm:$0xff]
    %v839 = vld [vmem:[#allocation5 + $0xfd8] sm:$0xff]
    %v840 = vld [vmem:[#allocation5 + $0xfe0] sm:$0xff]
    %v841 = vld [vmem:[#allocation5 + $0xfe8] sm:$0xff]
    %v842 = vld [vmem:[#allocation5 + $0xff0] sm:$0xff]
    %v843 = vld [vmem:[#allocation5 + $0xff8] sm:$0xff]
    %v844 = vld [vmem:[#allocation5 + $0x1000] sm:$0xff]
    %v845 = vld [vmem:[#allocation5 + $0x1008] sm:$0xff]
    %v846 = vld [vmem:[#allocation5 + $0x1010] sm:$0xff]
    %v847 = vld [vmem:[#allocation5 + $0x1018] sm:$0xff]
    %v848 = vld [vmem:[#allocation5 + $0x1020] sm:$0xff]
    %v849 = vld [vmem:[#allocation5 + $0x1028] sm:$0xff]
    %v850 = vld [vmem:[#allocation5 + $0x1030] sm:$0xff]
    %v851 = vld [vmem:[#allocation5 + $0x1038] sm:$0xff]
    %v852 = vld [vmem:[#allocation5 + $0x1040] sm:$0xff]
    %v853 = vld [vmem:[#allocation5 + $0x1048] sm:$0xff]
    %v854 = vld [vmem:[#allocation5 + $0x1050] sm:$0xff]
    %v855 = vld [vmem:[#allocation5 + $0x1058] sm:$0xff]
    %v856 = vld [vmem:[#allocation5 + $0x1060] sm:$0xff]
    %v857 = vld [vmem:[#allocation5 + $0x1068] sm:$0xff]
    %v858 = vld [vmem:[#allocation5 + $0x1070] sm:$0xff]
    %v859 = vld [vmem:[#allocation5 + $0x1078] sm:$0xff]
    %v860 = vld [vmem:[#allocation5 + $0x1080] sm:$0xff]
    %v861 = vld [vmem:[#allocation5 + $0x1088] sm:$0xff]
    %v862 = vld [vmem:[#allocation5 + $0x1090] sm:$0xff]
    %v863 = vld [vmem:[#allocation5 + $0x1098] sm:$0xff]
    %v864 = vld [vmem:[#allocation5 + $0x10a0] sm:$0xff]
    %v865 = vld [vmem:[#allocation5 + $0x10a8] sm:$0xff]
    %v866 = vld [vmem:[#allocation5 + $0x10b0] sm:$0xff]
    %v867 = vld [vmem:[#allocation5 + $0x10b8] sm:$0xff]
    %v868 = vld [vmem:[#allocation5 + $0x10c0] sm:$0xff]
    %v869 = vld [vmem:[#allocation5 + $0x10c8] sm:$0xff]
    %v870 = vld [vmem:[#allocation5 + $0x10d0] sm:$0xff]
    %v871 = vld [vmem:[#allocation5 + $0x10d8] sm:$0xff]
    %v872 = vld [vmem:[#allocation5 + $0x10e0] sm:$0xff]
    %v873 = vld [vmem:[#allocation5 + $0x10e8] sm:$0xff]
    %v874 = vld [vmem:[#allocation5 + $0x10f0] sm:$0xff]
    %v875 = vld [vmem:[#allocation5 + $0x10f8] sm:$0xff]
    %v876 = vld [vmem:[#allocation5 + $0x1100] sm:$0xff]
    %v877 = vld [vmem:[#allocation5 + $0x1108] sm:$0xff]
    %v878 = vld [vmem:[#allocation5 + $0x1110] sm:$0xff]
    %v879 = vld [vmem:[#allocation5 + $0x1118] sm:$0xff]
    %v880 = vld [vmem:[#allocation5 + $0x1120] sm:$0xff]
    %v881 = vld [vmem:[#allocation5 + $0x1128] sm:$0xff]
    %v882 = vld [vmem:[#allocation5 + $0x1130] sm:$0xff]
    %v883 = vld [vmem:[#allocation5 + $0x1138] sm:$0xff]
    %v884 = vld [vmem:[#allocation5 + $0x1140] sm:$0xff]
    %v885 = vld [vmem:[#allocation5 + $0x1148] sm:$0xff]
    %v886 = vld [vmem:[#allocation5 + $0x1150] sm:$0xff]
    %v887 = vld [vmem:[#allocation5 + $0x1158] sm:$0xff]
    %v888 = vld [vmem:[#allocation5 + $0x1160] sm:$0xff]
    %v889 = vld [vmem:[#allocation5 + $0x1168] sm:$0xff]
    %v890 = vld [vmem:[#allocation5 + $0x1170] sm:$0xff]
    %v891 = vld [vmem:[#allocation5 + $0x1178] sm:$0xff]
    %v892 = vld [vmem:[#allocation5 + $0x1180] sm:$0xff]
    %v893 = vld [vmem:[#allocation5 + $0x1188] sm:$0xff]
    %v894 = vld [vmem:[#allocation5 + $0x1190] sm:$0xff]
    %v895 = vld [vmem:[#allocation5 + $0x1198] sm:$0xff]
    %v896 = vld [vmem:[#allocation5 + $0x11a0] sm:$0xff]
    %v897 = vld [vmem:[#allocation5 + $0x11a8] sm:$0xff]
    %v898 = vld [vmem:[#allocation5 + $0x11b0] sm:$0xff]
    %v899 = vld [vmem:[#allocation5 + $0x11b8] sm:$0xff]
    %v900 = vld [vmem:[#allocation5 + $0x11c0] sm:$0xff]
    %v901 = vld [vmem:[#allocation5 + $0x11c8] sm:$0xff]
    %v902 = vld [vmem:[#allocation5 + $0x11d0] sm:$0xff]
    %v903 = vld [vmem:[#allocation5 + $0x11d8] sm:$0xff]
    %v904 = vld [vmem:[#allocation5 + $0x11e0] sm:$0xff]
    %v905 = vld [vmem:[#allocation5 + $0x11e8] sm:$0xff]
    %v906 = vld [vmem:[#allocation5 + $0x11f0] sm:$0xff]
    %v907 = vld [vmem:[#allocation5 + $0x11f8] sm:$0xff]
    %908 = vmatpush.msra.mxu0 %v362
    %909 = vmatpush.msra.mxu0 %v360
    %910 = vmatpush.msra.mxu0 %v358
    %911 = vmatpush.msra.mxu0 %v356
    %912 = vmatpush.msra.mxu0 %v354
    %913 = vmatpush.msra.mxu0 %v352
    %914 = vmatpush.msra.mxu0 %v350
    %915 = vmatpush.msra.mxu0 %v348
    %916 = vmatpush.msra.mxu0 %v346
    %917 = vmatpush.msra.mxu0 %v344
    %918 = vmatpush.msra.mxu0 %v342
    %919 = vmatpush.msra.mxu0 %v340
    %920 = vmatpush.msra.mxu0 %v338
    %921 = vmatpush.msra.mxu0 %v336
    %922 = vmatpush.msra.mxu0 %v334
    %923 = vmatpush.msra.mxu0 %v332
    %924 = vmatmul.f32.gmra.mxu0 %v44
    %v925 = vpop.f32.mrf.mxu0
    %v926 = vadd.f32 0.0, %v925
    %927 = vmatmul.f32.gmra.mxu0 %v62
    %v928 = vpop.f32.mrf.mxu0
    %v929 = vadd.f32 0.0, %v928
    %930 = vmatmul.f32.gmra.mxu0 %v80
    %v931 = vpop.f32.mrf.mxu0
    %v932 = vadd.f32 0.0, %v931
    %933 = vmatmul.f32.gmra.mxu0 %v98
    %v934 = vpop.f32.mrf.mxu0
    %v935 = vadd.f32 0.0, %v934
    %936 = vmatmul.f32.gmra.mxu0 %v116
    %v937 = vpop.f32.mrf.mxu0
    %v938 = vadd.f32 0.0, %v937
    %939 = vmatmul.f32.gmra.mxu0 %v134
    %v940 = vpop.f32.mrf.mxu0
    %v941 = vadd.f32 0.0, %v940
    %942 = vmatmul.f32.gmra.mxu0 %v152
    %v943 = vpop.f32.mrf.mxu0
    %v944 = vadd.f32 0.0, %v943
    %945 = vmatmul.f32.gmra.mxu0 %v170
    %v946 = vpop.f32.mrf.mxu0
    %v947 = vadd.f32 0.0, %v946
    %948 = vmatmul.f32.gmra.mxu0 %v188
    %v949 = vpop.f32.mrf.mxu0
    %v950 = vadd.f32 0.0, %v949
    %951 = vmatmul.f32.gmra.mxu0 %v206
    %v952 = vpop.f32.mrf.mxu0
    %v953 = vadd.f32 0.0, %v952
    %954 = vmatmul.f32.gmra.mxu0 %v224
    %v955 = vpop.f32.mrf.mxu0
    %v956 = vadd.f32 0.0, %v955
    %957 = vmatmul.f32.gmra.mxu0 %v242
    %v958 = vpop.f32.mrf.mxu0
    %v959 = vadd.f32 0.0, %v958
    %960 = vmatmul.f32.gmra.mxu0 %v260
    %v961 = vpop.f32.mrf.mxu0
    %v962 = vadd.f32 0.0, %v961
    %963 = vmatmul.f32.gmra.mxu0 %v278
    %v964 = vpop.f32.mrf.mxu0
    %v965 = vadd.f32 0.0, %v964
    %966 = vmatmul.f32.gmra.mxu0 %v296
    %v967 = vpop.f32.mrf.mxu0
    %v968 = vadd.f32 0.0, %v967
    %969 = vmatmul.f32.gmra.mxu0 %v314
    %v970 = vpop.f32.mrf.mxu0
    %v971 = vadd.f32 0.0, %v970
    %972 = vdwg.mxu0
    %973 = vmatpush.msra.mxu0 %v394
    %974 = vmatpush.msra.mxu0 %v392
    %975 = vmatpush.msra.mxu0 %v390
    %976 = vmatpush.msra.mxu0 %v388
    %977 = vmatpush.msra.mxu0 %v386
    %978 = vmatpush.msra.mxu0 %v384
    %979 = vmatpush.msra.mxu0 %v382
    %980 = vmatpush.msra.mxu0 %v380
    %981 = vmatpush.msra.mxu0 %v378
    %982 = vmatpush.msra.mxu0 %v376
    %983 = vmatpush.msra.mxu0 %v374
    %984 = vmatpush.msra.mxu0 %v372
    %985 = vmatpush.msra.mxu0 %v370
    %986 = vmatpush.msra.mxu0 %v368
    %987 = vmatpush.msra.mxu0 %v366
    %988 = vmatpush.msra.mxu0 %v364
    %989 = vmatmul.f32.gmra.mxu0 %v45
    %v990 = vpop.f32.mrf.mxu0
    %v991 = vadd.f32 %v926, %v990
    %992 = vmatmul.f32.gmra.mxu0 %v63
    %v993 = vpop.f32.mrf.mxu0
    %v994 = vadd.f32 %v929, %v993
    %995 = vmatmul.f32.gmra.mxu0 %v81
    %v996 = vpop.f32.mrf.mxu0
    %v997 = vadd.f32 %v932, %v996
    %998 = vmatmul.f32.gmra.mxu0 %v99
    %v999 = vpop.f32.mrf.mxu0
    %v1000 = vadd.f32 %v935, %v999
    %1001 = vmatmul.f32.gmra.mxu0 %v117
    %v1002 = vpop.f32.mrf.mxu0
    %v1003 = vadd.f32 %v938, %v1002
    %1004 = vmatmul.f32.gmra.mxu0 %v135
    %v1005 = vpop.f32.mrf.mxu0
    %v1006 = vadd.f32 %v941, %v1005
    %1007 = vmatmul.f32.gmra.mxu0 %v153
    %v1008 = vpop.f32.mrf.mxu0
    %v1009 = vadd.f32 %v944, %v1008
    %1010 = vmatmul.f32.gmra.mxu0 %v171
    %v1011 = vpop.f32.mrf.mxu0
    %v1012 = vadd.f32 %v947, %v1011
    %1013 = vmatmul.f32.gmra.mxu0 %v189
    %v1014 = vpop.f32.mrf.mxu0
    %v1015 = vadd.f32 %v950, %v1014
    %1016 = vmatmul.f32.gmra.mxu0 %v207
    %v1017 = vpop.f32.mrf.mxu0
    %v1018 = vadd.f32 %v953, %v1017
    %1019 = vmatmul.f32.gmra.mxu0 %v225
    %v1020 = vpop.f32.mrf.mxu0
    %v1021 = vadd.f32 %v956, %v1020
    %1022 = vmatmul.f32.gmra.mxu0 %v243
    %v1023 = vpop.f32.mrf.mxu0
    %v1024 = vadd.f32 %v959, %v1023
    %1025 = vmatmul.f32.gmra.mxu0 %v261
    %v1026 = vpop.f32.mrf.mxu0
    %v1027 = vadd.f32 %v962, %v1026
    %1028 = vmatmul.f32.gmra.mxu0 %v279
    %v1029 = vpop.f32.mrf.mxu0
    %v1030 = vadd.f32 %v965, %v1029
    %1031 = vmatmul.f32.gmra.mxu0 %v297
    %v1032 = vpop.f32.mrf.mxu0
    %v1033 = vadd.f32 %v968, %v1032
    %1034 = vmatmul.f32.gmra.mxu0 %v315
    %v1035 = vpop.f32.mrf.mxu0
    %v1036 = vadd.f32 %v971, %v1035
    %1037 = vdwg.mxu0
    %1038 = vmatpush.msra.mxu0 %v426
    %1039 = vmatpush.msra.mxu0 %v424
    %1040 = vmatpush.msra.mxu0 %v422
    %1041 = vmatpush.msra.mxu0 %v420
    %1042 = vmatpush.msra.mxu0 %v418
    %1043 = vmatpush.msra.mxu0 %v416
    %1044 = vmatpush.msra.mxu0 %v414
    %1045 = vmatpush.msra.mxu0 %v412
    %1046 = vmatpush.msra.mxu0 %v410
    %1047 = vmatpush.msra.mxu0 %v408
    %1048 = vmatpush.msra.mxu0 %v406
    %1049 = vmatpush.msra.mxu0 %v404
    %1050 = vmatpush.msra.mxu0 %v402
    %1051 = vmatpush.msra.mxu0 %v400
    %1052 = vmatpush.msra.mxu0 %v398
    %1053 = vmatpush.msra.mxu0 %v396
    %1054 = vmatmul.f32.gmra.mxu0 %v46
    %v1055 = vpop.f32.mrf.mxu0
    %v1056 = vadd.f32 %v991, %v1055
    %1057 = vmatmul.f32.gmra.mxu0 %v64
    %v1058 = vpop.f32.mrf.mxu0
    %v1059 = vadd.f32 %v994, %v1058
    %1060 = vmatmul.f32.gmra.mxu0 %v82
    %v1061 = vpop.f32.mrf.mxu0
    %v1062 = vadd.f32 %v997, %v1061
    %1063 = vmatmul.f32.gmra.mxu0 %v100
    %v1064 = vpop.f32.mrf.mxu0
    %v1065 = vadd.f32 %v1000, %v1064
    %1066 = vmatmul.f32.gmra.mxu0 %v118
    %v1067 = vpop.f32.mrf.mxu0
    %v1068 = vadd.f32 %v1003, %v1067
    %1069 = vmatmul.f32.gmra.mxu0 %v136
    %v1070 = vpop.f32.mrf.mxu0
    %v1071 = vadd.f32 %v1006, %v1070
    %1072 = vmatmul.f32.gmra.mxu0 %v154
    %v1073 = vpop.f32.mrf.mxu0
    %v1074 = vadd.f32 %v1009, %v1073
    %1075 = vmatmul.f32.gmra.mxu0 %v172
    %v1076 = vpop.f32.mrf.mxu0
    %v1077 = vadd.f32 %v1012, %v1076
    %1078 = vmatmul.f32.gmra.mxu0 %v190
    %v1079 = vpop.f32.mrf.mxu0
    %v1080 = vadd.f32 %v1015, %v1079
    %1081 = vmatmul.f32.gmra.mxu0 %v208
    %v1082 = vpop.f32.mrf.mxu0
    %v1083 = vadd.f32 %v1018, %v1082
    %1084 = vmatmul.f32.gmra.mxu0 %v226
    %v1085 = vpop.f32.mrf.mxu0
    %v1086 = vadd.f32 %v1021, %v1085
    %1087 = vmatmul.f32.gmra.mxu0 %v244
    %v1088 = vpop.f32.mrf.mxu0
    %v1089 = vadd.f32 %v1024, %v1088
    %1090 = vmatmul.f32.gmra.mxu0 %v262
    %v1091 = vpop.f32.mrf.mxu0
    %v1092 = vadd.f32 %v1027, %v1091
    %1093 = vmatmul.f32.gmra.mxu0 %v280
    %v1094 = vpop.f32.mrf.mxu0
    %v1095 = vadd.f32 %v1030, %v1094
    %1096 = vmatmul.f32.gmra.mxu0 %v298
    %v1097 = vpop.f32.mrf.mxu0
    %v1098 = vadd.f32 %v1033, %v1097
    %1099 = vmatmul.f32.gmra.mxu0 %v316
    %v1100 = vpop.f32.mrf.mxu0
    %v1101 = vadd.f32 %v1036, %v1100
    %1102 = vdwg.mxu0
    %1103 = vmatpush.msra.mxu0 %v458
    %1104 = vmatpush.msra.mxu0 %v456
    %1105 = vmatpush.msra.mxu0 %v454
    %1106 = vmatpush.msra.mxu0 %v452
    %1107 = vmatpush.msra.mxu0 %v450
    %1108 = vmatpush.msra.mxu0 %v448
    %1109 = vmatpush.msra.mxu0 %v446
    %1110 = vmatpush.msra.mxu0 %v444
    %1111 = vmatpush.msra.mxu0 %v442
    %1112 = vmatpush.msra.mxu0 %v440
    %1113 = vmatpush.msra.mxu0 %v438
    %1114 = vmatpush.msra.mxu0 %v436
    %1115 = vmatpush.msra.mxu0 %v434
    %1116 = vmatpush.msra.mxu0 %v432
    %1117 = vmatpush.msra.mxu0 %v430
    %1118 = vmatpush.msra.mxu0 %v428
    %1119 = vmatmul.f32.gmra.mxu0 %v47
    %v1120 = vpop.f32.mrf.mxu0
    %v1121 = vadd.f32 %v1056, %v1120
    %1122 = vmatmul.f32.gmra.mxu0 %v65
    %v1123 = vpop.f32.mrf.mxu0
    %v1124 = vadd.f32 %v1059, %v1123
    %1125 = vmatmul.f32.gmra.mxu0 %v83
    %v1126 = vpop.f32.mrf.mxu0
    %v1127 = vadd.f32 %v1062, %v1126
    %1128 = vmatmul.f32.gmra.mxu0 %v101
    %v1129 = vpop.f32.mrf.mxu0
    %v1130 = vadd.f32 %v1065, %v1129
    %1131 = vmatmul.f32.gmra.mxu0 %v119
    %v1132 = vpop.f32.mrf.mxu0
    %v1133 = vadd.f32 %v1068, %v1132
    %1134 = vmatmul.f32.gmra.mxu0 %v137
    %v1135 = vpop.f32.mrf.mxu0
    %v1136 = vadd.f32 %v1071, %v1135
    %1137 = vmatmul.f32.gmra.mxu0 %v155
    %v1138 = vpop.f32.mrf.mxu0
    %v1139 = vadd.f32 %v1074, %v1138
    %1140 = vmatmul.f32.gmra.mxu0 %v173
    %v1141 = vpop.f32.mrf.mxu0
    %v1142 = vadd.f32 %v1077, %v1141
    %1143 = vmatmul.f32.gmra.mxu0 %v191
    %v1144 = vpop.f32.mrf.mxu0
    %v1145 = vadd.f32 %v1080, %v1144
    %1146 = vmatmul.f32.gmra.mxu0 %v209
    %v1147 = vpop.f32.mrf.mxu0
    %v1148 = vadd.f32 %v1083, %v1147
    %1149 = vmatmul.f32.gmra.mxu0 %v227
    %v1150 = vpop.f32.mrf.mxu0
    %v1151 = vadd.f32 %v1086, %v1150
    %1152 = vmatmul.f32.gmra.mxu0 %v245
    %v1153 = vpop.f32.mrf.mxu0
    %v1154 = vadd.f32 %v1089, %v1153
    %1155 = vmatmul.f32.gmra.mxu0 %v263
    %v1156 = vpop.f32.mrf.mxu0
    %v1157 = vadd.f32 %v1092, %v1156
    %1158 = vmatmul.f32.gmra.mxu0 %v281
    %v1159 = vpop.f32.mrf.mxu0
    %v1160 = vadd.f32 %v1095, %v1159
    %1161 = vmatmul.f32.gmra.mxu0 %v299
    %v1162 = vpop.f32.mrf.mxu0
    %v1163 = vadd.f32 %v1098, %v1162
    %1164 = vmatmul.f32.gmra.mxu0 %v317
    %v1165 = vpop.f32.mrf.mxu0
    %v1166 = vadd.f32 %v1101, %v1165
    %1167 = vdwg.mxu0
    %1168 = vmatpush.msra.mxu0 %v490
    %1169 = vmatpush.msra.mxu0 %v488
    %1170 = vmatpush.msra.mxu0 %v486
    %1171 = vmatpush.msra.mxu0 %v484
    %1172 = vmatpush.msra.mxu0 %v482
    %1173 = vmatpush.msra.mxu0 %v480
    %1174 = vmatpush.msra.mxu0 %v478
    %1175 = vmatpush.msra.mxu0 %v476
    %1176 = vmatpush.msra.mxu0 %v474
    %1177 = vmatpush.msra.mxu0 %v472
    %1178 = vmatpush.msra.mxu0 %v470
    %1179 = vmatpush.msra.mxu0 %v468
    %1180 = vmatpush.msra.mxu0 %v466
    %1181 = vmatpush.msra.mxu0 %v464
    %1182 = vmatpush.msra.mxu0 %v462
    %1183 = vmatpush.msra.mxu0 %v460
    %1184 = vmatmul.f32.gmra.mxu0 %v48
    %v1185 = vpop.f32.mrf.mxu0
    %v1186 = vadd.f32 %v1121, %v1185
    %1187 = vmatmul.f32.gmra.mxu0 %v66
    %v1188 = vpop.f32.mrf.mxu0
    %v1189 = vadd.f32 %v1124, %v1188
    %1190 = vmatmul.f32.gmra.mxu0 %v84
    %v1191 = vpop.f32.mrf.mxu0
    %v1192 = vadd.f32 %v1127, %v1191
    %1193 = vmatmul.f32.gmra.mxu0 %v102
    %v1194 = vpop.f32.mrf.mxu0
    %v1195 = vadd.f32 %v1130, %v1194
    %1196 = vmatmul.f32.gmra.mxu0 %v120
    %v1197 = vpop.f32.mrf.mxu0
    %v1198 = vadd.f32 %v1133, %v1197
    %1199 = vmatmul.f32.gmra.mxu0 %v138
    %v1200 = vpop.f32.mrf.mxu0
    %v1201 = vadd.f32 %v1136, %v1200
    %1202 = vmatmul.f32.gmra.mxu0 %v156
    %v1203 = vpop.f32.mrf.mxu0
    %v1204 = vadd.f32 %v1139, %v1203
    %1205 = vmatmul.f32.gmra.mxu0 %v174
    %v1206 = vpop.f32.mrf.mxu0
    %v1207 = vadd.f32 %v1142, %v1206
    %1208 = vmatmul.f32.gmra.mxu0 %v192
    %v1209 = vpop.f32.mrf.mxu0
    %v1210 = vadd.f32 %v1145, %v1209
    %1211 = vmatmul.f32.gmra.mxu0 %v210
    %v1212 = vpop.f32.mrf.mxu0
    %v1213 = vadd.f32 %v1148, %v1212
    %1214 = vmatmul.f32.gmra.mxu0 %v228
    %v1215 = vpop.f32.mrf.mxu0
    %v1216 = vadd.f32 %v1151, %v1215
    %1217 = vmatmul.f32.gmra.mxu0 %v246
    %v1218 = vpop.f32.mrf.mxu0
    %v1219 = vadd.f32 %v1154, %v1218
    %1220 = vmatmul.f32.gmra.mxu0 %v264
    %v1221 = vpop.f32.mrf.mxu0
    %v1222 = vadd.f32 %v1157, %v1221
    %1223 = vmatmul.f32.gmra.mxu0 %v282
    %v1224 = vpop.f32.mrf.mxu0
    %v1225 = vadd.f32 %v1160, %v1224
    %1226 = vmatmul.f32.gmra.mxu0 %v300
    %v1227 = vpop.f32.mrf.mxu0
    %v1228 = vadd.f32 %v1163, %v1227
    %1229 = vmatmul.f32.gmra.mxu0 %v318
    %v1230 = vpop.f32.mrf.mxu0
    %v1231 = vadd.f32 %v1166, %v1230
    %1232 = vdwg.mxu0
    %1233 = vmatpush.msra.mxu0 %v522
    %1234 = vmatpush.msra.mxu0 %v520
    %1235 = vmatpush.msra.mxu0 %v518
    %1236 = vmatpush.msra.mxu0 %v516
    %1237 = vmatpush.msra.mxu0 %v514
    %1238 = vmatpush.msra.mxu0 %v512
    %1239 = vmatpush.msra.mxu0 %v510
    %1240 = vmatpush.msra.mxu0 %v508
    %1241 = vmatpush.msra.mxu0 %v506
    %1242 = vmatpush.msra.mxu0 %v504
    %1243 = vmatpush.msra.mxu0 %v502
    %1244 = vmatpush.msra.mxu0 %v500
    %1245 = vmatpush.msra.mxu0 %v498
    %1246 = vmatpush.msra.mxu0 %v496
    %1247 = vmatpush.msra.mxu0 %v494
    %1248 = vmatpush.msra.mxu0 %v492
    %1249 = vmatmul.f32.gmra.mxu0 %v49
    %v1250 = vpop.f32.mrf.mxu0
    %v1251 = vadd.f32 %v1186, %v1250
    %1252 = vmatmul.f32.gmra.mxu0 %v67
    %v1253 = vpop.f32.mrf.mxu0
    %v1254 = vadd.f32 %v1189, %v1253
    %1255 = vmatmul.f32.gmra.mxu0 %v85
    %v1256 = vpop.f32.mrf.mxu0
    %v1257 = vadd.f32 %v1192, %v1256
    %1258 = vmatmul.f32.gmra.mxu0 %v103
    %v1259 = vpop.f32.mrf.mxu0
    %v1260 = vadd.f32 %v1195, %v1259
    %1261 = vmatmul.f32.gmra.mxu0 %v121
    %v1262 = vpop.f32.mrf.mxu0
    %v1263 = vadd.f32 %v1198, %v1262
    %1264 = vmatmul.f32.gmra.mxu0 %v139
    %v1265 = vpop.f32.mrf.mxu0
    %v1266 = vadd.f32 %v1201, %v1265
    %1267 = vmatmul.f32.gmra.mxu0 %v157
    %v1268 = vpop.f32.mrf.mxu0
    %v1269 = vadd.f32 %v1204, %v1268
    %1270 = vmatmul.f32.gmra.mxu0 %v175
    %v1271 = vpop.f32.mrf.mxu0
    %v1272 = vadd.f32 %v1207, %v1271
    %1273 = vmatmul.f32.gmra.mxu0 %v193
    %v1274 = vpop.f32.mrf.mxu0
    %v1275 = vadd.f32 %v1210, %v1274
    %1276 = vmatmul.f32.gmra.mxu0 %v211
    %v1277 = vpop.f32.mrf.mxu0
    %v1278 = vadd.f32 %v1213, %v1277
    %1279 = vmatmul.f32.gmra.mxu0 %v229
    %v1280 = vpop.f32.mrf.mxu0
    %v1281 = vadd.f32 %v1216, %v1280
    %1282 = vmatmul.f32.gmra.mxu0 %v247
    %v1283 = vpop.f32.mrf.mxu0
    %v1284 = vadd.f32 %v1219, %v1283
    %1285 = vmatmul.f32.gmra.mxu0 %v265
    %v1286 = vpop.f32.mrf.mxu0
    %v1287 = vadd.f32 %v1222, %v1286
    %1288 = vmatmul.f32.gmra.mxu0 %v283
    %v1289 = vpop.f32.mrf.mxu0
    %v1290 = vadd.f32 %v1225, %v1289
    %1291 = vmatmul.f32.gmra.mxu0 %v301
    %v1292 = vpop.f32.mrf.mxu0
    %v1293 = vadd.f32 %v1228, %v1292
    %1294 = vmatmul.f32.gmra.mxu0 %v319
    %v1295 = vpop.f32.mrf.mxu0
    %v1296 = vadd.f32 %v1231, %v1295
    %1297 = vdwg.mxu0
    %1298 = vmatpush.msra.mxu0 %v554
    %1299 = vmatpush.msra.mxu0 %v552
    %1300 = vmatpush.msra.mxu0 %v550
    %1301 = vmatpush.msra.mxu0 %v548
    %1302 = vmatpush.msra.mxu0 %v546
    %1303 = vmatpush.msra.mxu0 %v544
    %1304 = vmatpush.msra.mxu0 %v542
    %1305 = vmatpush.msra.mxu0 %v540
    %1306 = vmatpush.msra.mxu0 %v538
    %1307 = vmatpush.msra.mxu0 %v536
    %1308 = vmatpush.msra.mxu0 %v534
    %1309 = vmatpush.msra.mxu0 %v532
    %1310 = vmatpush.msra.mxu0 %v530
    %1311 = vmatpush.msra.mxu0 %v528
    %1312 = vmatpush.msra.mxu0 %v526
    %1313 = vmatpush.msra.mxu0 %v524
    %1314 = vmatmul.f32.gmra.mxu0 %v50
    %v1315 = vpop.f32.mrf.mxu0
    %v1316 = vadd.f32 %v1251, %v1315
    %1317 = vmatmul.f32.gmra.mxu0 %v68
    %v1318 = vpop.f32.mrf.mxu0
    %v1319 = vadd.f32 %v1254, %v1318
    %1320 = vmatmul.f32.gmra.mxu0 %v86
    %v1321 = vpop.f32.mrf.mxu0
    %v1322 = vadd.f32 %v1257, %v1321
    %1323 = vmatmul.f32.gmra.mxu0 %v104
    %v1324 = vpop.f32.mrf.mxu0
    %v1325 = vadd.f32 %v1260, %v1324
    %1326 = vmatmul.f32.gmra.mxu0 %v122
    %v1327 = vpop.f32.mrf.mxu0
    %v1328 = vadd.f32 %v1263, %v1327
    %1329 = vmatmul.f32.gmra.mxu0 %v140
    %v1330 = vpop.f32.mrf.mxu0
    %v1331 = vadd.f32 %v1266, %v1330
    %1332 = vmatmul.f32.gmra.mxu0 %v158
    %v1333 = vpop.f32.mrf.mxu0
    %v1334 = vadd.f32 %v1269, %v1333
    %1335 = vmatmul.f32.gmra.mxu0 %v176
    %v1336 = vpop.f32.mrf.mxu0
    %v1337 = vadd.f32 %v1272, %v1336
    %1338 = vmatmul.f32.gmra.mxu0 %v194
    %v1339 = vpop.f32.mrf.mxu0
    %v1340 = vadd.f32 %v1275, %v1339
    %1341 = vmatmul.f32.gmra.mxu0 %v212
    %v1342 = vpop.f32.mrf.mxu0
    %v1343 = vadd.f32 %v1278, %v1342
    %1344 = vmatmul.f32.gmra.mxu0 %v230
    %v1345 = vpop.f32.mrf.mxu0
    %v1346 = vadd.f32 %v1281, %v1345
    %1347 = vmatmul.f32.gmra.mxu0 %v248
    %v1348 = vpop.f32.mrf.mxu0
    %v1349 = vadd.f32 %v1284, %v1348
    %1350 = vmatmul.f32.gmra.mxu0 %v266
    %v1351 = vpop.f32.mrf.mxu0
    %v1352 = vadd.f32 %v1287, %v1351
    %1353 = vmatmul.f32.gmra.mxu0 %v284
    %v1354 = vpop.f32.mrf.mxu0
    %v1355 = vadd.f32 %v1290, %v1354
    %1356 = vmatmul.f32.gmra.mxu0 %v302
    %v1357 = vpop.f32.mrf.mxu0
    %v1358 = vadd.f32 %v1293, %v1357
    %1359 = vmatmul.f32.gmra.mxu0 %v320
    %v1360 = vpop.f32.mrf.mxu0
    %v1361 = vadd.f32 %v1296, %v1360
    %1362 = vdwg.mxu0
    %1363 = vmatpush.msra.mxu0 %v586
    %1364 = vmatpush.msra.mxu0 %v584
    %1365 = vmatpush.msra.mxu0 %v582
    %1366 = vmatpush.msra.mxu0 %v580
    %1367 = vmatpush.msra.mxu0 %v578
    %1368 = vmatpush.msra.mxu0 %v576
    %1369 = vmatpush.msra.mxu0 %v574
    %1370 = vmatpush.msra.mxu0 %v572
    %1371 = vmatpush.msra.mxu0 %v570
    %1372 = vmatpush.msra.mxu0 %v568
    %1373 = vmatpush.msra.mxu0 %v566
    %1374 = vmatpush.msra.mxu0 %v564
    %1375 = vmatpush.msra.mxu0 %v562
    %1376 = vmatpush.msra.mxu0 %v560
    %1377 = vmatpush.msra.mxu0 %v558
    %1378 = vmatpush.msra.mxu0 %v556
    %1379 = vmatmul.f32.gmra.mxu0 %v51
    %v1380 = vpop.f32.mrf.mxu0
    %v1381 = vadd.f32 %v1316, %v1380
    %1382 = vmatmul.f32.gmra.mxu0 %v69
    %v1383 = vpop.f32.mrf.mxu0
    %v1384 = vadd.f32 %v1319, %v1383
    %1385 = vmatmul.f32.gmra.mxu0 %v87
    %v1386 = vpop.f32.mrf.mxu0
    %v1387 = vadd.f32 %v1322, %v1386
    %1388 = vmatmul.f32.gmra.mxu0 %v105
    %v1389 = vpop.f32.mrf.mxu0
    %v1390 = vadd.f32 %v1325, %v1389
    %1391 = vmatmul.f32.gmra.mxu0 %v123
    %v1392 = vpop.f32.mrf.mxu0
    %v1393 = vadd.f32 %v1328, %v1392
    %1394 = vmatmul.f32.gmra.mxu0 %v141
    %v1395 = vpop.f32.mrf.mxu0
    %v1396 = vadd.f32 %v1331, %v1395
    %1397 = vmatmul.f32.gmra.mxu0 %v159
    %v1398 = vpop.f32.mrf.mxu0
    %v1399 = vadd.f32 %v1334, %v1398
    %1400 = vmatmul.f32.gmra.mxu0 %v177
    %v1401 = vpop.f32.mrf.mxu0
    %v1402 = vadd.f32 %v1337, %v1401
    %1403 = vmatmul.f32.gmra.mxu0 %v195
    %v1404 = vpop.f32.mrf.mxu0
    %v1405 = vadd.f32 %v1340, %v1404
    %1406 = vmatmul.f32.gmra.mxu0 %v213
    %v1407 = vpop.f32.mrf.mxu0
    %v1408 = vadd.f32 %v1343, %v1407
    %1409 = vmatmul.f32.gmra.mxu0 %v231
    %v1410 = vpop.f32.mrf.mxu0
    %v1411 = vadd.f32 %v1346, %v1410
    %1412 = vmatmul.f32.gmra.mxu0 %v249
    %v1413 = vpop.f32.mrf.mxu0
    %v1414 = vadd.f32 %v1349, %v1413
    %1415 = vmatmul.f32.gmra.mxu0 %v267
    %v1416 = vpop.f32.mrf.mxu0
    %v1417 = vadd.f32 %v1352, %v1416
    %1418 = vmatmul.f32.gmra.mxu0 %v285
    %v1419 = vpop.f32.mrf.mxu0
    %v1420 = vadd.f32 %v1355, %v1419
    %1421 = vmatmul.f32.gmra.mxu0 %v303
    %v1422 = vpop.f32.mrf.mxu0
    %v1423 = vadd.f32 %v1358, %v1422
    %1424 = vmatmul.f32.gmra.mxu0 %v321
    %v1425 = vpop.f32.mrf.mxu0
    %v1426 = vadd.f32 %v1361, %v1425
    %1427 = vdwg.mxu0
    %1428 = vmatpush.msra.mxu0 %v618
    %1429 = vmatpush.msra.mxu0 %v616
    %1430 = vmatpush.msra.mxu0 %v614
    %1431 = vmatpush.msra.mxu0 %v612
    %1432 = vmatpush.msra.mxu0 %v610
    %1433 = vmatpush.msra.mxu0 %v608
    %1434 = vmatpush.msra.mxu0 %v606
    %1435 = vmatpush.msra.mxu0 %v604
    %1436 = vmatpush.msra.mxu0 %v602
    %1437 = vmatpush.msra.mxu0 %v600
    %1438 = vmatpush.msra.mxu0 %v598
    %1439 = vmatpush.msra.mxu0 %v596
    %1440 = vmatpush.msra.mxu0 %v594
    %1441 = vmatpush.msra.mxu0 %v592
    %1442 = vmatpush.msra.mxu0 %v590
    %1443 = vmatpush.msra.mxu0 %v588
    %1444 = vmatmul.f32.gmra.mxu0 %v52
    %v1445 = vpop.f32.mrf.mxu0
    %v1446 = vadd.f32 %v1381, %v1445
    %1447 = vmatmul.f32.gmra.mxu0 %v70
    %v1448 = vpop.f32.mrf.mxu0
    %v1449 = vadd.f32 %v1384, %v1448
    %1450 = vmatmul.f32.gmra.mxu0 %v88
    %v1451 = vpop.f32.mrf.mxu0
    %v1452 = vadd.f32 %v1387, %v1451
    %1453 = vmatmul.f32.gmra.mxu0 %v106
    %v1454 = vpop.f32.mrf.mxu0
    %v1455 = vadd.f32 %v1390, %v1454
    %1456 = vmatmul.f32.gmra.mxu0 %v124
    %v1457 = vpop.f32.mrf.mxu0
    %v1458 = vadd.f32 %v1393, %v1457
    %1459 = vmatmul.f32.gmra.mxu0 %v142
    %v1460 = vpop.f32.mrf.mxu0
    %v1461 = vadd.f32 %v1396, %v1460
    %1462 = vmatmul.f32.gmra.mxu0 %v160
    %v1463 = vpop.f32.mrf.mxu0
    %v1464 = vadd.f32 %v1399, %v1463
    %1465 = vmatmul.f32.gmra.mxu0 %v178
    %v1466 = vpop.f32.mrf.mxu0
    %v1467 = vadd.f32 %v1402, %v1466
    %1468 = vmatmul.f32.gmra.mxu0 %v196
    %v1469 = vpop.f32.mrf.mxu0
    %v1470 = vadd.f32 %v1405, %v1469
    %1471 = vmatmul.f32.gmra.mxu0 %v214
    %v1472 = vpop.f32.mrf.mxu0
    %v1473 = vadd.f32 %v1408, %v1472
    %1474 = vmatmul.f32.gmra.mxu0 %v232
    %v1475 = vpop.f32.mrf.mxu0
    %v1476 = vadd.f32 %v1411, %v1475
    %1477 = vmatmul.f32.gmra.mxu0 %v250
    %v1478 = vpop.f32.mrf.mxu0
    %v1479 = vadd.f32 %v1414, %v1478
    %1480 = vmatmul.f32.gmra.mxu0 %v268
    %v1481 = vpop.f32.mrf.mxu0
    %v1482 = vadd.f32 %v1417, %v1481
    %1483 = vmatmul.f32.gmra.mxu0 %v286
    %v1484 = vpop.f32.mrf.mxu0
    %v1485 = vadd.f32 %v1420, %v1484
    %1486 = vmatmul.f32.gmra.mxu0 %v304
    %v1487 = vpop.f32.mrf.mxu0
    %v1488 = vadd.f32 %v1423, %v1487
    %1489 = vmatmul.f32.gmra.mxu0 %v322
    %v1490 = vpop.f32.mrf.mxu0
    %v1491 = vadd.f32 %v1426, %v1490
    %1492 = vdwg.mxu0
    %1493 = vmatpush.msra.mxu0 %v650
    %1494 = vmatpush.msra.mxu0 %v648
    %1495 = vmatpush.msra.mxu0 %v646
    %1496 = vmatpush.msra.mxu0 %v644
    %1497 = vmatpush.msra.mxu0 %v642
    %1498 = vmatpush.msra.mxu0 %v640
    %1499 = vmatpush.msra.mxu0 %v638
    %1500 = vmatpush.msra.mxu0 %v636
    %1501 = vmatpush.msra.mxu0 %v634
    %1502 = vmatpush.msra.mxu0 %v632
    %1503 = vmatpush.msra.mxu0 %v630
    %1504 = vmatpush.msra.mxu0 %v628
    %1505 = vmatpush.msra.mxu0 %v626
    %1506 = vmatpush.msra.mxu0 %v624
    %1507 = vmatpush.msra.mxu0 %v622
    %1508 = vmatpush.msra.mxu0 %v620
    %1509 = vmatmul.f32.gmra.mxu0 %v53
    %v1510 = vpop.f32.mrf.mxu0
    %v1511 = vadd.f32 %v1446, %v1510
    %1512 = vmatmul.f32.gmra.mxu0 %v71
    %v1513 = vpop.f32.mrf.mxu0
    %v1514 = vadd.f32 %v1449, %v1513
    %1515 = vmatmul.f32.gmra.mxu0 %v89
    %v1516 = vpop.f32.mrf.mxu0
    %v1517 = vadd.f32 %v1452, %v1516
    %1518 = vmatmul.f32.gmra.mxu0 %v107
    %v1519 = vpop.f32.mrf.mxu0
    %v1520 = vadd.f32 %v1455, %v1519
    %1521 = vmatmul.f32.gmra.mxu0 %v125
    %v1522 = vpop.f32.mrf.mxu0
    %v1523 = vadd.f32 %v1458, %v1522
    %1524 = vmatmul.f32.gmra.mxu0 %v143
    %v1525 = vpop.f32.mrf.mxu0
    %v1526 = vadd.f32 %v1461, %v1525
    %1527 = vmatmul.f32.gmra.mxu0 %v161
    %v1528 = vpop.f32.mrf.mxu0
    %v1529 = vadd.f32 %v1464, %v1528
    %1530 = vmatmul.f32.gmra.mxu0 %v179
    %v1531 = vpop.f32.mrf.mxu0
    %v1532 = vadd.f32 %v1467, %v1531
    %1533 = vmatmul.f32.gmra.mxu0 %v197
    %v1534 = vpop.f32.mrf.mxu0
    %v1535 = vadd.f32 %v1470, %v1534
    %1536 = vmatmul.f32.gmra.mxu0 %v215
    %v1537 = vpop.f32.mrf.mxu0
    %v1538 = vadd.f32 %v1473, %v1537
    %1539 = vmatmul.f32.gmra.mxu0 %v233
    %v1540 = vpop.f32.mrf.mxu0
    %v1541 = vadd.f32 %v1476, %v1540
    %1542 = vmatmul.f32.gmra.mxu0 %v251
    %v1543 = vpop.f32.mrf.mxu0
    %v1544 = vadd.f32 %v1479, %v1543
    %1545 = vmatmul.f32.gmra.mxu0 %v269
    %v1546 = vpop.f32.mrf.mxu0
    %v1547 = vadd.f32 %v1482, %v1546
    %1548 = vmatmul.f32.gmra.mxu0 %v287
    %v1549 = vpop.f32.mrf.mxu0
    %v1550 = vadd.f32 %v1485, %v1549
    %1551 = vmatmul.f32.gmra.mxu0 %v305
    %v1552 = vpop.f32.mrf.mxu0
    %v1553 = vadd.f32 %v1488, %v1552
    %1554 = vmatmul.f32.gmra.mxu0 %v323
    %v1555 = vpop.f32.mrf.mxu0
    %v1556 = vadd.f32 %v1491, %v1555
    %1557 = vdwg.mxu0
    %1558 = vmatpush.msra.mxu0 %v682
    %1559 = vmatpush.msra.mxu0 %v680
    %1560 = vmatpush.msra.mxu0 %v678
    %1561 = vmatpush.msra.mxu0 %v676
    %1562 = vmatpush.msra.mxu0 %v674
    %1563 = vmatpush.msra.mxu0 %v672
    %1564 = vmatpush.msra.mxu0 %v670
    %1565 = vmatpush.msra.mxu0 %v668
    %1566 = vmatpush.msra.mxu0 %v666
    %1567 = vmatpush.msra.mxu0 %v664
    %1568 = vmatpush.msra.mxu0 %v662
    %1569 = vmatpush.msra.mxu0 %v660
    %1570 = vmatpush.msra.mxu0 %v658
    %1571 = vmatpush.msra.mxu0 %v656
    %1572 = vmatpush.msra.mxu0 %v654
    %1573 = vmatpush.msra.mxu0 %v652
    %1574 = vmatmul.f32.gmra.mxu0 %v54
    %v1575 = vpop.f32.mrf.mxu0
    %v1576 = vadd.f32 %v1511, %v1575
    %1577 = vmatmul.f32.gmra.mxu0 %v72
    %v1578 = vpop.f32.mrf.mxu0
    %v1579 = vadd.f32 %v1514, %v1578
    %1580 = vmatmul.f32.gmra.mxu0 %v90
    %v1581 = vpop.f32.mrf.mxu0
    %v1582 = vadd.f32 %v1517, %v1581
    %1583 = vmatmul.f32.gmra.mxu0 %v108
    %v1584 = vpop.f32.mrf.mxu0
    %v1585 = vadd.f32 %v1520, %v1584
    %1586 = vmatmul.f32.gmra.mxu0 %v126
    %v1587 = vpop.f32.mrf.mxu0
    %v1588 = vadd.f32 %v1523, %v1587
    %1589 = vmatmul.f32.gmra.mxu0 %v144
    %v1590 = vpop.f32.mrf.mxu0
    %v1591 = vadd.f32 %v1526, %v1590
    %1592 = vmatmul.f32.gmra.mxu0 %v162
    %v1593 = vpop.f32.mrf.mxu0
    %v1594 = vadd.f32 %v1529, %v1593
    %1595 = vmatmul.f32.gmra.mxu0 %v180
    %v1596 = vpop.f32.mrf.mxu0
    %v1597 = vadd.f32 %v1532, %v1596
    %1598 = vmatmul.f32.gmra.mxu0 %v198
    %v1599 = vpop.f32.mrf.mxu0
    %v1600 = vadd.f32 %v1535, %v1599
    %1601 = vmatmul.f32.gmra.mxu0 %v216
    %v1602 = vpop.f32.mrf.mxu0
    %v1603 = vadd.f32 %v1538, %v1602
    %1604 = vmatmul.f32.gmra.mxu0 %v234
    %v1605 = vpop.f32.mrf.mxu0
    %v1606 = vadd.f32 %v1541, %v1605
    %1607 = vmatmul.f32.gmra.mxu0 %v252
    %v1608 = vpop.f32.mrf.mxu0
    %v1609 = vadd.f32 %v1544, %v1608
    %1610 = vmatmul.f32.gmra.mxu0 %v270
    %v1611 = vpop.f32.mrf.mxu0
    %v1612 = vadd.f32 %v1547, %v1611
    %1613 = vmatmul.f32.gmra.mxu0 %v288
    %v1614 = vpop.f32.mrf.mxu0
    %v1615 = vadd.f32 %v1550, %v1614
    %1616 = vmatmul.f32.gmra.mxu0 %v306
    %v1617 = vpop.f32.mrf.mxu0
    %v1618 = vadd.f32 %v1553, %v1617
    %1619 = vmatmul.f32.gmra.mxu0 %v324
    %v1620 = vpop.f32.mrf.mxu0
    %v1621 = vadd.f32 %v1556, %v1620
    %1622 = vdwg.mxu0
    %1623 = vmatpush.msra.mxu0 %v714
    %1624 = vmatpush.msra.mxu0 %v712
    %1625 = vmatpush.msra.mxu0 %v710
    %1626 = vmatpush.msra.mxu0 %v708
    %1627 = vmatpush.msra.mxu0 %v706
    %1628 = vmatpush.msra.mxu0 %v704
    %1629 = vmatpush.msra.mxu0 %v702
    %1630 = vmatpush.msra.mxu0 %v700
    %1631 = vmatpush.msra.mxu0 %v698
    %1632 = vmatpush.msra.mxu0 %v696
    %1633 = vmatpush.msra.mxu0 %v694
    %1634 = vmatpush.msra.mxu0 %v692
    %1635 = vmatpush.msra.mxu0 %v690
    %1636 = vmatpush.msra.mxu0 %v688
    %1637 = vmatpush.msra.mxu0 %v686
    %1638 = vmatpush.msra.mxu0 %v684
    %1639 = vmatmul.f32.gmra.mxu0 %v55
    %v1640 = vpop.f32.mrf.mxu0
    %v1641 = vadd.f32 %v1576, %v1640
    %1642 = vmatmul.f32.gmra.mxu0 %v73
    %v1643 = vpop.f32.mrf.mxu0
    %v1644 = vadd.f32 %v1579, %v1643
    %1645 = vmatmul.f32.gmra.mxu0 %v91
    %v1646 = vpop.f32.mrf.mxu0
    %v1647 = vadd.f32 %v1582, %v1646
    %1648 = vmatmul.f32.gmra.mxu0 %v109
    %v1649 = vpop.f32.mrf.mxu0
    %v1650 = vadd.f32 %v1585, %v1649
    %1651 = vmatmul.f32.gmra.mxu0 %v127
    %v1652 = vpop.f32.mrf.mxu0
    %v1653 = vadd.f32 %v1588, %v1652
    %1654 = vmatmul.f32.gmra.mxu0 %v145
    %v1655 = vpop.f32.mrf.mxu0
    %v1656 = vadd.f32 %v1591, %v1655
    %1657 = vmatmul.f32.gmra.mxu0 %v163
    %v1658 = vpop.f32.mrf.mxu0
    %v1659 = vadd.f32 %v1594, %v1658
    %1660 = vmatmul.f32.gmra.mxu0 %v181
    %v1661 = vpop.f32.mrf.mxu0
    %v1662 = vadd.f32 %v1597, %v1661
    %1663 = vmatmul.f32.gmra.mxu0 %v199
    %v1664 = vpop.f32.mrf.mxu0
    %v1665 = vadd.f32 %v1600, %v1664
    %1666 = vmatmul.f32.gmra.mxu0 %v217
    %v1667 = vpop.f32.mrf.mxu0
    %v1668 = vadd.f32 %v1603, %v1667
    %1669 = vmatmul.f32.gmra.mxu0 %v235
    %v1670 = vpop.f32.mrf.mxu0
    %v1671 = vadd.f32 %v1606, %v1670
    %1672 = vmatmul.f32.gmra.mxu0 %v253
    %v1673 = vpop.f32.mrf.mxu0
    %v1674 = vadd.f32 %v1609, %v1673
    %1675 = vmatmul.f32.gmra.mxu0 %v271
    %v1676 = vpop.f32.mrf.mxu0
    %v1677 = vadd.f32 %v1612, %v1676
    %1678 = vmatmul.f32.gmra.mxu0 %v289
    %v1679 = vpop.f32.mrf.mxu0
    %v1680 = vadd.f32 %v1615, %v1679
    %1681 = vmatmul.f32.gmra.mxu0 %v307
    %v1682 = vpop.f32.mrf.mxu0
    %v1683 = vadd.f32 %v1618, %v1682
    %1684 = vmatmul.f32.gmra.mxu0 %v325
    %v1685 = vpop.f32.mrf.mxu0
    %v1686 = vadd.f32 %v1621, %v1685
    %1687 = vdwg.mxu0
    %1688 = vmatpush.msra.mxu0 %v746
    %1689 = vmatpush.msra.mxu0 %v744
    %1690 = vmatpush.msra.mxu0 %v742
    %1691 = vmatpush.msra.mxu0 %v740
    %1692 = vmatpush.msra.mxu0 %v738
    %1693 = vmatpush.msra.mxu0 %v736
    %1694 = vmatpush.msra.mxu0 %v734
    %1695 = vmatpush.msra.mxu0 %v732
    %1696 = vmatpush.msra.mxu0 %v730
    %1697 = vmatpush.msra.mxu0 %v728
    %1698 = vmatpush.msra.mxu0 %v726
    %1699 = vmatpush.msra.mxu0 %v724
    %1700 = vmatpush.msra.mxu0 %v722
    %1701 = vmatpush.msra.mxu0 %v720
    %1702 = vmatpush.msra.mxu0 %v718
    %1703 = vmatpush.msra.mxu0 %v716
    %1704 = vmatmul.f32.gmra.mxu0 %v56
    %v1705 = vpop.f32.mrf.mxu0
    %v1706 = vadd.f32 %v1641, %v1705
    %1707 = vmatmul.f32.gmra.mxu0 %v74
    %v1708 = vpop.f32.mrf.mxu0
    %v1709 = vadd.f32 %v1644, %v1708
    %1710 = vmatmul.f32.gmra.mxu0 %v92
    %v1711 = vpop.f32.mrf.mxu0
    %v1712 = vadd.f32 %v1647, %v1711
    %1713 = vmatmul.f32.gmra.mxu0 %v110
    %v1714 = vpop.f32.mrf.mxu0
    %v1715 = vadd.f32 %v1650, %v1714
    %1716 = vmatmul.f32.gmra.mxu0 %v128
    %v1717 = vpop.f32.mrf.mxu0
    %v1718 = vadd.f32 %v1653, %v1717
    %1719 = vmatmul.f32.gmra.mxu0 %v146
    %v1720 = vpop.f32.mrf.mxu0
    %v1721 = vadd.f32 %v1656, %v1720
    %1722 = vmatmul.f32.gmra.mxu0 %v164
    %v1723 = vpop.f32.mrf.mxu0
    %v1724 = vadd.f32 %v1659, %v1723
    %1725 = vmatmul.f32.gmra.mxu0 %v182
    %v1726 = vpop.f32.mrf.mxu0
    %v1727 = vadd.f32 %v1662, %v1726
    %1728 = vmatmul.f32.gmra.mxu0 %v200
    %v1729 = vpop.f32.mrf.mxu0
    %v1730 = vadd.f32 %v1665, %v1729
    %1731 = vmatmul.f32.gmra.mxu0 %v218
    %v1732 = vpop.f32.mrf.mxu0
    %v1733 = vadd.f32 %v1668, %v1732
    %1734 = vmatmul.f32.gmra.mxu0 %v236
    %v1735 = vpop.f32.mrf.mxu0
    %v1736 = vadd.f32 %v1671, %v1735
    %1737 = vmatmul.f32.gmra.mxu0 %v254
    %v1738 = vpop.f32.mrf.mxu0
    %v1739 = vadd.f32 %v1674, %v1738
    %1740 = vmatmul.f32.gmra.mxu0 %v272
    %v1741 = vpop.f32.mrf.mxu0
    %v1742 = vadd.f32 %v1677, %v1741
    %1743 = vmatmul.f32.gmra.mxu0 %v290
    %v1744 = vpop.f32.mrf.mxu0
    %v1745 = vadd.f32 %v1680, %v1744
    %1746 = vmatmul.f32.gmra.mxu0 %v308
    %v1747 = vpop.f32.mrf.mxu0
    %v1748 = vadd.f32 %v1683, %v1747
    %1749 = vmatmul.f32.gmra.mxu0 %v326
    %v1750 = vpop.f32.mrf.mxu0
    %v1751 = vadd.f32 %v1686, %v1750
    %1752 = vdwg.mxu0
    %1753 = vmatpush.msra.mxu0 %v778
    %1754 = vmatpush.msra.mxu0 %v776
    %1755 = vmatpush.msra.mxu0 %v774
    %1756 = vmatpush.msra.mxu0 %v772
    %1757 = vmatpush.msra.mxu0 %v770
    %1758 = vmatpush.msra.mxu0 %v768
    %1759 = vmatpush.msra.mxu0 %v766
    %1760 = vmatpush.msra.mxu0 %v764
    %1761 = vmatpush.msra.mxu0 %v762
    %1762 = vmatpush.msra.mxu0 %v760
    %1763 = vmatpush.msra.mxu0 %v758
    %1764 = vmatpush.msra.mxu0 %v756
    %1765 = vmatpush.msra.mxu0 %v754
    %1766 = vmatpush.msra.mxu0 %v752
    %1767 = vmatpush.msra.mxu0 %v750
    %1768 = vmatpush.msra.mxu0 %v748
    %1769 = vmatmul.f32.gmra.mxu0 %v57
    %v1770 = vpop.f32.mrf.mxu0
    %v1771 = vadd.f32 %v1706, %v1770
    %1772 = vmatmul.f32.gmra.mxu0 %v75
    %v1773 = vpop.f32.mrf.mxu0
    %v1774 = vadd.f32 %v1709, %v1773
    %1775 = vmatmul.f32.gmra.mxu0 %v93
    %v1776 = vpop.f32.mrf.mxu0
    %v1777 = vadd.f32 %v1712, %v1776
    %1778 = vmatmul.f32.gmra.mxu0 %v111
    %v1779 = vpop.f32.mrf.mxu0
    %v1780 = vadd.f32 %v1715, %v1779
    %1781 = vmatmul.f32.gmra.mxu0 %v129
    %v1782 = vpop.f32.mrf.mxu0
    %v1783 = vadd.f32 %v1718, %v1782
    %1784 = vmatmul.f32.gmra.mxu0 %v147
    %v1785 = vpop.f32.mrf.mxu0
    %v1786 = vadd.f32 %v1721, %v1785
    %1787 = vmatmul.f32.gmra.mxu0 %v165
    %v1788 = vpop.f32.mrf.mxu0
    %v1789 = vadd.f32 %v1724, %v1788
    %1790 = vmatmul.f32.gmra.mxu0 %v183
    %v1791 = vpop.f32.mrf.mxu0
    %v1792 = vadd.f32 %v1727, %v1791
    %1793 = vmatmul.f32.gmra.mxu0 %v201
    %v1794 = vpop.f32.mrf.mxu0
    %v1795 = vadd.f32 %v1730, %v1794
    %1796 = vmatmul.f32.gmra.mxu0 %v219
    %v1797 = vpop.f32.mrf.mxu0
    %v1798 = vadd.f32 %v1733, %v1797
    %1799 = vmatmul.f32.gmra.mxu0 %v237
    %v1800 = vpop.f32.mrf.mxu0
    %v1801 = vadd.f32 %v1736, %v1800
    %1802 = vmatmul.f32.gmra.mxu0 %v255
    %v1803 = vpop.f32.mrf.mxu0
    %v1804 = vadd.f32 %v1739, %v1803
    %1805 = vmatmul.f32.gmra.mxu0 %v273
    %v1806 = vpop.f32.mrf.mxu0
    %v1807 = vadd.f32 %v1742, %v1806
    %1808 = vmatmul.f32.gmra.mxu0 %v291
    %v1809 = vpop.f32.mrf.mxu0
    %v1810 = vadd.f32 %v1745, %v1809
    %1811 = vmatmul.f32.gmra.mxu0 %v309
    %v1812 = vpop.f32.mrf.mxu0
    %v1813 = vadd.f32 %v1748, %v1812
    %1814 = vmatmul.f32.gmra.mxu0 %v327
    %v1815 = vpop.f32.mrf.mxu0
    %v1816 = vadd.f32 %v1751, %v1815
    %1817 = vdwg.mxu0
    %1818 = vmatpush.msra.mxu0 %v810
    %1819 = vmatpush.msra.mxu0 %v808
    %1820 = vmatpush.msra.mxu0 %v806
    %1821 = vmatpush.msra.mxu0 %v804
    %1822 = vmatpush.msra.mxu0 %v802
    %1823 = vmatpush.msra.mxu0 %v800
    %1824 = vmatpush.msra.mxu0 %v798
    %1825 = vmatpush.msra.mxu0 %v796
    %1826 = vmatpush.msra.mxu0 %v794
    %1827 = vmatpush.msra.mxu0 %v792
    %1828 = vmatpush.msra.mxu0 %v790
    %1829 = vmatpush.msra.mxu0 %v788
    %1830 = vmatpush.msra.mxu0 %v786
    %1831 = vmatpush.msra.mxu0 %v784
    %1832 = vmatpush.msra.mxu0 %v782
    %1833 = vmatpush.msra.mxu0 %v780
    %1834 = vmatmul.f32.gmra.mxu0 %v58
    %v1835 = vpop.f32.mrf.mxu0
    %v1836 = vadd.f32 %v1771, %v1835
    %1837 = vmatmul.f32.gmra.mxu0 %v76
    %v1838 = vpop.f32.mrf.mxu0
    %v1839 = vadd.f32 %v1774, %v1838
    %1840 = vmatmul.f32.gmra.mxu0 %v94
    %v1841 = vpop.f32.mrf.mxu0
    %v1842 = vadd.f32 %v1777, %v1841
    %1843 = vmatmul.f32.gmra.mxu0 %v112
    %v1844 = vpop.f32.mrf.mxu0
    %v1845 = vadd.f32 %v1780, %v1844
    %1846 = vmatmul.f32.gmra.mxu0 %v130
    %v1847 = vpop.f32.mrf.mxu0
    %v1848 = vadd.f32 %v1783, %v1847
    %1849 = vmatmul.f32.gmra.mxu0 %v148
    %v1850 = vpop.f32.mrf.mxu0
    %v1851 = vadd.f32 %v1786, %v1850
    %1852 = vmatmul.f32.gmra.mxu0 %v166
    %v1853 = vpop.f32.mrf.mxu0
    %v1854 = vadd.f32 %v1789, %v1853
    %1855 = vmatmul.f32.gmra.mxu0 %v184
    %v1856 = vpop.f32.mrf.mxu0
    %v1857 = vadd.f32 %v1792, %v1856
    %1858 = vmatmul.f32.gmra.mxu0 %v202
    %v1859 = vpop.f32.mrf.mxu0
    %v1860 = vadd.f32 %v1795, %v1859
    %1861 = vmatmul.f32.gmra.mxu0 %v220
    %v1862 = vpop.f32.mrf.mxu0
    %v1863 = vadd.f32 %v1798, %v1862
    %1864 = vmatmul.f32.gmra.mxu0 %v238
    %v1865 = vpop.f32.mrf.mxu0
    %v1866 = vadd.f32 %v1801, %v1865
    %1867 = vmatmul.f32.gmra.mxu0 %v256
    %v1868 = vpop.f32.mrf.mxu0
    %v1869 = vadd.f32 %v1804, %v1868
    %1870 = vmatmul.f32.gmra.mxu0 %v274
    %v1871 = vpop.f32.mrf.mxu0
    %v1872 = vadd.f32 %v1807, %v1871
    %1873 = vmatmul.f32.gmra.mxu0 %v292
    %v1874 = vpop.f32.mrf.mxu0
    %v1875 = vadd.f32 %v1810, %v1874
    %1876 = vmatmul.f32.gmra.mxu0 %v310
    %v1877 = vpop.f32.mrf.mxu0
    %v1878 = vadd.f32 %v1813, %v1877
    %1879 = vmatmul.f32.gmra.mxu0 %v328
    %v1880 = vpop.f32.mrf.mxu0
    %v1881 = vadd.f32 %v1816, %v1880
    %1882 = vdwg.mxu0
    %1883 = vmatpush.msra.mxu0 %v842
    %1884 = vmatpush.msra.mxu0 %v840
    %1885 = vmatpush.msra.mxu0 %v838
    %1886 = vmatpush.msra.mxu0 %v836
    %1887 = vmatpush.msra.mxu0 %v834
    %1888 = vmatpush.msra.mxu0 %v832
    %1889 = vmatpush.msra.mxu0 %v830
    %1890 = vmatpush.msra.mxu0 %v828
    %1891 = vmatpush.msra.mxu0 %v826
    %1892 = vmatpush.msra.mxu0 %v824
    %1893 = vmatpush.msra.mxu0 %v822
    %1894 = vmatpush.msra.mxu0 %v820
    %1895 = vmatpush.msra.mxu0 %v818
    %1896 = vmatpush.msra.mxu0 %v816
    %1897 = vmatpush.msra.mxu0 %v814
    %1898 = vmatpush.msra.mxu0 %v812
    %1899 = vmatmul.f32.gmra.mxu0 %v59
    %v1900 = vpop.f32.mrf.mxu0
    %v1901 = vadd.f32 %v1836, %v1900
    %1902 = vmatmul.f32.gmra.mxu0 %v77
    %v1903 = vpop.f32.mrf.mxu0
    %v1904 = vadd.f32 %v1839, %v1903
    %1905 = vmatmul.f32.gmra.mxu0 %v95
    %v1906 = vpop.f32.mrf.mxu0
    %v1907 = vadd.f32 %v1842, %v1906
    %1908 = vmatmul.f32.gmra.mxu0 %v113
    %v1909 = vpop.f32.mrf.mxu0
    %v1910 = vadd.f32 %v1845, %v1909
    %1911 = vmatmul.f32.gmra.mxu0 %v131
    %v1912 = vpop.f32.mrf.mxu0
    %v1913 = vadd.f32 %v1848, %v1912
    %1914 = vmatmul.f32.gmra.mxu0 %v149
    %v1915 = vpop.f32.mrf.mxu0
    %v1916 = vadd.f32 %v1851, %v1915
    %1917 = vmatmul.f32.gmra.mxu0 %v167
    %v1918 = vpop.f32.mrf.mxu0
    %v1919 = vadd.f32 %v1854, %v1918
    %1920 = vmatmul.f32.gmra.mxu0 %v185
    %v1921 = vpop.f32.mrf.mxu0
    %v1922 = vadd.f32 %v1857, %v1921
    %1923 = vmatmul.f32.gmra.mxu0 %v203
    %v1924 = vpop.f32.mrf.mxu0
    %v1925 = vadd.f32 %v1860, %v1924
    %1926 = vmatmul.f32.gmra.mxu0 %v221
    %v1927 = vpop.f32.mrf.mxu0
    %v1928 = vadd.f32 %v1863, %v1927
    %1929 = vmatmul.f32.gmra.mxu0 %v239
    %v1930 = vpop.f32.mrf.mxu0
    %v1931 = vadd.f32 %v1866, %v1930
    %1932 = vmatmul.f32.gmra.mxu0 %v257
    %v1933 = vpop.f32.mrf.mxu0
    %v1934 = vadd.f32 %v1869, %v1933
    %1935 = vmatmul.f32.gmra.mxu0 %v275
    %v1936 = vpop.f32.mrf.mxu0
    %v1937 = vadd.f32 %v1872, %v1936
    %1938 = vmatmul.f32.gmra.mxu0 %v293
    %v1939 = vpop.f32.mrf.mxu0
    %v1940 = vadd.f32 %v1875, %v1939
    %1941 = vmatmul.f32.gmra.mxu0 %v311
    %v1942 = vpop.f32.mrf.mxu0
    %v1943 = vadd.f32 %v1878, %v1942
    %1944 = vmatmul.f32.gmra.mxu0 %v329
    %v1945 = vpop.f32.mrf.mxu0
    %v1946 = vadd.f32 %v1881, %v1945
    %1947 = vdwg.mxu0
    %1948 = vmatpush.msra.mxu0 %v874
    %1949 = vmatpush.msra.mxu0 %v872
    %1950 = vmatpush.msra.mxu0 %v870
    %1951 = vmatpush.msra.mxu0 %v868
    %1952 = vmatpush.msra.mxu0 %v866
    %1953 = vmatpush.msra.mxu0 %v864
    %1954 = vmatpush.msra.mxu0 %v862
    %1955 = vmatpush.msra.mxu0 %v860
    %1956 = vmatpush.msra.mxu0 %v858
    %1957 = vmatpush.msra.mxu0 %v856
    %1958 = vmatpush.msra.mxu0 %v854
    %1959 = vmatpush.msra.mxu0 %v852
    %1960 = vmatpush.msra.mxu0 %v850
    %1961 = vmatpush.msra.mxu0 %v848
    %1962 = vmatpush.msra.mxu0 %v846
    %1963 = vmatpush.msra.mxu0 %v844
    %1964 = vmatmul.f32.gmra.mxu0 %v60
    %v1965 = vpop.f32.mrf.mxu0
    %v1966 = vadd.f32 %v1901, %v1965
    %1967 = vmatmul.f32.gmra.mxu0 %v78
    %v1968 = vpop.f32.mrf.mxu0
    %v1969 = vadd.f32 %v1904, %v1968
    %1970 = vmatmul.f32.gmra.mxu0 %v96
    %v1971 = vpop.f32.mrf.mxu0
    %v1972 = vadd.f32 %v1907, %v1971
    %1973 = vmatmul.f32.gmra.mxu0 %v114
    %v1974 = vpop.f32.mrf.mxu0
    %v1975 = vadd.f32 %v1910, %v1974
    %1976 = vmatmul.f32.gmra.mxu0 %v132
    %v1977 = vpop.f32.mrf.mxu0
    %v1978 = vadd.f32 %v1913, %v1977
    %1979 = vmatmul.f32.gmra.mxu0 %v150
    %v1980 = vpop.f32.mrf.mxu0
    %v1981 = vadd.f32 %v1916, %v1980
    %1982 = vmatmul.f32.gmra.mxu0 %v168
    %v1983 = vpop.f32.mrf.mxu0
    %v1984 = vadd.f32 %v1919, %v1983
    %1985 = vmatmul.f32.gmra.mxu0 %v186
    %v1986 = vpop.f32.mrf.mxu0
    %v1987 = vadd.f32 %v1922, %v1986
    %1988 = vmatmul.f32.gmra.mxu0 %v204
    %v1989 = vpop.f32.mrf.mxu0
    %v1990 = vadd.f32 %v1925, %v1989
    %1991 = vmatmul.f32.gmra.mxu0 %v222
    %v1992 = vpop.f32.mrf.mxu0
    %v1993 = vadd.f32 %v1928, %v1992
    %1994 = vmatmul.f32.gmra.mxu0 %v240
    %v1995 = vpop.f32.mrf.mxu0
    %v1996 = vadd.f32 %v1931, %v1995
    %1997 = vmatmul.f32.gmra.mxu0 %v258
    %v1998 = vpop.f32.mrf.mxu0
    %v1999 = vadd.f32 %v1934, %v1998
    %2000 = vmatmul.f32.gmra.mxu0 %v276
    %v2001 = vpop.f32.mrf.mxu0
    %v2002 = vadd.f32 %v1937, %v2001
    %2003 = vmatmul.f32.gmra.mxu0 %v294
    %v2004 = vpop.f32.mrf.mxu0
    %v2005 = vadd.f32 %v1940, %v2004
    %2006 = vmatmul.f32.gmra.mxu0 %v312
    %v2007 = vpop.f32.mrf.mxu0
    %v2008 = vadd.f32 %v1943, %v2007
    %2009 = vmatmul.f32.gmra.mxu0 %v330
    %v2010 = vpop.f32.mrf.mxu0
    %v2011 = vadd.f32 %v1946, %v2010
    %2012 = vdwg.mxu0
    %2013 = vmatpush.msra.mxu0 %v906
    %2014 = vmatpush.msra.mxu0 %v904
    %2015 = vmatpush.msra.mxu0 %v902
    %2016 = vmatpush.msra.mxu0 %v900
    %2017 = vmatpush.msra.mxu0 %v898
    %2018 = vmatpush.msra.mxu0 %v896
    %2019 = vmatpush.msra.mxu0 %v894
    %2020 = vmatpush.msra.mxu0 %v892
    %2021 = vmatpush.msra.mxu0 %v890
    %2022 = vmatpush.msra.mxu0 %v888
    %2023 = vmatpush.msra.mxu0 %v886
    %2024 = vmatpush.msra.mxu0 %v884
    %2025 = vmatpush.msra.mxu0 %v882
    %2026 = vmatpush.msra.mxu0 %v880
    %2027 = vmatpush.msra.mxu0 %v878
    %2028 = vmatpush.msra.mxu0 %v876
    %2029 = vmatmul.f32.gmra.mxu0 %v61
    %v2030 = vpop.f32.mrf.mxu0
    %v2031 = vadd.f32 %v1966, %v2030
    %2032 = vmatmul.f32.gmra.mxu0 %v79
    %v2033 = vpop.f32.mrf.mxu0
    %v2034 = vadd.f32 %v1969, %v2033
    %2035 = vmatmul.f32.gmra.mxu0 %v97
    %v2036 = vpop.f32.mrf.mxu0
    %v2037 = vadd.f32 %v1972, %v2036
    %2038 = vmatmul.f32.gmra.mxu0 %v115
    %v2039 = vpop.f32.mrf.mxu0
    %v2040 = vadd.f32 %v1975, %v2039
    %2041 = vmatmul.f32.gmra.mxu0 %v133
    %v2042 = vpop.f32.mrf.mxu0
    %v2043 = vadd.f32 %v1978, %v2042
    %2044 = vmatmul.f32.gmra.mxu0 %v151
    %v2045 = vpop.f32.mrf.mxu0
    %v2046 = vadd.f32 %v1981, %v2045
    %2047 = vmatmul.f32.gmra.mxu0 %v169
    %v2048 = vpop.f32.mrf.mxu0
    %v2049 = vadd.f32 %v1984, %v2048
    %2050 = vmatmul.f32.gmra.mxu0 %v187
    %v2051 = vpop.f32.mrf.mxu0
    %v2052 = vadd.f32 %v1987, %v2051
    %2053 = vmatmul.f32.gmra.mxu0 %v205
    %v2054 = vpop.f32.mrf.mxu0
    %v2055 = vadd.f32 %v1990, %v2054
    %2056 = vmatmul.f32.gmra.mxu0 %v223
    %v2057 = vpop.f32.mrf.mxu0
    %v2058 = vadd.f32 %v1993, %v2057
    %2059 = vmatmul.f32.gmra.mxu0 %v241
    %v2060 = vpop.f32.mrf.mxu0
    %v2061 = vadd.f32 %v1996, %v2060
    %2062 = vmatmul.f32.gmra.mxu0 %v259
    %v2063 = vpop.f32.mrf.mxu0
    %v2064 = vadd.f32 %v1999, %v2063
    %2065 = vmatmul.f32.gmra.mxu0 %v277
    %v2066 = vpop.f32.mrf.mxu0
    %v2067 = vadd.f32 %v2002, %v2066
    %2068 = vmatmul.f32.gmra.mxu0 %v295
    %v2069 = vpop.f32.mrf.mxu0
    %v2070 = vadd.f32 %v2005, %v2069
    %2071 = vmatmul.f32.gmra.mxu0 %v313
    %v2072 = vpop.f32.mrf.mxu0
    %v2073 = vadd.f32 %v2008, %v2072
    %2074 = vmatmul.f32.gmra.mxu0 %v331
    %v2075 = vpop.f32.mrf.mxu0
    %v2076 = vadd.f32 %v2011, %v2075
    %2077 = vdwg.mxu0
    %2078 = vmatpush.msra.mxu0 %v363
    %2079 = vmatpush.msra.mxu0 %v361
    %2080 = vmatpush.msra.mxu0 %v359
    %2081 = vmatpush.msra.mxu0 %v357
    %2082 = vmatpush.msra.mxu0 %v355
    %2083 = vmatpush.msra.mxu0 %v353
    %2084 = vmatpush.msra.mxu0 %v351
    %2085 = vmatpush.msra.mxu0 %v349
    %2086 = vmatpush.msra.mxu0 %v347
    %2087 = vmatpush.msra.mxu0 %v345
    %2088 = vmatpush.msra.mxu0 %v343
    %2089 = vmatpush.msra.mxu0 %v341
    %2090 = vmatpush.msra.mxu0 %v339
    %2091 = vmatpush.msra.mxu0 %v337
    %2092 = vmatpush.msra.mxu0 %v335
    %2093 = vmatpush.msra.mxu0 %v333
    %2094 = vmatmul.f32.gmra.mxu0 %v44
    %v2095 = vpop.f32.mrf.mxu0
    %v2096 = vadd.f32 0.0, %v2095
    %2097 = vmatmul.f32.gmra.mxu0 %v62
    %v2098 = vpop.f32.mrf.mxu0
    %v2099 = vadd.f32 0.0, %v2098
    %2100 = vmatmul.f32.gmra.mxu0 %v80
    %v2101 = vpop.f32.mrf.mxu0
    %v2102 = vadd.f32 0.0, %v2101
    %2103 = vmatmul.f32.gmra.mxu0 %v98
    %v2104 = vpop.f32.mrf.mxu0
    %v2105 = vadd.f32 0.0, %v2104
    %2106 = vmatmul.f32.gmra.mxu0 %v116
    %v2107 = vpop.f32.mrf.mxu0
    %v2108 = vadd.f32 0.0, %v2107
    %2109 = vmatmul.f32.gmra.mxu0 %v134
    %v2110 = vpop.f32.mrf.mxu0
    %v2111 = vadd.f32 0.0, %v2110
    %2112 = vmatmul.f32.gmra.mxu0 %v152
    %v2113 = vpop.f32.mrf.mxu0
    %v2114 = vadd.f32 0.0, %v2113
    %2115 = vmatmul.f32.gmra.mxu0 %v170
    %v2116 = vpop.f32.mrf.mxu0
    %v2117 = vadd.f32 0.0, %v2116
    %2118 = vmatmul.f32.gmra.mxu0 %v188
    %v2119 = vpop.f32.mrf.mxu0
    %v2120 = vadd.f32 0.0, %v2119
    %2121 = vmatmul.f32.gmra.mxu0 %v206
    %v2122 = vpop.f32.mrf.mxu0
    %v2123 = vadd.f32 0.0, %v2122
    %2124 = vmatmul.f32.gmra.mxu0 %v224
    %v2125 = vpop.f32.mrf.mxu0
    %v2126 = vadd.f32 0.0, %v2125
    %2127 = vmatmul.f32.gmra.mxu0 %v242
    %v2128 = vpop.f32.mrf.mxu0
    %v2129 = vadd.f32 0.0, %v2128
    %2130 = vmatmul.f32.gmra.mxu0 %v260
    %v2131 = vpop.f32.mrf.mxu0
    %v2132 = vadd.f32 0.0, %v2131
    %2133 = vmatmul.f32.gmra.mxu0 %v278
    %v2134 = vpop.f32.mrf.mxu0
    %v2135 = vadd.f32 0.0, %v2134
    %2136 = vmatmul.f32.gmra.mxu0 %v296
    %v2137 = vpop.f32.mrf.mxu0
    %v2138 = vadd.f32 0.0, %v2137
    %2139 = vmatmul.f32.gmra.mxu0 %v314
    %v2140 = vpop.f32.mrf.mxu0
    %v2141 = vadd.f32 0.0, %v2140
    %2142 = vdwg.mxu0
    %2143 = vmatpush.msra.mxu0 %v395
    %2144 = vmatpush.msra.mxu0 %v393
    %2145 = vmatpush.msra.mxu0 %v391
    %2146 = vmatpush.msra.mxu0 %v389
    %2147 = vmatpush.msra.mxu0 %v387
    %2148 = vmatpush.msra.mxu0 %v385
    %2149 = vmatpush.msra.mxu0 %v383
    %2150 = vmatpush.msra.mxu0 %v381
    %2151 = vmatpush.msra.mxu0 %v379
    %2152 = vmatpush.msra.mxu0 %v377
    %2153 = vmatpush.msra.mxu0 %v375
    %2154 = vmatpush.msra.mxu0 %v373
    %2155 = vmatpush.msra.mxu0 %v371
    %2156 = vmatpush.msra.mxu0 %v369
    %2157 = vmatpush.msra.mxu0 %v367
    %2158 = vmatpush.msra.mxu0 %v365
    %2159 = vmatmul.f32.gmra.mxu0 %v45
    %v2160 = vpop.f32.mrf.mxu0
    %v2161 = vadd.f32 %v2096, %v2160
    %2162 = vmatmul.f32.gmra.mxu0 %v63
    %v2163 = vpop.f32.mrf.mxu0
    %v2164 = vadd.f32 %v2099, %v2163
    %2165 = vmatmul.f32.gmra.mxu0 %v81
    %v2166 = vpop.f32.mrf.mxu0
    %v2167 = vadd.f32 %v2102, %v2166
    %2168 = vmatmul.f32.gmra.mxu0 %v99
    %v2169 = vpop.f32.mrf.mxu0
    %v2170 = vadd.f32 %v2105, %v2169
    %2171 = vmatmul.f32.gmra.mxu0 %v117
    %v2172 = vpop.f32.mrf.mxu0
    %v2173 = vadd.f32 %v2108, %v2172
    %2174 = vmatmul.f32.gmra.mxu0 %v135
    %v2175 = vpop.f32.mrf.mxu0
    %v2176 = vadd.f32 %v2111, %v2175
    %2177 = vmatmul.f32.gmra.mxu0 %v153
    %v2178 = vpop.f32.mrf.mxu0
    %v2179 = vadd.f32 %v2114, %v2178
    %2180 = vmatmul.f32.gmra.mxu0 %v171
    %v2181 = vpop.f32.mrf.mxu0
    %v2182 = vadd.f32 %v2117, %v2181
    %2183 = vmatmul.f32.gmra.mxu0 %v189
    %v2184 = vpop.f32.mrf.mxu0
    %v2185 = vadd.f32 %v2120, %v2184
    %2186 = vmatmul.f32.gmra.mxu0 %v207
    %v2187 = vpop.f32.mrf.mxu0
    %v2188 = vadd.f32 %v2123, %v2187
    %2189 = vmatmul.f32.gmra.mxu0 %v225
    %v2190 = vpop.f32.mrf.mxu0
    %v2191 = vadd.f32 %v2126, %v2190
    %2192 = vmatmul.f32.gmra.mxu0 %v243
    %v2193 = vpop.f32.mrf.mxu0
    %v2194 = vadd.f32 %v2129, %v2193
    %2195 = vmatmul.f32.gmra.mxu0 %v261
    %v2196 = vpop.f32.mrf.mxu0
    %v2197 = vadd.f32 %v2132, %v2196
    %2198 = vmatmul.f32.gmra.mxu0 %v279
    %v2199 = vpop.f32.mrf.mxu0
    %v2200 = vadd.f32 %v2135, %v2199
    %2201 = vmatmul.f32.gmra.mxu0 %v297
    %v2202 = vpop.f32.mrf.mxu0
    %v2203 = vadd.f32 %v2138, %v2202
    %2204 = vmatmul.f32.gmra.mxu0 %v315
    %v2205 = vpop.f32.mrf.mxu0
    %v2206 = vadd.f32 %v2141, %v2205
    %2207 = vdwg.mxu0
    %2208 = vmatpush.msra.mxu0 %v427
    %2209 = vmatpush.msra.mxu0 %v425
    %2210 = vmatpush.msra.mxu0 %v423
    %2211 = vmatpush.msra.mxu0 %v421
    %2212 = vmatpush.msra.mxu0 %v419
    %2213 = vmatpush.msra.mxu0 %v417
    %2214 = vmatpush.msra.mxu0 %v415
    %2215 = vmatpush.msra.mxu0 %v413
    %2216 = vmatpush.msra.mxu0 %v411
    %2217 = vmatpush.msra.mxu0 %v409
    %2218 = vmatpush.msra.mxu0 %v407
    %2219 = vmatpush.msra.mxu0 %v405
    %2220 = vmatpush.msra.mxu0 %v403
    %2221 = vmatpush.msra.mxu0 %v401
    %2222 = vmatpush.msra.mxu0 %v399
    %2223 = vmatpush.msra.mxu0 %v397
    %2224 = vmatmul.f32.gmra.mxu0 %v46
    %v2225 = vpop.f32.mrf.mxu0
    %v2226 = vadd.f32 %v2161, %v2225
    %2227 = vmatmul.f32.gmra.mxu0 %v64
    %v2228 = vpop.f32.mrf.mxu0
    %v2229 = vadd.f32 %v2164, %v2228
    %2230 = vmatmul.f32.gmra.mxu0 %v82
    %v2231 = vpop.f32.mrf.mxu0
    %v2232 = vadd.f32 %v2167, %v2231
    %2233 = vmatmul.f32.gmra.mxu0 %v100
    %v2234 = vpop.f32.mrf.mxu0
    %v2235 = vadd.f32 %v2170, %v2234
    %2236 = vmatmul.f32.gmra.mxu0 %v118
    %v2237 = vpop.f32.mrf.mxu0
    %v2238 = vadd.f32 %v2173, %v2237
    %2239 = vmatmul.f32.gmra.mxu0 %v136
    %v2240 = vpop.f32.mrf.mxu0
    %v2241 = vadd.f32 %v2176, %v2240
    %2242 = vmatmul.f32.gmra.mxu0 %v154
    %v2243 = vpop.f32.mrf.mxu0
    %v2244 = vadd.f32 %v2179, %v2243
    %2245 = vmatmul.f32.gmra.mxu0 %v172
    %v2246 = vpop.f32.mrf.mxu0
    %v2247 = vadd.f32 %v2182, %v2246
    %2248 = vmatmul.f32.gmra.mxu0 %v190
    %v2249 = vpop.f32.mrf.mxu0
    %v2250 = vadd.f32 %v2185, %v2249
    %2251 = vmatmul.f32.gmra.mxu0 %v208
    %v2252 = vpop.f32.mrf.mxu0
    %v2253 = vadd.f32 %v2188, %v2252
    %2254 = vmatmul.f32.gmra.mxu0 %v226
    %v2255 = vpop.f32.mrf.mxu0
    %v2256 = vadd.f32 %v2191, %v2255
    %2257 = vmatmul.f32.gmra.mxu0 %v244
    %v2258 = vpop.f32.mrf.mxu0
    %v2259 = vadd.f32 %v2194, %v2258
    %2260 = vmatmul.f32.gmra.mxu0 %v262
    %v2261 = vpop.f32.mrf.mxu0
    %v2262 = vadd.f32 %v2197, %v2261
    %2263 = vmatmul.f32.gmra.mxu0 %v280
    %v2264 = vpop.f32.mrf.mxu0
    %v2265 = vadd.f32 %v2200, %v2264
    %2266 = vmatmul.f32.gmra.mxu0 %v298
    %v2267 = vpop.f32.mrf.mxu0
    %v2268 = vadd.f32 %v2203, %v2267
    %2269 = vmatmul.f32.gmra.mxu0 %v316
    %v2270 = vpop.f32.mrf.mxu0
    %v2271 = vadd.f32 %v2206, %v2270
    %2272 = vdwg.mxu0
    %2273 = vmatpush.msra.mxu0 %v459
    %2274 = vmatpush.msra.mxu0 %v457
    %2275 = vmatpush.msra.mxu0 %v455
    %2276 = vmatpush.msra.mxu0 %v453
    %2277 = vmatpush.msra.mxu0 %v451
    %2278 = vmatpush.msra.mxu0 %v449
    %2279 = vmatpush.msra.mxu0 %v447
    %2280 = vmatpush.msra.mxu0 %v445
    %2281 = vmatpush.msra.mxu0 %v443
    %2282 = vmatpush.msra.mxu0 %v441
    %2283 = vmatpush.msra.mxu0 %v439
    %2284 = vmatpush.msra.mxu0 %v437
    %2285 = vmatpush.msra.mxu0 %v435
    %2286 = vmatpush.msra.mxu0 %v433
    %2287 = vmatpush.msra.mxu0 %v431
    %2288 = vmatpush.msra.mxu0 %v429
    %2289 = vmatmul.f32.gmra.mxu0 %v47
    %v2290 = vpop.f32.mrf.mxu0
    %v2291 = vadd.f32 %v2226, %v2290
    %2292 = vmatmul.f32.gmra.mxu0 %v65
    %v2293 = vpop.f32.mrf.mxu0
    %v2294 = vadd.f32 %v2229, %v2293
    %2295 = vmatmul.f32.gmra.mxu0 %v83
    %v2296 = vpop.f32.mrf.mxu0
    %v2297 = vadd.f32 %v2232, %v2296
    %2298 = vmatmul.f32.gmra.mxu0 %v101
    %v2299 = vpop.f32.mrf.mxu0
    %v2300 = vadd.f32 %v2235, %v2299
    %2301 = vmatmul.f32.gmra.mxu0 %v119
    %v2302 = vpop.f32.mrf.mxu0
    %v2303 = vadd.f32 %v2238, %v2302
    %2304 = vmatmul.f32.gmra.mxu0 %v137
    %v2305 = vpop.f32.mrf.mxu0
    %v2306 = vadd.f32 %v2241, %v2305
    %2307 = vmatmul.f32.gmra.mxu0 %v155
    %v2308 = vpop.f32.mrf.mxu0
    %v2309 = vadd.f32 %v2244, %v2308
    %2310 = vmatmul.f32.gmra.mxu0 %v173
    %v2311 = vpop.f32.mrf.mxu0
    %v2312 = vadd.f32 %v2247, %v2311
    %2313 = vmatmul.f32.gmra.mxu0 %v191
    %v2314 = vpop.f32.mrf.mxu0
    %v2315 = vadd.f32 %v2250, %v2314
    %2316 = vmatmul.f32.gmra.mxu0 %v209
    %v2317 = vpop.f32.mrf.mxu0
    %v2318 = vadd.f32 %v2253, %v2317
    %2319 = vmatmul.f32.gmra.mxu0 %v227
    %v2320 = vpop.f32.mrf.mxu0
    %v2321 = vadd.f32 %v2256, %v2320
    %2322 = vmatmul.f32.gmra.mxu0 %v245
    %v2323 = vpop.f32.mrf.mxu0
    %v2324 = vadd.f32 %v2259, %v2323
    %2325 = vmatmul.f32.gmra.mxu0 %v263
    %v2326 = vpop.f32.mrf.mxu0
    %v2327 = vadd.f32 %v2262, %v2326
    %2328 = vmatmul.f32.gmra.mxu0 %v281
    %v2329 = vpop.f32.mrf.mxu0
    %v2330 = vadd.f32 %v2265, %v2329
    %2331 = vmatmul.f32.gmra.mxu0 %v299
    %v2332 = vpop.f32.mrf.mxu0
    %v2333 = vadd.f32 %v2268, %v2332
    %2334 = vmatmul.f32.gmra.mxu0 %v317
    %v2335 = vpop.f32.mrf.mxu0
    %v2336 = vadd.f32 %v2271, %v2335
    %2337 = vdwg.mxu0
    %2338 = vmatpush.msra.mxu0 %v491
    %2339 = vmatpush.msra.mxu0 %v489
    %2340 = vmatpush.msra.mxu0 %v487
    %2341 = vmatpush.msra.mxu0 %v485
    %2342 = vmatpush.msra.mxu0 %v483
    %2343 = vmatpush.msra.mxu0 %v481
    %2344 = vmatpush.msra.mxu0 %v479
    %2345 = vmatpush.msra.mxu0 %v477
    %2346 = vmatpush.msra.mxu0 %v475
    %2347 = vmatpush.msra.mxu0 %v473
    %2348 = vmatpush.msra.mxu0 %v471
    %2349 = vmatpush.msra.mxu0 %v469
    %2350 = vmatpush.msra.mxu0 %v467
    %2351 = vmatpush.msra.mxu0 %v465
    %2352 = vmatpush.msra.mxu0 %v463
    %2353 = vmatpush.msra.mxu0 %v461
    %2354 = vmatmul.f32.gmra.mxu0 %v48
    %v2355 = vpop.f32.mrf.mxu0
    %v2356 = vadd.f32 %v2291, %v2355
    %2357 = vmatmul.f32.gmra.mxu0 %v66
    %v2358 = vpop.f32.mrf.mxu0
    %v2359 = vadd.f32 %v2294, %v2358
    %2360 = vmatmul.f32.gmra.mxu0 %v84
    %v2361 = vpop.f32.mrf.mxu0
    %v2362 = vadd.f32 %v2297, %v2361
    %2363 = vmatmul.f32.gmra.mxu0 %v102
    %v2364 = vpop.f32.mrf.mxu0
    %v2365 = vadd.f32 %v2300, %v2364
    %2366 = vmatmul.f32.gmra.mxu0 %v120
    %v2367 = vpop.f32.mrf.mxu0
    %v2368 = vadd.f32 %v2303, %v2367
    %2369 = vmatmul.f32.gmra.mxu0 %v138
    %v2370 = vpop.f32.mrf.mxu0
    %v2371 = vadd.f32 %v2306, %v2370
    %2372 = vmatmul.f32.gmra.mxu0 %v156
    %v2373 = vpop.f32.mrf.mxu0
    %v2374 = vadd.f32 %v2309, %v2373
    %2375 = vmatmul.f32.gmra.mxu0 %v174
    %v2376 = vpop.f32.mrf.mxu0
    %v2377 = vadd.f32 %v2312, %v2376
    %2378 = vmatmul.f32.gmra.mxu0 %v192
    %v2379 = vpop.f32.mrf.mxu0
    %v2380 = vadd.f32 %v2315, %v2379
    %2381 = vmatmul.f32.gmra.mxu0 %v210
    %v2382 = vpop.f32.mrf.mxu0
    %v2383 = vadd.f32 %v2318, %v2382
    %2384 = vmatmul.f32.gmra.mxu0 %v228
    %v2385 = vpop.f32.mrf.mxu0
    %v2386 = vadd.f32 %v2321, %v2385
    %2387 = vmatmul.f32.gmra.mxu0 %v246
    %v2388 = vpop.f32.mrf.mxu0
    %v2389 = vadd.f32 %v2324, %v2388
    %2390 = vmatmul.f32.gmra.mxu0 %v264
    %v2391 = vpop.f32.mrf.mxu0
    %v2392 = vadd.f32 %v2327, %v2391
    %2393 = vmatmul.f32.gmra.mxu0 %v282
    %v2394 = vpop.f32.mrf.mxu0
    %v2395 = vadd.f32 %v2330, %v2394
    %2396 = vmatmul.f32.gmra.mxu0 %v300
    %v2397 = vpop.f32.mrf.mxu0
    %v2398 = vadd.f32 %v2333, %v2397
    %2399 = vmatmul.f32.gmra.mxu0 %v318
    %v2400 = vpop.f32.mrf.mxu0
    %v2401 = vadd.f32 %v2336, %v2400
    %2402 = vdwg.mxu0
    %2403 = vmatpush.msra.mxu0 %v523
    %2404 = vmatpush.msra.mxu0 %v521
    %2405 = vmatpush.msra.mxu0 %v519
    %2406 = vmatpush.msra.mxu0 %v517
    %2407 = vmatpush.msra.mxu0 %v515
    %2408 = vmatpush.msra.mxu0 %v513
    %2409 = vmatpush.msra.mxu0 %v511
    %2410 = vmatpush.msra.mxu0 %v509
    %2411 = vmatpush.msra.mxu0 %v507
    %2412 = vmatpush.msra.mxu0 %v505
    %2413 = vmatpush.msra.mxu0 %v503
    %2414 = vmatpush.msra.mxu0 %v501
    %2415 = vmatpush.msra.mxu0 %v499
    %2416 = vmatpush.msra.mxu0 %v497
    %2417 = vmatpush.msra.mxu0 %v495
    %2418 = vmatpush.msra.mxu0 %v493
    %2419 = vmatmul.f32.gmra.mxu0 %v49
    %v2420 = vpop.f32.mrf.mxu0
    %v2421 = vadd.f32 %v2356, %v2420
    %2422 = vmatmul.f32.gmra.mxu0 %v67
    %v2423 = vpop.f32.mrf.mxu0
    %v2424 = vadd.f32 %v2359, %v2423
    %2425 = vmatmul.f32.gmra.mxu0 %v85
    %v2426 = vpop.f32.mrf.mxu0
    %v2427 = vadd.f32 %v2362, %v2426
    %2428 = vmatmul.f32.gmra.mxu0 %v103
    %v2429 = vpop.f32.mrf.mxu0
    %v2430 = vadd.f32 %v2365, %v2429
    %2431 = vmatmul.f32.gmra.mxu0 %v121
    %v2432 = vpop.f32.mrf.mxu0
    %v2433 = vadd.f32 %v2368, %v2432
    %2434 = vmatmul.f32.gmra.mxu0 %v139
    %v2435 = vpop.f32.mrf.mxu0
    %v2436 = vadd.f32 %v2371, %v2435
    %2437 = vmatmul.f32.gmra.mxu0 %v157
    %v2438 = vpop.f32.mrf.mxu0
    %v2439 = vadd.f32 %v2374, %v2438
    %2440 = vmatmul.f32.gmra.mxu0 %v175
    %v2441 = vpop.f32.mrf.mxu0
    %v2442 = vadd.f32 %v2377, %v2441
    %2443 = vmatmul.f32.gmra.mxu0 %v193
    %v2444 = vpop.f32.mrf.mxu0
    %v2445 = vadd.f32 %v2380, %v2444
    %2446 = vmatmul.f32.gmra.mxu0 %v211
    %v2447 = vpop.f32.mrf.mxu0
    %v2448 = vadd.f32 %v2383, %v2447
    %2449 = vmatmul.f32.gmra.mxu0 %v229
    %v2450 = vpop.f32.mrf.mxu0
    %v2451 = vadd.f32 %v2386, %v2450
    %2452 = vmatmul.f32.gmra.mxu0 %v247
    %v2453 = vpop.f32.mrf.mxu0
    %v2454 = vadd.f32 %v2389, %v2453
    %2455 = vmatmul.f32.gmra.mxu0 %v265
    %v2456 = vpop.f32.mrf.mxu0
    %v2457 = vadd.f32 %v2392, %v2456
    %2458 = vmatmul.f32.gmra.mxu0 %v283
    %v2459 = vpop.f32.mrf.mxu0
    %v2460 = vadd.f32 %v2395, %v2459
    %2461 = vmatmul.f32.gmra.mxu0 %v301
    %v2462 = vpop.f32.mrf.mxu0
    %v2463 = vadd.f32 %v2398, %v2462
    %2464 = vmatmul.f32.gmra.mxu0 %v319
    %v2465 = vpop.f32.mrf.mxu0
    %v2466 = vadd.f32 %v2401, %v2465
    %2467 = vdwg.mxu0
    %2468 = vmatpush.msra.mxu0 %v555
    %2469 = vmatpush.msra.mxu0 %v553
    %2470 = vmatpush.msra.mxu0 %v551
    %2471 = vmatpush.msra.mxu0 %v549
    %2472 = vmatpush.msra.mxu0 %v547
    %2473 = vmatpush.msra.mxu0 %v545
    %2474 = vmatpush.msra.mxu0 %v543
    %2475 = vmatpush.msra.mxu0 %v541
    %2476 = vmatpush.msra.mxu0 %v539
    %2477 = vmatpush.msra.mxu0 %v537
    %2478 = vmatpush.msra.mxu0 %v535
    %2479 = vmatpush.msra.mxu0 %v533
    %2480 = vmatpush.msra.mxu0 %v531
    %2481 = vmatpush.msra.mxu0 %v529
    %2482 = vmatpush.msra.mxu0 %v527
    %2483 = vmatpush.msra.mxu0 %v525
    %2484 = vmatmul.f32.gmra.mxu0 %v50
    %v2485 = vpop.f32.mrf.mxu0
    %v2486 = vadd.f32 %v2421, %v2485
    %2487 = vmatmul.f32.gmra.mxu0 %v68
    %v2488 = vpop.f32.mrf.mxu0
    %v2489 = vadd.f32 %v2424, %v2488
    %2490 = vmatmul.f32.gmra.mxu0 %v86
    %v2491 = vpop.f32.mrf.mxu0
    %v2492 = vadd.f32 %v2427, %v2491
    %2493 = vmatmul.f32.gmra.mxu0 %v104
    %v2494 = vpop.f32.mrf.mxu0
    %v2495 = vadd.f32 %v2430, %v2494
    %2496 = vmatmul.f32.gmra.mxu0 %v122
    %v2497 = vpop.f32.mrf.mxu0
    %v2498 = vadd.f32 %v2433, %v2497
    %2499 = vmatmul.f32.gmra.mxu0 %v140
    %v2500 = vpop.f32.mrf.mxu0
    %v2501 = vadd.f32 %v2436, %v2500
    %2502 = vmatmul.f32.gmra.mxu0 %v158
    %v2503 = vpop.f32.mrf.mxu0
    %v2504 = vadd.f32 %v2439, %v2503
    %2505 = vmatmul.f32.gmra.mxu0 %v176
    %v2506 = vpop.f32.mrf.mxu0
    %v2507 = vadd.f32 %v2442, %v2506
    %2508 = vmatmul.f32.gmra.mxu0 %v194
    %v2509 = vpop.f32.mrf.mxu0
    %v2510 = vadd.f32 %v2445, %v2509
    %2511 = vmatmul.f32.gmra.mxu0 %v212
    %v2512 = vpop.f32.mrf.mxu0
    %v2513 = vadd.f32 %v2448, %v2512
    %2514 = vmatmul.f32.gmra.mxu0 %v230
    %v2515 = vpop.f32.mrf.mxu0
    %v2516 = vadd.f32 %v2451, %v2515
    %2517 = vmatmul.f32.gmra.mxu0 %v248
    %v2518 = vpop.f32.mrf.mxu0
    %v2519 = vadd.f32 %v2454, %v2518
    %2520 = vmatmul.f32.gmra.mxu0 %v266
    %v2521 = vpop.f32.mrf.mxu0
    %v2522 = vadd.f32 %v2457, %v2521
    %2523 = vmatmul.f32.gmra.mxu0 %v284
    %v2524 = vpop.f32.mrf.mxu0
    %v2525 = vadd.f32 %v2460, %v2524
    %2526 = vmatmul.f32.gmra.mxu0 %v302
    %v2527 = vpop.f32.mrf.mxu0
    %v2528 = vadd.f32 %v2463, %v2527
    %2529 = vmatmul.f32.gmra.mxu0 %v320
    %v2530 = vpop.f32.mrf.mxu0
    %v2531 = vadd.f32 %v2466, %v2530
    %2532 = vdwg.mxu0
    %2533 = vmatpush.msra.mxu0 %v587
    %2534 = vmatpush.msra.mxu0 %v585
    %2535 = vmatpush.msra.mxu0 %v583
    %2536 = vmatpush.msra.mxu0 %v581
    %2537 = vmatpush.msra.mxu0 %v579
    %2538 = vmatpush.msra.mxu0 %v577
    %2539 = vmatpush.msra.mxu0 %v575
    %2540 = vmatpush.msra.mxu0 %v573
    %2541 = vmatpush.msra.mxu0 %v571
    %2542 = vmatpush.msra.mxu0 %v569
    %2543 = vmatpush.msra.mxu0 %v567
    %2544 = vmatpush.msra.mxu0 %v565
    %2545 = vmatpush.msra.mxu0 %v563
    %2546 = vmatpush.msra.mxu0 %v561
    %2547 = vmatpush.msra.mxu0 %v559
    %2548 = vmatpush.msra.mxu0 %v557
    %2549 = vmatmul.f32.gmra.mxu0 %v51
    %v2550 = vpop.f32.mrf.mxu0
    %v2551 = vadd.f32 %v2486, %v2550
    %2552 = vmatmul.f32.gmra.mxu0 %v69
    %v2553 = vpop.f32.mrf.mxu0
    %v2554 = vadd.f32 %v2489, %v2553
    %2555 = vmatmul.f32.gmra.mxu0 %v87
    %v2556 = vpop.f32.mrf.mxu0
    %v2557 = vadd.f32 %v2492, %v2556
    %2558 = vmatmul.f32.gmra.mxu0 %v105
    %v2559 = vpop.f32.mrf.mxu0
    %v2560 = vadd.f32 %v2495, %v2559
    %2561 = vmatmul.f32.gmra.mxu0 %v123
    %v2562 = vpop.f32.mrf.mxu0
    %v2563 = vadd.f32 %v2498, %v2562
    %2564 = vmatmul.f32.gmra.mxu0 %v141
    %v2565 = vpop.f32.mrf.mxu0
    %v2566 = vadd.f32 %v2501, %v2565
    %2567 = vmatmul.f32.gmra.mxu0 %v159
    %v2568 = vpop.f32.mrf.mxu0
    %v2569 = vadd.f32 %v2504, %v2568
    %2570 = vmatmul.f32.gmra.mxu0 %v177
    %v2571 = vpop.f32.mrf.mxu0
    %v2572 = vadd.f32 %v2507, %v2571
    %2573 = vmatmul.f32.gmra.mxu0 %v195
    %v2574 = vpop.f32.mrf.mxu0
    %v2575 = vadd.f32 %v2510, %v2574
    %2576 = vmatmul.f32.gmra.mxu0 %v213
    %v2577 = vpop.f32.mrf.mxu0
    %v2578 = vadd.f32 %v2513, %v2577
    %2579 = vmatmul.f32.gmra.mxu0 %v231
    %v2580 = vpop.f32.mrf.mxu0
    %v2581 = vadd.f32 %v2516, %v2580
    %2582 = vmatmul.f32.gmra.mxu0 %v249
    %v2583 = vpop.f32.mrf.mxu0
    %v2584 = vadd.f32 %v2519, %v2583
    %2585 = vmatmul.f32.gmra.mxu0 %v267
    %v2586 = vpop.f32.mrf.mxu0
    %v2587 = vadd.f32 %v2522, %v2586
    %2588 = vmatmul.f32.gmra.mxu0 %v285
    %v2589 = vpop.f32.mrf.mxu0
    %v2590 = vadd.f32 %v2525, %v2589
    %2591 = vmatmul.f32.gmra.mxu0 %v303
    %v2592 = vpop.f32.mrf.mxu0
    %v2593 = vadd.f32 %v2528, %v2592
    %2594 = vmatmul.f32.gmra.mxu0 %v321
    %v2595 = vpop.f32.mrf.mxu0
    %v2596 = vadd.f32 %v2531, %v2595
    %2597 = vdwg.mxu0
    %2598 = vmatpush.msra.mxu0 %v619
    %2599 = vmatpush.msra.mxu0 %v617
    %2600 = vmatpush.msra.mxu0 %v615
    %2601 = vmatpush.msra.mxu0 %v613
    %2602 = vmatpush.msra.mxu0 %v611
    %2603 = vmatpush.msra.mxu0 %v609
    %2604 = vmatpush.msra.mxu0 %v607
    %2605 = vmatpush.msra.mxu0 %v605
    %2606 = vmatpush.msra.mxu0 %v603
    %2607 = vmatpush.msra.mxu0 %v601
    %2608 = vmatpush.msra.mxu0 %v599
    %2609 = vmatpush.msra.mxu0 %v597
    %2610 = vmatpush.msra.mxu0 %v595
    %2611 = vmatpush.msra.mxu0 %v593
    %2612 = vmatpush.msra.mxu0 %v591
    %2613 = vmatpush.msra.mxu0 %v589
    %2614 = vmatmul.f32.gmra.mxu0 %v52
    %v2615 = vpop.f32.mrf.mxu0
    %v2616 = vadd.f32 %v2551, %v2615
    %2617 = vmatmul.f32.gmra.mxu0 %v70
    %v2618 = vpop.f32.mrf.mxu0
    %v2619 = vadd.f32 %v2554, %v2618
    %2620 = vmatmul.f32.gmra.mxu0 %v88
    %v2621 = vpop.f32.mrf.mxu0
    %v2622 = vadd.f32 %v2557, %v2621
    %2623 = vmatmul.f32.gmra.mxu0 %v106
    %v2624 = vpop.f32.mrf.mxu0
    %v2625 = vadd.f32 %v2560, %v2624
    %2626 = vmatmul.f32.gmra.mxu0 %v124
    %v2627 = vpop.f32.mrf.mxu0
    %v2628 = vadd.f32 %v2563, %v2627
    %2629 = vmatmul.f32.gmra.mxu0 %v142
    %v2630 = vpop.f32.mrf.mxu0
    %v2631 = vadd.f32 %v2566, %v2630
    %2632 = vmatmul.f32.gmra.mxu0 %v160
    %v2633 = vpop.f32.mrf.mxu0
    %v2634 = vadd.f32 %v2569, %v2633
    %2635 = vmatmul.f32.gmra.mxu0 %v178
    %v2636 = vpop.f32.mrf.mxu0
    %v2637 = vadd.f32 %v2572, %v2636
    %2638 = vmatmul.f32.gmra.mxu0 %v196
    %v2639 = vpop.f32.mrf.mxu0
    %v2640 = vadd.f32 %v2575, %v2639
    %2641 = vmatmul.f32.gmra.mxu0 %v214
    %v2642 = vpop.f32.mrf.mxu0
    %v2643 = vadd.f32 %v2578, %v2642
    %2644 = vmatmul.f32.gmra.mxu0 %v232
    %v2645 = vpop.f32.mrf.mxu0
    %v2646 = vadd.f32 %v2581, %v2645
    %2647 = vmatmul.f32.gmra.mxu0 %v250
    %v2648 = vpop.f32.mrf.mxu0
    %v2649 = vadd.f32 %v2584, %v2648
    %2650 = vmatmul.f32.gmra.mxu0 %v268
    %v2651 = vpop.f32.mrf.mxu0
    %v2652 = vadd.f32 %v2587, %v2651
    %2653 = vmatmul.f32.gmra.mxu0 %v286
    %v2654 = vpop.f32.mrf.mxu0
    %v2655 = vadd.f32 %v2590, %v2654
    %2656 = vmatmul.f32.gmra.mxu0 %v304
    %v2657 = vpop.f32.mrf.mxu0
    %v2658 = vadd.f32 %v2593, %v2657
    %2659 = vmatmul.f32.gmra.mxu0 %v322
    %v2660 = vpop.f32.mrf.mxu0
    %v2661 = vadd.f32 %v2596, %v2660
    %2662 = vdwg.mxu0
    %2663 = vmatpush.msra.mxu0 %v651
    %2664 = vmatpush.msra.mxu0 %v649
    %2665 = vmatpush.msra.mxu0 %v647
    %2666 = vmatpush.msra.mxu0 %v645
    %2667 = vmatpush.msra.mxu0 %v643
    %2668 = vmatpush.msra.mxu0 %v641
    %2669 = vmatpush.msra.mxu0 %v639
    %2670 = vmatpush.msra.mxu0 %v637
    %2671 = vmatpush.msra.mxu0 %v635
    %2672 = vmatpush.msra.mxu0 %v633
    %2673 = vmatpush.msra.mxu0 %v631
    %2674 = vmatpush.msra.mxu0 %v629
    %2675 = vmatpush.msra.mxu0 %v627
    %2676 = vmatpush.msra.mxu0 %v625
    %2677 = vmatpush.msra.mxu0 %v623
    %2678 = vmatpush.msra.mxu0 %v621
    %2679 = vmatmul.f32.gmra.mxu0 %v53
    %v2680 = vpop.f32.mrf.mxu0
    %v2681 = vadd.f32 %v2616, %v2680
    %2682 = vmatmul.f32.gmra.mxu0 %v71
    %v2683 = vpop.f32.mrf.mxu0
    %v2684 = vadd.f32 %v2619, %v2683
    %2685 = vmatmul.f32.gmra.mxu0 %v89
    %v2686 = vpop.f32.mrf.mxu0
    %v2687 = vadd.f32 %v2622, %v2686
    %2688 = vmatmul.f32.gmra.mxu0 %v107
    %v2689 = vpop.f32.mrf.mxu0
    %v2690 = vadd.f32 %v2625, %v2689
    %2691 = vmatmul.f32.gmra.mxu0 %v125
    %v2692 = vpop.f32.mrf.mxu0
    %v2693 = vadd.f32 %v2628, %v2692
    %2694 = vmatmul.f32.gmra.mxu0 %v143
    %v2695 = vpop.f32.mrf.mxu0
    %v2696 = vadd.f32 %v2631, %v2695
    %2697 = vmatmul.f32.gmra.mxu0 %v161
    %v2698 = vpop.f32.mrf.mxu0
    %v2699 = vadd.f32 %v2634, %v2698
    %2700 = vmatmul.f32.gmra.mxu0 %v179
    %v2701 = vpop.f32.mrf.mxu0
    %v2702 = vadd.f32 %v2637, %v2701
    %2703 = vmatmul.f32.gmra.mxu0 %v197
    %v2704 = vpop.f32.mrf.mxu0
    %v2705 = vadd.f32 %v2640, %v2704
    %2706 = vmatmul.f32.gmra.mxu0 %v215
    %v2707 = vpop.f32.mrf.mxu0
    %v2708 = vadd.f32 %v2643, %v2707
    %2709 = vmatmul.f32.gmra.mxu0 %v233
    %v2710 = vpop.f32.mrf.mxu0
    %v2711 = vadd.f32 %v2646, %v2710
    %2712 = vmatmul.f32.gmra.mxu0 %v251
    %v2713 = vpop.f32.mrf.mxu0
    %v2714 = vadd.f32 %v2649, %v2713
    %2715 = vmatmul.f32.gmra.mxu0 %v269
    %v2716 = vpop.f32.mrf.mxu0
    %v2717 = vadd.f32 %v2652, %v2716
    %2718 = vmatmul.f32.gmra.mxu0 %v287
    %v2719 = vpop.f32.mrf.mxu0
    %v2720 = vadd.f32 %v2655, %v2719
    %2721 = vmatmul.f32.gmra.mxu0 %v305
    %v2722 = vpop.f32.mrf.mxu0
    %v2723 = vadd.f32 %v2658, %v2722
    %2724 = vmatmul.f32.gmra.mxu0 %v323
    %v2725 = vpop.f32.mrf.mxu0
    %v2726 = vadd.f32 %v2661, %v2725
    %2727 = vdwg.mxu0
    %2728 = vmatpush.msra.mxu0 %v683
    %2729 = vmatpush.msra.mxu0 %v681
    %2730 = vmatpush.msra.mxu0 %v679
    %2731 = vmatpush.msra.mxu0 %v677
    %2732 = vmatpush.msra.mxu0 %v675
    %2733 = vmatpush.msra.mxu0 %v673
    %2734 = vmatpush.msra.mxu0 %v671
    %2735 = vmatpush.msra.mxu0 %v669
    %2736 = vmatpush.msra.mxu0 %v667
    %2737 = vmatpush.msra.mxu0 %v665
    %2738 = vmatpush.msra.mxu0 %v663
    %2739 = vmatpush.msra.mxu0 %v661
    %2740 = vmatpush.msra.mxu0 %v659
    %2741 = vmatpush.msra.mxu0 %v657
    %2742 = vmatpush.msra.mxu0 %v655
    %2743 = vmatpush.msra.mxu0 %v653
    %2744 = vmatmul.f32.gmra.mxu0 %v54
    %v2745 = vpop.f32.mrf.mxu0
    %v2746 = vadd.f32 %v2681, %v2745
    %2747 = vmatmul.f32.gmra.mxu0 %v72
    %v2748 = vpop.f32.mrf.mxu0
    %v2749 = vadd.f32 %v2684, %v2748
    %2750 = vmatmul.f32.gmra.mxu0 %v90
    %v2751 = vpop.f32.mrf.mxu0
    %v2752 = vadd.f32 %v2687, %v2751
    %2753 = vmatmul.f32.gmra.mxu0 %v108
    %v2754 = vpop.f32.mrf.mxu0
    %v2755 = vadd.f32 %v2690, %v2754
    %2756 = vmatmul.f32.gmra.mxu0 %v126
    %v2757 = vpop.f32.mrf.mxu0
    %v2758 = vadd.f32 %v2693, %v2757
    %2759 = vmatmul.f32.gmra.mxu0 %v144
    %v2760 = vpop.f32.mrf.mxu0
    %v2761 = vadd.f32 %v2696, %v2760
    %2762 = vmatmul.f32.gmra.mxu0 %v162
    %v2763 = vpop.f32.mrf.mxu0
    %v2764 = vadd.f32 %v2699, %v2763
    %2765 = vmatmul.f32.gmra.mxu0 %v180
    %v2766 = vpop.f32.mrf.mxu0
    %v2767 = vadd.f32 %v2702, %v2766
    %2768 = vmatmul.f32.gmra.mxu0 %v198
    %v2769 = vpop.f32.mrf.mxu0
    %v2770 = vadd.f32 %v2705, %v2769
    %2771 = vmatmul.f32.gmra.mxu0 %v216
    %v2772 = vpop.f32.mrf.mxu0
    %v2773 = vadd.f32 %v2708, %v2772
    %2774 = vmatmul.f32.gmra.mxu0 %v234
    %v2775 = vpop.f32.mrf.mxu0
    %v2776 = vadd.f32 %v2711, %v2775
    %2777 = vmatmul.f32.gmra.mxu0 %v252
    %v2778 = vpop.f32.mrf.mxu0
    %v2779 = vadd.f32 %v2714, %v2778
    %2780 = vmatmul.f32.gmra.mxu0 %v270
    %v2781 = vpop.f32.mrf.mxu0
    %v2782 = vadd.f32 %v2717, %v2781
    %2783 = vmatmul.f32.gmra.mxu0 %v288
    %v2784 = vpop.f32.mrf.mxu0
    %v2785 = vadd.f32 %v2720, %v2784
    %2786 = vmatmul.f32.gmra.mxu0 %v306
    %v2787 = vpop.f32.mrf.mxu0
    %v2788 = vadd.f32 %v2723, %v2787
    %2789 = vmatmul.f32.gmra.mxu0 %v324
    %v2790 = vpop.f32.mrf.mxu0
    %v2791 = vadd.f32 %v2726, %v2790
    %2792 = vdwg.mxu0
    %2793 = vmatpush.msra.mxu0 %v715
    %2794 = vmatpush.msra.mxu0 %v713
    %2795 = vmatpush.msra.mxu0 %v711
    %2796 = vmatpush.msra.mxu0 %v709
    %2797 = vmatpush.msra.mxu0 %v707
    %2798 = vmatpush.msra.mxu0 %v705
    %2799 = vmatpush.msra.mxu0 %v703
    %2800 = vmatpush.msra.mxu0 %v701
    %2801 = vmatpush.msra.mxu0 %v699
    %2802 = vmatpush.msra.mxu0 %v697
    %2803 = vmatpush.msra.mxu0 %v695
    %2804 = vmatpush.msra.mxu0 %v693
    %2805 = vmatpush.msra.mxu0 %v691
    %2806 = vmatpush.msra.mxu0 %v689
    %2807 = vmatpush.msra.mxu0 %v687
    %2808 = vmatpush.msra.mxu0 %v685
    %2809 = vmatmul.f32.gmra.mxu0 %v55
    %v2810 = vpop.f32.mrf.mxu0
    %v2811 = vadd.f32 %v2746, %v2810
    %2812 = vmatmul.f32.gmra.mxu0 %v73
    %v2813 = vpop.f32.mrf.mxu0
    %v2814 = vadd.f32 %v2749, %v2813
    %2815 = vmatmul.f32.gmra.mxu0 %v91
    %v2816 = vpop.f32.mrf.mxu0
    %v2817 = vadd.f32 %v2752, %v2816
    %2818 = vmatmul.f32.gmra.mxu0 %v109
    %v2819 = vpop.f32.mrf.mxu0
    %v2820 = vadd.f32 %v2755, %v2819
    %2821 = vmatmul.f32.gmra.mxu0 %v127
    %v2822 = vpop.f32.mrf.mxu0
    %v2823 = vadd.f32 %v2758, %v2822
    %2824 = vmatmul.f32.gmra.mxu0 %v145
    %v2825 = vpop.f32.mrf.mxu0
    %v2826 = vadd.f32 %v2761, %v2825
    %2827 = vmatmul.f32.gmra.mxu0 %v163
    %v2828 = vpop.f32.mrf.mxu0
    %v2829 = vadd.f32 %v2764, %v2828
    %2830 = vmatmul.f32.gmra.mxu0 %v181
    %v2831 = vpop.f32.mrf.mxu0
    %v2832 = vadd.f32 %v2767, %v2831
    %2833 = vmatmul.f32.gmra.mxu0 %v199
    %v2834 = vpop.f32.mrf.mxu0
    %v2835 = vadd.f32 %v2770, %v2834
    %2836 = vmatmul.f32.gmra.mxu0 %v217
    %v2837 = vpop.f32.mrf.mxu0
    %v2838 = vadd.f32 %v2773, %v2837
    %2839 = vmatmul.f32.gmra.mxu0 %v235
    %v2840 = vpop.f32.mrf.mxu0
    %v2841 = vadd.f32 %v2776, %v2840
    %2842 = vmatmul.f32.gmra.mxu0 %v253
    %v2843 = vpop.f32.mrf.mxu0
    %v2844 = vadd.f32 %v2779, %v2843
    %2845 = vmatmul.f32.gmra.mxu0 %v271
    %v2846 = vpop.f32.mrf.mxu0
    %v2847 = vadd.f32 %v2782, %v2846
    %2848 = vmatmul.f32.gmra.mxu0 %v289
    %v2849 = vpop.f32.mrf.mxu0
    %v2850 = vadd.f32 %v2785, %v2849
    %2851 = vmatmul.f32.gmra.mxu0 %v307
    %v2852 = vpop.f32.mrf.mxu0
    %v2853 = vadd.f32 %v2788, %v2852
    %2854 = vmatmul.f32.gmra.mxu0 %v325
    %v2855 = vpop.f32.mrf.mxu0
    %v2856 = vadd.f32 %v2791, %v2855
    %2857 = vdwg.mxu0
    %2858 = vmatpush.msra.mxu0 %v747
    %2859 = vmatpush.msra.mxu0 %v745
    %2860 = vmatpush.msra.mxu0 %v743
    %2861 = vmatpush.msra.mxu0 %v741
    %2862 = vmatpush.msra.mxu0 %v739
    %2863 = vmatpush.msra.mxu0 %v737
    %2864 = vmatpush.msra.mxu0 %v735
    %2865 = vmatpush.msra.mxu0 %v733
    %2866 = vmatpush.msra.mxu0 %v731
    %2867 = vmatpush.msra.mxu0 %v729
    %2868 = vmatpush.msra.mxu0 %v727
    %2869 = vmatpush.msra.mxu0 %v725
    %2870 = vmatpush.msra.mxu0 %v723
    %2871 = vmatpush.msra.mxu0 %v721
    %2872 = vmatpush.msra.mxu0 %v719
    %2873 = vmatpush.msra.mxu0 %v717
    %2874 = vmatmul.f32.gmra.mxu0 %v56
    %v2875 = vpop.f32.mrf.mxu0
    %v2876 = vadd.f32 %v2811, %v2875
    %2877 = vmatmul.f32.gmra.mxu0 %v74
    %v2878 = vpop.f32.mrf.mxu0
    %v2879 = vadd.f32 %v2814, %v2878
    %2880 = vmatmul.f32.gmra.mxu0 %v92
    %v2881 = vpop.f32.mrf.mxu0
    %v2882 = vadd.f32 %v2817, %v2881
    %2883 = vmatmul.f32.gmra.mxu0 %v110
    %v2884 = vpop.f32.mrf.mxu0
    %v2885 = vadd.f32 %v2820, %v2884
    %2886 = vmatmul.f32.gmra.mxu0 %v128
    %v2887 = vpop.f32.mrf.mxu0
    %v2888 = vadd.f32 %v2823, %v2887
    %2889 = vmatmul.f32.gmra.mxu0 %v146
    %v2890 = vpop.f32.mrf.mxu0
    %v2891 = vadd.f32 %v2826, %v2890
    %2892 = vmatmul.f32.gmra.mxu0 %v164
    %v2893 = vpop.f32.mrf.mxu0
    %v2894 = vadd.f32 %v2829, %v2893
    %2895 = vmatmul.f32.gmra.mxu0 %v182
    %v2896 = vpop.f32.mrf.mxu0
    %v2897 = vadd.f32 %v2832, %v2896
    %2898 = vmatmul.f32.gmra.mxu0 %v200
    %v2899 = vpop.f32.mrf.mxu0
    %v2900 = vadd.f32 %v2835, %v2899
    %2901 = vmatmul.f32.gmra.mxu0 %v218
    %v2902 = vpop.f32.mrf.mxu0
    %v2903 = vadd.f32 %v2838, %v2902
    %2904 = vmatmul.f32.gmra.mxu0 %v236
    %v2905 = vpop.f32.mrf.mxu0
    %v2906 = vadd.f32 %v2841, %v2905
    %2907 = vmatmul.f32.gmra.mxu0 %v254
    %v2908 = vpop.f32.mrf.mxu0
    %v2909 = vadd.f32 %v2844, %v2908
    %2910 = vmatmul.f32.gmra.mxu0 %v272
    %v2911 = vpop.f32.mrf.mxu0
    %v2912 = vadd.f32 %v2847, %v2911
    %2913 = vmatmul.f32.gmra.mxu0 %v290
    %v2914 = vpop.f32.mrf.mxu0
    %v2915 = vadd.f32 %v2850, %v2914
    %2916 = vmatmul.f32.gmra.mxu0 %v308
    %v2917 = vpop.f32.mrf.mxu0
    %v2918 = vadd.f32 %v2853, %v2917
    %2919 = vmatmul.f32.gmra.mxu0 %v326
    %v2920 = vpop.f32.mrf.mxu0
    %v2921 = vadd.f32 %v2856, %v2920
    %2922 = vdwg.mxu0
    %2923 = vmatpush.msra.mxu0 %v779
    %2924 = vmatpush.msra.mxu0 %v777
    %2925 = vmatpush.msra.mxu0 %v775
    %2926 = vmatpush.msra.mxu0 %v773
    %2927 = vmatpush.msra.mxu0 %v771
    %2928 = vmatpush.msra.mxu0 %v769
    %2929 = vmatpush.msra.mxu0 %v767
    %2930 = vmatpush.msra.mxu0 %v765
    %2931 = vmatpush.msra.mxu0 %v763
    %2932 = vmatpush.msra.mxu0 %v761
    %2933 = vmatpush.msra.mxu0 %v759
    %2934 = vmatpush.msra.mxu0 %v757
    %2935 = vmatpush.msra.mxu0 %v755
    %2936 = vmatpush.msra.mxu0 %v753
    %2937 = vmatpush.msra.mxu0 %v751
    %2938 = vmatpush.msra.mxu0 %v749
    %2939 = vmatmul.f32.gmra.mxu0 %v57
    %v2940 = vpop.f32.mrf.mxu0
    %v2941 = vadd.f32 %v2876, %v2940
    %2942 = vmatmul.f32.gmra.mxu0 %v75
    %v2943 = vpop.f32.mrf.mxu0
    %v2944 = vadd.f32 %v2879, %v2943
    %2945 = vmatmul.f32.gmra.mxu0 %v93
    %v2946 = vpop.f32.mrf.mxu0
    %v2947 = vadd.f32 %v2882, %v2946
    %2948 = vmatmul.f32.gmra.mxu0 %v111
    %v2949 = vpop.f32.mrf.mxu0
    %v2950 = vadd.f32 %v2885, %v2949
    %2951 = vmatmul.f32.gmra.mxu0 %v129
    %v2952 = vpop.f32.mrf.mxu0
    %v2953 = vadd.f32 %v2888, %v2952
    %2954 = vmatmul.f32.gmra.mxu0 %v147
    %v2955 = vpop.f32.mrf.mxu0
    %v2956 = vadd.f32 %v2891, %v2955
    %2957 = vmatmul.f32.gmra.mxu0 %v165
    %v2958 = vpop.f32.mrf.mxu0
    %v2959 = vadd.f32 %v2894, %v2958
    %2960 = vmatmul.f32.gmra.mxu0 %v183
    %v2961 = vpop.f32.mrf.mxu0
    %v2962 = vadd.f32 %v2897, %v2961
    %2963 = vmatmul.f32.gmra.mxu0 %v201
    %v2964 = vpop.f32.mrf.mxu0
    %v2965 = vadd.f32 %v2900, %v2964
    %2966 = vmatmul.f32.gmra.mxu0 %v219
    %v2967 = vpop.f32.mrf.mxu0
    %v2968 = vadd.f32 %v2903, %v2967
    %2969 = vmatmul.f32.gmra.mxu0 %v237
    %v2970 = vpop.f32.mrf.mxu0
    %v2971 = vadd.f32 %v2906, %v2970
    %2972 = vmatmul.f32.gmra.mxu0 %v255
    %v2973 = vpop.f32.mrf.mxu0
    %v2974 = vadd.f32 %v2909, %v2973
    %2975 = vmatmul.f32.gmra.mxu0 %v273
    %v2976 = vpop.f32.mrf.mxu0
    %v2977 = vadd.f32 %v2912, %v2976
    %2978 = vmatmul.f32.gmra.mxu0 %v291
    %v2979 = vpop.f32.mrf.mxu0
    %v2980 = vadd.f32 %v2915, %v2979
    %2981 = vmatmul.f32.gmra.mxu0 %v309
    %v2982 = vpop.f32.mrf.mxu0
    %v2983 = vadd.f32 %v2918, %v2982
    %2984 = vmatmul.f32.gmra.mxu0 %v327
    %v2985 = vpop.f32.mrf.mxu0
    %v2986 = vadd.f32 %v2921, %v2985
    %2987 = vdwg.mxu0
    %2988 = vmatpush.msra.mxu0 %v811
    %2989 = vmatpush.msra.mxu0 %v809
    %2990 = vmatpush.msra.mxu0 %v807
    %2991 = vmatpush.msra.mxu0 %v805
    %2992 = vmatpush.msra.mxu0 %v803
    %2993 = vmatpush.msra.mxu0 %v801
    %2994 = vmatpush.msra.mxu0 %v799
    %2995 = vmatpush.msra.mxu0 %v797
    %2996 = vmatpush.msra.mxu0 %v795
    %2997 = vmatpush.msra.mxu0 %v793
    %2998 = vmatpush.msra.mxu0 %v791
    %2999 = vmatpush.msra.mxu0 %v789
    %3000 = vmatpush.msra.mxu0 %v787
    %3001 = vmatpush.msra.mxu0 %v785
    %3002 = vmatpush.msra.mxu0 %v783
    %3003 = vmatpush.msra.mxu0 %v781
    %3004 = vmatmul.f32.gmra.mxu0 %v58
    %v3005 = vpop.f32.mrf.mxu0
    %v3006 = vadd.f32 %v2941, %v3005
    %3007 = vmatmul.f32.gmra.mxu0 %v76
    %v3008 = vpop.f32.mrf.mxu0
    %v3009 = vadd.f32 %v2944, %v3008
    %3010 = vmatmul.f32.gmra.mxu0 %v94
    %v3011 = vpop.f32.mrf.mxu0
    %v3012 = vadd.f32 %v2947, %v3011
    %3013 = vmatmul.f32.gmra.mxu0 %v112
    %v3014 = vpop.f32.mrf.mxu0
    %v3015 = vadd.f32 %v2950, %v3014
    %3016 = vmatmul.f32.gmra.mxu0 %v130
    %v3017 = vpop.f32.mrf.mxu0
    %v3018 = vadd.f32 %v2953, %v3017
    %3019 = vmatmul.f32.gmra.mxu0 %v148
    %v3020 = vpop.f32.mrf.mxu0
    %v3021 = vadd.f32 %v2956, %v3020
    %3022 = vmatmul.f32.gmra.mxu0 %v166
    %v3023 = vpop.f32.mrf.mxu0
    %v3024 = vadd.f32 %v2959, %v3023
    %3025 = vmatmul.f32.gmra.mxu0 %v184
    %v3026 = vpop.f32.mrf.mxu0
    %v3027 = vadd.f32 %v2962, %v3026
    %3028 = vmatmul.f32.gmra.mxu0 %v202
    %v3029 = vpop.f32.mrf.mxu0
    %v3030 = vadd.f32 %v2965, %v3029
    %3031 = vmatmul.f32.gmra.mxu0 %v220
    %v3032 = vpop.f32.mrf.mxu0
    %v3033 = vadd.f32 %v2968, %v3032
    %3034 = vmatmul.f32.gmra.mxu0 %v238
    %v3035 = vpop.f32.mrf.mxu0
    %v3036 = vadd.f32 %v2971, %v3035
    %3037 = vmatmul.f32.gmra.mxu0 %v256
    %v3038 = vpop.f32.mrf.mxu0
    %v3039 = vadd.f32 %v2974, %v3038
    %3040 = vmatmul.f32.gmra.mxu0 %v274
    %v3041 = vpop.f32.mrf.mxu0
    %v3042 = vadd.f32 %v2977, %v3041
    %3043 = vmatmul.f32.gmra.mxu0 %v292
    %v3044 = vpop.f32.mrf.mxu0
    %v3045 = vadd.f32 %v2980, %v3044
    %3046 = vmatmul.f32.gmra.mxu0 %v310
    %v3047 = vpop.f32.mrf.mxu0
    %v3048 = vadd.f32 %v2983, %v3047
    %3049 = vmatmul.f32.gmra.mxu0 %v328
    %v3050 = vpop.f32.mrf.mxu0
    %v3051 = vadd.f32 %v2986, %v3050
    %3052 = vdwg.mxu0
    %3053 = vmatpush.msra.mxu0 %v843
    %3054 = vmatpush.msra.mxu0 %v841
    %3055 = vmatpush.msra.mxu0 %v839
    %3056 = vmatpush.msra.mxu0 %v837
    %3057 = vmatpush.msra.mxu0 %v835
    %3058 = vmatpush.msra.mxu0 %v833
    %3059 = vmatpush.msra.mxu0 %v831
    %3060 = vmatpush.msra.mxu0 %v829
    %3061 = vmatpush.msra.mxu0 %v827
    %3062 = vmatpush.msra.mxu0 %v825
    %3063 = vmatpush.msra.mxu0 %v823
    %3064 = vmatpush.msra.mxu0 %v821
    %3065 = vmatpush.msra.mxu0 %v819
    %3066 = vmatpush.msra.mxu0 %v817
    %3067 = vmatpush.msra.mxu0 %v815
    %3068 = vmatpush.msra.mxu0 %v813
    %3069 = vmatmul.f32.gmra.mxu0 %v59
    %v3070 = vpop.f32.mrf.mxu0
    %v3071 = vadd.f32 %v3006, %v3070
    %3072 = vmatmul.f32.gmra.mxu0 %v77
    %v3073 = vpop.f32.mrf.mxu0
    %v3074 = vadd.f32 %v3009, %v3073
    %3075 = vmatmul.f32.gmra.mxu0 %v95
    %v3076 = vpop.f32.mrf.mxu0
    %v3077 = vadd.f32 %v3012, %v3076
    %3078 = vmatmul.f32.gmra.mxu0 %v113
    %v3079 = vpop.f32.mrf.mxu0
    %v3080 = vadd.f32 %v3015, %v3079
    %3081 = vmatmul.f32.gmra.mxu0 %v131
    %v3082 = vpop.f32.mrf.mxu0
    %v3083 = vadd.f32 %v3018, %v3082
    %3084 = vmatmul.f32.gmra.mxu0 %v149
    %v3085 = vpop.f32.mrf.mxu0
    %v3086 = vadd.f32 %v3021, %v3085
    %3087 = vmatmul.f32.gmra.mxu0 %v167
    %v3088 = vpop.f32.mrf.mxu0
    %v3089 = vadd.f32 %v3024, %v3088
    %3090 = vmatmul.f32.gmra.mxu0 %v185
    %v3091 = vpop.f32.mrf.mxu0
    %v3092 = vadd.f32 %v3027, %v3091
    %3093 = vmatmul.f32.gmra.mxu0 %v203
    %v3094 = vpop.f32.mrf.mxu0
    %v3095 = vadd.f32 %v3030, %v3094
    %3096 = vmatmul.f32.gmra.mxu0 %v221
    %v3097 = vpop.f32.mrf.mxu0
    %v3098 = vadd.f32 %v3033, %v3097
    %3099 = vmatmul.f32.gmra.mxu0 %v239
    %v3100 = vpop.f32.mrf.mxu0
    %v3101 = vadd.f32 %v3036, %v3100
    %3102 = vmatmul.f32.gmra.mxu0 %v257
    %v3103 = vpop.f32.mrf.mxu0
    %v3104 = vadd.f32 %v3039, %v3103
    %3105 = vmatmul.f32.gmra.mxu0 %v275
    %v3106 = vpop.f32.mrf.mxu0
    %v3107 = vadd.f32 %v3042, %v3106
    %3108 = vmatmul.f32.gmra.mxu0 %v293
    %v3109 = vpop.f32.mrf.mxu0
    %v3110 = vadd.f32 %v3045, %v3109
    %3111 = vmatmul.f32.gmra.mxu0 %v311
    %v3112 = vpop.f32.mrf.mxu0
    %v3113 = vadd.f32 %v3048, %v3112
    %3114 = vmatmul.f32.gmra.mxu0 %v329
    %v3115 = vpop.f32.mrf.mxu0
    %v3116 = vadd.f32 %v3051, %v3115
    %3117 = vdwg.mxu0
    %3118 = vmatpush.msra.mxu0 %v875
    %3119 = vmatpush.msra.mxu0 %v873
    %3120 = vmatpush.msra.mxu0 %v871
    %3121 = vmatpush.msra.mxu0 %v869
    %3122 = vmatpush.msra.mxu0 %v867
    %3123 = vmatpush.msra.mxu0 %v865
    %3124 = vmatpush.msra.mxu0 %v863
    %3125 = vmatpush.msra.mxu0 %v861
    %3126 = vmatpush.msra.mxu0 %v859
    %3127 = vmatpush.msra.mxu0 %v857
    %3128 = vmatpush.msra.mxu0 %v855
    %3129 = vmatpush.msra.mxu0 %v853
    %3130 = vmatpush.msra.mxu0 %v851
    %3131 = vmatpush.msra.mxu0 %v849
    %3132 = vmatpush.msra.mxu0 %v847
    %3133 = vmatpush.msra.mxu0 %v845
    %3134 = vmatmul.f32.gmra.mxu0 %v60
    %v3135 = vpop.f32.mrf.mxu0
    %v3136 = vadd.f32 %v3071, %v3135
    %3137 = vmatmul.f32.gmra.mxu0 %v78
    %v3138 = vpop.f32.mrf.mxu0
    %v3139 = vadd.f32 %v3074, %v3138
    %3140 = vmatmul.f32.gmra.mxu0 %v96
    %v3141 = vpop.f32.mrf.mxu0
    %v3142 = vadd.f32 %v3077, %v3141
    %3143 = vmatmul.f32.gmra.mxu0 %v114
    %v3144 = vpop.f32.mrf.mxu0
    %v3145 = vadd.f32 %v3080, %v3144
    %3146 = vmatmul.f32.gmra.mxu0 %v132
    %v3147 = vpop.f32.mrf.mxu0
    %v3148 = vadd.f32 %v3083, %v3147
    %3149 = vmatmul.f32.gmra.mxu0 %v150
    %v3150 = vpop.f32.mrf.mxu0
    %v3151 = vadd.f32 %v3086, %v3150
    %3152 = vmatmul.f32.gmra.mxu0 %v168
    %v3153 = vpop.f32.mrf.mxu0
    %v3154 = vadd.f32 %v3089, %v3153
    %3155 = vmatmul.f32.gmra.mxu0 %v186
    %v3156 = vpop.f32.mrf.mxu0
    %v3157 = vadd.f32 %v3092, %v3156
    %3158 = vmatmul.f32.gmra.mxu0 %v204
    %v3159 = vpop.f32.mrf.mxu0
    %v3160 = vadd.f32 %v3095, %v3159
    %3161 = vmatmul.f32.gmra.mxu0 %v222
    %v3162 = vpop.f32.mrf.mxu0
    %v3163 = vadd.f32 %v3098, %v3162
    %3164 = vmatmul.f32.gmra.mxu0 %v240
    %v3165 = vpop.f32.mrf.mxu0
    %v3166 = vadd.f32 %v3101, %v3165
    %3167 = vmatmul.f32.gmra.mxu0 %v258
    %v3168 = vpop.f32.mrf.mxu0
    %v3169 = vadd.f32 %v3104, %v3168
    %3170 = vmatmul.f32.gmra.mxu0 %v276
    %v3171 = vpop.f32.mrf.mxu0
    %v3172 = vadd.f32 %v3107, %v3171
    %3173 = vmatmul.f32.gmra.mxu0 %v294
    %v3174 = vpop.f32.mrf.mxu0
    %v3175 = vadd.f32 %v3110, %v3174
    %3176 = vmatmul.f32.gmra.mxu0 %v312
    %v3177 = vpop.f32.mrf.mxu0
    %v3178 = vadd.f32 %v3113, %v3177
    %3179 = vmatmul.f32.gmra.mxu0 %v330
    %v3180 = vpop.f32.mrf.mxu0
    %v3181 = vadd.f32 %v3116, %v3180
    %3182 = vdwg.mxu0
    %3183 = vmatpush.msra.mxu0 %v907
    %3184 = vmatpush.msra.mxu0 %v905
    %3185 = vmatpush.msra.mxu0 %v903
    %3186 = vmatpush.msra.mxu0 %v901
    %3187 = vmatpush.msra.mxu0 %v899
    %3188 = vmatpush.msra.mxu0 %v897
    %3189 = vmatpush.msra.mxu0 %v895
    %3190 = vmatpush.msra.mxu0 %v893
    %3191 = vmatpush.msra.mxu0 %v891
    %3192 = vmatpush.msra.mxu0 %v889
    %3193 = vmatpush.msra.mxu0 %v887
    %3194 = vmatpush.msra.mxu0 %v885
    %3195 = vmatpush.msra.mxu0 %v883
    %3196 = vmatpush.msra.mxu0 %v881
    %3197 = vmatpush.msra.mxu0 %v879
    %3198 = vmatpush.msra.mxu0 %v877
    %3199 = vmatmul.f32.gmra.mxu0 %v61
    %v3200 = vpop.f32.mrf.mxu0
    %v3201 = vadd.f32 %v3136, %v3200
    %3202 = vmatmul.f32.gmra.mxu0 %v79
    %v3203 = vpop.f32.mrf.mxu0
    %v3204 = vadd.f32 %v3139, %v3203
    %3205 = vmatmul.f32.gmra.mxu0 %v97
    %v3206 = vpop.f32.mrf.mxu0
    %v3207 = vadd.f32 %v3142, %v3206
    %3208 = vmatmul.f32.gmra.mxu0 %v115
    %v3209 = vpop.f32.mrf.mxu0
    %v3210 = vadd.f32 %v3145, %v3209
    %3211 = vmatmul.f32.gmra.mxu0 %v133
    %v3212 = vpop.f32.mrf.mxu0
    %v3213 = vadd.f32 %v3148, %v3212
    %3214 = vmatmul.f32.gmra.mxu0 %v151
    %v3215 = vpop.f32.mrf.mxu0
    %v3216 = vadd.f32 %v3151, %v3215
    %3217 = vmatmul.f32.gmra.mxu0 %v169
    %v3218 = vpop.f32.mrf.mxu0
    %v3219 = vadd.f32 %v3154, %v3218
    %3220 = vmatmul.f32.gmra.mxu0 %v187
    %v3221 = vpop.f32.mrf.mxu0
    %v3222 = vadd.f32 %v3157, %v3221
    %3223 = vmatmul.f32.gmra.mxu0 %v205
    %v3224 = vpop.f32.mrf.mxu0
    %v3225 = vadd.f32 %v3160, %v3224
    %3226 = vmatmul.f32.gmra.mxu0 %v223
    %v3227 = vpop.f32.mrf.mxu0
    %v3228 = vadd.f32 %v3163, %v3227
    %3229 = vmatmul.f32.gmra.mxu0 %v241
    %v3230 = vpop.f32.mrf.mxu0
    %v3231 = vadd.f32 %v3166, %v3230
    %3232 = vmatmul.f32.gmra.mxu0 %v259
    %v3233 = vpop.f32.mrf.mxu0
    %v3234 = vadd.f32 %v3169, %v3233
    %3235 = vmatmul.f32.gmra.mxu0 %v277
    %v3236 = vpop.f32.mrf.mxu0
    %v3237 = vadd.f32 %v3172, %v3236
    %3238 = vmatmul.f32.gmra.mxu0 %v295
    %v3239 = vpop.f32.mrf.mxu0
    %v3240 = vadd.f32 %v3175, %v3239
    %3241 = vmatmul.f32.gmra.mxu0 %v313
    %v3242 = vpop.f32.mrf.mxu0
    %v3243 = vadd.f32 %v3178, %v3242
    %3244 = vmatmul.f32.gmra.mxu0 %v331
    %v3245 = vpop.f32.mrf.mxu0
    %v3246 = vadd.f32 %v3181, %v3245
    %3247 = vdwg.mxu0
    %3248 = vst [vmem:[#allocation7] sm:$0xff] %v2031
    %3249 = vst [vmem:[#allocation7 + $0x8] sm:$0xff] %v3201
    %3250 = vst [vmem:[#allocation7 + $0x10] sm:$0xff] %v2034
    %3251 = vst [vmem:[#allocation7 + $0x18] sm:$0xff] %v3204
    %3252 = vst [vmem:[#allocation7 + $0x20] sm:$0xff] %v2037
    %3253 = vst [vmem:[#allocation7 + $0x28] sm:$0xff] %v3207
    %3254 = vst [vmem:[#allocation7 + $0x30] sm:$0xff] %v2040
    %3255 = vst [vmem:[#allocation7 + $0x38] sm:$0xff] %v3210
    %3256 = vst [vmem:[#allocation7 + $0x40] sm:$0xff] %v2043
    %3257 = vst [vmem:[#allocation7 + $0x48] sm:$0xff] %v3213
    %3258 = vst [vmem:[#allocation7 + $0x50] sm:$0xff] %v2046
    %3259 = vst [vmem:[#allocation7 + $0x58] sm:$0xff] %v3216
    %3260 = vst [vmem:[#allocation7 + $0x60] sm:$0xff] %v2049
    %3261 = vst [vmem:[#allocation7 + $0x68] sm:$0xff] %v3219
    %3262 = vst [vmem:[#allocation7 + $0x70] sm:$0xff] %v2052
    %3263 = vst [vmem:[#allocation7 + $0x78] sm:$0xff] %v3222
    %3264 = vst [vmem:[#allocation7 + $0x80] sm:$0xff] %v2055
    %3265 = vst [vmem:[#allocation7 + $0x88] sm:$0xff] %v3225
    %3266 = vst [vmem:[#allocation7 + $0x90] sm:$0xff] %v2058
    %3267 = vst [vmem:[#allocation7 + $0x98] sm:$0xff] %v3228
    %3268 = vst [vmem:[#allocation7 + $0xa0] sm:$0xff] %v2061
    %3269 = vst [vmem:[#allocation7 + $0xa8] sm:$0xff] %v3231
    %3270 = vst [vmem:[#allocation7 + $0xb0] sm:$0xff] %v2064
    %3271 = vst [vmem:[#allocation7 + $0xb8] sm:$0xff] %v3234
    %3272 = vst [vmem:[#allocation7 + $0xc0] sm:$0xff] %v2067
    %3273 = vst [vmem:[#allocation7 + $0xc8] sm:$0xff] %v3237
    %3274 = vst [vmem:[#allocation7 + $0xd0] sm:$0xff] %v2070
    %3275 = vst [vmem:[#allocation7 + $0xd8] sm:$0xff] %v3240
    %3276 = vst [vmem:[#allocation7 + $0xe0] sm:$0xff] %v2073
    %3277 = vst [vmem:[#allocation7 + $0xe8] sm:$0xff] %v3243
    %3278 = vst [vmem:[#allocation7 + $0xf0] sm:$0xff] %v2076
    %3279 = vst [vmem:[#allocation7 + $0xf8] sm:$0xff] %v3246
    // Predicated region
    $region18: #{tpu_custom_call.1} parent=1 // pred_check
      _
    $region19: #{tpu_custom_call.1} parent=1 // pred_check_branch
      %3281 = sbr.rel (0) target = $region21
    $region20: #{tpu_custom_call.1} parent=1 // pred_region
      %3283 = vsyncadd [#allocation4], 0
      %s3284 = sshll.u32 [#allocation7], 4
      %s3285 = int_to_ptr.vmem [resolvable:$true] %s3284
      %s3286 = sshll.u32 %s2, 4
      %s3287 = int_to_ptr.hbm [resolvable:$true] %s3286
      %3292 = dma.vmem_to_hbm [thread:$0]  %s3285, 4096, %s3287, [#allocation4], 256, 256, 16
    $region21: #{tpu_custom_call.1} parent=1 // pred_fallthru
      _
    // Predicated region
    $region22: #{tpu_custom_call.1} parent=1 // pred_check
      _
    $region23: #{tpu_custom_call.1} parent=1 // pred_check_branch
      %3294 = sbr.rel (0) target = $region25
    $region24: #{tpu_custom_call.1} parent=1 // pred_region
      %3296 = dma.done [#allocation4], 4096
    $region25: #{tpu_custom_call.1} parent=1 // pred_fallthru
      _
    %3297 = vsyncpa [#allocation3], 1
    %3298 = vsyncpa [#allocation6], 1
    %3299 = vsyncpa [#allocation4], 1

</llo_original>
